<compile_context>
chip_gen: v7x
topology: tpu7x:2x2x1
jax: 0.10.0
libtpu: 0.0.40
codegen_flags: <defaults>
</compile_context>

<pallas_src>
import jax
import jax.numpy as jnp
from jax.experimental import pallas as pl
from jax.experimental.pallas import tpu as pltpu


# --------------------------------------------------------------------------- #
# Kernel
# --------------------------------------------------------------------------- #
def _fold_kernel(x_ref, place_ref, o_ref):
    # x_ref     : (G, r2, Hb, Wb)   unfold columns for G (batch, out-channel) groups
    # place_ref : (r2, Wb, r*out)   constant 0/1 column-placement (whole array, VMEM)
    # o_ref     : (G*Hb, r*out)     lane-dense output rows, (group, block-row)-major
    G, r2, Hb, Wb = x_ref.shape
    M = G * Hb
    acc = None
    # r2 == ratio**2 is tiny (typically 4): a short static chain of fused dots,
    # each with M = G*Hb rows (all groups of the step fused into one matmul).
    for k in range(r2):
        # Layout-preserving collapse (Hb is a multiple of the sublane tile).
        lhs = x_ref[:, k, :, :].reshape(M, Wb)
        d = jnp.dot(lhs, place_ref[k],
                    preferred_element_type=jnp.float32,
                    precision=jax.lax.Precision.HIGHEST)  # exact f32 pass-through
        acc = d if acc is None else acc + d
    o_ref[...] = acc.astype(o_ref.dtype)


# --------------------------------------------------------------------------- #
# Sizing helpers (byte-driven, generation-aware)
# --------------------------------------------------------------------------- #
def _round_up(a, b):
    return (a + b - 1) // b * b


def _tpu_defaults():
    """(physical VMEM bytes, min grid steps) for the current TPU generation."""
    vmem_cap = 64 * 2**20            # conservative (v7x-sized) fallback
    min_grid_steps = 1               # v5e / v6e: single TensorCore
    try:
        vmem_cap = int(pltpu.get_tpu_info().vmem_capacity_bytes)
    except Exception:
        pass
    try:
        kind = jax.devices()[0].device_kind.lower()
        if "v7" in kind or "tpu7" in kind:
            min_grid_steps = 2       # v7x: 2 TensorCores share the grid
    except Exception:
        pass
    return vmem_cap, min_grid_steps


def _pick_group_size(n_groups, per_group_block_bytes, block_budget_bytes,
                     min_grid_steps):
    """Largest divisor of n_groups whose (in+out) block fits the byte budget,
    leaving >= min_grid_steps grid steps when possible (v7x only)."""
    cap = max(1, block_budget_bytes // max(per_group_block_bytes, 1))
    cap = min(cap, n_groups)
    if min_grid_steps > 1 and n_groups >= min_grid_steps:
        cap = min(cap, max(1, n_groups // min_grid_steps))
    best = 1
    for d in range(1, n_groups + 1):
        if d <= cap and n_groups % d == 0:
            best = d
    return best


# --------------------------------------------------------------------------- #
# Wrapper
# --------------------------------------------------------------------------- #
def fold_sampling_ref(x, out_size, ratio=2):
    """Pure-JAX reference (mirrors torch.nn.Fold with stride == kernel_size)."""
    B, C_in, H, W = x.shape
    r = ratio
    C_out = C_in // (r * r)
    Hb = out_size // r
    v = x.reshape(B, C_out, r, r, Hb, Hb)
    v = v.transpose(0, 1, 4, 2, 5, 3)          # (B, C_out, i, kh, j, kw)
    return v.reshape(B, C_out, out_size, out_size)


def fold_sampling(x, out_size, ratio=2):
    """Pallas equivalent of FoldSampling(out_size, ratio).forward(x)."""
    B, C_in, H, W = x.shape
    r = ratio
    r2 = r * r
    assert C_in % r2 == 0, "input channels must be divisible by ratio**2"
    assert out_size % r == 0, "out_size must be divisible by ratio"
    C_out = C_in // r2
    Hb = out_size // r                 # fold-block grid height (square output)
    Wb = Hb
    assert H * W == Hb * Wb, "spatial size must equal the number of fold blocks"
    N = B * C_out

    itemsize = jnp.dtype(x.dtype).itemsize
    sublane = max(8, 32 // max(itemsize, 1))     # 8 (f32) / 16 (bf16, f16)
    lane = 128
    cols = r * out_size                          # output columns per row-block

    pallas_ok = (jnp.issubdtype(x.dtype, jnp.floating)
                 and itemsize in (2, 4)          # f32 / bf16 / f16
                 and Hb % sublane == 0           # layout-preserving row fuse
                 and cols >= lane)               # lane-dense output stores
    if not pallas_ok:
        # TODO(synk): integer dtypes, tiny out_size (ratio*out_size < 128) and
        # odd block heights take the pure-XLA view path; a bitcast/roll-based
        # Pallas path for those cases is not implemented.
        return fold_sampling_ref(x, out_size, ratio)

    # Free wrapper-side views (no data movement).
    x_r = x.reshape(N, r2, Hb, Wb)

    # Constant 0/1 column-placement: place[k, j, c] = 1 iff c == kh*out + r*j + kw,
    # with k = kh*r + kw.  Built once on the host side, single copy in VMEM.
    k_idx = jnp.arange(r2)
    kh = k_idx // r
    kw = k_idx % r
    j_idx = jnp.arange(Wb)
    target = kh[:, None] * out_size + r * j_idx[None, :] + kw[:, None]     # (r2, Wb)
    c_idx = jnp.arange(cols)
    place = (c_idx[None, None, :] == target[:, :, None]).astype(x.dtype)   # (r2, Wb, cols)

    # ---- byte-driven, generation-aware block sizing -------------------------
    vmem_cap, min_grid_steps = _tpu_defaults()
    # (sublane, lane)-padded VMEM footprint of one (batch, out-channel) group.
    in_tile = r2 * _round_up(Hb, sublane) * _round_up(Wb, lane) * itemsize
    out_tile = _round_up(Hb, sublane) * _round_up(cols, lane) * itemsize
    acc_tile = _round_up(Hb, 8) * _round_up(cols, lane) * 4                # f32 acc
    place_bytes = r2 * _round_up(Wb, sublane) * _round_up(cols, lane) * itemsize

    # Target (in + out) bytes per grid step: ~VMEM/8, clamped to [4, 16] MiB
    # (16 MiB on 128-MiB v5e/v6e, 8 MiB on 64-MiB v7x).
    block_budget = min(16 * 2**20, max(4 * 2**20, vmem_cap // 8))
    G = _pick_group_size(N, in_tile + out_tile, block_budget, min_grid_steps)
    grid = (N // G,)

    # Double-buffered in/out blocks + accumulator + single-buffered placement.
    needed = G * (2 * (in_tile + out_tile) + acc_tile) + place_bytes + 8 * 2**20
    if needed > int(0.9 * vmem_cap):
        # TODO(synk): pathologically large out_size (placement operand alone
        # exceeds VMEM) falls back to the pure-XLA view path.
        return fold_sampling_ref(x, out_size, ratio)
    vmem_limit = int(min(0.9 * vmem_cap, max(needed, 32 * 2**20)))

    total_bytes = ((N * r2 * Hb * Wb + N * Hb * cols) * itemsize
                   + r2 * Wb * cols * itemsize)

    out2 = pl.pallas_call(
        _fold_kernel,
        out_shape=jax.ShapeDtypeStruct((N * Hb, cols), x.dtype),
        grid=grid,
        in_specs=[
            pl.BlockSpec((G, r2, Hb, Wb), lambda n: (n, 0, 0, 0)),
            # Constant operand: whole array resident in VMEM, never re-fetched
            # and never double-buffered.
            pl.BlockSpec(memory_space=pltpu.MemorySpace.VMEM),
        ],
        out_specs=pl.BlockSpec((G * Hb, cols), lambda n: (n, 0)),
        compiler_params=pltpu.CompilerParams(
            dimension_semantics=("parallel",),
            vmem_limit_bytes=vmem_limit,
        ),
        cost_estimate=pl.CostEstimate(
            flops=0, transcendentals=0, bytes_accessed=total_bytes),
    )(x_r, place)

    # Rows of out2 are (b, c_out, block-row i); columns are (kh, j, kw):
    # a plain row-major reshape lands directly in NCHW
    # (output row = i*r + kh, output col = j*r + kw).
    return out2.reshape(B, C_out, out_size, out_size)


class FoldSampling:
    """Forward-only drop-in for the PyTorch module."""

    def __init__(self, out_size, ratio=2):
        self.out_size = out_size
        self.ratio = ratio

    def __call__(self, x):
        return fold_sampling(x, self.out_size, self.ratio)


# --------------------------------------------------------------------------- #
# Demo / self-test
# --------------------------------------------------------------------------- #
if __name__ == "__main__":
    out_size, ratio = 64, 2          # ratio*out_size = 128 -> lane-dense Pallas path
    B, C_in = 2, 16                  # C_out = 4
    H = W = out_size // ratio        # H*W == number of fold blocks (32*32)

    key = jax.random.PRNGKey(0)
    x = jax.random.normal(key, (B, C_in, H, W), dtype=jnp.float32)

    y = jax.block_until_ready(FoldSampling(out_size, ratio)(x))
    y_ref = fold_sampling_ref(x, out_size, ratio)

    assert y.shape == (B, C_in // (ratio * ratio), out_size, out_size)
    assert jnp.allclose(y, y_ref, atol=1e-6, rtol=1e-6)

    print("KERNEL_OK")
</pallas_src>

<mosaic_0001>
module attributes {stable_mosaic.version = 11 : i64} {
  func.func @_fold_kernel(%arg0: i32, %arg1: memref<8x4x32x32xf32, #tpu.memory_space<vmem>>, %arg2: memref<4x32x128xf32, #tpu.memory_space<vmem>>, %arg3: memref<256x128xf32, #tpu.memory_space<vmem>>) attributes {dimension_semantics = [#tpu.dimension_semantics<parallel>], iteration_bounds = array<i64: 1>, scalar_prefetch = 0 : i64, scratch_operands = 0 : i64, tpu.core_type = #tpu.core_type<tc>, window_params = [{transform_indices = @transform_0, window_bounds = array<i64: 8, 4, 32, 32>}, {pipeline_mode = #tpu.pipeline_mode<synchronous>, transform_indices = @transform_1, window_bounds = array<i64: 4, 32, 128>}, {transform_indices = @transform_2, window_bounds = array<i64: 256, 128>}]} {
    %c0 = arith.constant 0 : index
    %c0_0 = arith.constant 0 : index
    %c0_1 = arith.constant 0 : index
    %c0_2 = arith.constant 0 : index
    %0 = vector.load %arg1[%c0, %c0_0, %c0_1, %c0_2] : memref<8x4x32x32xf32, #tpu.memory_space<vmem>>, vector<8x1x32x32xf32>
    %1 = vector.shape_cast %0 : vector<8x1x32x32xf32> to vector<8x32x32xf32>
    %2 = vector.shape_cast %1 : vector<8x32x32xf32> to vector<256x32xf32>
    %c0_3 = arith.constant 0 : index
    %c0_4 = arith.constant 0 : index
    %c0_5 = arith.constant 0 : index
    %3 = vector.load %arg2[%c0_3, %c0_4, %c0_5] : memref<4x32x128xf32, #tpu.memory_space<vmem>>, vector<1x32x128xf32>
    %4 = vector.shape_cast %3 : vector<1x32x128xf32> to vector<32x128xf32>
    %cst = arith.constant dense<0.000000e+00> : vector<256x128xf32>
    %5 = tpu.matmul %2, %4, %cst {dimension_numbers = #tpu.dot_dimension_numbers<[1], [0], [0], [1], [0, 0, 1, 1], [], []>, precision = #tpu.contract_precision<fp32>} : vector<256x32xf32>, vector<32x128xf32>, vector<256x128xf32> -> vector<256x128xf32>
    %c0_6 = arith.constant 0 : index
    %c1 = arith.constant 1 : index
    %c0_7 = arith.constant 0 : index
    %c0_8 = arith.constant 0 : index
    %6 = vector.load %arg1[%c0_6, %c1, %c0_7, %c0_8] : memref<8x4x32x32xf32, #tpu.memory_space<vmem>>, vector<8x1x32x32xf32>
    %7 = vector.shape_cast %6 : vector<8x1x32x32xf32> to vector<8x32x32xf32>
    %8 = vector.shape_cast %7 : vector<8x32x32xf32> to vector<256x32xf32>
    %c1_9 = arith.constant 1 : index
    %c0_10 = arith.constant 0 : index
    %c0_11 = arith.constant 0 : index
    %9 = vector.load %arg2[%c1_9, %c0_10, %c0_11] : memref<4x32x128xf32, #tpu.memory_space<vmem>>, vector<1x32x128xf32>
    %10 = vector.shape_cast %9 : vector<1x32x128xf32> to vector<32x128xf32>
    %cst_12 = arith.constant dense<0.000000e+00> : vector<256x128xf32>
    %11 = tpu.matmul %8, %10, %cst_12 {dimension_numbers = #tpu.dot_dimension_numbers<[1], [0], [0], [1], [0, 0, 1, 1], [], []>, precision = #tpu.contract_precision<fp32>} : vector<256x32xf32>, vector<32x128xf32>, vector<256x128xf32> -> vector<256x128xf32>
    %12 = arith.addf %5, %11 : vector<256x128xf32>
    %c0_13 = arith.constant 0 : index
    %c2 = arith.constant 2 : index
    %c0_14 = arith.constant 0 : index
    %c0_15 = arith.constant 0 : index
    %13 = vector.load %arg1[%c0_13, %c2, %c0_14, %c0_15] : memref<8x4x32x32xf32, #tpu.memory_space<vmem>>, vector<8x1x32x32xf32>
    %14 = vector.shape_cast %13 : vector<8x1x32x32xf32> to vector<8x32x32xf32>
    %15 = vector.shape_cast %14 : vector<8x32x32xf32> to vector<256x32xf32>
    %c2_16 = arith.constant 2 : index
    %c0_17 = arith.constant 0 : index
    %c0_18 = arith.constant 0 : index
    %16 = vector.load %arg2[%c2_16, %c0_17, %c0_18] : memref<4x32x128xf32, #tpu.memory_space<vmem>>, vector<1x32x128xf32>
    %17 = vector.shape_cast %16 : vector<1x32x128xf32> to vector<32x128xf32>
    %cst_19 = arith.constant dense<0.000000e+00> : vector<256x128xf32>
    %18 = tpu.matmul %15, %17, %cst_19 {dimension_numbers = #tpu.dot_dimension_numbers<[1], [0], [0], [1], [0, 0, 1, 1], [], []>, precision = #tpu.contract_precision<fp32>} : vector<256x32xf32>, vector<32x128xf32>, vector<256x128xf32> -> vector<256x128xf32>
    %19 = arith.addf %12, %18 : vector<256x128xf32>
    %c0_20 = arith.constant 0 : index
    %c3 = arith.constant 3 : index
    %c0_21 = arith.constant 0 : index
    %c0_22 = arith.constant 0 : index
    %20 = vector.load %arg1[%c0_20, %c3, %c0_21, %c0_22] : memref<8x4x32x32xf32, #tpu.memory_space<vmem>>, vector<8x1x32x32xf32>
    %21 = vector.shape_cast %20 : vector<8x1x32x32xf32> to vector<8x32x32xf32>
    %22 = vector.shape_cast %21 : vector<8x32x32xf32> to vector<256x32xf32>
    %c3_23 = arith.constant 3 : index
    %c0_24 = arith.constant 0 : index
    %c0_25 = arith.constant 0 : index
    %23 = vector.load %arg2[%c3_23, %c0_24, %c0_25] : memref<4x32x128xf32, #tpu.memory_space<vmem>>, vector<1x32x128xf32>
    %24 = vector.shape_cast %23 : vector<1x32x128xf32> to vector<32x128xf32>
    %cst_26 = arith.constant dense<0.000000e+00> : vector<256x128xf32>
    %25 = tpu.matmul %22, %24, %cst_26 {dimension_numbers = #tpu.dot_dimension_numbers<[1], [0], [0], [1], [0, 0, 1, 1], [], []>, precision = #tpu.contract_precision<fp32>} : vector<256x32xf32>, vector<32x128xf32>, vector<256x128xf32> -> vector<256x128xf32>
    %26 = arith.addf %19, %25 : vector<256x128xf32>
    %c0_27 = arith.constant 0 : index
    %c0_28 = arith.constant 0 : index
    %27 = vector.load %arg3[%c0_27, %c0_28] : memref<256x128xf32, #tpu.memory_space<vmem>>, vector<256x128xf32>
    tpu.vector_store %arg3[%c0_27, %c0_28], %26 {strides = array<i32>} : memref<256x128xf32, #tpu.memory_space<vmem>>, vector<256x128xf32>,
    return
  }
  func.func @transform_0(%arg0: i32) -> (i32, i32, i32, i32) {
    %c0_i32 = arith.constant 0 : i32
    %c0_i32_0 = arith.constant 0 : i32
    %c0_i32_1 = arith.constant 0 : i32
    %c0_i32_2 = arith.constant 0 : i32
    return %arg0, %c0_i32, %c0_i32_0, %c0_i32_1 : i32, i32, i32, i32
  }
  func.func @transform_1(%arg0: i32) -> (i32, i32, i32) {
    %c0_i32 = arith.constant 0 : i32
    %c0_i32_0 = arith.constant 0 : i32
    %c0_i32_1 = arith.constant 0 : i32
    %c0_i32_2 = arith.constant 0 : i32
    return %c0_i32, %c0_i32_0, %c0_i32_1 : i32, i32, i32
  }
  func.func @transform_2(%arg0: i32) -> (i32, i32) {
    %c0_i32 = arith.constant 0 : i32
    %c0_i32_0 = arith.constant 0 : i32
    return %arg0, %c0_i32 : i32, i32
  }
}

</mosaic_0001>

<llo_original>
// kernel: tpu_custom_call.1
$region0: #{tpu_custom_call.1}
  #allocation0 [shape = 'u32[]', space=smem, size = 0x4, offset = 0x4, fixed_abs, tag = 'smem constant byte address 0x4 - core index']
  #allocation1 [shape = 'u32[144,128]{1,0:T(1,128)}', space=vmem, size = 0x12000, scoped, tag = 'internal scratch']
  %s0 = inlined_call_operand.hbm [shape: f32[8,4,32,32], index: 0, kind: input, shape index: {}]
  %s1 = inlined_call_operand.hbm [shape: f32[4,32,128], index: 1, kind: input, shape index: {}]
  %s2 = inlined_call_operand.hbm [shape: f32[256,128], index: 2, kind: output, shape index: {}]
  %s3 = sld [smem:[#allocation0]]
  $region26: #{tpu_custom_call.1} parent=0
    _
  %s5 = ssub.s32 1, %s3
  %s6 = scalar_select 0, %s5, %s3
  $region1: #{tpu_custom_call.1} parent=0
    #allocation2 [shape = 'u8[524288]{0}', space=vmem, size = 0x80000, scoped, tag = 'input window, operand 0, single buffered']
    #allocation3 [shape = 's32[1]{0}', space=sflag, size = 0x4, scoped, tag = 'scoped memory for tpu_custom_call.1']
    #allocation4 [shape = 's32[1]{0}', space=sflag, size = 0x4, scoped, tag = 'scoped memory for tpu_custom_call.1']
    #allocation5 [shape = 'u8[65536]{0}', space=vmem, size = 0x10000, scoped, tag = 'input window, operand 1, single buffered']
    #allocation6 [shape = 's32[1]{0}', space=sflag, size = 0x4, scoped, tag = 'scoped memory for tpu_custom_call.1']
    #allocation7 [shape = 'u8[131072]{0}', space=vmem, size = 0x20000, scoped, tag = 'output window, operand 0, single buffered']
    %7 = vsyncpa [#allocation3], 0
    %8 = vsyncpa [#allocation6], 0
    %9 = vsyncpa [#allocation4], 0
    // Predicated region
    $region2: #{tpu_custom_call.1} parent=1 // pred_check
      _
    $region3: #{tpu_custom_call.1} parent=1 // pred_check_branch
      %11 = sbr.rel (0) target = $region5
    $region4: #{tpu_custom_call.1} parent=1 // pred_region
      %s13 = ssub.s32 16384, 16384
      %14 = vsyncadd [#allocation3], %s13
      %s15 = sshll.u32 [#allocation2], 4
      %s16 = int_to_ptr.vmem [resolvable:$true] %s15
      %21 = dma.hbm_to_vmem [thread:$0]  %s0, 16384, %s16, [#allocation3], 128, 128, 8
    $region5: #{tpu_custom_call.1} parent=1 // pred_fallthru
      _
    // Predicated region
    $region6: #{tpu_custom_call.1} parent=1 // pred_check
      _
    $region7: #{tpu_custom_call.1} parent=1 // pred_check_branch
      %23 = sbr.rel (0) target = $region9
    $region8: #{tpu_custom_call.1} parent=1 // pred_region
      %s25 = ssub.s32 2048, 2048
      %26 = vsyncadd [#allocation6], %s25
      %s27 = sshll.u32 [#allocation5], 4
      %s28 = int_to_ptr.vmem [resolvable:$true] %s27
      %33 = dma.hbm_to_vmem [thread:$0]  %s1, 2048, %s28, [#allocation6], 128, 128, 8
    $region9: #{tpu_custom_call.1} parent=1 // pred_fallthru
      _
    // Predicated region
    $region10: #{tpu_custom_call.1} parent=1 // pred_check
      _
    $region11: #{tpu_custom_call.1} parent=1 // pred_check_branch
      %35 = sbr.rel (0) target = $region13
    $region12: #{tpu_custom_call.1} parent=1 // pred_region
      %36 = dma.done [#allocation3], 16384
    $region13: #{tpu_custom_call.1} parent=1 // pred_fallthru
      _
    // Predicated region
    $region14: #{tpu_custom_call.1} parent=1 // pred_check
      _
    $region15: #{tpu_custom_call.1} parent=1 // pred_check_branch
      %38 = sbr.rel (0) target = $region17
    $region16: #{tpu_custom_call.1} parent=1 // pred_region
      %39 = dma.done [#allocation6], 2048
    $region17: #{tpu_custom_call.1} parent=1 // pred_fallthru
      _
    %v40 = vld [vmem:[#allocation2] sm:$0xff]
    %v41 = vld [vmem:[#allocation2 + $0x8] sm:$0xff]
    %v42 = vld [vmem:[#allocation2 + $0x10] sm:$0xff]
    %v43 = vld [vmem:[#allocation2 + $0x18] sm:$0xff]
    %v44 = vld [vmem:[#allocation2 + $0x80] sm:$0xff]
    %v45 = vld [vmem:[#allocation2 + $0x88] sm:$0xff]
    %v46 = vld [vmem:[#allocation2 + $0x90] sm:$0xff]
    %v47 = vld [vmem:[#allocation2 + $0x98] sm:$0xff]
    %v48 = vld [vmem:[#allocation2 + $0x100] sm:$0xff]
    %v49 = vld [vmem:[#allocation2 + $0x108] sm:$0xff]
    %v50 = vld [vmem:[#allocation2 + $0x110] sm:$0xff]
    %v51 = vld [vmem:[#allocation2 + $0x118] sm:$0xff]
    %v52 = vld [vmem:[#allocation2 + $0x180] sm:$0xff]
    %v53 = vld [vmem:[#allocation2 + $0x188] sm:$0xff]
    %v54 = vld [vmem:[#allocation2 + $0x190] sm:$0xff]
    %v55 = vld [vmem:[#allocation2 + $0x198] sm:$0xff]
    %v56 = vld [vmem:[#allocation2 + $0x200] sm:$0xff]
    %v57 = vld [vmem:[#allocation2 + $0x208] sm:$0xff]
    %v58 = vld [vmem:[#allocation2 + $0x210] sm:$0xff]
    %v59 = vld [vmem:[#allocation2 + $0x218] sm:$0xff]
    %v60 = vld [vmem:[#allocation2 + $0x280] sm:$0xff]
    %v61 = vld [vmem:[#allocation2 + $0x288] sm:$0xff]
    %v62 = vld [vmem:[#allocation2 + $0x290] sm:$0xff]
    %v63 = vld [vmem:[#allocation2 + $0x298] sm:$0xff]
    %v64 = vld [vmem:[#allocation2 + $0x300] sm:$0xff]
    %v65 = vld [vmem:[#allocation2 + $0x308] sm:$0xff]
    %v66 = vld [vmem:[#allocation2 + $0x310] sm:$0xff]
    %v67 = vld [vmem:[#allocation2 + $0x318] sm:$0xff]
    %v68 = vld [vmem:[#allocation2 + $0x380] sm:$0xff]
    %v69 = vld [vmem:[#allocation2 + $0x388] sm:$0xff]
    %v70 = vld [vmem:[#allocation2 + $0x390] sm:$0xff]
    %v71 = vld [vmem:[#allocation2 + $0x398] sm:$0xff]
    %v72 = vld [vmem:[#allocation5] sm:$0xff]
    %v73 = vld [vmem:[#allocation5 + $0x8] sm:$0xff]
    %v74 = vld [vmem:[#allocation5 + $0x10] sm:$0xff]
    %v75 = vld [vmem:[#allocation5 + $0x18] sm:$0xff]
    %s76 = scalar_lea.vmem [#allocation2], 32
    %v77 = vld [vmem:[%s76] sm:$0xff]
    %v78 = vld [vmem:[%s76 + $0x8] sm:$0xff]
    %v79 = vld [vmem:[%s76 + $0x10] sm:$0xff]
    %v80 = vld [vmem:[%s76 + $0x18] sm:$0xff]
    %v81 = vld [vmem:[%s76 + $0x80] sm:$0xff]
    %v82 = vld [vmem:[%s76 + $0x88] sm:$0xff]
    %v83 = vld [vmem:[%s76 + $0x90] sm:$0xff]
    %v84 = vld [vmem:[%s76 + $0x98] sm:$0xff]
    %v85 = vld [vmem:[%s76 + $0x100] sm:$0xff]
    %v86 = vld [vmem:[%s76 + $0x108] sm:$0xff]
    %v87 = vld [vmem:[%s76 + $0x110] sm:$0xff]
    %v88 = vld [vmem:[%s76 + $0x118] sm:$0xff]
    %v89 = vld [vmem:[%s76 + $0x180] sm:$0xff]
    %v90 = vld [vmem:[%s76 + $0x188] sm:$0xff]
    %v91 = vld [vmem:[%s76 + $0x190] sm:$0xff]
    %v92 = vld [vmem:[%s76 + $0x198] sm:$0xff]
    %v93 = vld [vmem:[%s76 + $0x200] sm:$0xff]
    %v94 = vld [vmem:[%s76 + $0x208] sm:$0xff]
    %v95 = vld [vmem:[%s76 + $0x210] sm:$0xff]
    %v96 = vld [vmem:[%s76 + $0x218] sm:$0xff]
    %v97 = vld [vmem:[%s76 + $0x280] sm:$0xff]
    %v98 = vld [vmem:[%s76 + $0x288] sm:$0xff]
    %v99 = vld [vmem:[%s76 + $0x290] sm:$0xff]
    %v100 = vld [vmem:[%s76 + $0x298] sm:$0xff]
    %v101 = vld [vmem:[%s76 + $0x300] sm:$0xff]
    %v102 = vld [vmem:[%s76 + $0x308] sm:$0xff]
    %v103 = vld [vmem:[%s76 + $0x310] sm:$0xff]
    %v104 = vld [vmem:[%s76 + $0x318] sm:$0xff]
    %v105 = vld [vmem:[%s76 + $0x380] sm:$0xff]
    %v106 = vld [vmem:[%s76 + $0x388] sm:$0xff]
    %v107 = vld [vmem:[%s76 + $0x390] sm:$0xff]
    %v108 = vld [vmem:[%s76 + $0x398] sm:$0xff]
    %s109 = scalar_lea.vmem [#allocation5], 32
    %v110 = vld [vmem:[%s109] sm:$0xff]
    %v111 = vld [vmem:[%s109 + $0x8] sm:$0xff]
    %v112 = vld [vmem:[%s109 + $0x10] sm:$0xff]
    %v113 = vld [vmem:[%s109 + $0x18] sm:$0xff]
    %vm114 = vcmask 261120
    %v116 = vsel %vm114, %v77, 0
    %v119 = vsel %vm114, %v78, 0
    %v122 = vsel %vm114, %v79, 0
    %v125 = vsel %vm114, %v80, 0
    %v128 = vsel %vm114, %v81, 0
    %v131 = vsel %vm114, %v82, 0
    %v134 = vsel %vm114, %v83, 0
    %v137 = vsel %vm114, %v84, 0
    %v140 = vsel %vm114, %v85, 0
    %v143 = vsel %vm114, %v86, 0
    %v146 = vsel %vm114, %v87, 0
    %v149 = vsel %vm114, %v88, 0
    %v152 = vsel %vm114, %v89, 0
    %v155 = vsel %vm114, %v90, 0
    %v158 = vsel %vm114, %v91, 0
    %v161 = vsel %vm114, %v92, 0
    %v164 = vsel %vm114, %v93, 0
    %v167 = vsel %vm114, %v94, 0
    %v170 = vsel %vm114, %v95, 0
    %v173 = vsel %vm114, %v96, 0
    %v176 = vsel %vm114, %v97, 0
    %v179 = vsel %vm114, %v98, 0
    %v182 = vsel %vm114, %v99, 0
    %v185 = vsel %vm114, %v100, 0
    %v188 = vsel %vm114, %v101, 0
    %v191 = vsel %vm114, %v102, 0
    %v194 = vsel %vm114, %v103, 0
    %v197 = vsel %vm114, %v104, 0
    %v200 = vsel %vm114, %v105, 0
    %v203 = vsel %vm114, %v106, 0
    %v206 = vsel %vm114, %v107, 0
    %v209 = vsel %vm114, %v108, 0
    %211 = vmatprep.subr.mxu0 0.0
    %v212 = vand.u32 %v110, 4294901760
    %213 = vmatpush1.msra.mxu0 %v212
    %214 = vmatprep.subr.mxu0 0.0
    %v215 = vand.u32 %v111, 4294901760
    %216 = vmatpush1.msra.mxu0 %v215
    %217 = vmatprep.subr.mxu0 0.0
    %v218 = vand.u32 %v112, 4294901760
    %219 = vmatpush1.msra.mxu0 %v218
    %220 = vmatprep.subr.mxu0 0.0
    %v221 = vand.u32 %v113, 4294901760
    %222 = vmatpush1.msra.mxu0 %v221
    %223 = vmatprep.subr.mxu0 0.0
    %224 = vmatpush1.msra.mxu0 0.0
    %225 = vmatprep.subr.mxu0 0.0
    %226 = vmatpush1.msra.mxu0 0.0
    %227 = vmatprep.subr.mxu0 0.0
    %228 = vmatpush1.msra.mxu0 0.0
    %229 = vmatprep.subr.mxu0 0.0
    %230 = vmatpush1.msra.mxu0 0.0
    %231 = vmatprep.subr.mxu0 0.0
    %232 = vmatpush1.msra.mxu0 0.0
    %233 = vmatprep.subr.mxu0 0.0
    %234 = vmatpush1.msra.mxu0 0.0
    %235 = vmatprep.subr.mxu0 0.0
    %236 = vmatpush1.msra.mxu0 0.0
    %237 = vmatprep.subr.mxu0 0.0
    %238 = vmatpush1.msra.mxu0 0.0
    %239 = vmatprep.subr.mxu0 0.0
    %240 = vmatpush1.msra.mxu0 0.0
    %241 = vmatprep.subr.mxu0 0.0
    %242 = vmatpush1.msra.mxu0 0.0
    %243 = vmatprep.subr.mxu0 0.0
    %244 = vmatpush1.msra.mxu0 0.0
    %245 = vmatprep.subr.mxu0 0.0
    %246 = vmatpush1.msra.mxu0 0.0
    %247 = vmatprep.subr.mxu0 0.0
    %248 = vmatpush1.msra.mxu0 0.0
    %249 = vmatprep.subr.mxu0 0.0
    %250 = vmatpush1.msra.mxu0 0.0
    %251 = vmatprep.subr.mxu0 0.0
    %252 = vmatpush1.msra.mxu0 0.0
    %253 = vmatprep.subr.mxu0 0.0
    %254 = vmatpush1.msra.mxu0 0.0
    %255 = vmatprep.subr.mxu0 0.0
    %256 = vmatpush1.msra.mxu0 0.0
    %257 = vmatprep.subr.mxu0 0.0
    %258 = vmatpush1.msra.mxu0 0.0
    %259 = vmatprep.subr.mxu0 0.0
    %260 = vmatpush1.msra.mxu0 0.0
    %261 = vmatprep.subr.mxu0 0.0
    %262 = vmatpush1.msra.mxu0 0.0
    %263 = vmatprep.subr.mxu0 0.0
    %264 = vmatpush1.msra.mxu0 0.0
    %265 = vmatprep.subr.mxu0 0.0
    %266 = vmatpush1.msra.mxu0 0.0
    %267 = vmatprep.subr.mxu0 0.0
    %268 = vmatpush1.msra.mxu0 0.0
    %269 = vmatprep.subr.mxu0 0.0
    %270 = vmatpush1.msra.mxu0 0.0
    %271 = vmatprep.subr.mxu0 0.0
    %272 = vmatpush1.msra.mxu0 0.0
    %273 = vmatprep.subr.mxu0 0.0
    %274 = vmatpush1.msra.mxu0 0.0
    %275 = vmatprep.subr.mxu0 0.0
    %276 = vmatpush1.msra.mxu0 0.0
    %277 = vmatprep.subr.mxu0 0.0
    %278 = vmatpush1.msra.mxu0 0.0
    %279 = vmatprep.mubr.f32.mxu0 0.0
    %v280 = vand.u32 %v116, 4294901760
    %v281 = vsub.f32 %v116, %v280
    %v282 = vand.u32 %v281, 4294901760
    %v283 = vsub.f32 %v281, %v282
    %v284 = vand.u32 %v283, 4294901760
    %285 = vmatmul.mubr.f32.gmra.mrb[0].mxu0 %v284
    %v286 = vpop.f32.mrb[0].mxu0
    %v287 = vadd.f32 0.0, %v286
    %v288 = vpop.f32.mrb[0].mxu0
    %289 = vmatprep.mubr.f32.mxu0 0.0
    %v290 = vand.u32 %v119, 4294901760
    %v291 = vsub.f32 %v119, %v290
    %v292 = vand.u32 %v291, 4294901760
    %v293 = vsub.f32 %v291, %v292
    %v294 = vand.u32 %v293, 4294901760
    %295 = vmatmul.mubr.f32.gmra.mrb[0].mxu0 %v294
    %v296 = vpop.f32.mrb[0].mxu0
    %v297 = vadd.f32 0.0, %v296
    %v298 = vpop.f32.mrb[0].mxu0
    %299 = vmatprep.mubr.f32.mxu0 0.0
    %v300 = vand.u32 %v122, 4294901760
    %v301 = vsub.f32 %v122, %v300
    %v302 = vand.u32 %v301, 4294901760
    %v303 = vsub.f32 %v301, %v302
    %v304 = vand.u32 %v303, 4294901760
    %305 = vmatmul.mubr.f32.gmra.mrb[0].mxu0 %v304
    %v306 = vpop.f32.mrb[0].mxu0
    %v307 = vadd.f32 0.0, %v306
    %v308 = vpop.f32.mrb[0].mxu0
    %309 = vmatprep.mubr.f32.mxu0 0.0
    %v310 = vand.u32 %v125, 4294901760
    %v311 = vsub.f32 %v125, %v310
    %v312 = vand.u32 %v311, 4294901760
    %v313 = vsub.f32 %v311, %v312
    %v314 = vand.u32 %v313, 4294901760
    %315 = vmatmul.mubr.f32.gmra.mrb[0].mxu0 %v314
    %v316 = vpop.f32.mrb[0].mxu0
    %v317 = vadd.f32 0.0, %v316
    %v318 = vpop.f32.mrb[0].mxu0
    %319 = vmatprep.mubr.f32.mxu0 0.0
    %v320 = vand.u32 %v128, 4294901760
    %v321 = vsub.f32 %v128, %v320
    %v322 = vand.u32 %v321, 4294901760
    %v323 = vsub.f32 %v321, %v322
    %v324 = vand.u32 %v323, 4294901760
    %325 = vmatmul.mubr.f32.gmra.mrb[0].mxu0 %v324
    %v326 = vpop.f32.mrb[0].mxu0
    %v327 = vadd.f32 0.0, %v326
    %v328 = vpop.f32.mrb[0].mxu0
    %329 = vmatprep.mubr.f32.mxu0 0.0
    %v330 = vand.u32 %v131, 4294901760
    %v331 = vsub.f32 %v131, %v330
    %v332 = vand.u32 %v331, 4294901760
    %v333 = vsub.f32 %v331, %v332
    %v334 = vand.u32 %v333, 4294901760
    %335 = vmatmul.mubr.f32.gmra.mrb[0].mxu0 %v334
    %v336 = vpop.f32.mrb[0].mxu0
    %v337 = vadd.f32 0.0, %v336
    %v338 = vpop.f32.mrb[0].mxu0
    %339 = vmatprep.mubr.f32.mxu0 0.0
    %v340 = vand.u32 %v134, 4294901760
    %v341 = vsub.f32 %v134, %v340
    %v342 = vand.u32 %v341, 4294901760
    %v343 = vsub.f32 %v341, %v342
    %v344 = vand.u32 %v343, 4294901760
    %345 = vmatmul.mubr.f32.gmra.mrb[0].mxu0 %v344
    %v346 = vpop.f32.mrb[0].mxu0
    %v347 = vadd.f32 0.0, %v346
    %v348 = vpop.f32.mrb[0].mxu0
    %349 = vmatprep.mubr.f32.mxu0 0.0
    %v350 = vand.u32 %v137, 4294901760
    %v351 = vsub.f32 %v137, %v350
    %v352 = vand.u32 %v351, 4294901760
    %v353 = vsub.f32 %v351, %v352
    %v354 = vand.u32 %v353, 4294901760
    %355 = vmatmul.mubr.f32.gmra.mrb[0].mxu0 %v354
    %v356 = vpop.f32.mrb[0].mxu0
    %v357 = vadd.f32 0.0, %v356
    %v358 = vpop.f32.mrb[0].mxu0
    %359 = vmatprep.mubr.f32.mxu0 0.0
    %v360 = vand.u32 %v140, 4294901760
    %v361 = vsub.f32 %v140, %v360
    %v362 = vand.u32 %v361, 4294901760
    %v363 = vsub.f32 %v361, %v362
    %v364 = vand.u32 %v363, 4294901760
    %365 = vmatmul.mubr.f32.gmra.mrb[0].mxu0 %v364
    %v366 = vpop.f32.mrb[0].mxu0
    %v367 = vadd.f32 0.0, %v366
    %v368 = vpop.f32.mrb[0].mxu0
    %369 = vmatprep.mubr.f32.mxu0 0.0
    %v370 = vand.u32 %v143, 4294901760
    %v371 = vsub.f32 %v143, %v370
    %v372 = vand.u32 %v371, 4294901760
    %v373 = vsub.f32 %v371, %v372
    %v374 = vand.u32 %v373, 4294901760
    %375 = vmatmul.mubr.f32.gmra.mrb[0].mxu0 %v374
    %v376 = vpop.f32.mrb[0].mxu0
    %v377 = vadd.f32 0.0, %v376
    %v378 = vpop.f32.mrb[0].mxu0
    %379 = vmatprep.mubr.f32.mxu0 0.0
    %v380 = vand.u32 %v146, 4294901760
    %v381 = vsub.f32 %v146, %v380
    %v382 = vand.u32 %v381, 4294901760
    %v383 = vsub.f32 %v381, %v382
    %v384 = vand.u32 %v383, 4294901760
    %385 = vmatmul.mubr.f32.gmra.mrb[0].mxu0 %v384
    %v386 = vpop.f32.mrb[0].mxu0
    %v387 = vadd.f32 0.0, %v386
    %v388 = vpop.f32.mrb[0].mxu0
    %389 = vmatprep.mubr.f32.mxu0 0.0
    %v390 = vand.u32 %v149, 4294901760
    %v391 = vsub.f32 %v149, %v390
    %v392 = vand.u32 %v391, 4294901760
    %v393 = vsub.f32 %v391, %v392
    %v394 = vand.u32 %v393, 4294901760
    %395 = vmatmul.mubr.f32.gmra.mrb[0].mxu0 %v394
    %v396 = vpop.f32.mrb[0].mxu0
    %v397 = vadd.f32 0.0, %v396
    %v398 = vpop.f32.mrb[0].mxu0
    %399 = vmatprep.mubr.f32.mxu0 0.0
    %v400 = vand.u32 %v152, 4294901760
    %v401 = vsub.f32 %v152, %v400
    %v402 = vand.u32 %v401, 4294901760
    %v403 = vsub.f32 %v401, %v402
    %v404 = vand.u32 %v403, 4294901760
    %405 = vmatmul.mubr.f32.gmra.mrb[0].mxu0 %v404
    %v406 = vpop.f32.mrb[0].mxu0
    %v407 = vadd.f32 0.0, %v406
    %v408 = vpop.f32.mrb[0].mxu0
    %409 = vmatprep.mubr.f32.mxu0 0.0
    %v410 = vand.u32 %v155, 4294901760
    %v411 = vsub.f32 %v155, %v410
    %v412 = vand.u32 %v411, 4294901760
    %v413 = vsub.f32 %v411, %v412
    %v414 = vand.u32 %v413, 4294901760
    %415 = vmatmul.mubr.f32.gmra.mrb[0].mxu0 %v414
    %v416 = vpop.f32.mrb[0].mxu0
    %v417 = vadd.f32 0.0, %v416
    %v418 = vpop.f32.mrb[0].mxu0
    %419 = vmatprep.mubr.f32.mxu0 0.0
    %v420 = vand.u32 %v158, 4294901760
    %v421 = vsub.f32 %v158, %v420
    %v422 = vand.u32 %v421, 4294901760
    %v423 = vsub.f32 %v421, %v422
    %v424 = vand.u32 %v423, 4294901760
    %425 = vmatmul.mubr.f32.gmra.mrb[0].mxu0 %v424
    %v426 = vpop.f32.mrb[0].mxu0
    %v427 = vadd.f32 0.0, %v426
    %v428 = vpop.f32.mrb[0].mxu0
    %429 = vmatprep.mubr.f32.mxu0 0.0
    %v430 = vand.u32 %v161, 4294901760
    %v431 = vsub.f32 %v161, %v430
    %v432 = vand.u32 %v431, 4294901760
    %v433 = vsub.f32 %v431, %v432
    %v434 = vand.u32 %v433, 4294901760
    %435 = vmatmul.mubr.f32.gmra.mrb[0].mxu0 %v434
    %v436 = vpop.f32.mrb[0].mxu0
    %v437 = vadd.f32 0.0, %v436
    %v438 = vpop.f32.mrb[0].mxu0
    %439 = vmatprep.mubr.f32.mxu0 0.0
    %v440 = vand.u32 %v164, 4294901760
    %v441 = vsub.f32 %v164, %v440
    %v442 = vand.u32 %v441, 4294901760
    %v443 = vsub.f32 %v441, %v442
    %v444 = vand.u32 %v443, 4294901760
    %445 = vmatmul.mubr.f32.gmra.mrb[0].mxu0 %v444
    %v446 = vpop.f32.mrb[0].mxu0
    %v447 = vadd.f32 0.0, %v446
    %v448 = vpop.f32.mrb[0].mxu0
    %449 = vmatprep.mubr.f32.mxu0 0.0
    %v450 = vand.u32 %v167, 4294901760
    %v451 = vsub.f32 %v167, %v450
    %v452 = vand.u32 %v451, 4294901760
    %v453 = vsub.f32 %v451, %v452
    %v454 = vand.u32 %v453, 4294901760
    %455 = vmatmul.mubr.f32.gmra.mrb[0].mxu0 %v454
    %v456 = vpop.f32.mrb[0].mxu0
    %v457 = vadd.f32 0.0, %v456
    %v458 = vpop.f32.mrb[0].mxu0
    %459 = vmatprep.mubr.f32.mxu0 0.0
    %v460 = vand.u32 %v170, 4294901760
    %v461 = vsub.f32 %v170, %v460
    %v462 = vand.u32 %v461, 4294901760
    %v463 = vsub.f32 %v461, %v462
    %v464 = vand.u32 %v463, 4294901760
    %465 = vmatmul.mubr.f32.gmra.mrb[0].mxu0 %v464
    %v466 = vpop.f32.mrb[0].mxu0
    %v467 = vadd.f32 0.0, %v466
    %v468 = vpop.f32.mrb[0].mxu0
    %469 = vmatprep.mubr.f32.mxu0 0.0
    %v470 = vand.u32 %v173, 4294901760
    %v471 = vsub.f32 %v173, %v470
    %v472 = vand.u32 %v471, 4294901760
    %v473 = vsub.f32 %v471, %v472
    %v474 = vand.u32 %v473, 4294901760
    %475 = vmatmul.mubr.f32.gmra.mrb[0].mxu0 %v474
    %v476 = vpop.f32.mrb[0].mxu0
    %v477 = vadd.f32 0.0, %v476
    %v478 = vpop.f32.mrb[0].mxu0
    %479 = vmatprep.mubr.f32.mxu0 0.0
    %v480 = vand.u32 %v176, 4294901760
    %v481 = vsub.f32 %v176, %v480
    %v482 = vand.u32 %v481, 4294901760
    %v483 = vsub.f32 %v481, %v482
    %v484 = vand.u32 %v483, 4294901760
    %485 = vmatmul.mubr.f32.gmra.mrb[0].mxu0 %v484
    %v486 = vpop.f32.mrb[0].mxu0
    %v487 = vadd.f32 0.0, %v486
    %v488 = vpop.f32.mrb[0].mxu0
    %489 = vmatprep.mubr.f32.mxu0 0.0
    %v490 = vand.u32 %v179, 4294901760
    %v491 = vsub.f32 %v179, %v490
    %v492 = vand.u32 %v491, 4294901760
    %v493 = vsub.f32 %v491, %v492
    %v494 = vand.u32 %v493, 4294901760
    %495 = vmatmul.mubr.f32.gmra.mrb[0].mxu0 %v494
    %v496 = vpop.f32.mrb[0].mxu0
    %v497 = vadd.f32 0.0, %v496
    %v498 = vpop.f32.mrb[0].mxu0
    %499 = vmatprep.mubr.f32.mxu0 0.0
    %v500 = vand.u32 %v182, 4294901760
    %v501 = vsub.f32 %v182, %v500
    %v502 = vand.u32 %v501, 4294901760
    %v503 = vsub.f32 %v501, %v502
    %v504 = vand.u32 %v503, 4294901760
    %505 = vmatmul.mubr.f32.gmra.mrb[0].mxu0 %v504
    %v506 = vpop.f32.mrb[0].mxu0
    %v507 = vadd.f32 0.0, %v506
    %v508 = vpop.f32.mrb[0].mxu0
    %509 = vmatprep.mubr.f32.mxu0 0.0
    %v510 = vand.u32 %v185, 4294901760
    %v511 = vsub.f32 %v185, %v510
    %v512 = vand.u32 %v511, 4294901760
    %v513 = vsub.f32 %v511, %v512
    %v514 = vand.u32 %v513, 4294901760
    %515 = vmatmul.mubr.f32.gmra.mrb[0].mxu0 %v514
    %v516 = vpop.f32.mrb[0].mxu0
    %v517 = vadd.f32 0.0, %v516
    %v518 = vpop.f32.mrb[0].mxu0
    %519 = vmatprep.mubr.f32.mxu0 0.0
    %v520 = vand.u32 %v188, 4294901760
    %v521 = vsub.f32 %v188, %v520
    %v522 = vand.u32 %v521, 4294901760
    %v523 = vsub.f32 %v521, %v522
    %v524 = vand.u32 %v523, 4294901760
    %525 = vmatmul.mubr.f32.gmra.mrb[0].mxu0 %v524
    %v526 = vpop.f32.mrb[0].mxu0
    %v527 = vadd.f32 0.0, %v526
    %v528 = vpop.f32.mrb[0].mxu0
    %529 = vmatprep.mubr.f32.mxu0 0.0
    %v530 = vand.u32 %v191, 4294901760
    %v531 = vsub.f32 %v191, %v530
    %v532 = vand.u32 %v531, 4294901760
    %v533 = vsub.f32 %v531, %v532
    %v534 = vand.u32 %v533, 4294901760
    %535 = vmatmul.mubr.f32.gmra.mrb[0].mxu0 %v534
    %v536 = vpop.f32.mrb[0].mxu0
    %v537 = vadd.f32 0.0, %v536
    %v538 = vpop.f32.mrb[0].mxu0
    %539 = vmatprep.mubr.f32.mxu0 0.0
    %v540 = vand.u32 %v194, 4294901760
    %v541 = vsub.f32 %v194, %v540
    %v542 = vand.u32 %v541, 4294901760
    %v543 = vsub.f32 %v541, %v542
    %v544 = vand.u32 %v543, 4294901760
    %545 = vmatmul.mubr.f32.gmra.mrb[0].mxu0 %v544
    %v546 = vpop.f32.mrb[0].mxu0
    %v547 = vadd.f32 0.0, %v546
    %v548 = vpop.f32.mrb[0].mxu0
    %549 = vmatprep.mubr.f32.mxu0 0.0
    %v550 = vand.u32 %v197, 4294901760
    %v551 = vsub.f32 %v197, %v550
    %v552 = vand.u32 %v551, 4294901760
    %v553 = vsub.f32 %v551, %v552
    %v554 = vand.u32 %v553, 4294901760
    %555 = vmatmul.mubr.f32.gmra.mrb[0].mxu0 %v554
    %v556 = vpop.f32.mrb[0].mxu0
    %v557 = vadd.f32 0.0, %v556
    %v558 = vpop.f32.mrb[0].mxu0
    %559 = vmatprep.mubr.f32.mxu0 0.0
    %v560 = vand.u32 %v200, 4294901760
    %v561 = vsub.f32 %v200, %v560
    %v562 = vand.u32 %v561, 4294901760
    %v563 = vsub.f32 %v561, %v562
    %v564 = vand.u32 %v563, 4294901760
    %565 = vmatmul.mubr.f32.gmra.mrb[0].mxu0 %v564
    %v566 = vpop.f32.mrb[0].mxu0
    %v567 = vadd.f32 0.0, %v566
    %v568 = vpop.f32.mrb[0].mxu0
    %569 = vmatprep.mubr.f32.mxu0 0.0
    %v570 = vand.u32 %v203, 4294901760
    %v571 = vsub.f32 %v203, %v570
    %v572 = vand.u32 %v571, 4294901760
    %v573 = vsub.f32 %v571, %v572
    %v574 = vand.u32 %v573, 4294901760
    %575 = vmatmul.mubr.f32.gmra.mrb[0].mxu0 %v574
    %v576 = vpop.f32.mrb[0].mxu0
    %v577 = vadd.f32 0.0, %v576
    %v578 = vpop.f32.mrb[0].mxu0
    %579 = vmatprep.mubr.f32.mxu0 0.0
    %v580 = vand.u32 %v206, 4294901760
    %v581 = vsub.f32 %v206, %v580
    %v582 = vand.u32 %v581, 4294901760
    %v583 = vsub.f32 %v581, %v582
    %v584 = vand.u32 %v583, 4294901760
    %585 = vmatmul.mubr.f32.gmra.mrb[0].mxu0 %v584
    %v586 = vpop.f32.mrb[0].mxu0
    %v587 = vadd.f32 0.0, %v586
    %v588 = vpop.f32.mrb[0].mxu0
    %589 = vmatprep.mubr.f32.mxu0 0.0
    %v590 = vand.u32 %v209, 4294901760
    %v591 = vsub.f32 %v209, %v590
    %v592 = vand.u32 %v591, 4294901760
    %v593 = vsub.f32 %v591, %v592
    %v594 = vand.u32 %v593, 4294901760
    %595 = vmatmul.mubr.f32.gmra.mrb[0].mxu0 %v594
    %v596 = vpop.f32.mrb[0].mxu0
    %v597 = vadd.f32 0.0, %v596
    %v598 = vpop.f32.mrb[0].mxu0
    %599 = vdwg.mxu0
    %600 = vmatprep.subr.mxu0 0.0
    %v601 = vand.u32 %v110, 4294901760
    %v602 = vsub.f32 %v110, %v601
    %v603 = vand.u32 %v602, 4294901760
    %v604 = vsub.f32 %v602, %v603
    %v605 = vand.u32 %v604, 4294901760
    %606 = vmatpush1.msra.mxu0 %v605
    %607 = vmatprep.subr.mxu0 0.0
    %v608 = vand.u32 %v111, 4294901760
    %v609 = vsub.f32 %v111, %v608
    %v610 = vand.u32 %v609, 4294901760
    %v611 = vsub.f32 %v609, %v610
    %v612 = vand.u32 %v611, 4294901760
    %613 = vmatpush1.msra.mxu0 %v612
    %614 = vmatprep.subr.mxu0 0.0
    %v615 = vand.u32 %v112, 4294901760
    %v616 = vsub.f32 %v112, %v615
    %v617 = vand.u32 %v616, 4294901760
    %v618 = vsub.f32 %v616, %v617
    %v619 = vand.u32 %v618, 4294901760
    %620 = vmatpush1.msra.mxu0 %v619
    %621 = vmatprep.subr.mxu0 0.0
    %v622 = vand.u32 %v113, 4294901760
    %v623 = vsub.f32 %v113, %v622
    %v624 = vand.u32 %v623, 4294901760
    %v625 = vsub.f32 %v623, %v624
    %v626 = vand.u32 %v625, 4294901760
    %627 = vmatpush1.msra.mxu0 %v626
    %628 = vmatprep.subr.mxu0 0.0
    %629 = vmatpush1.msra.mxu0 0.0
    %630 = vmatprep.subr.mxu0 0.0
    %631 = vmatpush1.msra.mxu0 0.0
    %632 = vmatprep.subr.mxu0 0.0
    %633 = vmatpush1.msra.mxu0 0.0
    %634 = vmatprep.subr.mxu0 0.0
    %635 = vmatpush1.msra.mxu0 0.0
    %636 = vmatprep.subr.mxu0 0.0
    %637 = vmatpush1.msra.mxu0 0.0
    %638 = vmatprep.subr.mxu0 0.0
    %639 = vmatpush1.msra.mxu0 0.0
    %640 = vmatprep.subr.mxu0 0.0
    %641 = vmatpush1.msra.mxu0 0.0
    %642 = vmatprep.subr.mxu0 0.0
    %643 = vmatpush1.msra.mxu0 0.0
    %644 = vmatprep.subr.mxu0 0.0
    %645 = vmatpush1.msra.mxu0 0.0
    %646 = vmatprep.subr.mxu0 0.0
    %647 = vmatpush1.msra.mxu0 0.0
    %648 = vmatprep.subr.mxu0 0.0
    %649 = vmatpush1.msra.mxu0 0.0
    %650 = vmatprep.subr.mxu0 0.0
    %651 = vmatpush1.msra.mxu0 0.0
    %652 = vmatprep.subr.mxu0 0.0
    %653 = vmatpush1.msra.mxu0 0.0
    %654 = vmatprep.subr.mxu0 0.0
    %655 = vmatpush1.msra.mxu0 0.0
    %656 = vmatprep.subr.mxu0 0.0
    %657 = vmatpush1.msra.mxu0 0.0
    %658 = vmatprep.subr.mxu0 0.0
    %659 = vmatpush1.msra.mxu0 0.0
    %660 = vmatprep.subr.mxu0 0.0
    %661 = vmatpush1.msra.mxu0 0.0
    %662 = vmatprep.subr.mxu0 0.0
    %663 = vmatpush1.msra.mxu0 0.0
    %664 = vmatprep.subr.mxu0 0.0
    %665 = vmatpush1.msra.mxu0 0.0
    %666 = vmatprep.subr.mxu0 0.0
    %667 = vmatpush1.msra.mxu0 0.0
    %668 = vmatprep.subr.mxu0 0.0
    %669 = vmatpush1.msra.mxu0 0.0
    %670 = vmatprep.subr.mxu0 0.0
    %671 = vmatpush1.msra.mxu0 0.0
    %672 = vmatprep.subr.mxu0 0.0
    %673 = vmatpush1.msra.mxu0 0.0
    %674 = vmatprep.subr.mxu0 0.0
    %675 = vmatpush1.msra.mxu0 0.0
    %676 = vmatprep.subr.mxu0 0.0
    %677 = vmatpush1.msra.mxu0 0.0
    %678 = vmatprep.subr.mxu0 0.0
    %679 = vmatpush1.msra.mxu0 0.0
    %680 = vmatprep.subr.mxu0 0.0
    %681 = vmatpush1.msra.mxu0 0.0
    %682 = vmatprep.subr.mxu0 0.0
    %683 = vmatpush1.msra.mxu0 0.0
    %684 = vmatprep.mubr.f32.mxu0 0.0
    %v685 = vand.u32 %v116, 4294901760
    %686 = vmatmul.mubr.f32.gmra.mrb[0].mxu0 %v685
    %v687 = vpop.f32.mrb[0].mxu0
    %v688 = vadd.f32 %v287, %v687
    %v689 = vpop.f32.mrb[0].mxu0
    %690 = vmatprep.mubr.f32.mxu0 0.0
    %v691 = vand.u32 %v119, 4294901760
    %692 = vmatmul.mubr.f32.gmra.mrb[0].mxu0 %v691
    %v693 = vpop.f32.mrb[0].mxu0
    %v694 = vadd.f32 %v297, %v693
    %v695 = vpop.f32.mrb[0].mxu0
    %696 = vmatprep.mubr.f32.mxu0 0.0
    %v697 = vand.u32 %v122, 4294901760
    %698 = vmatmul.mubr.f32.gmra.mrb[0].mxu0 %v697
    %v699 = vpop.f32.mrb[0].mxu0
    %v700 = vadd.f32 %v307, %v699
    %v701 = vpop.f32.mrb[0].mxu0
    %702 = vmatprep.mubr.f32.mxu0 0.0
    %v703 = vand.u32 %v125, 4294901760
    %704 = vmatmul.mubr.f32.gmra.mrb[0].mxu0 %v703
    %v705 = vpop.f32.mrb[0].mxu0
    %v706 = vadd.f32 %v317, %v705
    %v707 = vpop.f32.mrb[0].mxu0
    %708 = vmatprep.mubr.f32.mxu0 0.0
    %v709 = vand.u32 %v128, 4294901760
    %710 = vmatmul.mubr.f32.gmra.mrb[0].mxu0 %v709
    %v711 = vpop.f32.mrb[0].mxu0
    %v712 = vadd.f32 %v327, %v711
    %v713 = vpop.f32.mrb[0].mxu0
    %714 = vmatprep.mubr.f32.mxu0 0.0
    %v715 = vand.u32 %v131, 4294901760
    %716 = vmatmul.mubr.f32.gmra.mrb[0].mxu0 %v715
    %v717 = vpop.f32.mrb[0].mxu0
    %v718 = vadd.f32 %v337, %v717
    %v719 = vpop.f32.mrb[0].mxu0
    %720 = vmatprep.mubr.f32.mxu0 0.0
    %v721 = vand.u32 %v134, 4294901760
    %722 = vmatmul.mubr.f32.gmra.mrb[0].mxu0 %v721
    %v723 = vpop.f32.mrb[0].mxu0
    %v724 = vadd.f32 %v347, %v723
    %v725 = vpop.f32.mrb[0].mxu0
    %726 = vmatprep.mubr.f32.mxu0 0.0
    %v727 = vand.u32 %v137, 4294901760
    %728 = vmatmul.mubr.f32.gmra.mrb[0].mxu0 %v727
    %v729 = vpop.f32.mrb[0].mxu0
    %v730 = vadd.f32 %v357, %v729
    %v731 = vpop.f32.mrb[0].mxu0
    %732 = vmatprep.mubr.f32.mxu0 0.0
    %v733 = vand.u32 %v140, 4294901760
    %734 = vmatmul.mubr.f32.gmra.mrb[0].mxu0 %v733
    %v735 = vpop.f32.mrb[0].mxu0
    %v736 = vadd.f32 %v367, %v735
    %v737 = vpop.f32.mrb[0].mxu0
    %738 = vmatprep.mubr.f32.mxu0 0.0
    %v739 = vand.u32 %v143, 4294901760
    %740 = vmatmul.mubr.f32.gmra.mrb[0].mxu0 %v739
    %v741 = vpop.f32.mrb[0].mxu0
    %v742 = vadd.f32 %v377, %v741
    %v743 = vpop.f32.mrb[0].mxu0
    %744 = vmatprep.mubr.f32.mxu0 0.0
    %v745 = vand.u32 %v146, 4294901760
    %746 = vmatmul.mubr.f32.gmra.mrb[0].mxu0 %v745
    %v747 = vpop.f32.mrb[0].mxu0
    %v748 = vadd.f32 %v387, %v747
    %v749 = vpop.f32.mrb[0].mxu0
    %750 = vmatprep.mubr.f32.mxu0 0.0
    %v751 = vand.u32 %v149, 4294901760
    %752 = vmatmul.mubr.f32.gmra.mrb[0].mxu0 %v751
    %v753 = vpop.f32.mrb[0].mxu0
    %v754 = vadd.f32 %v397, %v753
    %v755 = vpop.f32.mrb[0].mxu0
    %756 = vmatprep.mubr.f32.mxu0 0.0
    %v757 = vand.u32 %v152, 4294901760
    %758 = vmatmul.mubr.f32.gmra.mrb[0].mxu0 %v757
    %v759 = vpop.f32.mrb[0].mxu0
    %v760 = vadd.f32 %v407, %v759
    %v761 = vpop.f32.mrb[0].mxu0
    %762 = vmatprep.mubr.f32.mxu0 0.0
    %v763 = vand.u32 %v155, 4294901760
    %764 = vmatmul.mubr.f32.gmra.mrb[0].mxu0 %v763
    %v765 = vpop.f32.mrb[0].mxu0
    %v766 = vadd.f32 %v417, %v765
    %v767 = vpop.f32.mrb[0].mxu0
    %768 = vmatprep.mubr.f32.mxu0 0.0
    %v769 = vand.u32 %v158, 4294901760
    %770 = vmatmul.mubr.f32.gmra.mrb[0].mxu0 %v769
    %v771 = vpop.f32.mrb[0].mxu0
    %v772 = vadd.f32 %v427, %v771
    %v773 = vpop.f32.mrb[0].mxu0
    %774 = vmatprep.mubr.f32.mxu0 0.0
    %v775 = vand.u32 %v161, 4294901760
    %776 = vmatmul.mubr.f32.gmra.mrb[0].mxu0 %v775
    %v777 = vpop.f32.mrb[0].mxu0
    %v778 = vadd.f32 %v437, %v777
    %v779 = vpop.f32.mrb[0].mxu0
    %780 = vmatprep.mubr.f32.mxu0 0.0
    %v781 = vand.u32 %v164, 4294901760
    %782 = vmatmul.mubr.f32.gmra.mrb[0].mxu0 %v781
    %v783 = vpop.f32.mrb[0].mxu0
    %v784 = vadd.f32 %v447, %v783
    %v785 = vpop.f32.mrb[0].mxu0
    %786 = vmatprep.mubr.f32.mxu0 0.0
    %v787 = vand.u32 %v167, 4294901760
    %788 = vmatmul.mubr.f32.gmra.mrb[0].mxu0 %v787
    %v789 = vpop.f32.mrb[0].mxu0
    %v790 = vadd.f32 %v457, %v789
    %v791 = vpop.f32.mrb[0].mxu0
    %792 = vmatprep.mubr.f32.mxu0 0.0
    %v793 = vand.u32 %v170, 4294901760
    %794 = vmatmul.mubr.f32.gmra.mrb[0].mxu0 %v793
    %v795 = vpop.f32.mrb[0].mxu0
    %v796 = vadd.f32 %v467, %v795
    %v797 = vpop.f32.mrb[0].mxu0
    %798 = vmatprep.mubr.f32.mxu0 0.0
    %v799 = vand.u32 %v173, 4294901760
    %800 = vmatmul.mubr.f32.gmra.mrb[0].mxu0 %v799
    %v801 = vpop.f32.mrb[0].mxu0
    %v802 = vadd.f32 %v477, %v801
    %v803 = vpop.f32.mrb[0].mxu0
    %804 = vmatprep.mubr.f32.mxu0 0.0
    %v805 = vand.u32 %v176, 4294901760
    %806 = vmatmul.mubr.f32.gmra.mrb[0].mxu0 %v805
    %v807 = vpop.f32.mrb[0].mxu0
    %v808 = vadd.f32 %v487, %v807
    %v809 = vpop.f32.mrb[0].mxu0
    %810 = vmatprep.mubr.f32.mxu0 0.0
    %v811 = vand.u32 %v179, 4294901760
    %812 = vmatmul.mubr.f32.gmra.mrb[0].mxu0 %v811
    %v813 = vpop.f32.mrb[0].mxu0
    %v814 = vadd.f32 %v497, %v813
    %v815 = vpop.f32.mrb[0].mxu0
    %816 = vmatprep.mubr.f32.mxu0 0.0
    %v817 = vand.u32 %v182, 4294901760
    %818 = vmatmul.mubr.f32.gmra.mrb[0].mxu0 %v817
    %v819 = vpop.f32.mrb[0].mxu0
    %v820 = vadd.f32 %v507, %v819
    %v821 = vpop.f32.mrb[0].mxu0
    %822 = vmatprep.mubr.f32.mxu0 0.0
    %v823 = vand.u32 %v185, 4294901760
    %824 = vmatmul.mubr.f32.gmra.mrb[0].mxu0 %v823
    %v825 = vpop.f32.mrb[0].mxu0
    %v826 = vadd.f32 %v517, %v825
    %v827 = vpop.f32.mrb[0].mxu0
    %828 = vmatprep.mubr.f32.mxu0 0.0
    %v829 = vand.u32 %v188, 4294901760
    %830 = vmatmul.mubr.f32.gmra.mrb[0].mxu0 %v829
    %v831 = vpop.f32.mrb[0].mxu0
    %v832 = vadd.f32 %v527, %v831
    %v833 = vpop.f32.mrb[0].mxu0
    %834 = vmatprep.mubr.f32.mxu0 0.0
    %v835 = vand.u32 %v191, 4294901760
    %836 = vmatmul.mubr.f32.gmra.mrb[0].mxu0 %v835
    %v837 = vpop.f32.mrb[0].mxu0
    %v838 = vadd.f32 %v537, %v837
    %v839 = vpop.f32.mrb[0].mxu0
    %840 = vmatprep.mubr.f32.mxu0 0.0
    %v841 = vand.u32 %v194, 4294901760
    %842 = vmatmul.mubr.f32.gmra.mrb[0].mxu0 %v841
    %v843 = vpop.f32.mrb[0].mxu0
    %v844 = vadd.f32 %v547, %v843
    %v845 = vpop.f32.mrb[0].mxu0
    %846 = vmatprep.mubr.f32.mxu0 0.0
    %v847 = vand.u32 %v197, 4294901760
    %848 = vmatmul.mubr.f32.gmra.mrb[0].mxu0 %v847
    %v849 = vpop.f32.mrb[0].mxu0
    %v850 = vadd.f32 %v557, %v849
    %v851 = vpop.f32.mrb[0].mxu0
    %852 = vmatprep.mubr.f32.mxu0 0.0
    %v853 = vand.u32 %v200, 4294901760
    %854 = vmatmul.mubr.f32.gmra.mrb[0].mxu0 %v853
    %v855 = vpop.f32.mrb[0].mxu0
    %v856 = vadd.f32 %v567, %v855
    %v857 = vpop.f32.mrb[0].mxu0
    %858 = vmatprep.mubr.f32.mxu0 0.0
    %v859 = vand.u32 %v203, 4294901760
    %860 = vmatmul.mubr.f32.gmra.mrb[0].mxu0 %v859
    %v861 = vpop.f32.mrb[0].mxu0
    %v862 = vadd.f32 %v577, %v861
    %v863 = vpop.f32.mrb[0].mxu0
    %864 = vmatprep.mubr.f32.mxu0 0.0
    %v865 = vand.u32 %v206, 4294901760
    %866 = vmatmul.mubr.f32.gmra.mrb[0].mxu0 %v865
    %v867 = vpop.f32.mrb[0].mxu0
    %v868 = vadd.f32 %v587, %v867
    %v869 = vpop.f32.mrb[0].mxu0
    %870 = vmatprep.mubr.f32.mxu0 0.0
    %v871 = vand.u32 %v209, 4294901760
    %872 = vmatmul.mubr.f32.gmra.mrb[0].mxu0 %v871
    %v873 = vpop.f32.mrb[0].mxu0
    %v874 = vadd.f32 %v597, %v873
    %v875 = vpop.f32.mrb[0].mxu0
    %876 = vdwg.mxu0
    %877 = vmatprep.subr.mxu0 0.0
    %v878 = vand.u32 %v110, 4294901760
    %v879 = vsub.f32 %v110, %v878
    %880 = vmatpush1.msra.mxu0 %v879
    %881 = vmatprep.subr.mxu0 0.0
    %v882 = vand.u32 %v111, 4294901760
    %v883 = vsub.f32 %v111, %v882
    %884 = vmatpush1.msra.mxu0 %v883
    %885 = vmatprep.subr.mxu0 0.0
    %v886 = vand.u32 %v112, 4294901760
    %v887 = vsub.f32 %v112, %v886
    %888 = vmatpush1.msra.mxu0 %v887
    %889 = vmatprep.subr.mxu0 0.0
    %v890 = vand.u32 %v113, 4294901760
    %v891 = vsub.f32 %v113, %v890
    %892 = vmatpush1.msra.mxu0 %v891
    %893 = vmatprep.subr.mxu0 0.0
    %894 = vmatpush1.msra.mxu0 0.0
    %895 = vmatprep.subr.mxu0 0.0
    %896 = vmatpush1.msra.mxu0 0.0
    %897 = vmatprep.subr.mxu0 0.0
    %898 = vmatpush1.msra.mxu0 0.0
    %899 = vmatprep.subr.mxu0 0.0
    %900 = vmatpush1.msra.mxu0 0.0
    %901 = vmatprep.subr.mxu0 0.0
    %902 = vmatpush1.msra.mxu0 0.0
    %903 = vmatprep.subr.mxu0 0.0
    %904 = vmatpush1.msra.mxu0 0.0
    %905 = vmatprep.subr.mxu0 0.0
    %906 = vmatpush1.msra.mxu0 0.0
    %907 = vmatprep.subr.mxu0 0.0
    %908 = vmatpush1.msra.mxu0 0.0
    %909 = vmatprep.subr.mxu0 0.0
    %910 = vmatpush1.msra.mxu0 0.0
    %911 = vmatprep.subr.mxu0 0.0
    %912 = vmatpush1.msra.mxu0 0.0
    %913 = vmatprep.subr.mxu0 0.0
    %914 = vmatpush1.msra.mxu0 0.0
    %915 = vmatprep.subr.mxu0 0.0
    %916 = vmatpush1.msra.mxu0 0.0
    %917 = vmatprep.subr.mxu0 0.0
    %918 = vmatpush1.msra.mxu0 0.0
    %919 = vmatprep.subr.mxu0 0.0
    %920 = vmatpush1.msra.mxu0 0.0
    %921 = vmatprep.subr.mxu0 0.0
    %922 = vmatpush1.msra.mxu0 0.0
    %923 = vmatprep.subr.mxu0 0.0
    %924 = vmatpush1.msra.mxu0 0.0
    %925 = vmatprep.subr.mxu0 0.0
    %926 = vmatpush1.msra.mxu0 0.0
    %927 = vmatprep.subr.mxu0 0.0
    %928 = vmatpush1.msra.mxu0 0.0
    %929 = vmatprep.subr.mxu0 0.0
    %930 = vmatpush1.msra.mxu0 0.0
    %931 = vmatprep.subr.mxu0 0.0
    %932 = vmatpush1.msra.mxu0 0.0
    %933 = vmatprep.subr.mxu0 0.0
    %934 = vmatpush1.msra.mxu0 0.0
    %935 = vmatprep.subr.mxu0 0.0
    %936 = vmatpush1.msra.mxu0 0.0
    %937 = vmatprep.subr.mxu0 0.0
    %938 = vmatpush1.msra.mxu0 0.0
    %939 = vmatprep.subr.mxu0 0.0
    %940 = vmatpush1.msra.mxu0 0.0
    %941 = vmatprep.subr.mxu0 0.0
    %942 = vmatpush1.msra.mxu0 0.0
    %943 = vmatprep.subr.mxu0 0.0
    %944 = vmatpush1.msra.mxu0 0.0
    %945 = vmatprep.subr.mxu0 0.0
    %946 = vmatpush1.msra.mxu0 0.0
    %947 = vmatprep.subr.mxu0 0.0
    %948 = vmatpush1.msra.mxu0 0.0
    %949 = vmatprep.mubr.f32.mxu0 0.0
    %v950 = vand.u32 %v116, 4294901760
    %v951 = vsub.f32 %v116, %v950
    %952 = vmatmul.mubr.f32.gmra.mrb[0].mxu0 %v951
    %v953 = vpop.f32.mrb[0].mxu0
    %v954 = vadd.f32 %v688, %v953
    %v955 = vpop.f32.mrb[0].mxu0
    %956 = vmatprep.mubr.f32.mxu0 0.0
    %v957 = vand.u32 %v119, 4294901760
    %v958 = vsub.f32 %v119, %v957
    %959 = vmatmul.mubr.f32.gmra.mrb[0].mxu0 %v958
    %v960 = vpop.f32.mrb[0].mxu0
    %v961 = vadd.f32 %v694, %v960
    %v962 = vpop.f32.mrb[0].mxu0
    %963 = vmatprep.mubr.f32.mxu0 0.0
    %v964 = vand.u32 %v122, 4294901760
    %v965 = vsub.f32 %v122, %v964
    %966 = vmatmul.mubr.f32.gmra.mrb[0].mxu0 %v965
    %v967 = vpop.f32.mrb[0].mxu0
    %v968 = vadd.f32 %v700, %v967
    %v969 = vpop.f32.mrb[0].mxu0
    %970 = vmatprep.mubr.f32.mxu0 0.0
    %v971 = vand.u32 %v125, 4294901760
    %v972 = vsub.f32 %v125, %v971
    %973 = vmatmul.mubr.f32.gmra.mrb[0].mxu0 %v972
    %v974 = vpop.f32.mrb[0].mxu0
    %v975 = vadd.f32 %v706, %v974
    %v976 = vpop.f32.mrb[0].mxu0
    %977 = vmatprep.mubr.f32.mxu0 0.0
    %v978 = vand.u32 %v128, 4294901760
    %v979 = vsub.f32 %v128, %v978
    %980 = vmatmul.mubr.f32.gmra.mrb[0].mxu0 %v979
    %v981 = vpop.f32.mrb[0].mxu0
    %v982 = vadd.f32 %v712, %v981
    %v983 = vpop.f32.mrb[0].mxu0
    %984 = vmatprep.mubr.f32.mxu0 0.0
    %v985 = vand.u32 %v131, 4294901760
    %v986 = vsub.f32 %v131, %v985
    %987 = vmatmul.mubr.f32.gmra.mrb[0].mxu0 %v986
    %v988 = vpop.f32.mrb[0].mxu0
    %v989 = vadd.f32 %v718, %v988
    %v990 = vpop.f32.mrb[0].mxu0
    %991 = vmatprep.mubr.f32.mxu0 0.0
    %v992 = vand.u32 %v134, 4294901760
    %v993 = vsub.f32 %v134, %v992
    %994 = vmatmul.mubr.f32.gmra.mrb[0].mxu0 %v993
    %v995 = vpop.f32.mrb[0].mxu0
    %v996 = vadd.f32 %v724, %v995
    %v997 = vpop.f32.mrb[0].mxu0
    %998 = vmatprep.mubr.f32.mxu0 0.0
    %v999 = vand.u32 %v137, 4294901760
    %v1000 = vsub.f32 %v137, %v999
    %1001 = vmatmul.mubr.f32.gmra.mrb[0].mxu0 %v1000
    %v1002 = vpop.f32.mrb[0].mxu0
    %v1003 = vadd.f32 %v730, %v1002
    %v1004 = vpop.f32.mrb[0].mxu0
    %1005 = vmatprep.mubr.f32.mxu0 0.0
    %v1006 = vand.u32 %v140, 4294901760
    %v1007 = vsub.f32 %v140, %v1006
    %1008 = vmatmul.mubr.f32.gmra.mrb[0].mxu0 %v1007
    %v1009 = vpop.f32.mrb[0].mxu0
    %v1010 = vadd.f32 %v736, %v1009
    %v1011 = vpop.f32.mrb[0].mxu0
    %1012 = vmatprep.mubr.f32.mxu0 0.0
    %v1013 = vand.u32 %v143, 4294901760
    %v1014 = vsub.f32 %v143, %v1013
    %1015 = vmatmul.mubr.f32.gmra.mrb[0].mxu0 %v1014
    %v1016 = vpop.f32.mrb[0].mxu0
    %v1017 = vadd.f32 %v742, %v1016
    %v1018 = vpop.f32.mrb[0].mxu0
    %1019 = vmatprep.mubr.f32.mxu0 0.0
    %v1020 = vand.u32 %v146, 4294901760
    %v1021 = vsub.f32 %v146, %v1020
    %1022 = vmatmul.mubr.f32.gmra.mrb[0].mxu0 %v1021
    %v1023 = vpop.f32.mrb[0].mxu0
    %v1024 = vadd.f32 %v748, %v1023
    %v1025 = vpop.f32.mrb[0].mxu0
    %1026 = vmatprep.mubr.f32.mxu0 0.0
    %v1027 = vand.u32 %v149, 4294901760
    %v1028 = vsub.f32 %v149, %v1027
    %1029 = vmatmul.mubr.f32.gmra.mrb[0].mxu0 %v1028
    %v1030 = vpop.f32.mrb[0].mxu0
    %v1031 = vadd.f32 %v754, %v1030
    %v1032 = vpop.f32.mrb[0].mxu0
    %1033 = vmatprep.mubr.f32.mxu0 0.0
    %v1034 = vand.u32 %v152, 4294901760
    %v1035 = vsub.f32 %v152, %v1034
    %1036 = vmatmul.mubr.f32.gmra.mrb[0].mxu0 %v1035
    %v1037 = vpop.f32.mrb[0].mxu0
    %v1038 = vadd.f32 %v760, %v1037
    %v1039 = vpop.f32.mrb[0].mxu0
    %1040 = vmatprep.mubr.f32.mxu0 0.0
    %v1041 = vand.u32 %v155, 4294901760
    %v1042 = vsub.f32 %v155, %v1041
    %1043 = vmatmul.mubr.f32.gmra.mrb[0].mxu0 %v1042
    %v1044 = vpop.f32.mrb[0].mxu0
    %v1045 = vadd.f32 %v766, %v1044
    %v1046 = vpop.f32.mrb[0].mxu0
    %1047 = vmatprep.mubr.f32.mxu0 0.0
    %v1048 = vand.u32 %v158, 4294901760
    %v1049 = vsub.f32 %v158, %v1048
    %1050 = vmatmul.mubr.f32.gmra.mrb[0].mxu0 %v1049
    %v1051 = vpop.f32.mrb[0].mxu0
    %v1052 = vadd.f32 %v772, %v1051
    %v1053 = vpop.f32.mrb[0].mxu0
    %1054 = vmatprep.mubr.f32.mxu0 0.0
    %v1055 = vand.u32 %v161, 4294901760
    %v1056 = vsub.f32 %v161, %v1055
    %1057 = vmatmul.mubr.f32.gmra.mrb[0].mxu0 %v1056
    %v1058 = vpop.f32.mrb[0].mxu0
    %v1059 = vadd.f32 %v778, %v1058
    %v1060 = vpop.f32.mrb[0].mxu0
    %1061 = vmatprep.mubr.f32.mxu0 0.0
    %v1062 = vand.u32 %v164, 4294901760
    %v1063 = vsub.f32 %v164, %v1062
    %1064 = vmatmul.mubr.f32.gmra.mrb[0].mxu0 %v1063
    %v1065 = vpop.f32.mrb[0].mxu0
    %v1066 = vadd.f32 %v784, %v1065
    %v1067 = vpop.f32.mrb[0].mxu0
    %1068 = vmatprep.mubr.f32.mxu0 0.0
    %v1069 = vand.u32 %v167, 4294901760
    %v1070 = vsub.f32 %v167, %v1069
    %1071 = vmatmul.mubr.f32.gmra.mrb[0].mxu0 %v1070
    %v1072 = vpop.f32.mrb[0].mxu0
    %v1073 = vadd.f32 %v790, %v1072
    %v1074 = vpop.f32.mrb[0].mxu0
    %1075 = vmatprep.mubr.f32.mxu0 0.0
    %v1076 = vand.u32 %v170, 4294901760
    %v1077 = vsub.f32 %v170, %v1076
    %1078 = vmatmul.mubr.f32.gmra.mrb[0].mxu0 %v1077
    %v1079 = vpop.f32.mrb[0].mxu0
    %v1080 = vadd.f32 %v796, %v1079
    %v1081 = vpop.f32.mrb[0].mxu0
    %1082 = vmatprep.mubr.f32.mxu0 0.0
    %v1083 = vand.u32 %v173, 4294901760
    %v1084 = vsub.f32 %v173, %v1083
    %1085 = vmatmul.mubr.f32.gmra.mrb[0].mxu0 %v1084
    %v1086 = vpop.f32.mrb[0].mxu0
    %v1087 = vadd.f32 %v802, %v1086
    %v1088 = vpop.f32.mrb[0].mxu0
    %1089 = vmatprep.mubr.f32.mxu0 0.0
    %v1090 = vand.u32 %v176, 4294901760
    %v1091 = vsub.f32 %v176, %v1090
    %1092 = vmatmul.mubr.f32.gmra.mrb[0].mxu0 %v1091
    %v1093 = vpop.f32.mrb[0].mxu0
    %v1094 = vadd.f32 %v808, %v1093
    %v1095 = vpop.f32.mrb[0].mxu0
    %1096 = vmatprep.mubr.f32.mxu0 0.0
    %v1097 = vand.u32 %v179, 4294901760
    %v1098 = vsub.f32 %v179, %v1097
    %1099 = vmatmul.mubr.f32.gmra.mrb[0].mxu0 %v1098
    %v1100 = vpop.f32.mrb[0].mxu0
    %v1101 = vadd.f32 %v814, %v1100
    %v1102 = vpop.f32.mrb[0].mxu0
    %1103 = vmatprep.mubr.f32.mxu0 0.0
    %v1104 = vand.u32 %v182, 4294901760
    %v1105 = vsub.f32 %v182, %v1104
    %1106 = vmatmul.mubr.f32.gmra.mrb[0].mxu0 %v1105
    %v1107 = vpop.f32.mrb[0].mxu0
    %v1108 = vadd.f32 %v820, %v1107
    %v1109 = vpop.f32.mrb[0].mxu0
    %1110 = vmatprep.mubr.f32.mxu0 0.0
    %v1111 = vand.u32 %v185, 4294901760
    %v1112 = vsub.f32 %v185, %v1111
    %1113 = vmatmul.mubr.f32.gmra.mrb[0].mxu0 %v1112
    %v1114 = vpop.f32.mrb[0].mxu0
    %v1115 = vadd.f32 %v826, %v1114
    %v1116 = vpop.f32.mrb[0].mxu0
    %1117 = vmatprep.mubr.f32.mxu0 0.0
    %v1118 = vand.u32 %v188, 4294901760
    %v1119 = vsub.f32 %v188, %v1118
    %1120 = vmatmul.mubr.f32.gmra.mrb[0].mxu0 %v1119
    %v1121 = vpop.f32.mrb[0].mxu0
    %v1122 = vadd.f32 %v832, %v1121
    %v1123 = vpop.f32.mrb[0].mxu0
    %1124 = vmatprep.mubr.f32.mxu0 0.0
    %v1125 = vand.u32 %v191, 4294901760
    %v1126 = vsub.f32 %v191, %v1125
    %1127 = vmatmul.mubr.f32.gmra.mrb[0].mxu0 %v1126
    %v1128 = vpop.f32.mrb[0].mxu0
    %v1129 = vadd.f32 %v838, %v1128
    %v1130 = vpop.f32.mrb[0].mxu0
    %1131 = vmatprep.mubr.f32.mxu0 0.0
    %v1132 = vand.u32 %v194, 4294901760
    %v1133 = vsub.f32 %v194, %v1132
    %1134 = vmatmul.mubr.f32.gmra.mrb[0].mxu0 %v1133
    %v1135 = vpop.f32.mrb[0].mxu0
    %v1136 = vadd.f32 %v844, %v1135
    %v1137 = vpop.f32.mrb[0].mxu0
    %1138 = vmatprep.mubr.f32.mxu0 0.0
    %v1139 = vand.u32 %v197, 4294901760
    %v1140 = vsub.f32 %v197, %v1139
    %1141 = vmatmul.mubr.f32.gmra.mrb[0].mxu0 %v1140
    %v1142 = vpop.f32.mrb[0].mxu0
    %v1143 = vadd.f32 %v850, %v1142
    %v1144 = vpop.f32.mrb[0].mxu0
    %1145 = vmatprep.mubr.f32.mxu0 0.0
    %v1146 = vand.u32 %v200, 4294901760
    %v1147 = vsub.f32 %v200, %v1146
    %1148 = vmatmul.mubr.f32.gmra.mrb[0].mxu0 %v1147
    %v1149 = vpop.f32.mrb[0].mxu0
    %v1150 = vadd.f32 %v856, %v1149
    %v1151 = vpop.f32.mrb[0].mxu0
    %1152 = vmatprep.mubr.f32.mxu0 0.0
    %v1153 = vand.u32 %v203, 4294901760
    %v1154 = vsub.f32 %v203, %v1153
    %1155 = vmatmul.mubr.f32.gmra.mrb[0].mxu0 %v1154
    %v1156 = vpop.f32.mrb[0].mxu0
    %v1157 = vadd.f32 %v862, %v1156
    %v1158 = vpop.f32.mrb[0].mxu0
    %1159 = vmatprep.mubr.f32.mxu0 0.0
    %v1160 = vand.u32 %v206, 4294901760
    %v1161 = vsub.f32 %v206, %v1160
    %1162 = vmatmul.mubr.f32.gmra.mrb[0].mxu0 %v1161
    %v1163 = vpop.f32.mrb[0].mxu0
    %v1164 = vadd.f32 %v868, %v1163
    %v1165 = vpop.f32.mrb[0].mxu0
    %1166 = vmatprep.mubr.f32.mxu0 0.0
    %v1167 = vand.u32 %v209, 4294901760
    %v1168 = vsub.f32 %v209, %v1167
    %1169 = vmatmul.mubr.f32.gmra.mrb[0].mxu0 %v1168
    %v1170 = vpop.f32.mrb[0].mxu0
    %v1171 = vadd.f32 %v874, %v1170
    %v1172 = vpop.f32.mrb[0].mxu0
    %1173 = vdwg.mxu0
    %1174 = vmatprep.subr.mxu0 0.0
    %v1175 = vand.u32 %v110, 4294901760
    %1176 = vmatpush1.msra.mxu0 %v1175
    %1177 = vmatprep.subr.mxu0 0.0
    %v1178 = vand.u32 %v111, 4294901760
    %1179 = vmatpush1.msra.mxu0 %v1178
    %1180 = vmatprep.subr.mxu0 0.0
    %v1181 = vand.u32 %v112, 4294901760
    %1182 = vmatpush1.msra.mxu0 %v1181
    %1183 = vmatprep.subr.mxu0 0.0
    %v1184 = vand.u32 %v113, 4294901760
    %1185 = vmatpush1.msra.mxu0 %v1184
    %1186 = vmatprep.subr.mxu0 0.0
    %1187 = vmatpush1.msra.mxu0 0.0
    %1188 = vmatprep.subr.mxu0 0.0
    %1189 = vmatpush1.msra.mxu0 0.0
    %1190 = vmatprep.subr.mxu0 0.0
    %1191 = vmatpush1.msra.mxu0 0.0
    %1192 = vmatprep.subr.mxu0 0.0
    %1193 = vmatpush1.msra.mxu0 0.0
    %1194 = vmatprep.subr.mxu0 0.0
    %1195 = vmatpush1.msra.mxu0 0.0
    %1196 = vmatprep.subr.mxu0 0.0
    %1197 = vmatpush1.msra.mxu0 0.0
    %1198 = vmatprep.subr.mxu0 0.0
    %1199 = vmatpush1.msra.mxu0 0.0
    %1200 = vmatprep.subr.mxu0 0.0
    %1201 = vmatpush1.msra.mxu0 0.0
    %1202 = vmatprep.subr.mxu0 0.0
    %1203 = vmatpush1.msra.mxu0 0.0
    %1204 = vmatprep.subr.mxu0 0.0
    %1205 = vmatpush1.msra.mxu0 0.0
    %1206 = vmatprep.subr.mxu0 0.0
    %1207 = vmatpush1.msra.mxu0 0.0
    %1208 = vmatprep.subr.mxu0 0.0
    %1209 = vmatpush1.msra.mxu0 0.0
    %1210 = vmatprep.subr.mxu0 0.0
    %1211 = vmatpush1.msra.mxu0 0.0
    %1212 = vmatprep.subr.mxu0 0.0
    %1213 = vmatpush1.msra.mxu0 0.0
    %1214 = vmatprep.subr.mxu0 0.0
    %1215 = vmatpush1.msra.mxu0 0.0
    %1216 = vmatprep.subr.mxu0 0.0
    %1217 = vmatpush1.msra.mxu0 0.0
    %1218 = vmatprep.subr.mxu0 0.0
    %1219 = vmatpush1.msra.mxu0 0.0
    %1220 = vmatprep.subr.mxu0 0.0
    %1221 = vmatpush1.msra.mxu0 0.0
    %1222 = vmatprep.subr.mxu0 0.0
    %1223 = vmatpush1.msra.mxu0 0.0
    %1224 = vmatprep.subr.mxu0 0.0
    %1225 = vmatpush1.msra.mxu0 0.0
    %1226 = vmatprep.subr.mxu0 0.0
    %1227 = vmatpush1.msra.mxu0 0.0
    %1228 = vmatprep.subr.mxu0 0.0
    %1229 = vmatpush1.msra.mxu0 0.0
    %1230 = vmatprep.subr.mxu0 0.0
    %1231 = vmatpush1.msra.mxu0 0.0
    %1232 = vmatprep.subr.mxu0 0.0
    %1233 = vmatpush1.msra.mxu0 0.0
    %1234 = vmatprep.subr.mxu0 0.0
    %1235 = vmatpush1.msra.mxu0 0.0
    %1236 = vmatprep.subr.mxu0 0.0
    %1237 = vmatpush1.msra.mxu0 0.0
    %1238 = vmatprep.subr.mxu0 0.0
    %1239 = vmatpush1.msra.mxu0 0.0
    %1240 = vmatprep.subr.mxu0 0.0
    %1241 = vmatpush1.msra.mxu0 0.0
    %1242 = vmatprep.mubr.f32.mxu0 0.0
    %v1243 = vand.u32 %v116, 4294901760
    %v1244 = vsub.f32 %v116, %v1243
    %v1245 = vand.u32 %v1244, 4294901760
    %1246 = vmatmul.mubr.f32.gmra.mrb[0].mxu0 %v1245
    %v1247 = vpop.f32.mrb[0].mxu0
    %v1248 = vadd.f32 %v954, %v1247
    %v1249 = vpop.f32.mrb[0].mxu0
    %1250 = vmatprep.mubr.f32.mxu0 0.0
    %v1251 = vand.u32 %v119, 4294901760
    %v1252 = vsub.f32 %v119, %v1251
    %v1253 = vand.u32 %v1252, 4294901760
    %1254 = vmatmul.mubr.f32.gmra.mrb[0].mxu0 %v1253
    %v1255 = vpop.f32.mrb[0].mxu0
    %v1256 = vadd.f32 %v961, %v1255
    %v1257 = vpop.f32.mrb[0].mxu0
    %1258 = vmatprep.mubr.f32.mxu0 0.0
    %v1259 = vand.u32 %v122, 4294901760
    %v1260 = vsub.f32 %v122, %v1259
    %v1261 = vand.u32 %v1260, 4294901760
    %1262 = vmatmul.mubr.f32.gmra.mrb[0].mxu0 %v1261
    %v1263 = vpop.f32.mrb[0].mxu0
    %v1264 = vadd.f32 %v968, %v1263
    %v1265 = vpop.f32.mrb[0].mxu0
    %1266 = vmatprep.mubr.f32.mxu0 0.0
    %v1267 = vand.u32 %v125, 4294901760
    %v1268 = vsub.f32 %v125, %v1267
    %v1269 = vand.u32 %v1268, 4294901760
    %1270 = vmatmul.mubr.f32.gmra.mrb[0].mxu0 %v1269
    %v1271 = vpop.f32.mrb[0].mxu0
    %v1272 = vadd.f32 %v975, %v1271
    %v1273 = vpop.f32.mrb[0].mxu0
    %1274 = vmatprep.mubr.f32.mxu0 0.0
    %v1275 = vand.u32 %v128, 4294901760
    %v1276 = vsub.f32 %v128, %v1275
    %v1277 = vand.u32 %v1276, 4294901760
    %1278 = vmatmul.mubr.f32.gmra.mrb[0].mxu0 %v1277
    %v1279 = vpop.f32.mrb[0].mxu0
    %v1280 = vadd.f32 %v982, %v1279
    %v1281 = vpop.f32.mrb[0].mxu0
    %1282 = vmatprep.mubr.f32.mxu0 0.0
    %v1283 = vand.u32 %v131, 4294901760
    %v1284 = vsub.f32 %v131, %v1283
    %v1285 = vand.u32 %v1284, 4294901760
    %1286 = vmatmul.mubr.f32.gmra.mrb[0].mxu0 %v1285
    %v1287 = vpop.f32.mrb[0].mxu0
    %v1288 = vadd.f32 %v989, %v1287
    %v1289 = vpop.f32.mrb[0].mxu0
    %1290 = vmatprep.mubr.f32.mxu0 0.0
    %v1291 = vand.u32 %v134, 4294901760
    %v1292 = vsub.f32 %v134, %v1291
    %v1293 = vand.u32 %v1292, 4294901760
    %1294 = vmatmul.mubr.f32.gmra.mrb[0].mxu0 %v1293
    %v1295 = vpop.f32.mrb[0].mxu0
    %v1296 = vadd.f32 %v996, %v1295
    %v1297 = vpop.f32.mrb[0].mxu0
    %1298 = vmatprep.mubr.f32.mxu0 0.0
    %v1299 = vand.u32 %v137, 4294901760
    %v1300 = vsub.f32 %v137, %v1299
    %v1301 = vand.u32 %v1300, 4294901760
    %1302 = vmatmul.mubr.f32.gmra.mrb[0].mxu0 %v1301
    %v1303 = vpop.f32.mrb[0].mxu0
    %v1304 = vadd.f32 %v1003, %v1303
    %v1305 = vpop.f32.mrb[0].mxu0
    %1306 = vmatprep.mubr.f32.mxu0 0.0
    %v1307 = vand.u32 %v140, 4294901760
    %v1308 = vsub.f32 %v140, %v1307
    %v1309 = vand.u32 %v1308, 4294901760
    %1310 = vmatmul.mubr.f32.gmra.mrb[0].mxu0 %v1309
    %v1311 = vpop.f32.mrb[0].mxu0
    %v1312 = vadd.f32 %v1010, %v1311
    %v1313 = vpop.f32.mrb[0].mxu0
    %1314 = vmatprep.mubr.f32.mxu0 0.0
    %v1315 = vand.u32 %v143, 4294901760
    %v1316 = vsub.f32 %v143, %v1315
    %v1317 = vand.u32 %v1316, 4294901760
    %1318 = vmatmul.mubr.f32.gmra.mrb[0].mxu0 %v1317
    %v1319 = vpop.f32.mrb[0].mxu0
    %v1320 = vadd.f32 %v1017, %v1319
    %v1321 = vpop.f32.mrb[0].mxu0
    %1322 = vmatprep.mubr.f32.mxu0 0.0
    %v1323 = vand.u32 %v146, 4294901760
    %v1324 = vsub.f32 %v146, %v1323
    %v1325 = vand.u32 %v1324, 4294901760
    %1326 = vmatmul.mubr.f32.gmra.mrb[0].mxu0 %v1325
    %v1327 = vpop.f32.mrb[0].mxu0
    %v1328 = vadd.f32 %v1024, %v1327
    %v1329 = vpop.f32.mrb[0].mxu0
    %1330 = vmatprep.mubr.f32.mxu0 0.0
    %v1331 = vand.u32 %v149, 4294901760
    %v1332 = vsub.f32 %v149, %v1331
    %v1333 = vand.u32 %v1332, 4294901760
    %1334 = vmatmul.mubr.f32.gmra.mrb[0].mxu0 %v1333
    %v1335 = vpop.f32.mrb[0].mxu0
    %v1336 = vadd.f32 %v1031, %v1335
    %v1337 = vpop.f32.mrb[0].mxu0
    %1338 = vmatprep.mubr.f32.mxu0 0.0
    %v1339 = vand.u32 %v152, 4294901760
    %v1340 = vsub.f32 %v152, %v1339
    %v1341 = vand.u32 %v1340, 4294901760
    %1342 = vmatmul.mubr.f32.gmra.mrb[0].mxu0 %v1341
    %v1343 = vpop.f32.mrb[0].mxu0
    %v1344 = vadd.f32 %v1038, %v1343
    %v1345 = vpop.f32.mrb[0].mxu0
    %1346 = vmatprep.mubr.f32.mxu0 0.0
    %v1347 = vand.u32 %v155, 4294901760
    %v1348 = vsub.f32 %v155, %v1347
    %v1349 = vand.u32 %v1348, 4294901760
    %1350 = vmatmul.mubr.f32.gmra.mrb[0].mxu0 %v1349
    %v1351 = vpop.f32.mrb[0].mxu0
    %v1352 = vadd.f32 %v1045, %v1351
    %v1353 = vpop.f32.mrb[0].mxu0
    %1354 = vmatprep.mubr.f32.mxu0 0.0
    %v1355 = vand.u32 %v158, 4294901760
    %v1356 = vsub.f32 %v158, %v1355
    %v1357 = vand.u32 %v1356, 4294901760
    %1358 = vmatmul.mubr.f32.gmra.mrb[0].mxu0 %v1357
    %v1359 = vpop.f32.mrb[0].mxu0
    %v1360 = vadd.f32 %v1052, %v1359
    %v1361 = vpop.f32.mrb[0].mxu0
    %1362 = vmatprep.mubr.f32.mxu0 0.0
    %v1363 = vand.u32 %v161, 4294901760
    %v1364 = vsub.f32 %v161, %v1363
    %v1365 = vand.u32 %v1364, 4294901760
    %1366 = vmatmul.mubr.f32.gmra.mrb[0].mxu0 %v1365
    %v1367 = vpop.f32.mrb[0].mxu0
    %v1368 = vadd.f32 %v1059, %v1367
    %v1369 = vpop.f32.mrb[0].mxu0
    %1370 = vmatprep.mubr.f32.mxu0 0.0
    %v1371 = vand.u32 %v164, 4294901760
    %v1372 = vsub.f32 %v164, %v1371
    %v1373 = vand.u32 %v1372, 4294901760
    %1374 = vmatmul.mubr.f32.gmra.mrb[0].mxu0 %v1373
    %v1375 = vpop.f32.mrb[0].mxu0
    %v1376 = vadd.f32 %v1066, %v1375
    %v1377 = vpop.f32.mrb[0].mxu0
    %1378 = vmatprep.mubr.f32.mxu0 0.0
    %v1379 = vand.u32 %v167, 4294901760
    %v1380 = vsub.f32 %v167, %v1379
    %v1381 = vand.u32 %v1380, 4294901760
    %1382 = vmatmul.mubr.f32.gmra.mrb[0].mxu0 %v1381
    %v1383 = vpop.f32.mrb[0].mxu0
    %v1384 = vadd.f32 %v1073, %v1383
    %v1385 = vpop.f32.mrb[0].mxu0
    %1386 = vmatprep.mubr.f32.mxu0 0.0
    %v1387 = vand.u32 %v170, 4294901760
    %v1388 = vsub.f32 %v170, %v1387
    %v1389 = vand.u32 %v1388, 4294901760
    %1390 = vmatmul.mubr.f32.gmra.mrb[0].mxu0 %v1389
    %v1391 = vpop.f32.mrb[0].mxu0
    %v1392 = vadd.f32 %v1080, %v1391
    %v1393 = vpop.f32.mrb[0].mxu0
    %1394 = vmatprep.mubr.f32.mxu0 0.0
    %v1395 = vand.u32 %v173, 4294901760
    %v1396 = vsub.f32 %v173, %v1395
    %v1397 = vand.u32 %v1396, 4294901760
    %1398 = vmatmul.mubr.f32.gmra.mrb[0].mxu0 %v1397
    %v1399 = vpop.f32.mrb[0].mxu0
    %v1400 = vadd.f32 %v1087, %v1399
    %v1401 = vpop.f32.mrb[0].mxu0
    %1402 = vmatprep.mubr.f32.mxu0 0.0
    %v1403 = vand.u32 %v176, 4294901760
    %v1404 = vsub.f32 %v176, %v1403
    %v1405 = vand.u32 %v1404, 4294901760
    %1406 = vmatmul.mubr.f32.gmra.mrb[0].mxu0 %v1405
    %v1407 = vpop.f32.mrb[0].mxu0
    %v1408 = vadd.f32 %v1094, %v1407
    %v1409 = vpop.f32.mrb[0].mxu0
    %1410 = vmatprep.mubr.f32.mxu0 0.0
    %v1411 = vand.u32 %v179, 4294901760
    %v1412 = vsub.f32 %v179, %v1411
    %v1413 = vand.u32 %v1412, 4294901760
    %1414 = vmatmul.mubr.f32.gmra.mrb[0].mxu0 %v1413
    %v1415 = vpop.f32.mrb[0].mxu0
    %v1416 = vadd.f32 %v1101, %v1415
    %v1417 = vpop.f32.mrb[0].mxu0
    %1418 = vmatprep.mubr.f32.mxu0 0.0
    %v1419 = vand.u32 %v182, 4294901760
    %v1420 = vsub.f32 %v182, %v1419
    %v1421 = vand.u32 %v1420, 4294901760
    %1422 = vmatmul.mubr.f32.gmra.mrb[0].mxu0 %v1421
    %v1423 = vpop.f32.mrb[0].mxu0
    %v1424 = vadd.f32 %v1108, %v1423
    %v1425 = vpop.f32.mrb[0].mxu0
    %1426 = vmatprep.mubr.f32.mxu0 0.0
    %v1427 = vand.u32 %v185, 4294901760
    %v1428 = vsub.f32 %v185, %v1427
    %v1429 = vand.u32 %v1428, 4294901760
    %1430 = vmatmul.mubr.f32.gmra.mrb[0].mxu0 %v1429
    %v1431 = vpop.f32.mrb[0].mxu0
    %v1432 = vadd.f32 %v1115, %v1431
    %v1433 = vpop.f32.mrb[0].mxu0
    %1434 = vmatprep.mubr.f32.mxu0 0.0
    %v1435 = vand.u32 %v188, 4294901760
    %v1436 = vsub.f32 %v188, %v1435
    %v1437 = vand.u32 %v1436, 4294901760
    %1438 = vmatmul.mubr.f32.gmra.mrb[0].mxu0 %v1437
    %v1439 = vpop.f32.mrb[0].mxu0
    %v1440 = vadd.f32 %v1122, %v1439
    %v1441 = vpop.f32.mrb[0].mxu0
    %1442 = vmatprep.mubr.f32.mxu0 0.0
    %v1443 = vand.u32 %v191, 4294901760
    %v1444 = vsub.f32 %v191, %v1443
    %v1445 = vand.u32 %v1444, 4294901760
    %1446 = vmatmul.mubr.f32.gmra.mrb[0].mxu0 %v1445
    %v1447 = vpop.f32.mrb[0].mxu0
    %v1448 = vadd.f32 %v1129, %v1447
    %v1449 = vpop.f32.mrb[0].mxu0
    %1450 = vmatprep.mubr.f32.mxu0 0.0
    %v1451 = vand.u32 %v194, 4294901760
    %v1452 = vsub.f32 %v194, %v1451
    %v1453 = vand.u32 %v1452, 4294901760
    %1454 = vmatmul.mubr.f32.gmra.mrb[0].mxu0 %v1453
    %v1455 = vpop.f32.mrb[0].mxu0
    %v1456 = vadd.f32 %v1136, %v1455
    %v1457 = vpop.f32.mrb[0].mxu0
    %1458 = vmatprep.mubr.f32.mxu0 0.0
    %v1459 = vand.u32 %v197, 4294901760
    %v1460 = vsub.f32 %v197, %v1459
    %v1461 = vand.u32 %v1460, 4294901760
    %1462 = vmatmul.mubr.f32.gmra.mrb[0].mxu0 %v1461
    %v1463 = vpop.f32.mrb[0].mxu0
    %v1464 = vadd.f32 %v1143, %v1463
    %v1465 = vpop.f32.mrb[0].mxu0
    %1466 = vmatprep.mubr.f32.mxu0 0.0
    %v1467 = vand.u32 %v200, 4294901760
    %v1468 = vsub.f32 %v200, %v1467
    %v1469 = vand.u32 %v1468, 4294901760
    %1470 = vmatmul.mubr.f32.gmra.mrb[0].mxu0 %v1469
    %v1471 = vpop.f32.mrb[0].mxu0
    %v1472 = vadd.f32 %v1150, %v1471
    %v1473 = vpop.f32.mrb[0].mxu0
    %1474 = vmatprep.mubr.f32.mxu0 0.0
    %v1475 = vand.u32 %v203, 4294901760
    %v1476 = vsub.f32 %v203, %v1475
    %v1477 = vand.u32 %v1476, 4294901760
    %1478 = vmatmul.mubr.f32.gmra.mrb[0].mxu0 %v1477
    %v1479 = vpop.f32.mrb[0].mxu0
    %v1480 = vadd.f32 %v1157, %v1479
    %v1481 = vpop.f32.mrb[0].mxu0
    %1482 = vmatprep.mubr.f32.mxu0 0.0
    %v1483 = vand.u32 %v206, 4294901760
    %v1484 = vsub.f32 %v206, %v1483
    %v1485 = vand.u32 %v1484, 4294901760
    %1486 = vmatmul.mubr.f32.gmra.mrb[0].mxu0 %v1485
    %v1487 = vpop.f32.mrb[0].mxu0
    %v1488 = vadd.f32 %v1164, %v1487
    %v1489 = vpop.f32.mrb[0].mxu0
    %1490 = vmatprep.mubr.f32.mxu0 0.0
    %v1491 = vand.u32 %v209, 4294901760
    %v1492 = vsub.f32 %v209, %v1491
    %v1493 = vand.u32 %v1492, 4294901760
    %1494 = vmatmul.mubr.f32.gmra.mrb[0].mxu0 %v1493
    %v1495 = vpop.f32.mrb[0].mxu0
    %v1496 = vadd.f32 %v1171, %v1495
    %v1497 = vpop.f32.mrb[0].mxu0
    %1498 = vdwg.mxu0
    %1499 = vmatprep.subr.mxu0 0.0
    %v1500 = vand.u32 %v110, 4294901760
    %v1501 = vsub.f32 %v110, %v1500
    %v1502 = vand.u32 %v1501, 4294901760
    %1503 = vmatpush1.msra.mxu0 %v1502
    %1504 = vmatprep.subr.mxu0 0.0
    %v1505 = vand.u32 %v111, 4294901760
    %v1506 = vsub.f32 %v111, %v1505
    %v1507 = vand.u32 %v1506, 4294901760
    %1508 = vmatpush1.msra.mxu0 %v1507
    %1509 = vmatprep.subr.mxu0 0.0
    %v1510 = vand.u32 %v112, 4294901760
    %v1511 = vsub.f32 %v112, %v1510
    %v1512 = vand.u32 %v1511, 4294901760
    %1513 = vmatpush1.msra.mxu0 %v1512
    %1514 = vmatprep.subr.mxu0 0.0
    %v1515 = vand.u32 %v113, 4294901760
    %v1516 = vsub.f32 %v113, %v1515
    %v1517 = vand.u32 %v1516, 4294901760
    %1518 = vmatpush1.msra.mxu0 %v1517
    %1519 = vmatprep.subr.mxu0 0.0
    %1520 = vmatpush1.msra.mxu0 0.0
    %1521 = vmatprep.subr.mxu0 0.0
    %1522 = vmatpush1.msra.mxu0 0.0
    %1523 = vmatprep.subr.mxu0 0.0
    %1524 = vmatpush1.msra.mxu0 0.0
    %1525 = vmatprep.subr.mxu0 0.0
    %1526 = vmatpush1.msra.mxu0 0.0
    %1527 = vmatprep.subr.mxu0 0.0
    %1528 = vmatpush1.msra.mxu0 0.0
    %1529 = vmatprep.subr.mxu0 0.0
    %1530 = vmatpush1.msra.mxu0 0.0
    %1531 = vmatprep.subr.mxu0 0.0
    %1532 = vmatpush1.msra.mxu0 0.0
    %1533 = vmatprep.subr.mxu0 0.0
    %1534 = vmatpush1.msra.mxu0 0.0
    %1535 = vmatprep.subr.mxu0 0.0
    %1536 = vmatpush1.msra.mxu0 0.0
    %1537 = vmatprep.subr.mxu0 0.0
    %1538 = vmatpush1.msra.mxu0 0.0
    %1539 = vmatprep.subr.mxu0 0.0
    %1540 = vmatpush1.msra.mxu0 0.0
    %1541 = vmatprep.subr.mxu0 0.0
    %1542 = vmatpush1.msra.mxu0 0.0
    %1543 = vmatprep.subr.mxu0 0.0
    %1544 = vmatpush1.msra.mxu0 0.0
    %1545 = vmatprep.subr.mxu0 0.0
    %1546 = vmatpush1.msra.mxu0 0.0
    %1547 = vmatprep.subr.mxu0 0.0
    %1548 = vmatpush1.msra.mxu0 0.0
    %1549 = vmatprep.subr.mxu0 0.0
    %1550 = vmatpush1.msra.mxu0 0.0
    %1551 = vmatprep.subr.mxu0 0.0
    %1552 = vmatpush1.msra.mxu0 0.0
    %1553 = vmatprep.subr.mxu0 0.0
    %1554 = vmatpush1.msra.mxu0 0.0
    %1555 = vmatprep.subr.mxu0 0.0
    %1556 = vmatpush1.msra.mxu0 0.0
    %1557 = vmatprep.subr.mxu0 0.0
    %1558 = vmatpush1.msra.mxu0 0.0
    %1559 = vmatprep.subr.mxu0 0.0
    %1560 = vmatpush1.msra.mxu0 0.0
    %1561 = vmatprep.subr.mxu0 0.0
    %1562 = vmatpush1.msra.mxu0 0.0
    %1563 = vmatprep.subr.mxu0 0.0
    %1564 = vmatpush1.msra.mxu0 0.0
    %1565 = vmatprep.subr.mxu0 0.0
    %1566 = vmatpush1.msra.mxu0 0.0
    %1567 = vmatprep.subr.mxu0 0.0
    %1568 = vmatpush1.msra.mxu0 0.0
    %1569 = vmatprep.subr.mxu0 0.0
    %1570 = vmatpush1.msra.mxu0 0.0
    %1571 = vmatprep.subr.mxu0 0.0
    %1572 = vmatpush1.msra.mxu0 0.0
    %1573 = vmatprep.subr.mxu0 0.0
    %1574 = vmatpush1.msra.mxu0 0.0
    %1575 = vmatprep.mubr.f32.mxu0 0.0
    %v1576 = vand.u32 %v116, 4294901760
    %1577 = vmatmul.mubr.f32.gmra.mrb[0].mxu0 %v1576
    %v1578 = vpop.f32.mrb[0].mxu0
    %v1579 = vadd.f32 %v1248, %v1578
    %v1580 = vpop.f32.mrb[0].mxu0
    %1581 = vmatprep.mubr.f32.mxu0 0.0
    %v1582 = vand.u32 %v119, 4294901760
    %1583 = vmatmul.mubr.f32.gmra.mrb[0].mxu0 %v1582
    %v1584 = vpop.f32.mrb[0].mxu0
    %v1585 = vadd.f32 %v1256, %v1584
    %v1586 = vpop.f32.mrb[0].mxu0
    %1587 = vmatprep.mubr.f32.mxu0 0.0
    %v1588 = vand.u32 %v122, 4294901760
    %1589 = vmatmul.mubr.f32.gmra.mrb[0].mxu0 %v1588
    %v1590 = vpop.f32.mrb[0].mxu0
    %v1591 = vadd.f32 %v1264, %v1590
    %v1592 = vpop.f32.mrb[0].mxu0
    %1593 = vmatprep.mubr.f32.mxu0 0.0
    %v1594 = vand.u32 %v125, 4294901760
    %1595 = vmatmul.mubr.f32.gmra.mrb[0].mxu0 %v1594
    %v1596 = vpop.f32.mrb[0].mxu0
    %v1597 = vadd.f32 %v1272, %v1596
    %v1598 = vpop.f32.mrb[0].mxu0
    %1599 = vmatprep.mubr.f32.mxu0 0.0
    %v1600 = vand.u32 %v128, 4294901760
    %1601 = vmatmul.mubr.f32.gmra.mrb[0].mxu0 %v1600
    %v1602 = vpop.f32.mrb[0].mxu0
    %v1603 = vadd.f32 %v1280, %v1602
    %v1604 = vpop.f32.mrb[0].mxu0
    %1605 = vmatprep.mubr.f32.mxu0 0.0
    %v1606 = vand.u32 %v131, 4294901760
    %1607 = vmatmul.mubr.f32.gmra.mrb[0].mxu0 %v1606
    %v1608 = vpop.f32.mrb[0].mxu0
    %v1609 = vadd.f32 %v1288, %v1608
    %v1610 = vpop.f32.mrb[0].mxu0
    %1611 = vmatprep.mubr.f32.mxu0 0.0
    %v1612 = vand.u32 %v134, 4294901760
    %1613 = vmatmul.mubr.f32.gmra.mrb[0].mxu0 %v1612
    %v1614 = vpop.f32.mrb[0].mxu0
    %v1615 = vadd.f32 %v1296, %v1614
    %v1616 = vpop.f32.mrb[0].mxu0
    %1617 = vmatprep.mubr.f32.mxu0 0.0
    %v1618 = vand.u32 %v137, 4294901760
    %1619 = vmatmul.mubr.f32.gmra.mrb[0].mxu0 %v1618
    %v1620 = vpop.f32.mrb[0].mxu0
    %v1621 = vadd.f32 %v1304, %v1620
    %v1622 = vpop.f32.mrb[0].mxu0
    %1623 = vmatprep.mubr.f32.mxu0 0.0
    %v1624 = vand.u32 %v140, 4294901760
    %1625 = vmatmul.mubr.f32.gmra.mrb[0].mxu0 %v1624
    %v1626 = vpop.f32.mrb[0].mxu0
    %v1627 = vadd.f32 %v1312, %v1626
    %v1628 = vpop.f32.mrb[0].mxu0
    %1629 = vmatprep.mubr.f32.mxu0 0.0
    %v1630 = vand.u32 %v143, 4294901760
    %1631 = vmatmul.mubr.f32.gmra.mrb[0].mxu0 %v1630
    %v1632 = vpop.f32.mrb[0].mxu0
    %v1633 = vadd.f32 %v1320, %v1632
    %v1634 = vpop.f32.mrb[0].mxu0
    %1635 = vmatprep.mubr.f32.mxu0 0.0
    %v1636 = vand.u32 %v146, 4294901760
    %1637 = vmatmul.mubr.f32.gmra.mrb[0].mxu0 %v1636
    %v1638 = vpop.f32.mrb[0].mxu0
    %v1639 = vadd.f32 %v1328, %v1638
    %v1640 = vpop.f32.mrb[0].mxu0
    %1641 = vmatprep.mubr.f32.mxu0 0.0
    %v1642 = vand.u32 %v149, 4294901760
    %1643 = vmatmul.mubr.f32.gmra.mrb[0].mxu0 %v1642
    %v1644 = vpop.f32.mrb[0].mxu0
    %v1645 = vadd.f32 %v1336, %v1644
    %v1646 = vpop.f32.mrb[0].mxu0
    %1647 = vmatprep.mubr.f32.mxu0 0.0
    %v1648 = vand.u32 %v152, 4294901760
    %1649 = vmatmul.mubr.f32.gmra.mrb[0].mxu0 %v1648
    %v1650 = vpop.f32.mrb[0].mxu0
    %v1651 = vadd.f32 %v1344, %v1650
    %v1652 = vpop.f32.mrb[0].mxu0
    %1653 = vmatprep.mubr.f32.mxu0 0.0
    %v1654 = vand.u32 %v155, 4294901760
    %1655 = vmatmul.mubr.f32.gmra.mrb[0].mxu0 %v1654
    %v1656 = vpop.f32.mrb[0].mxu0
    %v1657 = vadd.f32 %v1352, %v1656
    %v1658 = vpop.f32.mrb[0].mxu0
    %1659 = vmatprep.mubr.f32.mxu0 0.0
    %v1660 = vand.u32 %v158, 4294901760
    %1661 = vmatmul.mubr.f32.gmra.mrb[0].mxu0 %v1660
    %v1662 = vpop.f32.mrb[0].mxu0
    %v1663 = vadd.f32 %v1360, %v1662
    %v1664 = vpop.f32.mrb[0].mxu0
    %1665 = vmatprep.mubr.f32.mxu0 0.0
    %v1666 = vand.u32 %v161, 4294901760
    %1667 = vmatmul.mubr.f32.gmra.mrb[0].mxu0 %v1666
    %v1668 = vpop.f32.mrb[0].mxu0
    %v1669 = vadd.f32 %v1368, %v1668
    %v1670 = vpop.f32.mrb[0].mxu0
    %1671 = vmatprep.mubr.f32.mxu0 0.0
    %v1672 = vand.u32 %v164, 4294901760
    %1673 = vmatmul.mubr.f32.gmra.mrb[0].mxu0 %v1672
    %v1674 = vpop.f32.mrb[0].mxu0
    %v1675 = vadd.f32 %v1376, %v1674
    %v1676 = vpop.f32.mrb[0].mxu0
    %1677 = vmatprep.mubr.f32.mxu0 0.0
    %v1678 = vand.u32 %v167, 4294901760
    %1679 = vmatmul.mubr.f32.gmra.mrb[0].mxu0 %v1678
    %v1680 = vpop.f32.mrb[0].mxu0
    %v1681 = vadd.f32 %v1384, %v1680
    %v1682 = vpop.f32.mrb[0].mxu0
    %1683 = vmatprep.mubr.f32.mxu0 0.0
    %v1684 = vand.u32 %v170, 4294901760
    %1685 = vmatmul.mubr.f32.gmra.mrb[0].mxu0 %v1684
    %v1686 = vpop.f32.mrb[0].mxu0
    %v1687 = vadd.f32 %v1392, %v1686
    %v1688 = vpop.f32.mrb[0].mxu0
    %1689 = vmatprep.mubr.f32.mxu0 0.0
    %v1690 = vand.u32 %v173, 4294901760
    %1691 = vmatmul.mubr.f32.gmra.mrb[0].mxu0 %v1690
    %v1692 = vpop.f32.mrb[0].mxu0
    %v1693 = vadd.f32 %v1400, %v1692
    %v1694 = vpop.f32.mrb[0].mxu0
    %1695 = vmatprep.mubr.f32.mxu0 0.0
    %v1696 = vand.u32 %v176, 4294901760
    %1697 = vmatmul.mubr.f32.gmra.mrb[0].mxu0 %v1696
    %v1698 = vpop.f32.mrb[0].mxu0
    %v1699 = vadd.f32 %v1408, %v1698
    %v1700 = vpop.f32.mrb[0].mxu0
    %1701 = vmatprep.mubr.f32.mxu0 0.0
    %v1702 = vand.u32 %v179, 4294901760
    %1703 = vmatmul.mubr.f32.gmra.mrb[0].mxu0 %v1702
    %v1704 = vpop.f32.mrb[0].mxu0
    %v1705 = vadd.f32 %v1416, %v1704
    %v1706 = vpop.f32.mrb[0].mxu0
    %1707 = vmatprep.mubr.f32.mxu0 0.0
    %v1708 = vand.u32 %v182, 4294901760
    %1709 = vmatmul.mubr.f32.gmra.mrb[0].mxu0 %v1708
    %v1710 = vpop.f32.mrb[0].mxu0
    %v1711 = vadd.f32 %v1424, %v1710
    %v1712 = vpop.f32.mrb[0].mxu0
    %1713 = vmatprep.mubr.f32.mxu0 0.0
    %v1714 = vand.u32 %v185, 4294901760
    %1715 = vmatmul.mubr.f32.gmra.mrb[0].mxu0 %v1714
    %v1716 = vpop.f32.mrb[0].mxu0
    %v1717 = vadd.f32 %v1432, %v1716
    %v1718 = vpop.f32.mrb[0].mxu0
    %1719 = vmatprep.mubr.f32.mxu0 0.0
    %v1720 = vand.u32 %v188, 4294901760
    %1721 = vmatmul.mubr.f32.gmra.mrb[0].mxu0 %v1720
    %v1722 = vpop.f32.mrb[0].mxu0
    %v1723 = vadd.f32 %v1440, %v1722
    %v1724 = vpop.f32.mrb[0].mxu0
    %1725 = vmatprep.mubr.f32.mxu0 0.0
    %v1726 = vand.u32 %v191, 4294901760
    %1727 = vmatmul.mubr.f32.gmra.mrb[0].mxu0 %v1726
    %v1728 = vpop.f32.mrb[0].mxu0
    %v1729 = vadd.f32 %v1448, %v1728
    %v1730 = vpop.f32.mrb[0].mxu0
    %1731 = vmatprep.mubr.f32.mxu0 0.0
    %v1732 = vand.u32 %v194, 4294901760
    %1733 = vmatmul.mubr.f32.gmra.mrb[0].mxu0 %v1732
    %v1734 = vpop.f32.mrb[0].mxu0
    %v1735 = vadd.f32 %v1456, %v1734
    %v1736 = vpop.f32.mrb[0].mxu0
    %1737 = vmatprep.mubr.f32.mxu0 0.0
    %v1738 = vand.u32 %v197, 4294901760
    %1739 = vmatmul.mubr.f32.gmra.mrb[0].mxu0 %v1738
    %v1740 = vpop.f32.mrb[0].mxu0
    %v1741 = vadd.f32 %v1464, %v1740
    %v1742 = vpop.f32.mrb[0].mxu0
    %1743 = vmatprep.mubr.f32.mxu0 0.0
    %v1744 = vand.u32 %v200, 4294901760
    %1745 = vmatmul.mubr.f32.gmra.mrb[0].mxu0 %v1744
    %v1746 = vpop.f32.mrb[0].mxu0
    %v1747 = vadd.f32 %v1472, %v1746
    %v1748 = vpop.f32.mrb[0].mxu0
    %1749 = vmatprep.mubr.f32.mxu0 0.0
    %v1750 = vand.u32 %v203, 4294901760
    %1751 = vmatmul.mubr.f32.gmra.mrb[0].mxu0 %v1750
    %v1752 = vpop.f32.mrb[0].mxu0
    %v1753 = vadd.f32 %v1480, %v1752
    %v1754 = vpop.f32.mrb[0].mxu0
    %1755 = vmatprep.mubr.f32.mxu0 0.0
    %v1756 = vand.u32 %v206, 4294901760
    %1757 = vmatmul.mubr.f32.gmra.mrb[0].mxu0 %v1756
    %v1758 = vpop.f32.mrb[0].mxu0
    %v1759 = vadd.f32 %v1488, %v1758
    %v1760 = vpop.f32.mrb[0].mxu0
    %1761 = vmatprep.mubr.f32.mxu0 0.0
    %v1762 = vand.u32 %v209, 4294901760
    %1763 = vmatmul.mubr.f32.gmra.mrb[0].mxu0 %v1762
    %v1764 = vpop.f32.mrb[0].mxu0
    %v1765 = vadd.f32 %v1496, %v1764
    %v1766 = vpop.f32.mrb[0].mxu0
    %1767 = vdwg.mxu0
    %1768 = vmatprep.subr.mxu0 0.0
    %v1769 = vand.u32 %v110, 4294901760
    %1770 = vmatpush1.msra.mxu0 %v1769
    %1771 = vmatprep.subr.mxu0 0.0
    %v1772 = vand.u32 %v111, 4294901760
    %1773 = vmatpush1.msra.mxu0 %v1772
    %1774 = vmatprep.subr.mxu0 0.0
    %v1775 = vand.u32 %v112, 4294901760
    %1776 = vmatpush1.msra.mxu0 %v1775
    %1777 = vmatprep.subr.mxu0 0.0
    %v1778 = vand.u32 %v113, 4294901760
    %1779 = vmatpush1.msra.mxu0 %v1778
    %1780 = vmatprep.subr.mxu0 0.0
    %1781 = vmatpush1.msra.mxu0 0.0
    %1782 = vmatprep.subr.mxu0 0.0
    %1783 = vmatpush1.msra.mxu0 0.0
    %1784 = vmatprep.subr.mxu0 0.0
    %1785 = vmatpush1.msra.mxu0 0.0
    %1786 = vmatprep.subr.mxu0 0.0
    %1787 = vmatpush1.msra.mxu0 0.0
    %1788 = vmatprep.subr.mxu0 0.0
    %1789 = vmatpush1.msra.mxu0 0.0
    %1790 = vmatprep.subr.mxu0 0.0
    %1791 = vmatpush1.msra.mxu0 0.0
    %1792 = vmatprep.subr.mxu0 0.0
    %1793 = vmatpush1.msra.mxu0 0.0
    %1794 = vmatprep.subr.mxu0 0.0
    %1795 = vmatpush1.msra.mxu0 0.0
    %1796 = vmatprep.subr.mxu0 0.0
    %1797 = vmatpush1.msra.mxu0 0.0
    %1798 = vmatprep.subr.mxu0 0.0
    %1799 = vmatpush1.msra.mxu0 0.0
    %1800 = vmatprep.subr.mxu0 0.0
    %1801 = vmatpush1.msra.mxu0 0.0
    %1802 = vmatprep.subr.mxu0 0.0
    %1803 = vmatpush1.msra.mxu0 0.0
    %1804 = vmatprep.subr.mxu0 0.0
    %1805 = vmatpush1.msra.mxu0 0.0
    %1806 = vmatprep.subr.mxu0 0.0
    %1807 = vmatpush1.msra.mxu0 0.0
    %1808 = vmatprep.subr.mxu0 0.0
    %1809 = vmatpush1.msra.mxu0 0.0
    %1810 = vmatprep.subr.mxu0 0.0
    %1811 = vmatpush1.msra.mxu0 0.0
    %1812 = vmatprep.subr.mxu0 0.0
    %1813 = vmatpush1.msra.mxu0 0.0
    %1814 = vmatprep.subr.mxu0 0.0
    %1815 = vmatpush1.msra.mxu0 0.0
    %1816 = vmatprep.subr.mxu0 0.0
    %1817 = vmatpush1.msra.mxu0 0.0
    %1818 = vmatprep.subr.mxu0 0.0
    %1819 = vmatpush1.msra.mxu0 0.0
    %1820 = vmatprep.subr.mxu0 0.0
    %1821 = vmatpush1.msra.mxu0 0.0
    %1822 = vmatprep.subr.mxu0 0.0
    %1823 = vmatpush1.msra.mxu0 0.0
    %1824 = vmatprep.subr.mxu0 0.0
    %1825 = vmatpush1.msra.mxu0 0.0
    %1826 = vmatprep.subr.mxu0 0.0
    %1827 = vmatpush1.msra.mxu0 0.0
    %1828 = vmatprep.subr.mxu0 0.0
    %1829 = vmatpush1.msra.mxu0 0.0
    %1830 = vmatprep.subr.mxu0 0.0
    %1831 = vmatpush1.msra.mxu0 0.0
    %1832 = vmatprep.subr.mxu0 0.0
    %1833 = vmatpush1.msra.mxu0 0.0
    %1834 = vmatprep.subr.mxu0 0.0
    %1835 = vmatpush1.msra.mxu0 0.0
    %1836 = vmatprep.mubr.f32.mxu0 0.0
    %v1837 = vand.u32 %v116, 4294901760
    %1838 = vmatmul.mubr.f32.gmra.mrb[0].mxu0 %v1837
    %v1839 = vpop.f32.mrb[0].mxu0
    %v1840 = vadd.f32 %v1579, %v1839
    %v1841 = vpop.f32.mrb[0].mxu0
    %1842 = vmatprep.mubr.f32.mxu0 0.0
    %v1843 = vand.u32 %v119, 4294901760
    %1844 = vmatmul.mubr.f32.gmra.mrb[0].mxu0 %v1843
    %v1845 = vpop.f32.mrb[0].mxu0
    %v1846 = vadd.f32 %v1585, %v1845
    %v1847 = vpop.f32.mrb[0].mxu0
    %1848 = vmatprep.mubr.f32.mxu0 0.0
    %v1849 = vand.u32 %v122, 4294901760
    %1850 = vmatmul.mubr.f32.gmra.mrb[0].mxu0 %v1849
    %v1851 = vpop.f32.mrb[0].mxu0
    %v1852 = vadd.f32 %v1591, %v1851
    %v1853 = vpop.f32.mrb[0].mxu0
    %1854 = vmatprep.mubr.f32.mxu0 0.0
    %v1855 = vand.u32 %v125, 4294901760
    %1856 = vmatmul.mubr.f32.gmra.mrb[0].mxu0 %v1855
    %v1857 = vpop.f32.mrb[0].mxu0
    %v1858 = vadd.f32 %v1597, %v1857
    %v1859 = vpop.f32.mrb[0].mxu0
    %1860 = vmatprep.mubr.f32.mxu0 0.0
    %v1861 = vand.u32 %v128, 4294901760
    %1862 = vmatmul.mubr.f32.gmra.mrb[0].mxu0 %v1861
    %v1863 = vpop.f32.mrb[0].mxu0
    %v1864 = vadd.f32 %v1603, %v1863
    %v1865 = vpop.f32.mrb[0].mxu0
    %1866 = vmatprep.mubr.f32.mxu0 0.0
    %v1867 = vand.u32 %v131, 4294901760
    %1868 = vmatmul.mubr.f32.gmra.mrb[0].mxu0 %v1867
    %v1869 = vpop.f32.mrb[0].mxu0
    %v1870 = vadd.f32 %v1609, %v1869
    %v1871 = vpop.f32.mrb[0].mxu0
    %1872 = vmatprep.mubr.f32.mxu0 0.0
    %v1873 = vand.u32 %v134, 4294901760
    %1874 = vmatmul.mubr.f32.gmra.mrb[0].mxu0 %v1873
    %v1875 = vpop.f32.mrb[0].mxu0
    %v1876 = vadd.f32 %v1615, %v1875
    %v1877 = vpop.f32.mrb[0].mxu0
    %1878 = vmatprep.mubr.f32.mxu0 0.0
    %v1879 = vand.u32 %v137, 4294901760
    %1880 = vmatmul.mubr.f32.gmra.mrb[0].mxu0 %v1879
    %v1881 = vpop.f32.mrb[0].mxu0
    %v1882 = vadd.f32 %v1621, %v1881
    %v1883 = vpop.f32.mrb[0].mxu0
    %1884 = vmatprep.mubr.f32.mxu0 0.0
    %v1885 = vand.u32 %v140, 4294901760
    %1886 = vmatmul.mubr.f32.gmra.mrb[0].mxu0 %v1885
    %v1887 = vpop.f32.mrb[0].mxu0
    %v1888 = vadd.f32 %v1627, %v1887
    %v1889 = vpop.f32.mrb[0].mxu0
    %1890 = vmatprep.mubr.f32.mxu0 0.0
    %v1891 = vand.u32 %v143, 4294901760
    %1892 = vmatmul.mubr.f32.gmra.mrb[0].mxu0 %v1891
    %v1893 = vpop.f32.mrb[0].mxu0
    %v1894 = vadd.f32 %v1633, %v1893
    %v1895 = vpop.f32.mrb[0].mxu0
    %1896 = vmatprep.mubr.f32.mxu0 0.0
    %v1897 = vand.u32 %v146, 4294901760
    %1898 = vmatmul.mubr.f32.gmra.mrb[0].mxu0 %v1897
    %v1899 = vpop.f32.mrb[0].mxu0
    %v1900 = vadd.f32 %v1639, %v1899
    %v1901 = vpop.f32.mrb[0].mxu0
    %1902 = vmatprep.mubr.f32.mxu0 0.0
    %v1903 = vand.u32 %v149, 4294901760
    %1904 = vmatmul.mubr.f32.gmra.mrb[0].mxu0 %v1903
    %v1905 = vpop.f32.mrb[0].mxu0
    %v1906 = vadd.f32 %v1645, %v1905
    %v1907 = vpop.f32.mrb[0].mxu0
    %1908 = vmatprep.mubr.f32.mxu0 0.0
    %v1909 = vand.u32 %v152, 4294901760
    %1910 = vmatmul.mubr.f32.gmra.mrb[0].mxu0 %v1909
    %v1911 = vpop.f32.mrb[0].mxu0
    %v1912 = vadd.f32 %v1651, %v1911
    %v1913 = vpop.f32.mrb[0].mxu0
    %1914 = vmatprep.mubr.f32.mxu0 0.0
    %v1915 = vand.u32 %v155, 4294901760
    %1916 = vmatmul.mubr.f32.gmra.mrb[0].mxu0 %v1915
    %v1917 = vpop.f32.mrb[0].mxu0
    %v1918 = vadd.f32 %v1657, %v1917
    %v1919 = vpop.f32.mrb[0].mxu0
    %1920 = vmatprep.mubr.f32.mxu0 0.0
    %v1921 = vand.u32 %v158, 4294901760
    %1922 = vmatmul.mubr.f32.gmra.mrb[0].mxu0 %v1921
    %v1923 = vpop.f32.mrb[0].mxu0
    %v1924 = vadd.f32 %v1663, %v1923
    %v1925 = vpop.f32.mrb[0].mxu0
    %1926 = vmatprep.mubr.f32.mxu0 0.0
    %v1927 = vand.u32 %v161, 4294901760
    %1928 = vmatmul.mubr.f32.gmra.mrb[0].mxu0 %v1927
    %v1929 = vpop.f32.mrb[0].mxu0
    %v1930 = vadd.f32 %v1669, %v1929
    %v1931 = vpop.f32.mrb[0].mxu0
    %1932 = vmatprep.mubr.f32.mxu0 0.0
    %v1933 = vand.u32 %v164, 4294901760
    %1934 = vmatmul.mubr.f32.gmra.mrb[0].mxu0 %v1933
    %v1935 = vpop.f32.mrb[0].mxu0
    %v1936 = vadd.f32 %v1675, %v1935
    %v1937 = vpop.f32.mrb[0].mxu0
    %1938 = vmatprep.mubr.f32.mxu0 0.0
    %v1939 = vand.u32 %v167, 4294901760
    %1940 = vmatmul.mubr.f32.gmra.mrb[0].mxu0 %v1939
    %v1941 = vpop.f32.mrb[0].mxu0
    %v1942 = vadd.f32 %v1681, %v1941
    %v1943 = vpop.f32.mrb[0].mxu0
    %1944 = vmatprep.mubr.f32.mxu0 0.0
    %v1945 = vand.u32 %v170, 4294901760
    %1946 = vmatmul.mubr.f32.gmra.mrb[0].mxu0 %v1945
    %v1947 = vpop.f32.mrb[0].mxu0
    %v1948 = vadd.f32 %v1687, %v1947
    %v1949 = vpop.f32.mrb[0].mxu0
    %1950 = vmatprep.mubr.f32.mxu0 0.0
    %v1951 = vand.u32 %v173, 4294901760
    %1952 = vmatmul.mubr.f32.gmra.mrb[0].mxu0 %v1951
    %v1953 = vpop.f32.mrb[0].mxu0
    %v1954 = vadd.f32 %v1693, %v1953
    %v1955 = vpop.f32.mrb[0].mxu0
    %1956 = vmatprep.mubr.f32.mxu0 0.0
    %v1957 = vand.u32 %v176, 4294901760
    %1958 = vmatmul.mubr.f32.gmra.mrb[0].mxu0 %v1957
    %v1959 = vpop.f32.mrb[0].mxu0
    %v1960 = vadd.f32 %v1699, %v1959
    %v1961 = vpop.f32.mrb[0].mxu0
    %1962 = vmatprep.mubr.f32.mxu0 0.0
    %v1963 = vand.u32 %v179, 4294901760
    %1964 = vmatmul.mubr.f32.gmra.mrb[0].mxu0 %v1963
    %v1965 = vpop.f32.mrb[0].mxu0
    %v1966 = vadd.f32 %v1705, %v1965
    %v1967 = vpop.f32.mrb[0].mxu0
    %1968 = vmatprep.mubr.f32.mxu0 0.0
    %v1969 = vand.u32 %v182, 4294901760
    %1970 = vmatmul.mubr.f32.gmra.mrb[0].mxu0 %v1969
    %v1971 = vpop.f32.mrb[0].mxu0
    %v1972 = vadd.f32 %v1711, %v1971
    %v1973 = vpop.f32.mrb[0].mxu0
    %1974 = vmatprep.mubr.f32.mxu0 0.0
    %v1975 = vand.u32 %v185, 4294901760
    %1976 = vmatmul.mubr.f32.gmra.mrb[0].mxu0 %v1975
    %v1977 = vpop.f32.mrb[0].mxu0
    %v1978 = vadd.f32 %v1717, %v1977
    %v1979 = vpop.f32.mrb[0].mxu0
    %1980 = vmatprep.mubr.f32.mxu0 0.0
    %v1981 = vand.u32 %v188, 4294901760
    %1982 = vmatmul.mubr.f32.gmra.mrb[0].mxu0 %v1981
    %v1983 = vpop.f32.mrb[0].mxu0
    %v1984 = vadd.f32 %v1723, %v1983
    %v1985 = vpop.f32.mrb[0].mxu0
    %1986 = vmatprep.mubr.f32.mxu0 0.0
    %v1987 = vand.u32 %v191, 4294901760
    %1988 = vmatmul.mubr.f32.gmra.mrb[0].mxu0 %v1987
    %v1989 = vpop.f32.mrb[0].mxu0
    %v1990 = vadd.f32 %v1729, %v1989
    %v1991 = vpop.f32.mrb[0].mxu0
    %1992 = vmatprep.mubr.f32.mxu0 0.0
    %v1993 = vand.u32 %v194, 4294901760
    %1994 = vmatmul.mubr.f32.gmra.mrb[0].mxu0 %v1993
    %v1995 = vpop.f32.mrb[0].mxu0
    %v1996 = vadd.f32 %v1735, %v1995
    %v1997 = vpop.f32.mrb[0].mxu0
    %1998 = vmatprep.mubr.f32.mxu0 0.0
    %v1999 = vand.u32 %v197, 4294901760
    %2000 = vmatmul.mubr.f32.gmra.mrb[0].mxu0 %v1999
    %v2001 = vpop.f32.mrb[0].mxu0
    %v2002 = vadd.f32 %v1741, %v2001
    %v2003 = vpop.f32.mrb[0].mxu0
    %2004 = vmatprep.mubr.f32.mxu0 0.0
    %v2005 = vand.u32 %v200, 4294901760
    %2006 = vmatmul.mubr.f32.gmra.mrb[0].mxu0 %v2005
    %v2007 = vpop.f32.mrb[0].mxu0
    %v2008 = vadd.f32 %v1747, %v2007
    %v2009 = vpop.f32.mrb[0].mxu0
    %2010 = vmatprep.mubr.f32.mxu0 0.0
    %v2011 = vand.u32 %v203, 4294901760
    %2012 = vmatmul.mubr.f32.gmra.mrb[0].mxu0 %v2011
    %v2013 = vpop.f32.mrb[0].mxu0
    %v2014 = vadd.f32 %v1753, %v2013
    %v2015 = vpop.f32.mrb[0].mxu0
    %2016 = vmatprep.mubr.f32.mxu0 0.0
    %v2017 = vand.u32 %v206, 4294901760
    %2018 = vmatmul.mubr.f32.gmra.mrb[0].mxu0 %v2017
    %v2019 = vpop.f32.mrb[0].mxu0
    %v2020 = vadd.f32 %v1759, %v2019
    %v2021 = vpop.f32.mrb[0].mxu0
    %2022 = vmatprep.mubr.f32.mxu0 0.0
    %v2023 = vand.u32 %v209, 4294901760
    %2024 = vmatmul.mubr.f32.gmra.mrb[0].mxu0 %v2023
    %v2025 = vpop.f32.mrb[0].mxu0
    %v2026 = vadd.f32 %v1765, %v2025
    %v2027 = vpop.f32.mrb[0].mxu0
    %2028 = vdwg.mxu0
    %v2030 = vsel %vm114, %v40, 0
    %v2033 = vsel %vm114, %v41, 0
    %v2036 = vsel %vm114, %v42, 0
    %v2039 = vsel %vm114, %v43, 0
    %v2042 = vsel %vm114, %v44, 0
    %v2045 = vsel %vm114, %v45, 0
    %v2048 = vsel %vm114, %v46, 0
    %v2051 = vsel %vm114, %v47, 0
    %v2054 = vsel %vm114, %v48, 0
    %v2057 = vsel %vm114, %v49, 0
    %v2060 = vsel %vm114, %v50, 0
    %v2063 = vsel %vm114, %v51, 0
    %v2066 = vsel %vm114, %v52, 0
    %v2069 = vsel %vm114, %v53, 0
    %v2072 = vsel %vm114, %v54, 0
    %v2075 = vsel %vm114, %v55, 0
    %v2078 = vsel %vm114, %v56, 0
    %v2081 = vsel %vm114, %v57, 0
    %v2084 = vsel %vm114, %v58, 0
    %v2087 = vsel %vm114, %v59, 0
    %v2090 = vsel %vm114, %v60, 0
    %v2093 = vsel %vm114, %v61, 0
    %v2096 = vsel %vm114, %v62, 0
    %v2099 = vsel %vm114, %v63, 0
    %v2102 = vsel %vm114, %v64, 0
    %v2105 = vsel %vm114, %v65, 0
    %v2108 = vsel %vm114, %v66, 0
    %v2111 = vsel %vm114, %v67, 0
    %v2114 = vsel %vm114, %v68, 0
    %v2117 = vsel %vm114, %v69, 0
    %v2120 = vsel %vm114, %v70, 0
    %v2123 = vsel %vm114, %v71, 0
    %2125 = vmatprep.subr.mxu0 0.0
    %v2126 = vand.u32 %v72, 4294901760
    %2127 = vmatpush1.msra.mxu0 %v2126
    %2128 = vmatprep.subr.mxu0 0.0
    %v2129 = vand.u32 %v73, 4294901760
    %2130 = vmatpush1.msra.mxu0 %v2129
    %2131 = vmatprep.subr.mxu0 0.0
    %v2132 = vand.u32 %v74, 4294901760
    %2133 = vmatpush1.msra.mxu0 %v2132
    %2134 = vmatprep.subr.mxu0 0.0
    %v2135 = vand.u32 %v75, 4294901760
    %2136 = vmatpush1.msra.mxu0 %v2135
    %2137 = vmatprep.subr.mxu0 0.0
    %2138 = vmatpush1.msra.mxu0 0.0
    %2139 = vmatprep.subr.mxu0 0.0
    %2140 = vmatpush1.msra.mxu0 0.0
    %2141 = vmatprep.subr.mxu0 0.0
    %2142 = vmatpush1.msra.mxu0 0.0
    %2143 = vmatprep.subr.mxu0 0.0
    %2144 = vmatpush1.msra.mxu0 0.0
    %2145 = vmatprep.subr.mxu0 0.0
    %2146 = vmatpush1.msra.mxu0 0.0
    %2147 = vmatprep.subr.mxu0 0.0
    %2148 = vmatpush1.msra.mxu0 0.0
    %2149 = vmatprep.subr.mxu0 0.0
    %2150 = vmatpush1.msra.mxu0 0.0
    %2151 = vmatprep.subr.mxu0 0.0
    %2152 = vmatpush1.msra.mxu0 0.0
    %2153 = vmatprep.subr.mxu0 0.0
    %2154 = vmatpush1.msra.mxu0 0.0
    %2155 = vmatprep.subr.mxu0 0.0
    %2156 = vmatpush1.msra.mxu0 0.0
    %2157 = vmatprep.subr.mxu0 0.0
    %2158 = vmatpush1.msra.mxu0 0.0
    %2159 = vmatprep.subr.mxu0 0.0
    %2160 = vmatpush1.msra.mxu0 0.0
    %2161 = vmatprep.subr.mxu0 0.0
    %2162 = vmatpush1.msra.mxu0 0.0
    %2163 = vmatprep.subr.mxu0 0.0
    %2164 = vmatpush1.msra.mxu0 0.0
    %2165 = vmatprep.subr.mxu0 0.0
    %2166 = vmatpush1.msra.mxu0 0.0
    %2167 = vmatprep.subr.mxu0 0.0
    %2168 = vmatpush1.msra.mxu0 0.0
    %2169 = vmatprep.subr.mxu0 0.0
    %2170 = vmatpush1.msra.mxu0 0.0
    %2171 = vmatprep.subr.mxu0 0.0
    %2172 = vmatpush1.msra.mxu0 0.0
    %2173 = vmatprep.subr.mxu0 0.0
    %2174 = vmatpush1.msra.mxu0 0.0
    %2175 = vmatprep.subr.mxu0 0.0
    %2176 = vmatpush1.msra.mxu0 0.0
    %2177 = vmatprep.subr.mxu0 0.0
    %2178 = vmatpush1.msra.mxu0 0.0
    %2179 = vmatprep.subr.mxu0 0.0
    %2180 = vmatpush1.msra.mxu0 0.0
    %2181 = vmatprep.subr.mxu0 0.0
    %2182 = vmatpush1.msra.mxu0 0.0
    %2183 = vmatprep.subr.mxu0 0.0
    %2184 = vmatpush1.msra.mxu0 0.0
    %2185 = vmatprep.subr.mxu0 0.0
    %2186 = vmatpush1.msra.mxu0 0.0
    %2187 = vmatprep.subr.mxu0 0.0
    %2188 = vmatpush1.msra.mxu0 0.0
    %2189 = vmatprep.subr.mxu0 0.0
    %2190 = vmatpush1.msra.mxu0 0.0
    %2191 = vmatprep.subr.mxu0 0.0
    %2192 = vmatpush1.msra.mxu0 0.0
    %2193 = vmatprep.mubr.f32.mxu0 0.0
    %v2194 = vand.u32 %v2030, 4294901760
    %v2195 = vsub.f32 %v2030, %v2194
    %v2196 = vand.u32 %v2195, 4294901760
    %v2197 = vsub.f32 %v2195, %v2196
    %v2198 = vand.u32 %v2197, 4294901760
    %2199 = vmatmul.mubr.f32.gmra.mrb[0].mxu0 %v2198
    %v2200 = vpop.f32.mrb[0].mxu0
    %v2201 = vadd.f32 %v1840, %v2200
    %v2202 = vpop.f32.mrb[0].mxu0
    %2203 = vmatprep.mubr.f32.mxu0 0.0
    %v2204 = vand.u32 %v2033, 4294901760
    %v2205 = vsub.f32 %v2033, %v2204
    %v2206 = vand.u32 %v2205, 4294901760
    %v2207 = vsub.f32 %v2205, %v2206
    %v2208 = vand.u32 %v2207, 4294901760
    %2209 = vmatmul.mubr.f32.gmra.mrb[0].mxu0 %v2208
    %v2210 = vpop.f32.mrb[0].mxu0
    %v2211 = vadd.f32 %v1846, %v2210
    %v2212 = vpop.f32.mrb[0].mxu0
    %2213 = vmatprep.mubr.f32.mxu0 0.0
    %v2214 = vand.u32 %v2036, 4294901760
    %v2215 = vsub.f32 %v2036, %v2214
    %v2216 = vand.u32 %v2215, 4294901760
    %v2217 = vsub.f32 %v2215, %v2216
    %v2218 = vand.u32 %v2217, 4294901760
    %2219 = vmatmul.mubr.f32.gmra.mrb[0].mxu0 %v2218
    %v2220 = vpop.f32.mrb[0].mxu0
    %v2221 = vadd.f32 %v1852, %v2220
    %v2222 = vpop.f32.mrb[0].mxu0
    %2223 = vmatprep.mubr.f32.mxu0 0.0
    %v2224 = vand.u32 %v2039, 4294901760
    %v2225 = vsub.f32 %v2039, %v2224
    %v2226 = vand.u32 %v2225, 4294901760
    %v2227 = vsub.f32 %v2225, %v2226
    %v2228 = vand.u32 %v2227, 4294901760
    %2229 = vmatmul.mubr.f32.gmra.mrb[0].mxu0 %v2228
    %v2230 = vpop.f32.mrb[0].mxu0
    %v2231 = vadd.f32 %v1858, %v2230
    %v2232 = vpop.f32.mrb[0].mxu0
    %2233 = vmatprep.mubr.f32.mxu0 0.0
    %v2234 = vand.u32 %v2042, 4294901760
    %v2235 = vsub.f32 %v2042, %v2234
    %v2236 = vand.u32 %v2235, 4294901760
    %v2237 = vsub.f32 %v2235, %v2236
    %v2238 = vand.u32 %v2237, 4294901760
    %2239 = vmatmul.mubr.f32.gmra.mrb[0].mxu0 %v2238
    %v2240 = vpop.f32.mrb[0].mxu0
    %v2241 = vadd.f32 %v1864, %v2240
    %v2242 = vpop.f32.mrb[0].mxu0
    %2243 = vmatprep.mubr.f32.mxu0 0.0
    %v2244 = vand.u32 %v2045, 4294901760
    %v2245 = vsub.f32 %v2045, %v2244
    %v2246 = vand.u32 %v2245, 4294901760
    %v2247 = vsub.f32 %v2245, %v2246
    %v2248 = vand.u32 %v2247, 4294901760
    %2249 = vmatmul.mubr.f32.gmra.mrb[0].mxu0 %v2248
    %v2250 = vpop.f32.mrb[0].mxu0
    %v2251 = vadd.f32 %v1870, %v2250
    %v2252 = vpop.f32.mrb[0].mxu0
    %2253 = vmatprep.mubr.f32.mxu0 0.0
    %v2254 = vand.u32 %v2048, 4294901760
    %v2255 = vsub.f32 %v2048, %v2254
    %v2256 = vand.u32 %v2255, 4294901760
    %v2257 = vsub.f32 %v2255, %v2256
    %v2258 = vand.u32 %v2257, 4294901760
    %2259 = vmatmul.mubr.f32.gmra.mrb[0].mxu0 %v2258
    %v2260 = vpop.f32.mrb[0].mxu0
    %v2261 = vadd.f32 %v1876, %v2260
    %v2262 = vpop.f32.mrb[0].mxu0
    %2263 = vmatprep.mubr.f32.mxu0 0.0
    %v2264 = vand.u32 %v2051, 4294901760
    %v2265 = vsub.f32 %v2051, %v2264
    %v2266 = vand.u32 %v2265, 4294901760
    %v2267 = vsub.f32 %v2265, %v2266
    %v2268 = vand.u32 %v2267, 4294901760
    %2269 = vmatmul.mubr.f32.gmra.mrb[0].mxu0 %v2268
    %v2270 = vpop.f32.mrb[0].mxu0
    %v2271 = vadd.f32 %v1882, %v2270
    %v2272 = vpop.f32.mrb[0].mxu0
    %2273 = vmatprep.mubr.f32.mxu0 0.0
    %v2274 = vand.u32 %v2054, 4294901760
    %v2275 = vsub.f32 %v2054, %v2274
    %v2276 = vand.u32 %v2275, 4294901760
    %v2277 = vsub.f32 %v2275, %v2276
    %v2278 = vand.u32 %v2277, 4294901760
    %2279 = vmatmul.mubr.f32.gmra.mrb[0].mxu0 %v2278
    %v2280 = vpop.f32.mrb[0].mxu0
    %v2281 = vadd.f32 %v1888, %v2280
    %v2282 = vpop.f32.mrb[0].mxu0
    %2283 = vmatprep.mubr.f32.mxu0 0.0
    %v2284 = vand.u32 %v2057, 4294901760
    %v2285 = vsub.f32 %v2057, %v2284
    %v2286 = vand.u32 %v2285, 4294901760
    %v2287 = vsub.f32 %v2285, %v2286
    %v2288 = vand.u32 %v2287, 4294901760
    %2289 = vmatmul.mubr.f32.gmra.mrb[0].mxu0 %v2288
    %v2290 = vpop.f32.mrb[0].mxu0
    %v2291 = vadd.f32 %v1894, %v2290
    %v2292 = vpop.f32.mrb[0].mxu0
    %2293 = vmatprep.mubr.f32.mxu0 0.0
    %v2294 = vand.u32 %v2060, 4294901760
    %v2295 = vsub.f32 %v2060, %v2294
    %v2296 = vand.u32 %v2295, 4294901760
    %v2297 = vsub.f32 %v2295, %v2296
    %v2298 = vand.u32 %v2297, 4294901760
    %2299 = vmatmul.mubr.f32.gmra.mrb[0].mxu0 %v2298
    %v2300 = vpop.f32.mrb[0].mxu0
    %v2301 = vadd.f32 %v1900, %v2300
    %v2302 = vpop.f32.mrb[0].mxu0
    %2303 = vmatprep.mubr.f32.mxu0 0.0
    %v2304 = vand.u32 %v2063, 4294901760
    %v2305 = vsub.f32 %v2063, %v2304
    %v2306 = vand.u32 %v2305, 4294901760
    %v2307 = vsub.f32 %v2305, %v2306
    %v2308 = vand.u32 %v2307, 4294901760
    %2309 = vmatmul.mubr.f32.gmra.mrb[0].mxu0 %v2308
    %v2310 = vpop.f32.mrb[0].mxu0
    %v2311 = vadd.f32 %v1906, %v2310
    %v2312 = vpop.f32.mrb[0].mxu0
    %2313 = vmatprep.mubr.f32.mxu0 0.0
    %v2314 = vand.u32 %v2066, 4294901760
    %v2315 = vsub.f32 %v2066, %v2314
    %v2316 = vand.u32 %v2315, 4294901760
    %v2317 = vsub.f32 %v2315, %v2316
    %v2318 = vand.u32 %v2317, 4294901760
    %2319 = vmatmul.mubr.f32.gmra.mrb[0].mxu0 %v2318
    %v2320 = vpop.f32.mrb[0].mxu0
    %v2321 = vadd.f32 %v1912, %v2320
    %v2322 = vpop.f32.mrb[0].mxu0
    %2323 = vmatprep.mubr.f32.mxu0 0.0
    %v2324 = vand.u32 %v2069, 4294901760
    %v2325 = vsub.f32 %v2069, %v2324
    %v2326 = vand.u32 %v2325, 4294901760
    %v2327 = vsub.f32 %v2325, %v2326
    %v2328 = vand.u32 %v2327, 4294901760
    %2329 = vmatmul.mubr.f32.gmra.mrb[0].mxu0 %v2328
    %v2330 = vpop.f32.mrb[0].mxu0
    %v2331 = vadd.f32 %v1918, %v2330
    %v2332 = vpop.f32.mrb[0].mxu0
    %2333 = vmatprep.mubr.f32.mxu0 0.0
    %v2334 = vand.u32 %v2072, 4294901760
    %v2335 = vsub.f32 %v2072, %v2334
    %v2336 = vand.u32 %v2335, 4294901760
    %v2337 = vsub.f32 %v2335, %v2336
    %v2338 = vand.u32 %v2337, 4294901760
    %2339 = vmatmul.mubr.f32.gmra.mrb[0].mxu0 %v2338
    %v2340 = vpop.f32.mrb[0].mxu0
    %v2341 = vadd.f32 %v1924, %v2340
    %v2342 = vpop.f32.mrb[0].mxu0
    %2343 = vmatprep.mubr.f32.mxu0 0.0
    %v2344 = vand.u32 %v2075, 4294901760
    %v2345 = vsub.f32 %v2075, %v2344
    %v2346 = vand.u32 %v2345, 4294901760
    %v2347 = vsub.f32 %v2345, %v2346
    %v2348 = vand.u32 %v2347, 4294901760
    %2349 = vmatmul.mubr.f32.gmra.mrb[0].mxu0 %v2348
    %v2350 = vpop.f32.mrb[0].mxu0
    %v2351 = vadd.f32 %v1930, %v2350
    %v2352 = vpop.f32.mrb[0].mxu0
    %2353 = vmatprep.mubr.f32.mxu0 0.0
    %v2354 = vand.u32 %v2078, 4294901760
    %v2355 = vsub.f32 %v2078, %v2354
    %v2356 = vand.u32 %v2355, 4294901760
    %v2357 = vsub.f32 %v2355, %v2356
    %v2358 = vand.u32 %v2357, 4294901760
    %2359 = vmatmul.mubr.f32.gmra.mrb[0].mxu0 %v2358
    %v2360 = vpop.f32.mrb[0].mxu0
    %v2361 = vadd.f32 %v1936, %v2360
    %v2362 = vpop.f32.mrb[0].mxu0
    %2363 = vmatprep.mubr.f32.mxu0 0.0
    %v2364 = vand.u32 %v2081, 4294901760
    %v2365 = vsub.f32 %v2081, %v2364
    %v2366 = vand.u32 %v2365, 4294901760
    %v2367 = vsub.f32 %v2365, %v2366
    %v2368 = vand.u32 %v2367, 4294901760
    %2369 = vmatmul.mubr.f32.gmra.mrb[0].mxu0 %v2368
    %v2370 = vpop.f32.mrb[0].mxu0
    %v2371 = vadd.f32 %v1942, %v2370
    %v2372 = vpop.f32.mrb[0].mxu0
    %2373 = vmatprep.mubr.f32.mxu0 0.0
    %v2374 = vand.u32 %v2084, 4294901760
    %v2375 = vsub.f32 %v2084, %v2374
    %v2376 = vand.u32 %v2375, 4294901760
    %v2377 = vsub.f32 %v2375, %v2376
    %v2378 = vand.u32 %v2377, 4294901760
    %2379 = vmatmul.mubr.f32.gmra.mrb[0].mxu0 %v2378
    %v2380 = vpop.f32.mrb[0].mxu0
    %v2381 = vadd.f32 %v1948, %v2380
    %v2382 = vpop.f32.mrb[0].mxu0
    %2383 = vmatprep.mubr.f32.mxu0 0.0
    %v2384 = vand.u32 %v2087, 4294901760
    %v2385 = vsub.f32 %v2087, %v2384
    %v2386 = vand.u32 %v2385, 4294901760
    %v2387 = vsub.f32 %v2385, %v2386
    %v2388 = vand.u32 %v2387, 4294901760
    %2389 = vmatmul.mubr.f32.gmra.mrb[0].mxu0 %v2388
    %v2390 = vpop.f32.mrb[0].mxu0
    %v2391 = vadd.f32 %v1954, %v2390
    %v2392 = vpop.f32.mrb[0].mxu0
    %2393 = vmatprep.mubr.f32.mxu0 0.0
    %v2394 = vand.u32 %v2090, 4294901760
    %v2395 = vsub.f32 %v2090, %v2394
    %v2396 = vand.u32 %v2395, 4294901760
    %v2397 = vsub.f32 %v2395, %v2396
    %v2398 = vand.u32 %v2397, 4294901760
    %2399 = vmatmul.mubr.f32.gmra.mrb[0].mxu0 %v2398
    %v2400 = vpop.f32.mrb[0].mxu0
    %v2401 = vadd.f32 %v1960, %v2400
    %v2402 = vpop.f32.mrb[0].mxu0
    %2403 = vmatprep.mubr.f32.mxu0 0.0
    %v2404 = vand.u32 %v2093, 4294901760
    %v2405 = vsub.f32 %v2093, %v2404
    %v2406 = vand.u32 %v2405, 4294901760
    %v2407 = vsub.f32 %v2405, %v2406
    %v2408 = vand.u32 %v2407, 4294901760
    %2409 = vmatmul.mubr.f32.gmra.mrb[0].mxu0 %v2408
    %v2410 = vpop.f32.mrb[0].mxu0
    %v2411 = vadd.f32 %v1966, %v2410
    %v2412 = vpop.f32.mrb[0].mxu0
    %2413 = vmatprep.mubr.f32.mxu0 0.0
    %v2414 = vand.u32 %v2096, 4294901760
    %v2415 = vsub.f32 %v2096, %v2414
    %v2416 = vand.u32 %v2415, 4294901760
    %v2417 = vsub.f32 %v2415, %v2416
    %v2418 = vand.u32 %v2417, 4294901760
    %2419 = vmatmul.mubr.f32.gmra.mrb[0].mxu0 %v2418
    %v2420 = vpop.f32.mrb[0].mxu0
    %v2421 = vadd.f32 %v1972, %v2420
    %v2422 = vpop.f32.mrb[0].mxu0
    %2423 = vmatprep.mubr.f32.mxu0 0.0
    %v2424 = vand.u32 %v2099, 4294901760
    %v2425 = vsub.f32 %v2099, %v2424
    %v2426 = vand.u32 %v2425, 4294901760
    %v2427 = vsub.f32 %v2425, %v2426
    %v2428 = vand.u32 %v2427, 4294901760
    %2429 = vmatmul.mubr.f32.gmra.mrb[0].mxu0 %v2428
    %v2430 = vpop.f32.mrb[0].mxu0
    %v2431 = vadd.f32 %v1978, %v2430
    %v2432 = vpop.f32.mrb[0].mxu0
    %2433 = vmatprep.mubr.f32.mxu0 0.0
    %v2434 = vand.u32 %v2102, 4294901760
    %v2435 = vsub.f32 %v2102, %v2434
    %v2436 = vand.u32 %v2435, 4294901760
    %v2437 = vsub.f32 %v2435, %v2436
    %v2438 = vand.u32 %v2437, 4294901760
    %2439 = vmatmul.mubr.f32.gmra.mrb[0].mxu0 %v2438
    %v2440 = vpop.f32.mrb[0].mxu0
    %v2441 = vadd.f32 %v1984, %v2440
    %v2442 = vpop.f32.mrb[0].mxu0
    %2443 = vmatprep.mubr.f32.mxu0 0.0
    %v2444 = vand.u32 %v2105, 4294901760
    %v2445 = vsub.f32 %v2105, %v2444
    %v2446 = vand.u32 %v2445, 4294901760
    %v2447 = vsub.f32 %v2445, %v2446
    %v2448 = vand.u32 %v2447, 4294901760
    %2449 = vmatmul.mubr.f32.gmra.mrb[0].mxu0 %v2448
    %v2450 = vpop.f32.mrb[0].mxu0
    %v2451 = vadd.f32 %v1990, %v2450
    %v2452 = vpop.f32.mrb[0].mxu0
    %2453 = vmatprep.mubr.f32.mxu0 0.0
    %v2454 = vand.u32 %v2108, 4294901760
    %v2455 = vsub.f32 %v2108, %v2454
    %v2456 = vand.u32 %v2455, 4294901760
    %v2457 = vsub.f32 %v2455, %v2456
    %v2458 = vand.u32 %v2457, 4294901760
    %2459 = vmatmul.mubr.f32.gmra.mrb[0].mxu0 %v2458
    %v2460 = vpop.f32.mrb[0].mxu0
    %v2461 = vadd.f32 %v1996, %v2460
    %v2462 = vpop.f32.mrb[0].mxu0
    %2463 = vmatprep.mubr.f32.mxu0 0.0
    %v2464 = vand.u32 %v2111, 4294901760
    %v2465 = vsub.f32 %v2111, %v2464
    %v2466 = vand.u32 %v2465, 4294901760
    %v2467 = vsub.f32 %v2465, %v2466
    %v2468 = vand.u32 %v2467, 4294901760
    %2469 = vmatmul.mubr.f32.gmra.mrb[0].mxu0 %v2468
    %v2470 = vpop.f32.mrb[0].mxu0
    %v2471 = vadd.f32 %v2002, %v2470
    %v2472 = vpop.f32.mrb[0].mxu0
    %2473 = vmatprep.mubr.f32.mxu0 0.0
    %v2474 = vand.u32 %v2114, 4294901760
    %v2475 = vsub.f32 %v2114, %v2474
    %v2476 = vand.u32 %v2475, 4294901760
    %v2477 = vsub.f32 %v2475, %v2476
    %v2478 = vand.u32 %v2477, 4294901760
    %2479 = vmatmul.mubr.f32.gmra.mrb[0].mxu0 %v2478
    %v2480 = vpop.f32.mrb[0].mxu0
    %v2481 = vadd.f32 %v2008, %v2480
    %v2482 = vpop.f32.mrb[0].mxu0
    %2483 = vmatprep.mubr.f32.mxu0 0.0
    %v2484 = vand.u32 %v2117, 4294901760
    %v2485 = vsub.f32 %v2117, %v2484
    %v2486 = vand.u32 %v2485, 4294901760
    %v2487 = vsub.f32 %v2485, %v2486
    %v2488 = vand.u32 %v2487, 4294901760
    %2489 = vmatmul.mubr.f32.gmra.mrb[0].mxu0 %v2488
    %v2490 = vpop.f32.mrb[0].mxu0
    %v2491 = vadd.f32 %v2014, %v2490
    %v2492 = vpop.f32.mrb[0].mxu0
    %2493 = vmatprep.mubr.f32.mxu0 0.0
    %v2494 = vand.u32 %v2120, 4294901760
    %v2495 = vsub.f32 %v2120, %v2494
    %v2496 = vand.u32 %v2495, 4294901760
    %v2497 = vsub.f32 %v2495, %v2496
    %v2498 = vand.u32 %v2497, 4294901760
    %2499 = vmatmul.mubr.f32.gmra.mrb[0].mxu0 %v2498
    %v2500 = vpop.f32.mrb[0].mxu0
    %v2501 = vadd.f32 %v2020, %v2500
    %v2502 = vpop.f32.mrb[0].mxu0
    %2503 = vmatprep.mubr.f32.mxu0 0.0
    %v2504 = vand.u32 %v2123, 4294901760
    %v2505 = vsub.f32 %v2123, %v2504
    %v2506 = vand.u32 %v2505, 4294901760
    %v2507 = vsub.f32 %v2505, %v2506
    %v2508 = vand.u32 %v2507, 4294901760
    %2509 = vmatmul.mubr.f32.gmra.mrb[0].mxu0 %v2508
    %v2510 = vpop.f32.mrb[0].mxu0
    %v2511 = vadd.f32 %v2026, %v2510
    %v2512 = vpop.f32.mrb[0].mxu0
    %2513 = vdwg.mxu0
    %2514 = vmatprep.subr.mxu0 0.0
    %v2515 = vand.u32 %v72, 4294901760
    %v2516 = vsub.f32 %v72, %v2515
    %v2517 = vand.u32 %v2516, 4294901760
    %v2518 = vsub.f32 %v2516, %v2517
    %v2519 = vand.u32 %v2518, 4294901760
    %2520 = vmatpush1.msra.mxu0 %v2519
    %2521 = vmatprep.subr.mxu0 0.0
    %v2522 = vand.u32 %v73, 4294901760
    %v2523 = vsub.f32 %v73, %v2522
    %v2524 = vand.u32 %v2523, 4294901760
    %v2525 = vsub.f32 %v2523, %v2524
    %v2526 = vand.u32 %v2525, 4294901760
    %2527 = vmatpush1.msra.mxu0 %v2526
    %2528 = vmatprep.subr.mxu0 0.0
    %v2529 = vand.u32 %v74, 4294901760
    %v2530 = vsub.f32 %v74, %v2529
    %v2531 = vand.u32 %v2530, 4294901760
    %v2532 = vsub.f32 %v2530, %v2531
    %v2533 = vand.u32 %v2532, 4294901760
    %2534 = vmatpush1.msra.mxu0 %v2533
    %2535 = vmatprep.subr.mxu0 0.0
    %v2536 = vand.u32 %v75, 4294901760
    %v2537 = vsub.f32 %v75, %v2536
    %v2538 = vand.u32 %v2537, 4294901760
    %v2539 = vsub.f32 %v2537, %v2538
    %v2540 = vand.u32 %v2539, 4294901760
    %2541 = vmatpush1.msra.mxu0 %v2540
    %2542 = vmatprep.subr.mxu0 0.0
    %2543 = vmatpush1.msra.mxu0 0.0
    %2544 = vmatprep.subr.mxu0 0.0
    %2545 = vmatpush1.msra.mxu0 0.0
    %2546 = vmatprep.subr.mxu0 0.0
    %2547 = vmatpush1.msra.mxu0 0.0
    %2548 = vmatprep.subr.mxu0 0.0
    %2549 = vmatpush1.msra.mxu0 0.0
    %2550 = vmatprep.subr.mxu0 0.0
    %2551 = vmatpush1.msra.mxu0 0.0
    %2552 = vmatprep.subr.mxu0 0.0
    %2553 = vmatpush1.msra.mxu0 0.0
    %2554 = vmatprep.subr.mxu0 0.0
    %2555 = vmatpush1.msra.mxu0 0.0
    %2556 = vmatprep.subr.mxu0 0.0
    %2557 = vmatpush1.msra.mxu0 0.0
    %2558 = vmatprep.subr.mxu0 0.0
    %2559 = vmatpush1.msra.mxu0 0.0
    %2560 = vmatprep.subr.mxu0 0.0
    %2561 = vmatpush1.msra.mxu0 0.0
    %2562 = vmatprep.subr.mxu0 0.0
    %2563 = vmatpush1.msra.mxu0 0.0
    %2564 = vmatprep.subr.mxu0 0.0
    %2565 = vmatpush1.msra.mxu0 0.0
    %2566 = vmatprep.subr.mxu0 0.0
    %2567 = vmatpush1.msra.mxu0 0.0
    %2568 = vmatprep.subr.mxu0 0.0
    %2569 = vmatpush1.msra.mxu0 0.0
    %2570 = vmatprep.subr.mxu0 0.0
    %2571 = vmatpush1.msra.mxu0 0.0
    %2572 = vmatprep.subr.mxu0 0.0
    %2573 = vmatpush1.msra.mxu0 0.0
    %2574 = vmatprep.subr.mxu0 0.0
    %2575 = vmatpush1.msra.mxu0 0.0
    %2576 = vmatprep.subr.mxu0 0.0
    %2577 = vmatpush1.msra.mxu0 0.0
    %2578 = vmatprep.subr.mxu0 0.0
    %2579 = vmatpush1.msra.mxu0 0.0
    %2580 = vmatprep.subr.mxu0 0.0
    %2581 = vmatpush1.msra.mxu0 0.0
    %2582 = vmatprep.subr.mxu0 0.0
    %2583 = vmatpush1.msra.mxu0 0.0
    %2584 = vmatprep.subr.mxu0 0.0
    %2585 = vmatpush1.msra.mxu0 0.0
    %2586 = vmatprep.subr.mxu0 0.0
    %2587 = vmatpush1.msra.mxu0 0.0
    %2588 = vmatprep.subr.mxu0 0.0
    %2589 = vmatpush1.msra.mxu0 0.0
    %2590 = vmatprep.subr.mxu0 0.0
    %2591 = vmatpush1.msra.mxu0 0.0
    %2592 = vmatprep.subr.mxu0 0.0
    %2593 = vmatpush1.msra.mxu0 0.0
    %2594 = vmatprep.subr.mxu0 0.0
    %2595 = vmatpush1.msra.mxu0 0.0
    %2596 = vmatprep.subr.mxu0 0.0
    %2597 = vmatpush1.msra.mxu0 0.0
    %2598 = vmatprep.mubr.f32.mxu0 0.0
    %v2599 = vand.u32 %v2030, 4294901760
    %2600 = vmatmul.mubr.f32.gmra.mrb[0].mxu0 %v2599
    %v2601 = vpop.f32.mrb[0].mxu0
    %v2602 = vadd.f32 %v2201, %v2601
    %v2603 = vpop.f32.mrb[0].mxu0
    %2604 = vmatprep.mubr.f32.mxu0 0.0
    %v2605 = vand.u32 %v2033, 4294901760
    %2606 = vmatmul.mubr.f32.gmra.mrb[0].mxu0 %v2605
    %v2607 = vpop.f32.mrb[0].mxu0
    %v2608 = vadd.f32 %v2211, %v2607
    %v2609 = vpop.f32.mrb[0].mxu0
    %2610 = vmatprep.mubr.f32.mxu0 0.0
    %v2611 = vand.u32 %v2036, 4294901760
    %2612 = vmatmul.mubr.f32.gmra.mrb[0].mxu0 %v2611
    %v2613 = vpop.f32.mrb[0].mxu0
    %v2614 = vadd.f32 %v2221, %v2613
    %v2615 = vpop.f32.mrb[0].mxu0
    %2616 = vmatprep.mubr.f32.mxu0 0.0
    %v2617 = vand.u32 %v2039, 4294901760
    %2618 = vmatmul.mubr.f32.gmra.mrb[0].mxu0 %v2617
    %v2619 = vpop.f32.mrb[0].mxu0
    %v2620 = vadd.f32 %v2231, %v2619
    %v2621 = vpop.f32.mrb[0].mxu0
    %2622 = vmatprep.mubr.f32.mxu0 0.0
    %v2623 = vand.u32 %v2042, 4294901760
    %2624 = vmatmul.mubr.f32.gmra.mrb[0].mxu0 %v2623
    %v2625 = vpop.f32.mrb[0].mxu0
    %v2626 = vadd.f32 %v2241, %v2625
    %v2627 = vpop.f32.mrb[0].mxu0
    %2628 = vmatprep.mubr.f32.mxu0 0.0
    %v2629 = vand.u32 %v2045, 4294901760
    %2630 = vmatmul.mubr.f32.gmra.mrb[0].mxu0 %v2629
    %v2631 = vpop.f32.mrb[0].mxu0
    %v2632 = vadd.f32 %v2251, %v2631
    %v2633 = vpop.f32.mrb[0].mxu0
    %2634 = vmatprep.mubr.f32.mxu0 0.0
    %v2635 = vand.u32 %v2048, 4294901760
    %2636 = vmatmul.mubr.f32.gmra.mrb[0].mxu0 %v2635
    %v2637 = vpop.f32.mrb[0].mxu0
    %v2638 = vadd.f32 %v2261, %v2637
    %v2639 = vpop.f32.mrb[0].mxu0
    %2640 = vmatprep.mubr.f32.mxu0 0.0
    %v2641 = vand.u32 %v2051, 4294901760
    %2642 = vmatmul.mubr.f32.gmra.mrb[0].mxu0 %v2641
    %v2643 = vpop.f32.mrb[0].mxu0
    %v2644 = vadd.f32 %v2271, %v2643
    %v2645 = vpop.f32.mrb[0].mxu0
    %2646 = vmatprep.mubr.f32.mxu0 0.0
    %v2647 = vand.u32 %v2054, 4294901760
    %2648 = vmatmul.mubr.f32.gmra.mrb[0].mxu0 %v2647
    %v2649 = vpop.f32.mrb[0].mxu0
    %v2650 = vadd.f32 %v2281, %v2649
    %v2651 = vpop.f32.mrb[0].mxu0
    %2652 = vmatprep.mubr.f32.mxu0 0.0
    %v2653 = vand.u32 %v2057, 4294901760
    %2654 = vmatmul.mubr.f32.gmra.mrb[0].mxu0 %v2653
    %v2655 = vpop.f32.mrb[0].mxu0
    %v2656 = vadd.f32 %v2291, %v2655
    %v2657 = vpop.f32.mrb[0].mxu0
    %2658 = vmatprep.mubr.f32.mxu0 0.0
    %v2659 = vand.u32 %v2060, 4294901760
    %2660 = vmatmul.mubr.f32.gmra.mrb[0].mxu0 %v2659
    %v2661 = vpop.f32.mrb[0].mxu0
    %v2662 = vadd.f32 %v2301, %v2661
    %v2663 = vpop.f32.mrb[0].mxu0
    %2664 = vmatprep.mubr.f32.mxu0 0.0
    %v2665 = vand.u32 %v2063, 4294901760
    %2666 = vmatmul.mubr.f32.gmra.mrb[0].mxu0 %v2665
    %v2667 = vpop.f32.mrb[0].mxu0
    %v2668 = vadd.f32 %v2311, %v2667
    %v2669 = vpop.f32.mrb[0].mxu0
    %2670 = vmatprep.mubr.f32.mxu0 0.0
    %v2671 = vand.u32 %v2066, 4294901760
    %2672 = vmatmul.mubr.f32.gmra.mrb[0].mxu0 %v2671
    %v2673 = vpop.f32.mrb[0].mxu0
    %v2674 = vadd.f32 %v2321, %v2673
    %v2675 = vpop.f32.mrb[0].mxu0
    %2676 = vmatprep.mubr.f32.mxu0 0.0
    %v2677 = vand.u32 %v2069, 4294901760
    %2678 = vmatmul.mubr.f32.gmra.mrb[0].mxu0 %v2677
    %v2679 = vpop.f32.mrb[0].mxu0
    %v2680 = vadd.f32 %v2331, %v2679
    %v2681 = vpop.f32.mrb[0].mxu0
    %2682 = vmatprep.mubr.f32.mxu0 0.0
    %v2683 = vand.u32 %v2072, 4294901760
    %2684 = vmatmul.mubr.f32.gmra.mrb[0].mxu0 %v2683
    %v2685 = vpop.f32.mrb[0].mxu0
    %v2686 = vadd.f32 %v2341, %v2685
    %v2687 = vpop.f32.mrb[0].mxu0
    %2688 = vmatprep.mubr.f32.mxu0 0.0
    %v2689 = vand.u32 %v2075, 4294901760
    %2690 = vmatmul.mubr.f32.gmra.mrb[0].mxu0 %v2689
    %v2691 = vpop.f32.mrb[0].mxu0
    %v2692 = vadd.f32 %v2351, %v2691
    %v2693 = vpop.f32.mrb[0].mxu0
    %2694 = vmatprep.mubr.f32.mxu0 0.0
    %v2695 = vand.u32 %v2078, 4294901760
    %2696 = vmatmul.mubr.f32.gmra.mrb[0].mxu0 %v2695
    %v2697 = vpop.f32.mrb[0].mxu0
    %v2698 = vadd.f32 %v2361, %v2697
    %v2699 = vpop.f32.mrb[0].mxu0
    %2700 = vmatprep.mubr.f32.mxu0 0.0
    %v2701 = vand.u32 %v2081, 4294901760
    %2702 = vmatmul.mubr.f32.gmra.mrb[0].mxu0 %v2701
    %v2703 = vpop.f32.mrb[0].mxu0
    %v2704 = vadd.f32 %v2371, %v2703
    %v2705 = vpop.f32.mrb[0].mxu0
    %2706 = vmatprep.mubr.f32.mxu0 0.0
    %v2707 = vand.u32 %v2084, 4294901760
    %2708 = vmatmul.mubr.f32.gmra.mrb[0].mxu0 %v2707
    %v2709 = vpop.f32.mrb[0].mxu0
    %v2710 = vadd.f32 %v2381, %v2709
    %v2711 = vpop.f32.mrb[0].mxu0
    %2712 = vmatprep.mubr.f32.mxu0 0.0
    %v2713 = vand.u32 %v2087, 4294901760
    %2714 = vmatmul.mubr.f32.gmra.mrb[0].mxu0 %v2713
    %v2715 = vpop.f32.mrb[0].mxu0
    %v2716 = vadd.f32 %v2391, %v2715
    %v2717 = vpop.f32.mrb[0].mxu0
    %2718 = vmatprep.mubr.f32.mxu0 0.0
    %v2719 = vand.u32 %v2090, 4294901760
    %2720 = vmatmul.mubr.f32.gmra.mrb[0].mxu0 %v2719
    %v2721 = vpop.f32.mrb[0].mxu0
    %v2722 = vadd.f32 %v2401, %v2721
    %v2723 = vpop.f32.mrb[0].mxu0
    %2724 = vmatprep.mubr.f32.mxu0 0.0
    %v2725 = vand.u32 %v2093, 4294901760
    %2726 = vmatmul.mubr.f32.gmra.mrb[0].mxu0 %v2725
    %v2727 = vpop.f32.mrb[0].mxu0
    %v2728 = vadd.f32 %v2411, %v2727
    %v2729 = vpop.f32.mrb[0].mxu0
    %2730 = vmatprep.mubr.f32.mxu0 0.0
    %v2731 = vand.u32 %v2096, 4294901760
    %2732 = vmatmul.mubr.f32.gmra.mrb[0].mxu0 %v2731
    %v2733 = vpop.f32.mrb[0].mxu0
    %v2734 = vadd.f32 %v2421, %v2733
    %v2735 = vpop.f32.mrb[0].mxu0
    %2736 = vmatprep.mubr.f32.mxu0 0.0
    %v2737 = vand.u32 %v2099, 4294901760
    %2738 = vmatmul.mubr.f32.gmra.mrb[0].mxu0 %v2737
    %v2739 = vpop.f32.mrb[0].mxu0
    %v2740 = vadd.f32 %v2431, %v2739
    %v2741 = vpop.f32.mrb[0].mxu0
    %2742 = vmatprep.mubr.f32.mxu0 0.0
    %v2743 = vand.u32 %v2102, 4294901760
    %2744 = vmatmul.mubr.f32.gmra.mrb[0].mxu0 %v2743
    %v2745 = vpop.f32.mrb[0].mxu0
    %v2746 = vadd.f32 %v2441, %v2745
    %v2747 = vpop.f32.mrb[0].mxu0
    %2748 = vmatprep.mubr.f32.mxu0 0.0
    %v2749 = vand.u32 %v2105, 4294901760
    %2750 = vmatmul.mubr.f32.gmra.mrb[0].mxu0 %v2749
    %v2751 = vpop.f32.mrb[0].mxu0
    %v2752 = vadd.f32 %v2451, %v2751
    %v2753 = vpop.f32.mrb[0].mxu0
    %2754 = vmatprep.mubr.f32.mxu0 0.0
    %v2755 = vand.u32 %v2108, 4294901760
    %2756 = vmatmul.mubr.f32.gmra.mrb[0].mxu0 %v2755
    %v2757 = vpop.f32.mrb[0].mxu0
    %v2758 = vadd.f32 %v2461, %v2757
    %v2759 = vpop.f32.mrb[0].mxu0
    %2760 = vmatprep.mubr.f32.mxu0 0.0
    %v2761 = vand.u32 %v2111, 4294901760
    %2762 = vmatmul.mubr.f32.gmra.mrb[0].mxu0 %v2761
    %v2763 = vpop.f32.mrb[0].mxu0
    %v2764 = vadd.f32 %v2471, %v2763
    %v2765 = vpop.f32.mrb[0].mxu0
    %2766 = vmatprep.mubr.f32.mxu0 0.0
    %v2767 = vand.u32 %v2114, 4294901760
    %2768 = vmatmul.mubr.f32.gmra.mrb[0].mxu0 %v2767
    %v2769 = vpop.f32.mrb[0].mxu0
    %v2770 = vadd.f32 %v2481, %v2769
    %v2771 = vpop.f32.mrb[0].mxu0
    %2772 = vmatprep.mubr.f32.mxu0 0.0
    %v2773 = vand.u32 %v2117, 4294901760
    %2774 = vmatmul.mubr.f32.gmra.mrb[0].mxu0 %v2773
    %v2775 = vpop.f32.mrb[0].mxu0
    %v2776 = vadd.f32 %v2491, %v2775
    %v2777 = vpop.f32.mrb[0].mxu0
    %2778 = vmatprep.mubr.f32.mxu0 0.0
    %v2779 = vand.u32 %v2120, 4294901760
    %2780 = vmatmul.mubr.f32.gmra.mrb[0].mxu0 %v2779
    %v2781 = vpop.f32.mrb[0].mxu0
    %v2782 = vadd.f32 %v2501, %v2781
    %v2783 = vpop.f32.mrb[0].mxu0
    %2784 = vmatprep.mubr.f32.mxu0 0.0
    %v2785 = vand.u32 %v2123, 4294901760
    %2786 = vmatmul.mubr.f32.gmra.mrb[0].mxu0 %v2785
    %v2787 = vpop.f32.mrb[0].mxu0
    %v2788 = vadd.f32 %v2511, %v2787
    %v2789 = vpop.f32.mrb[0].mxu0
    %2790 = vdwg.mxu0
    %2791 = vmatprep.subr.mxu0 0.0
    %v2792 = vand.u32 %v72, 4294901760
    %v2793 = vsub.f32 %v72, %v2792
    %2794 = vmatpush1.msra.mxu0 %v2793
    %2795 = vmatprep.subr.mxu0 0.0
    %v2796 = vand.u32 %v73, 4294901760
    %v2797 = vsub.f32 %v73, %v2796
    %2798 = vmatpush1.msra.mxu0 %v2797
    %2799 = vmatprep.subr.mxu0 0.0
    %v2800 = vand.u32 %v74, 4294901760
    %v2801 = vsub.f32 %v74, %v2800
    %2802 = vmatpush1.msra.mxu0 %v2801
    %2803 = vmatprep.subr.mxu0 0.0
    %v2804 = vand.u32 %v75, 4294901760
    %v2805 = vsub.f32 %v75, %v2804
    %2806 = vmatpush1.msra.mxu0 %v2805
    %2807 = vmatprep.subr.mxu0 0.0
    %2808 = vmatpush1.msra.mxu0 0.0
    %2809 = vmatprep.subr.mxu0 0.0
    %2810 = vmatpush1.msra.mxu0 0.0
    %2811 = vmatprep.subr.mxu0 0.0
    %2812 = vmatpush1.msra.mxu0 0.0
    %2813 = vmatprep.subr.mxu0 0.0
    %2814 = vmatpush1.msra.mxu0 0.0
    %2815 = vmatprep.subr.mxu0 0.0
    %2816 = vmatpush1.msra.mxu0 0.0
    %2817 = vmatprep.subr.mxu0 0.0
    %2818 = vmatpush1.msra.mxu0 0.0
    %2819 = vmatprep.subr.mxu0 0.0
    %2820 = vmatpush1.msra.mxu0 0.0
    %2821 = vmatprep.subr.mxu0 0.0
    %2822 = vmatpush1.msra.mxu0 0.0
    %2823 = vmatprep.subr.mxu0 0.0
    %2824 = vmatpush1.msra.mxu0 0.0
    %2825 = vmatprep.subr.mxu0 0.0
    %2826 = vmatpush1.msra.mxu0 0.0
    %2827 = vmatprep.subr.mxu0 0.0
    %2828 = vmatpush1.msra.mxu0 0.0
    %2829 = vmatprep.subr.mxu0 0.0
    %2830 = vmatpush1.msra.mxu0 0.0
    %2831 = vmatprep.subr.mxu0 0.0
    %2832 = vmatpush1.msra.mxu0 0.0
    %2833 = vmatprep.subr.mxu0 0.0
    %2834 = vmatpush1.msra.mxu0 0.0
    %2835 = vmatprep.subr.mxu0 0.0
    %2836 = vmatpush1.msra.mxu0 0.0
    %2837 = vmatprep.subr.mxu0 0.0
    %2838 = vmatpush1.msra.mxu0 0.0
    %2839 = vmatprep.subr.mxu0 0.0
    %2840 = vmatpush1.msra.mxu0 0.0
    %2841 = vmatprep.subr.mxu0 0.0
    %2842 = vmatpush1.msra.mxu0 0.0
    %2843 = vmatprep.subr.mxu0 0.0
    %2844 = vmatpush1.msra.mxu0 0.0
    %2845 = vmatprep.subr.mxu0 0.0
    %2846 = vmatpush1.msra.mxu0 0.0
    %2847 = vmatprep.subr.mxu0 0.0
    %2848 = vmatpush1.msra.mxu0 0.0
    %2849 = vmatprep.subr.mxu0 0.0
    %2850 = vmatpush1.msra.mxu0 0.0
    %2851 = vmatprep.subr.mxu0 0.0
    %2852 = vmatpush1.msra.mxu0 0.0
    %2853 = vmatprep.subr.mxu0 0.0
    %2854 = vmatpush1.msra.mxu0 0.0
    %2855 = vmatprep.subr.mxu0 0.0
    %2856 = vmatpush1.msra.mxu0 0.0
    %2857 = vmatprep.subr.mxu0 0.0
    %2858 = vmatpush1.msra.mxu0 0.0
    %2859 = vmatprep.subr.mxu0 0.0
    %2860 = vmatpush1.msra.mxu0 0.0
    %2861 = vmatprep.subr.mxu0 0.0
    %2862 = vmatpush1.msra.mxu0 0.0
    %2863 = vmatprep.mubr.f32.mxu0 0.0
    %v2864 = vand.u32 %v2030, 4294901760
    %v2865 = vsub.f32 %v2030, %v2864
    %2866 = vmatmul.mubr.f32.gmra.mrb[0].mxu0 %v2865
    %v2867 = vpop.f32.mrb[0].mxu0
    %v2868 = vadd.f32 %v2602, %v2867
    %v2869 = vpop.f32.mrb[0].mxu0
    %2870 = vmatprep.mubr.f32.mxu0 0.0
    %v2871 = vand.u32 %v2033, 4294901760
    %v2872 = vsub.f32 %v2033, %v2871
    %2873 = vmatmul.mubr.f32.gmra.mrb[0].mxu0 %v2872
    %v2874 = vpop.f32.mrb[0].mxu0
    %v2875 = vadd.f32 %v2608, %v2874
    %v2876 = vpop.f32.mrb[0].mxu0
    %2877 = vmatprep.mubr.f32.mxu0 0.0
    %v2878 = vand.u32 %v2036, 4294901760
    %v2879 = vsub.f32 %v2036, %v2878
    %2880 = vmatmul.mubr.f32.gmra.mrb[0].mxu0 %v2879
    %v2881 = vpop.f32.mrb[0].mxu0
    %v2882 = vadd.f32 %v2614, %v2881
    %v2883 = vpop.f32.mrb[0].mxu0
    %2884 = vmatprep.mubr.f32.mxu0 0.0
    %v2885 = vand.u32 %v2039, 4294901760
    %v2886 = vsub.f32 %v2039, %v2885
    %2887 = vmatmul.mubr.f32.gmra.mrb[0].mxu0 %v2886
    %v2888 = vpop.f32.mrb[0].mxu0
    %v2889 = vadd.f32 %v2620, %v2888
    %v2890 = vpop.f32.mrb[0].mxu0
    %2891 = vmatprep.mubr.f32.mxu0 0.0
    %v2892 = vand.u32 %v2042, 4294901760
    %v2893 = vsub.f32 %v2042, %v2892
    %2894 = vmatmul.mubr.f32.gmra.mrb[0].mxu0 %v2893
    %v2895 = vpop.f32.mrb[0].mxu0
    %v2896 = vadd.f32 %v2626, %v2895
    %v2897 = vpop.f32.mrb[0].mxu0
    %2898 = vmatprep.mubr.f32.mxu0 0.0
    %v2899 = vand.u32 %v2045, 4294901760
    %v2900 = vsub.f32 %v2045, %v2899
    %2901 = vmatmul.mubr.f32.gmra.mrb[0].mxu0 %v2900
    %v2902 = vpop.f32.mrb[0].mxu0
    %v2903 = vadd.f32 %v2632, %v2902
    %v2904 = vpop.f32.mrb[0].mxu0
    %2905 = vmatprep.mubr.f32.mxu0 0.0
    %v2906 = vand.u32 %v2048, 4294901760
    %v2907 = vsub.f32 %v2048, %v2906
    %2908 = vmatmul.mubr.f32.gmra.mrb[0].mxu0 %v2907
    %v2909 = vpop.f32.mrb[0].mxu0
    %v2910 = vadd.f32 %v2638, %v2909
    %v2911 = vpop.f32.mrb[0].mxu0
    %2912 = vmatprep.mubr.f32.mxu0 0.0
    %v2913 = vand.u32 %v2051, 4294901760
    %v2914 = vsub.f32 %v2051, %v2913
    %2915 = vmatmul.mubr.f32.gmra.mrb[0].mxu0 %v2914
    %v2916 = vpop.f32.mrb[0].mxu0
    %v2917 = vadd.f32 %v2644, %v2916
    %v2918 = vpop.f32.mrb[0].mxu0
    %2919 = vmatprep.mubr.f32.mxu0 0.0
    %v2920 = vand.u32 %v2054, 4294901760
    %v2921 = vsub.f32 %v2054, %v2920
    %2922 = vmatmul.mubr.f32.gmra.mrb[0].mxu0 %v2921
    %v2923 = vpop.f32.mrb[0].mxu0
    %v2924 = vadd.f32 %v2650, %v2923
    %v2925 = vpop.f32.mrb[0].mxu0
    %2926 = vmatprep.mubr.f32.mxu0 0.0
    %v2927 = vand.u32 %v2057, 4294901760
    %v2928 = vsub.f32 %v2057, %v2927
    %2929 = vmatmul.mubr.f32.gmra.mrb[0].mxu0 %v2928
    %v2930 = vpop.f32.mrb[0].mxu0
    %v2931 = vadd.f32 %v2656, %v2930
    %v2932 = vpop.f32.mrb[0].mxu0
    %2933 = vmatprep.mubr.f32.mxu0 0.0
    %v2934 = vand.u32 %v2060, 4294901760
    %v2935 = vsub.f32 %v2060, %v2934
    %2936 = vmatmul.mubr.f32.gmra.mrb[0].mxu0 %v2935
    %v2937 = vpop.f32.mrb[0].mxu0
    %v2938 = vadd.f32 %v2662, %v2937
    %v2939 = vpop.f32.mrb[0].mxu0
    %2940 = vmatprep.mubr.f32.mxu0 0.0
    %v2941 = vand.u32 %v2063, 4294901760
    %v2942 = vsub.f32 %v2063, %v2941
    %2943 = vmatmul.mubr.f32.gmra.mrb[0].mxu0 %v2942
    %v2944 = vpop.f32.mrb[0].mxu0
    %v2945 = vadd.f32 %v2668, %v2944
    %v2946 = vpop.f32.mrb[0].mxu0
    %2947 = vmatprep.mubr.f32.mxu0 0.0
    %v2948 = vand.u32 %v2066, 4294901760
    %v2949 = vsub.f32 %v2066, %v2948
    %2950 = vmatmul.mubr.f32.gmra.mrb[0].mxu0 %v2949
    %v2951 = vpop.f32.mrb[0].mxu0
    %v2952 = vadd.f32 %v2674, %v2951
    %v2953 = vpop.f32.mrb[0].mxu0
    %2954 = vmatprep.mubr.f32.mxu0 0.0
    %v2955 = vand.u32 %v2069, 4294901760
    %v2956 = vsub.f32 %v2069, %v2955
    %2957 = vmatmul.mubr.f32.gmra.mrb[0].mxu0 %v2956
    %v2958 = vpop.f32.mrb[0].mxu0
    %v2959 = vadd.f32 %v2680, %v2958
    %v2960 = vpop.f32.mrb[0].mxu0
    %2961 = vmatprep.mubr.f32.mxu0 0.0
    %v2962 = vand.u32 %v2072, 4294901760
    %v2963 = vsub.f32 %v2072, %v2962
    %2964 = vmatmul.mubr.f32.gmra.mrb[0].mxu0 %v2963
    %v2965 = vpop.f32.mrb[0].mxu0
    %v2966 = vadd.f32 %v2686, %v2965
    %v2967 = vpop.f32.mrb[0].mxu0
    %2968 = vmatprep.mubr.f32.mxu0 0.0
    %v2969 = vand.u32 %v2075, 4294901760
    %v2970 = vsub.f32 %v2075, %v2969
    %2971 = vmatmul.mubr.f32.gmra.mrb[0].mxu0 %v2970
    %v2972 = vpop.f32.mrb[0].mxu0
    %v2973 = vadd.f32 %v2692, %v2972
    %v2974 = vpop.f32.mrb[0].mxu0
    %2975 = vmatprep.mubr.f32.mxu0 0.0
    %v2976 = vand.u32 %v2078, 4294901760
    %v2977 = vsub.f32 %v2078, %v2976
    %2978 = vmatmul.mubr.f32.gmra.mrb[0].mxu0 %v2977
    %v2979 = vpop.f32.mrb[0].mxu0
    %v2980 = vadd.f32 %v2698, %v2979
    %v2981 = vpop.f32.mrb[0].mxu0
    %2982 = vmatprep.mubr.f32.mxu0 0.0
    %v2983 = vand.u32 %v2081, 4294901760
    %v2984 = vsub.f32 %v2081, %v2983
    %2985 = vmatmul.mubr.f32.gmra.mrb[0].mxu0 %v2984
    %v2986 = vpop.f32.mrb[0].mxu0
    %v2987 = vadd.f32 %v2704, %v2986
    %v2988 = vpop.f32.mrb[0].mxu0
    %2989 = vmatprep.mubr.f32.mxu0 0.0
    %v2990 = vand.u32 %v2084, 4294901760
    %v2991 = vsub.f32 %v2084, %v2990
    %2992 = vmatmul.mubr.f32.gmra.mrb[0].mxu0 %v2991
    %v2993 = vpop.f32.mrb[0].mxu0
    %v2994 = vadd.f32 %v2710, %v2993
    %v2995 = vpop.f32.mrb[0].mxu0
    %2996 = vmatprep.mubr.f32.mxu0 0.0
    %v2997 = vand.u32 %v2087, 4294901760
    %v2998 = vsub.f32 %v2087, %v2997
    %2999 = vmatmul.mubr.f32.gmra.mrb[0].mxu0 %v2998
    %v3000 = vpop.f32.mrb[0].mxu0
    %v3001 = vadd.f32 %v2716, %v3000
    %v3002 = vpop.f32.mrb[0].mxu0
    %3003 = vmatprep.mubr.f32.mxu0 0.0
    %v3004 = vand.u32 %v2090, 4294901760
    %v3005 = vsub.f32 %v2090, %v3004
    %3006 = vmatmul.mubr.f32.gmra.mrb[0].mxu0 %v3005
    %v3007 = vpop.f32.mrb[0].mxu0
    %v3008 = vadd.f32 %v2722, %v3007
    %v3009 = vpop.f32.mrb[0].mxu0
    %3010 = vmatprep.mubr.f32.mxu0 0.0
    %v3011 = vand.u32 %v2093, 4294901760
    %v3012 = vsub.f32 %v2093, %v3011
    %3013 = vmatmul.mubr.f32.gmra.mrb[0].mxu0 %v3012
    %v3014 = vpop.f32.mrb[0].mxu0
    %v3015 = vadd.f32 %v2728, %v3014
    %v3016 = vpop.f32.mrb[0].mxu0
    %3017 = vmatprep.mubr.f32.mxu0 0.0
    %v3018 = vand.u32 %v2096, 4294901760
    %v3019 = vsub.f32 %v2096, %v3018
    %3020 = vmatmul.mubr.f32.gmra.mrb[0].mxu0 %v3019
    %v3021 = vpop.f32.mrb[0].mxu0
    %v3022 = vadd.f32 %v2734, %v3021
    %v3023 = vpop.f32.mrb[0].mxu0
    %3024 = vmatprep.mubr.f32.mxu0 0.0
    %v3025 = vand.u32 %v2099, 4294901760
    %v3026 = vsub.f32 %v2099, %v3025
    %3027 = vmatmul.mubr.f32.gmra.mrb[0].mxu0 %v3026
    %v3028 = vpop.f32.mrb[0].mxu0
    %v3029 = vadd.f32 %v2740, %v3028
    %v3030 = vpop.f32.mrb[0].mxu0
    %3031 = vmatprep.mubr.f32.mxu0 0.0
    %v3032 = vand.u32 %v2102, 4294901760
    %v3033 = vsub.f32 %v2102, %v3032
    %3034 = vmatmul.mubr.f32.gmra.mrb[0].mxu0 %v3033
    %v3035 = vpop.f32.mrb[0].mxu0
    %v3036 = vadd.f32 %v2746, %v3035
    %v3037 = vpop.f32.mrb[0].mxu0
    %3038 = vmatprep.mubr.f32.mxu0 0.0
    %v3039 = vand.u32 %v2105, 4294901760
    %v3040 = vsub.f32 %v2105, %v3039
    %3041 = vmatmul.mubr.f32.gmra.mrb[0].mxu0 %v3040
    %v3042 = vpop.f32.mrb[0].mxu0
    %v3043 = vadd.f32 %v2752, %v3042
    %v3044 = vpop.f32.mrb[0].mxu0
    %3045 = vmatprep.mubr.f32.mxu0 0.0
    %v3046 = vand.u32 %v2108, 4294901760
    %v3047 = vsub.f32 %v2108, %v3046
    %3048 = vmatmul.mubr.f32.gmra.mrb[0].mxu0 %v3047
    %v3049 = vpop.f32.mrb[0].mxu0
    %v3050 = vadd.f32 %v2758, %v3049
    %v3051 = vpop.f32.mrb[0].mxu0
    %3052 = vmatprep.mubr.f32.mxu0 0.0
    %v3053 = vand.u32 %v2111, 4294901760
    %v3054 = vsub.f32 %v2111, %v3053
    %3055 = vmatmul.mubr.f32.gmra.mrb[0].mxu0 %v3054
    %v3056 = vpop.f32.mrb[0].mxu0
    %v3057 = vadd.f32 %v2764, %v3056
    %v3058 = vpop.f32.mrb[0].mxu0
    %3059 = vmatprep.mubr.f32.mxu0 0.0
    %v3060 = vand.u32 %v2114, 4294901760
    %v3061 = vsub.f32 %v2114, %v3060
    %3062 = vmatmul.mubr.f32.gmra.mrb[0].mxu0 %v3061
    %v3063 = vpop.f32.mrb[0].mxu0
    %v3064 = vadd.f32 %v2770, %v3063
    %v3065 = vpop.f32.mrb[0].mxu0
    %3066 = vmatprep.mubr.f32.mxu0 0.0
    %v3067 = vand.u32 %v2117, 4294901760
    %v3068 = vsub.f32 %v2117, %v3067
    %3069 = vmatmul.mubr.f32.gmra.mrb[0].mxu0 %v3068
    %v3070 = vpop.f32.mrb[0].mxu0
    %v3071 = vadd.f32 %v2776, %v3070
    %v3072 = vpop.f32.mrb[0].mxu0
    %3073 = vmatprep.mubr.f32.mxu0 0.0
    %v3074 = vand.u32 %v2120, 4294901760
    %v3075 = vsub.f32 %v2120, %v3074
    %3076 = vmatmul.mubr.f32.gmra.mrb[0].mxu0 %v3075
    %v3077 = vpop.f32.mrb[0].mxu0
    %v3078 = vadd.f32 %v2782, %v3077
    %v3079 = vpop.f32.mrb[0].mxu0
    %3080 = vmatprep.mubr.f32.mxu0 0.0
    %v3081 = vand.u32 %v2123, 4294901760
    %v3082 = vsub.f32 %v2123, %v3081
    %3083 = vmatmul.mubr.f32.gmra.mrb[0].mxu0 %v3082
    %v3084 = vpop.f32.mrb[0].mxu0
    %v3085 = vadd.f32 %v2788, %v3084
    %v3086 = vpop.f32.mrb[0].mxu0
    %3087 = vdwg.mxu0
    %3088 = vmatprep.subr.mxu0 0.0
    %v3089 = vand.u32 %v72, 4294901760
    %3090 = vmatpush1.msra.mxu0 %v3089
    %3091 = vmatprep.subr.mxu0 0.0
    %v3092 = vand.u32 %v73, 4294901760
    %3093 = vmatpush1.msra.mxu0 %v3092
    %3094 = vmatprep.subr.mxu0 0.0
    %v3095 = vand.u32 %v74, 4294901760
    %3096 = vmatpush1.msra.mxu0 %v3095
    %3097 = vmatprep.subr.mxu0 0.0
    %v3098 = vand.u32 %v75, 4294901760
    %3099 = vmatpush1.msra.mxu0 %v3098
    %3100 = vmatprep.subr.mxu0 0.0
    %3101 = vmatpush1.msra.mxu0 0.0
    %3102 = vmatprep.subr.mxu0 0.0
    %3103 = vmatpush1.msra.mxu0 0.0
    %3104 = vmatprep.subr.mxu0 0.0
    %3105 = vmatpush1.msra.mxu0 0.0
    %3106 = vmatprep.subr.mxu0 0.0
    %3107 = vmatpush1.msra.mxu0 0.0
    %3108 = vmatprep.subr.mxu0 0.0
    %3109 = vmatpush1.msra.mxu0 0.0
    %3110 = vmatprep.subr.mxu0 0.0
    %3111 = vmatpush1.msra.mxu0 0.0
    %3112 = vmatprep.subr.mxu0 0.0
    %3113 = vmatpush1.msra.mxu0 0.0
    %3114 = vmatprep.subr.mxu0 0.0
    %3115 = vmatpush1.msra.mxu0 0.0
    %3116 = vmatprep.subr.mxu0 0.0
    %3117 = vmatpush1.msra.mxu0 0.0
    %3118 = vmatprep.subr.mxu0 0.0
    %3119 = vmatpush1.msra.mxu0 0.0
    %3120 = vmatprep.subr.mxu0 0.0
    %3121 = vmatpush1.msra.mxu0 0.0
    %3122 = vmatprep.subr.mxu0 0.0
    %3123 = vmatpush1.msra.mxu0 0.0
    %3124 = vmatprep.subr.mxu0 0.0
    %3125 = vmatpush1.msra.mxu0 0.0
    %3126 = vmatprep.subr.mxu0 0.0
    %3127 = vmatpush1.msra.mxu0 0.0
    %3128 = vmatprep.subr.mxu0 0.0
    %3129 = vmatpush1.msra.mxu0 0.0
    %3130 = vmatprep.subr.mxu0 0.0
    %3131 = vmatpush1.msra.mxu0 0.0
    %3132 = vmatprep.subr.mxu0 0.0
    %3133 = vmatpush1.msra.mxu0 0.0
    %3134 = vmatprep.subr.mxu0 0.0
    %3135 = vmatpush1.msra.mxu0 0.0
    %3136 = vmatprep.subr.mxu0 0.0
    %3137 = vmatpush1.msra.mxu0 0.0
    %3138 = vmatprep.subr.mxu0 0.0
    %3139 = vmatpush1.msra.mxu0 0.0
    %3140 = vmatprep.subr.mxu0 0.0
    %3141 = vmatpush1.msra.mxu0 0.0
    %3142 = vmatprep.subr.mxu0 0.0
    %3143 = vmatpush1.msra.mxu0 0.0
    %3144 = vmatprep.subr.mxu0 0.0
    %3145 = vmatpush1.msra.mxu0 0.0
    %3146 = vmatprep.subr.mxu0 0.0
    %3147 = vmatpush1.msra.mxu0 0.0
    %3148 = vmatprep.subr.mxu0 0.0
    %3149 = vmatpush1.msra.mxu0 0.0
    %3150 = vmatprep.subr.mxu0 0.0
    %3151 = vmatpush1.msra.mxu0 0.0
    %3152 = vmatprep.subr.mxu0 0.0
    %3153 = vmatpush1.msra.mxu0 0.0
    %3154 = vmatprep.subr.mxu0 0.0
    %3155 = vmatpush1.msra.mxu0 0.0
    %3156 = vmatprep.mubr.f32.mxu0 0.0
    %v3157 = vand.u32 %v2030, 4294901760
    %v3158 = vsub.f32 %v2030, %v3157
    %v3159 = vand.u32 %v3158, 4294901760
    %3160 = vmatmul.mubr.f32.gmra.mrb[0].mxu0 %v3159
    %v3161 = vpop.f32.mrb[0].mxu0
    %v3162 = vadd.f32 %v2868, %v3161
    %v3163 = vpop.f32.mrb[0].mxu0
    %3164 = vmatprep.mubr.f32.mxu0 0.0
    %v3165 = vand.u32 %v2033, 4294901760
    %v3166 = vsub.f32 %v2033, %v3165
    %v3167 = vand.u32 %v3166, 4294901760
    %3168 = vmatmul.mubr.f32.gmra.mrb[0].mxu0 %v3167
    %v3169 = vpop.f32.mrb[0].mxu0
    %v3170 = vadd.f32 %v2875, %v3169
    %v3171 = vpop.f32.mrb[0].mxu0
    %3172 = vmatprep.mubr.f32.mxu0 0.0
    %v3173 = vand.u32 %v2036, 4294901760
    %v3174 = vsub.f32 %v2036, %v3173
    %v3175 = vand.u32 %v3174, 4294901760
    %3176 = vmatmul.mubr.f32.gmra.mrb[0].mxu0 %v3175
    %v3177 = vpop.f32.mrb[0].mxu0
    %v3178 = vadd.f32 %v2882, %v3177
    %v3179 = vpop.f32.mrb[0].mxu0
    %3180 = vmatprep.mubr.f32.mxu0 0.0
    %v3181 = vand.u32 %v2039, 4294901760
    %v3182 = vsub.f32 %v2039, %v3181
    %v3183 = vand.u32 %v3182, 4294901760
    %3184 = vmatmul.mubr.f32.gmra.mrb[0].mxu0 %v3183
    %v3185 = vpop.f32.mrb[0].mxu0
    %v3186 = vadd.f32 %v2889, %v3185
    %v3187 = vpop.f32.mrb[0].mxu0
    %3188 = vmatprep.mubr.f32.mxu0 0.0
    %v3189 = vand.u32 %v2042, 4294901760
    %v3190 = vsub.f32 %v2042, %v3189
    %v3191 = vand.u32 %v3190, 4294901760
    %3192 = vmatmul.mubr.f32.gmra.mrb[0].mxu0 %v3191
    %v3193 = vpop.f32.mrb[0].mxu0
    %v3194 = vadd.f32 %v2896, %v3193
    %v3195 = vpop.f32.mrb[0].mxu0
    %3196 = vmatprep.mubr.f32.mxu0 0.0
    %v3197 = vand.u32 %v2045, 4294901760
    %v3198 = vsub.f32 %v2045, %v3197
    %v3199 = vand.u32 %v3198, 4294901760
    %3200 = vmatmul.mubr.f32.gmra.mrb[0].mxu0 %v3199
    %v3201 = vpop.f32.mrb[0].mxu0
    %v3202 = vadd.f32 %v2903, %v3201
    %v3203 = vpop.f32.mrb[0].mxu0
    %3204 = vmatprep.mubr.f32.mxu0 0.0
    %v3205 = vand.u32 %v2048, 4294901760
    %v3206 = vsub.f32 %v2048, %v3205
    %v3207 = vand.u32 %v3206, 4294901760
    %3208 = vmatmul.mubr.f32.gmra.mrb[0].mxu0 %v3207
    %v3209 = vpop.f32.mrb[0].mxu0
    %v3210 = vadd.f32 %v2910, %v3209
    %v3211 = vpop.f32.mrb[0].mxu0
    %3212 = vmatprep.mubr.f32.mxu0 0.0
    %v3213 = vand.u32 %v2051, 4294901760
    %v3214 = vsub.f32 %v2051, %v3213
    %v3215 = vand.u32 %v3214, 4294901760
    %3216 = vmatmul.mubr.f32.gmra.mrb[0].mxu0 %v3215
    %v3217 = vpop.f32.mrb[0].mxu0
    %v3218 = vadd.f32 %v2917, %v3217
    %v3219 = vpop.f32.mrb[0].mxu0
    %3220 = vmatprep.mubr.f32.mxu0 0.0
    %v3221 = vand.u32 %v2054, 4294901760
    %v3222 = vsub.f32 %v2054, %v3221
    %v3223 = vand.u32 %v3222, 4294901760
    %3224 = vmatmul.mubr.f32.gmra.mrb[0].mxu0 %v3223
    %v3225 = vpop.f32.mrb[0].mxu0
    %v3226 = vadd.f32 %v2924, %v3225
    %v3227 = vpop.f32.mrb[0].mxu0
    %3228 = vmatprep.mubr.f32.mxu0 0.0
    %v3229 = vand.u32 %v2057, 4294901760
    %v3230 = vsub.f32 %v2057, %v3229
    %v3231 = vand.u32 %v3230, 4294901760
    %3232 = vmatmul.mubr.f32.gmra.mrb[0].mxu0 %v3231
    %v3233 = vpop.f32.mrb[0].mxu0
    %v3234 = vadd.f32 %v2931, %v3233
    %v3235 = vpop.f32.mrb[0].mxu0
    %3236 = vmatprep.mubr.f32.mxu0 0.0
    %v3237 = vand.u32 %v2060, 4294901760
    %v3238 = vsub.f32 %v2060, %v3237
    %v3239 = vand.u32 %v3238, 4294901760
    %3240 = vmatmul.mubr.f32.gmra.mrb[0].mxu0 %v3239
    %v3241 = vpop.f32.mrb[0].mxu0
    %v3242 = vadd.f32 %v2938, %v3241
    %v3243 = vpop.f32.mrb[0].mxu0
    %3244 = vmatprep.mubr.f32.mxu0 0.0
    %v3245 = vand.u32 %v2063, 4294901760
    %v3246 = vsub.f32 %v2063, %v3245
    %v3247 = vand.u32 %v3246, 4294901760
    %3248 = vmatmul.mubr.f32.gmra.mrb[0].mxu0 %v3247
    %v3249 = vpop.f32.mrb[0].mxu0
    %v3250 = vadd.f32 %v2945, %v3249
    %v3251 = vpop.f32.mrb[0].mxu0
    %3252 = vmatprep.mubr.f32.mxu0 0.0
    %v3253 = vand.u32 %v2066, 4294901760
    %v3254 = vsub.f32 %v2066, %v3253
    %v3255 = vand.u32 %v3254, 4294901760
    %3256 = vmatmul.mubr.f32.gmra.mrb[0].mxu0 %v3255
    %v3257 = vpop.f32.mrb[0].mxu0
    %v3258 = vadd.f32 %v2952, %v3257
    %v3259 = vpop.f32.mrb[0].mxu0
    %3260 = vmatprep.mubr.f32.mxu0 0.0
    %v3261 = vand.u32 %v2069, 4294901760
    %v3262 = vsub.f32 %v2069, %v3261
    %v3263 = vand.u32 %v3262, 4294901760
    %3264 = vmatmul.mubr.f32.gmra.mrb[0].mxu0 %v3263
    %v3265 = vpop.f32.mrb[0].mxu0
    %v3266 = vadd.f32 %v2959, %v3265
    %v3267 = vpop.f32.mrb[0].mxu0
    %3268 = vmatprep.mubr.f32.mxu0 0.0
    %v3269 = vand.u32 %v2072, 4294901760
    %v3270 = vsub.f32 %v2072, %v3269
    %v3271 = vand.u32 %v3270, 4294901760
    %3272 = vmatmul.mubr.f32.gmra.mrb[0].mxu0 %v3271
    %v3273 = vpop.f32.mrb[0].mxu0
    %v3274 = vadd.f32 %v2966, %v3273
    %v3275 = vpop.f32.mrb[0].mxu0
    %3276 = vmatprep.mubr.f32.mxu0 0.0
    %v3277 = vand.u32 %v2075, 4294901760
    %v3278 = vsub.f32 %v2075, %v3277
    %v3279 = vand.u32 %v3278, 4294901760
    %3280 = vmatmul.mubr.f32.gmra.mrb[0].mxu0 %v3279
    %v3281 = vpop.f32.mrb[0].mxu0
    %v3282 = vadd.f32 %v2973, %v3281
    %v3283 = vpop.f32.mrb[0].mxu0
    %3284 = vmatprep.mubr.f32.mxu0 0.0
    %v3285 = vand.u32 %v2078, 4294901760
    %v3286 = vsub.f32 %v2078, %v3285
    %v3287 = vand.u32 %v3286, 4294901760
    %3288 = vmatmul.mubr.f32.gmra.mrb[0].mxu0 %v3287
    %v3289 = vpop.f32.mrb[0].mxu0
    %v3290 = vadd.f32 %v2980, %v3289
    %v3291 = vpop.f32.mrb[0].mxu0
    %3292 = vmatprep.mubr.f32.mxu0 0.0
    %v3293 = vand.u32 %v2081, 4294901760
    %v3294 = vsub.f32 %v2081, %v3293
    %v3295 = vand.u32 %v3294, 4294901760
    %3296 = vmatmul.mubr.f32.gmra.mrb[0].mxu0 %v3295
    %v3297 = vpop.f32.mrb[0].mxu0
    %v3298 = vadd.f32 %v2987, %v3297
    %v3299 = vpop.f32.mrb[0].mxu0
    %3300 = vmatprep.mubr.f32.mxu0 0.0
    %v3301 = vand.u32 %v2084, 4294901760
    %v3302 = vsub.f32 %v2084, %v3301
    %v3303 = vand.u32 %v3302, 4294901760
    %3304 = vmatmul.mubr.f32.gmra.mrb[0].mxu0 %v3303
    %v3305 = vpop.f32.mrb[0].mxu0
    %v3306 = vadd.f32 %v2994, %v3305
    %v3307 = vpop.f32.mrb[0].mxu0
    %3308 = vmatprep.mubr.f32.mxu0 0.0
    %v3309 = vand.u32 %v2087, 4294901760
    %v3310 = vsub.f32 %v2087, %v3309
    %v3311 = vand.u32 %v3310, 4294901760
    %3312 = vmatmul.mubr.f32.gmra.mrb[0].mxu0 %v3311
    %v3313 = vpop.f32.mrb[0].mxu0
    %v3314 = vadd.f32 %v3001, %v3313
    %v3315 = vpop.f32.mrb[0].mxu0
    %3316 = vmatprep.mubr.f32.mxu0 0.0
    %v3317 = vand.u32 %v2090, 4294901760
    %v3318 = vsub.f32 %v2090, %v3317
    %v3319 = vand.u32 %v3318, 4294901760
    %3320 = vmatmul.mubr.f32.gmra.mrb[0].mxu0 %v3319
    %v3321 = vpop.f32.mrb[0].mxu0
    %v3322 = vadd.f32 %v3008, %v3321
    %v3323 = vpop.f32.mrb[0].mxu0
    %3324 = vmatprep.mubr.f32.mxu0 0.0
    %v3325 = vand.u32 %v2093, 4294901760
    %v3326 = vsub.f32 %v2093, %v3325
    %v3327 = vand.u32 %v3326, 4294901760
    %3328 = vmatmul.mubr.f32.gmra.mrb[0].mxu0 %v3327
    %v3329 = vpop.f32.mrb[0].mxu0
    %v3330 = vadd.f32 %v3015, %v3329
    %v3331 = vpop.f32.mrb[0].mxu0
    %3332 = vmatprep.mubr.f32.mxu0 0.0
    %v3333 = vand.u32 %v2096, 4294901760
    %v3334 = vsub.f32 %v2096, %v3333
    %v3335 = vand.u32 %v3334, 4294901760
    %3336 = vmatmul.mubr.f32.gmra.mrb[0].mxu0 %v3335
    %v3337 = vpop.f32.mrb[0].mxu0
    %v3338 = vadd.f32 %v3022, %v3337
    %v3339 = vpop.f32.mrb[0].mxu0
    %3340 = vmatprep.mubr.f32.mxu0 0.0
    %v3341 = vand.u32 %v2099, 4294901760
    %v3342 = vsub.f32 %v2099, %v3341
    %v3343 = vand.u32 %v3342, 4294901760
    %3344 = vmatmul.mubr.f32.gmra.mrb[0].mxu0 %v3343
    %v3345 = vpop.f32.mrb[0].mxu0
    %v3346 = vadd.f32 %v3029, %v3345
    %v3347 = vpop.f32.mrb[0].mxu0
    %3348 = vmatprep.mubr.f32.mxu0 0.0
    %v3349 = vand.u32 %v2102, 4294901760
    %v3350 = vsub.f32 %v2102, %v3349
    %v3351 = vand.u32 %v3350, 4294901760
    %3352 = vmatmul.mubr.f32.gmra.mrb[0].mxu0 %v3351
    %v3353 = vpop.f32.mrb[0].mxu0
    %v3354 = vadd.f32 %v3036, %v3353
    %v3355 = vpop.f32.mrb[0].mxu0
    %3356 = vmatprep.mubr.f32.mxu0 0.0
    %v3357 = vand.u32 %v2105, 4294901760
    %v3358 = vsub.f32 %v2105, %v3357
    %v3359 = vand.u32 %v3358, 4294901760
    %3360 = vmatmul.mubr.f32.gmra.mrb[0].mxu0 %v3359
    %v3361 = vpop.f32.mrb[0].mxu0
    %v3362 = vadd.f32 %v3043, %v3361
    %v3363 = vpop.f32.mrb[0].mxu0
    %3364 = vmatprep.mubr.f32.mxu0 0.0
    %v3365 = vand.u32 %v2108, 4294901760
    %v3366 = vsub.f32 %v2108, %v3365
    %v3367 = vand.u32 %v3366, 4294901760
    %3368 = vmatmul.mubr.f32.gmra.mrb[0].mxu0 %v3367
    %v3369 = vpop.f32.mrb[0].mxu0
    %v3370 = vadd.f32 %v3050, %v3369
    %v3371 = vpop.f32.mrb[0].mxu0
    %3372 = vmatprep.mubr.f32.mxu0 0.0
    %v3373 = vand.u32 %v2111, 4294901760
    %v3374 = vsub.f32 %v2111, %v3373
    %v3375 = vand.u32 %v3374, 4294901760
    %3376 = vmatmul.mubr.f32.gmra.mrb[0].mxu0 %v3375
    %v3377 = vpop.f32.mrb[0].mxu0
    %v3378 = vadd.f32 %v3057, %v3377
    %v3379 = vpop.f32.mrb[0].mxu0
    %3380 = vmatprep.mubr.f32.mxu0 0.0
    %v3381 = vand.u32 %v2114, 4294901760
    %v3382 = vsub.f32 %v2114, %v3381
    %v3383 = vand.u32 %v3382, 4294901760
    %3384 = vmatmul.mubr.f32.gmra.mrb[0].mxu0 %v3383
    %v3385 = vpop.f32.mrb[0].mxu0
    %v3386 = vadd.f32 %v3064, %v3385
    %v3387 = vpop.f32.mrb[0].mxu0
    %3388 = vmatprep.mubr.f32.mxu0 0.0
    %v3389 = vand.u32 %v2117, 4294901760
    %v3390 = vsub.f32 %v2117, %v3389
    %v3391 = vand.u32 %v3390, 4294901760
    %3392 = vmatmul.mubr.f32.gmra.mrb[0].mxu0 %v3391
    %v3393 = vpop.f32.mrb[0].mxu0
    %v3394 = vadd.f32 %v3071, %v3393
    %v3395 = vpop.f32.mrb[0].mxu0
    %3396 = vmatprep.mubr.f32.mxu0 0.0
    %v3397 = vand.u32 %v2120, 4294901760
    %v3398 = vsub.f32 %v2120, %v3397
    %v3399 = vand.u32 %v3398, 4294901760
    %3400 = vmatmul.mubr.f32.gmra.mrb[0].mxu0 %v3399
    %v3401 = vpop.f32.mrb[0].mxu0
    %v3402 = vadd.f32 %v3078, %v3401
    %v3403 = vpop.f32.mrb[0].mxu0
    %3404 = vmatprep.mubr.f32.mxu0 0.0
    %v3405 = vand.u32 %v2123, 4294901760
    %v3406 = vsub.f32 %v2123, %v3405
    %v3407 = vand.u32 %v3406, 4294901760
    %3408 = vmatmul.mubr.f32.gmra.mrb[0].mxu0 %v3407
    %v3409 = vpop.f32.mrb[0].mxu0
    %v3410 = vadd.f32 %v3085, %v3409
    %v3411 = vpop.f32.mrb[0].mxu0
    %3412 = vdwg.mxu0
    %3413 = vmatprep.subr.mxu0 0.0
    %v3414 = vand.u32 %v72, 4294901760
    %v3415 = vsub.f32 %v72, %v3414
    %v3416 = vand.u32 %v3415, 4294901760
    %3417 = vmatpush1.msra.mxu0 %v3416
    %3418 = vmatprep.subr.mxu0 0.0
    %v3419 = vand.u32 %v73, 4294901760
    %v3420 = vsub.f32 %v73, %v3419
    %v3421 = vand.u32 %v3420, 4294901760
    %3422 = vmatpush1.msra.mxu0 %v3421
    %3423 = vmatprep.subr.mxu0 0.0
    %v3424 = vand.u32 %v74, 4294901760
    %v3425 = vsub.f32 %v74, %v3424
    %v3426 = vand.u32 %v3425, 4294901760
    %3427 = vmatpush1.msra.mxu0 %v3426
    %3428 = vmatprep.subr.mxu0 0.0
    %v3429 = vand.u32 %v75, 4294901760
    %v3430 = vsub.f32 %v75, %v3429
    %v3431 = vand.u32 %v3430, 4294901760
    %3432 = vmatpush1.msra.mxu0 %v3431
    %3433 = vmatprep.subr.mxu0 0.0
    %3434 = vmatpush1.msra.mxu0 0.0
    %3435 = vmatprep.subr.mxu0 0.0
    %3436 = vmatpush1.msra.mxu0 0.0
    %3437 = vmatprep.subr.mxu0 0.0
    %3438 = vmatpush1.msra.mxu0 0.0
    %3439 = vmatprep.subr.mxu0 0.0
    %3440 = vmatpush1.msra.mxu0 0.0
    %3441 = vmatprep.subr.mxu0 0.0
    %3442 = vmatpush1.msra.mxu0 0.0
    %3443 = vmatprep.subr.mxu0 0.0
    %3444 = vmatpush1.msra.mxu0 0.0
    %3445 = vmatprep.subr.mxu0 0.0
    %3446 = vmatpush1.msra.mxu0 0.0
    %3447 = vmatprep.subr.mxu0 0.0
    %3448 = vmatpush1.msra.mxu0 0.0
    %3449 = vmatprep.subr.mxu0 0.0
    %3450 = vmatpush1.msra.mxu0 0.0
    %3451 = vmatprep.subr.mxu0 0.0
    %3452 = vmatpush1.msra.mxu0 0.0
    %3453 = vmatprep.subr.mxu0 0.0
    %3454 = vmatpush1.msra.mxu0 0.0
    %3455 = vmatprep.subr.mxu0 0.0
    %3456 = vmatpush1.msra.mxu0 0.0
    %3457 = vmatprep.subr.mxu0 0.0
    %3458 = vmatpush1.msra.mxu0 0.0
    %3459 = vmatprep.subr.mxu0 0.0
    %3460 = vmatpush1.msra.mxu0 0.0
    %3461 = vmatprep.subr.mxu0 0.0
    %3462 = vmatpush1.msra.mxu0 0.0
    %3463 = vmatprep.subr.mxu0 0.0
    %3464 = vmatpush1.msra.mxu0 0.0
    %3465 = vmatprep.subr.mxu0 0.0
    %3466 = vmatpush1.msra.mxu0 0.0
    %3467 = vmatprep.subr.mxu0 0.0
    %3468 = vmatpush1.msra.mxu0 0.0
    %3469 = vmatprep.subr.mxu0 0.0
    %3470 = vmatpush1.msra.mxu0 0.0
    %3471 = vmatprep.subr.mxu0 0.0
    %3472 = vmatpush1.msra.mxu0 0.0
    %3473 = vmatprep.subr.mxu0 0.0
    %3474 = vmatpush1.msra.mxu0 0.0
    %3475 = vmatprep.subr.mxu0 0.0
    %3476 = vmatpush1.msra.mxu0 0.0
    %3477 = vmatprep.subr.mxu0 0.0
    %3478 = vmatpush1.msra.mxu0 0.0
    %3479 = vmatprep.subr.mxu0 0.0
    %3480 = vmatpush1.msra.mxu0 0.0
    %3481 = vmatprep.subr.mxu0 0.0
    %3482 = vmatpush1.msra.mxu0 0.0
    %3483 = vmatprep.subr.mxu0 0.0
    %3484 = vmatpush1.msra.mxu0 0.0
    %3485 = vmatprep.subr.mxu0 0.0
    %3486 = vmatpush1.msra.mxu0 0.0
    %3487 = vmatprep.subr.mxu0 0.0
    %3488 = vmatpush1.msra.mxu0 0.0
    %3489 = vmatprep.mubr.f32.mxu0 0.0
    %v3490 = vand.u32 %v2030, 4294901760
    %3491 = vmatmul.mubr.f32.gmra.mrb[0].mxu0 %v3490
    %v3492 = vpop.f32.mrb[0].mxu0
    %v3493 = vadd.f32 %v3162, %v3492
    %v3494 = vpop.f32.mrb[0].mxu0
    %3495 = vmatprep.mubr.f32.mxu0 0.0
    %v3496 = vand.u32 %v2033, 4294901760
    %3497 = vmatmul.mubr.f32.gmra.mrb[0].mxu0 %v3496
    %v3498 = vpop.f32.mrb[0].mxu0
    %v3499 = vadd.f32 %v3170, %v3498
    %v3500 = vpop.f32.mrb[0].mxu0
    %3501 = vmatprep.mubr.f32.mxu0 0.0
    %v3502 = vand.u32 %v2036, 4294901760
    %3503 = vmatmul.mubr.f32.gmra.mrb[0].mxu0 %v3502
    %v3504 = vpop.f32.mrb[0].mxu0
    %v3505 = vadd.f32 %v3178, %v3504
    %v3506 = vpop.f32.mrb[0].mxu0
    %3507 = vmatprep.mubr.f32.mxu0 0.0
    %v3508 = vand.u32 %v2039, 4294901760
    %3509 = vmatmul.mubr.f32.gmra.mrb[0].mxu0 %v3508
    %v3510 = vpop.f32.mrb[0].mxu0
    %v3511 = vadd.f32 %v3186, %v3510
    %v3512 = vpop.f32.mrb[0].mxu0
    %3513 = vmatprep.mubr.f32.mxu0 0.0
    %v3514 = vand.u32 %v2042, 4294901760
    %3515 = vmatmul.mubr.f32.gmra.mrb[0].mxu0 %v3514
    %v3516 = vpop.f32.mrb[0].mxu0
    %v3517 = vadd.f32 %v3194, %v3516
    %v3518 = vpop.f32.mrb[0].mxu0
    %3519 = vmatprep.mubr.f32.mxu0 0.0
    %v3520 = vand.u32 %v2045, 4294901760
    %3521 = vmatmul.mubr.f32.gmra.mrb[0].mxu0 %v3520
    %v3522 = vpop.f32.mrb[0].mxu0
    %v3523 = vadd.f32 %v3202, %v3522
    %v3524 = vpop.f32.mrb[0].mxu0
    %3525 = vmatprep.mubr.f32.mxu0 0.0
    %v3526 = vand.u32 %v2048, 4294901760
    %3527 = vmatmul.mubr.f32.gmra.mrb[0].mxu0 %v3526
    %v3528 = vpop.f32.mrb[0].mxu0
    %v3529 = vadd.f32 %v3210, %v3528
    %v3530 = vpop.f32.mrb[0].mxu0
    %3531 = vmatprep.mubr.f32.mxu0 0.0
    %v3532 = vand.u32 %v2051, 4294901760
    %3533 = vmatmul.mubr.f32.gmra.mrb[0].mxu0 %v3532
    %v3534 = vpop.f32.mrb[0].mxu0
    %v3535 = vadd.f32 %v3218, %v3534
    %v3536 = vpop.f32.mrb[0].mxu0
    %3537 = vmatprep.mubr.f32.mxu0 0.0
    %v3538 = vand.u32 %v2054, 4294901760
    %3539 = vmatmul.mubr.f32.gmra.mrb[0].mxu0 %v3538
    %v3540 = vpop.f32.mrb[0].mxu0
    %v3541 = vadd.f32 %v3226, %v3540
    %v3542 = vpop.f32.mrb[0].mxu0
    %3543 = vmatprep.mubr.f32.mxu0 0.0
    %v3544 = vand.u32 %v2057, 4294901760
    %3545 = vmatmul.mubr.f32.gmra.mrb[0].mxu0 %v3544
    %v3546 = vpop.f32.mrb[0].mxu0
    %v3547 = vadd.f32 %v3234, %v3546
    %v3548 = vpop.f32.mrb[0].mxu0
    %3549 = vmatprep.mubr.f32.mxu0 0.0
    %v3550 = vand.u32 %v2060, 4294901760
    %3551 = vmatmul.mubr.f32.gmra.mrb[0].mxu0 %v3550
    %v3552 = vpop.f32.mrb[0].mxu0
    %v3553 = vadd.f32 %v3242, %v3552
    %v3554 = vpop.f32.mrb[0].mxu0
    %3555 = vmatprep.mubr.f32.mxu0 0.0
    %v3556 = vand.u32 %v2063, 4294901760
    %3557 = vmatmul.mubr.f32.gmra.mrb[0].mxu0 %v3556
    %v3558 = vpop.f32.mrb[0].mxu0
    %v3559 = vadd.f32 %v3250, %v3558
    %v3560 = vpop.f32.mrb[0].mxu0
    %3561 = vmatprep.mubr.f32.mxu0 0.0
    %v3562 = vand.u32 %v2066, 4294901760
    %3563 = vmatmul.mubr.f32.gmra.mrb[0].mxu0 %v3562
    %v3564 = vpop.f32.mrb[0].mxu0
    %v3565 = vadd.f32 %v3258, %v3564
    %v3566 = vpop.f32.mrb[0].mxu0
    %3567 = vmatprep.mubr.f32.mxu0 0.0
    %v3568 = vand.u32 %v2069, 4294901760
    %3569 = vmatmul.mubr.f32.gmra.mrb[0].mxu0 %v3568
    %v3570 = vpop.f32.mrb[0].mxu0
    %v3571 = vadd.f32 %v3266, %v3570
    %v3572 = vpop.f32.mrb[0].mxu0
    %3573 = vmatprep.mubr.f32.mxu0 0.0
    %v3574 = vand.u32 %v2072, 4294901760
    %3575 = vmatmul.mubr.f32.gmra.mrb[0].mxu0 %v3574
    %v3576 = vpop.f32.mrb[0].mxu0
    %v3577 = vadd.f32 %v3274, %v3576
    %v3578 = vpop.f32.mrb[0].mxu0
    %3579 = vmatprep.mubr.f32.mxu0 0.0
    %v3580 = vand.u32 %v2075, 4294901760
    %3581 = vmatmul.mubr.f32.gmra.mrb[0].mxu0 %v3580
    %v3582 = vpop.f32.mrb[0].mxu0
    %v3583 = vadd.f32 %v3282, %v3582
    %v3584 = vpop.f32.mrb[0].mxu0
    %3585 = vmatprep.mubr.f32.mxu0 0.0
    %v3586 = vand.u32 %v2078, 4294901760
    %3587 = vmatmul.mubr.f32.gmra.mrb[0].mxu0 %v3586
    %v3588 = vpop.f32.mrb[0].mxu0
    %v3589 = vadd.f32 %v3290, %v3588
    %v3590 = vpop.f32.mrb[0].mxu0
    %3591 = vmatprep.mubr.f32.mxu0 0.0
    %v3592 = vand.u32 %v2081, 4294901760
    %3593 = vmatmul.mubr.f32.gmra.mrb[0].mxu0 %v3592
    %v3594 = vpop.f32.mrb[0].mxu0
    %v3595 = vadd.f32 %v3298, %v3594
    %v3596 = vpop.f32.mrb[0].mxu0
    %3597 = vmatprep.mubr.f32.mxu0 0.0
    %v3598 = vand.u32 %v2084, 4294901760
    %3599 = vmatmul.mubr.f32.gmra.mrb[0].mxu0 %v3598
    %v3600 = vpop.f32.mrb[0].mxu0
    %v3601 = vadd.f32 %v3306, %v3600
    %v3602 = vpop.f32.mrb[0].mxu0
    %3603 = vmatprep.mubr.f32.mxu0 0.0
    %v3604 = vand.u32 %v2087, 4294901760
    %3605 = vmatmul.mubr.f32.gmra.mrb[0].mxu0 %v3604
    %v3606 = vpop.f32.mrb[0].mxu0
    %v3607 = vadd.f32 %v3314, %v3606
    %v3608 = vpop.f32.mrb[0].mxu0
    %3609 = vmatprep.mubr.f32.mxu0 0.0
    %v3610 = vand.u32 %v2090, 4294901760
    %3611 = vmatmul.mubr.f32.gmra.mrb[0].mxu0 %v3610
    %v3612 = vpop.f32.mrb[0].mxu0
    %v3613 = vadd.f32 %v3322, %v3612
    %v3614 = vpop.f32.mrb[0].mxu0
    %3615 = vmatprep.mubr.f32.mxu0 0.0
    %v3616 = vand.u32 %v2093, 4294901760
    %3617 = vmatmul.mubr.f32.gmra.mrb[0].mxu0 %v3616
    %v3618 = vpop.f32.mrb[0].mxu0
    %v3619 = vadd.f32 %v3330, %v3618
    %v3620 = vpop.f32.mrb[0].mxu0
    %3621 = vmatprep.mubr.f32.mxu0 0.0
    %v3622 = vand.u32 %v2096, 4294901760
    %3623 = vmatmul.mubr.f32.gmra.mrb[0].mxu0 %v3622
    %v3624 = vpop.f32.mrb[0].mxu0
    %v3625 = vadd.f32 %v3338, %v3624
    %v3626 = vpop.f32.mrb[0].mxu0
    %3627 = vmatprep.mubr.f32.mxu0 0.0
    %v3628 = vand.u32 %v2099, 4294901760
    %3629 = vmatmul.mubr.f32.gmra.mrb[0].mxu0 %v3628
    %v3630 = vpop.f32.mrb[0].mxu0
    %v3631 = vadd.f32 %v3346, %v3630
    %v3632 = vpop.f32.mrb[0].mxu0
    %3633 = vmatprep.mubr.f32.mxu0 0.0
    %v3634 = vand.u32 %v2102, 4294901760
    %3635 = vmatmul.mubr.f32.gmra.mrb[0].mxu0 %v3634
    %v3636 = vpop.f32.mrb[0].mxu0
    %v3637 = vadd.f32 %v3354, %v3636
    %v3638 = vpop.f32.mrb[0].mxu0
    %3639 = vmatprep.mubr.f32.mxu0 0.0
    %v3640 = vand.u32 %v2105, 4294901760
    %3641 = vmatmul.mubr.f32.gmra.mrb[0].mxu0 %v3640
    %v3642 = vpop.f32.mrb[0].mxu0
    %v3643 = vadd.f32 %v3362, %v3642
    %v3644 = vpop.f32.mrb[0].mxu0
    %3645 = vmatprep.mubr.f32.mxu0 0.0
    %v3646 = vand.u32 %v2108, 4294901760
    %3647 = vmatmul.mubr.f32.gmra.mrb[0].mxu0 %v3646
    %v3648 = vpop.f32.mrb[0].mxu0
    %v3649 = vadd.f32 %v3370, %v3648
    %v3650 = vpop.f32.mrb[0].mxu0
    %3651 = vmatprep.mubr.f32.mxu0 0.0
    %v3652 = vand.u32 %v2111, 4294901760
    %3653 = vmatmul.mubr.f32.gmra.mrb[0].mxu0 %v3652
    %v3654 = vpop.f32.mrb[0].mxu0
    %v3655 = vadd.f32 %v3378, %v3654
    %v3656 = vpop.f32.mrb[0].mxu0
    %3657 = vmatprep.mubr.f32.mxu0 0.0
    %v3658 = vand.u32 %v2114, 4294901760
    %3659 = vmatmul.mubr.f32.gmra.mrb[0].mxu0 %v3658
    %v3660 = vpop.f32.mrb[0].mxu0
    %v3661 = vadd.f32 %v3386, %v3660
    %v3662 = vpop.f32.mrb[0].mxu0
    %3663 = vmatprep.mubr.f32.mxu0 0.0
    %v3664 = vand.u32 %v2117, 4294901760
    %3665 = vmatmul.mubr.f32.gmra.mrb[0].mxu0 %v3664
    %v3666 = vpop.f32.mrb[0].mxu0
    %v3667 = vadd.f32 %v3394, %v3666
    %v3668 = vpop.f32.mrb[0].mxu0
    %3669 = vmatprep.mubr.f32.mxu0 0.0
    %v3670 = vand.u32 %v2120, 4294901760
    %3671 = vmatmul.mubr.f32.gmra.mrb[0].mxu0 %v3670
    %v3672 = vpop.f32.mrb[0].mxu0
    %v3673 = vadd.f32 %v3402, %v3672
    %v3674 = vpop.f32.mrb[0].mxu0
    %3675 = vmatprep.mubr.f32.mxu0 0.0
    %v3676 = vand.u32 %v2123, 4294901760
    %3677 = vmatmul.mubr.f32.gmra.mrb[0].mxu0 %v3676
    %v3678 = vpop.f32.mrb[0].mxu0
    %v3679 = vadd.f32 %v3410, %v3678
    %v3680 = vpop.f32.mrb[0].mxu0
    %3681 = vdwg.mxu0
    %3682 = vmatprep.subr.mxu0 0.0
    %v3683 = vand.u32 %v72, 4294901760
    %3684 = vmatpush1.msra.mxu0 %v3683
    %3685 = vmatprep.subr.mxu0 0.0
    %v3686 = vand.u32 %v73, 4294901760
    %3687 = vmatpush1.msra.mxu0 %v3686
    %3688 = vmatprep.subr.mxu0 0.0
    %v3689 = vand.u32 %v74, 4294901760
    %3690 = vmatpush1.msra.mxu0 %v3689
    %3691 = vmatprep.subr.mxu0 0.0
    %v3692 = vand.u32 %v75, 4294901760
    %3693 = vmatpush1.msra.mxu0 %v3692
    %3694 = vmatprep.subr.mxu0 0.0
    %3695 = vmatpush1.msra.mxu0 0.0
    %3696 = vmatprep.subr.mxu0 0.0
    %3697 = vmatpush1.msra.mxu0 0.0
    %3698 = vmatprep.subr.mxu0 0.0
    %3699 = vmatpush1.msra.mxu0 0.0
    %3700 = vmatprep.subr.mxu0 0.0
    %3701 = vmatpush1.msra.mxu0 0.0
    %3702 = vmatprep.subr.mxu0 0.0
    %3703 = vmatpush1.msra.mxu0 0.0
    %3704 = vmatprep.subr.mxu0 0.0
    %3705 = vmatpush1.msra.mxu0 0.0
    %3706 = vmatprep.subr.mxu0 0.0
    %3707 = vmatpush1.msra.mxu0 0.0
    %3708 = vmatprep.subr.mxu0 0.0
    %3709 = vmatpush1.msra.mxu0 0.0
    %3710 = vmatprep.subr.mxu0 0.0
    %3711 = vmatpush1.msra.mxu0 0.0
    %3712 = vmatprep.subr.mxu0 0.0
    %3713 = vmatpush1.msra.mxu0 0.0
    %3714 = vmatprep.subr.mxu0 0.0
    %3715 = vmatpush1.msra.mxu0 0.0
    %3716 = vmatprep.subr.mxu0 0.0
    %3717 = vmatpush1.msra.mxu0 0.0
    %3718 = vmatprep.subr.mxu0 0.0
    %3719 = vmatpush1.msra.mxu0 0.0
    %3720 = vmatprep.subr.mxu0 0.0
    %3721 = vmatpush1.msra.mxu0 0.0
    %3722 = vmatprep.subr.mxu0 0.0
    %3723 = vmatpush1.msra.mxu0 0.0
    %3724 = vmatprep.subr.mxu0 0.0
    %3725 = vmatpush1.msra.mxu0 0.0
    %3726 = vmatprep.subr.mxu0 0.0
    %3727 = vmatpush1.msra.mxu0 0.0
    %3728 = vmatprep.subr.mxu0 0.0
    %3729 = vmatpush1.msra.mxu0 0.0
    %3730 = vmatprep.subr.mxu0 0.0
    %3731 = vmatpush1.msra.mxu0 0.0
    %3732 = vmatprep.subr.mxu0 0.0
    %3733 = vmatpush1.msra.mxu0 0.0
    %3734 = vmatprep.subr.mxu0 0.0
    %3735 = vmatpush1.msra.mxu0 0.0
    %3736 = vmatprep.subr.mxu0 0.0
    %3737 = vmatpush1.msra.mxu0 0.0
    %3738 = vmatprep.subr.mxu0 0.0
    %3739 = vmatpush1.msra.mxu0 0.0
    %3740 = vmatprep.subr.mxu0 0.0
    %3741 = vmatpush1.msra.mxu0 0.0
    %3742 = vmatprep.subr.mxu0 0.0
    %3743 = vmatpush1.msra.mxu0 0.0
    %3744 = vmatprep.subr.mxu0 0.0
    %3745 = vmatpush1.msra.mxu0 0.0
    %3746 = vmatprep.subr.mxu0 0.0
    %3747 = vmatpush1.msra.mxu0 0.0
    %3748 = vmatprep.subr.mxu0 0.0
    %3749 = vmatpush1.msra.mxu0 0.0
    %3750 = vmatprep.mubr.f32.mxu0 0.0
    %v3751 = vand.u32 %v2030, 4294901760
    %3752 = vmatmul.mubr.f32.gmra.mrb[0].mxu0 %v3751
    %v3753 = vpop.f32.mrb[0].mxu0
    %v3754 = vadd.f32 %v3493, %v3753
    %v3755 = vpop.f32.mrb[0].mxu0
    %3756 = vmatprep.mubr.f32.mxu0 0.0
    %v3757 = vand.u32 %v2033, 4294901760
    %3758 = vmatmul.mubr.f32.gmra.mrb[0].mxu0 %v3757
    %v3759 = vpop.f32.mrb[0].mxu0
    %v3760 = vadd.f32 %v3499, %v3759
    %v3761 = vpop.f32.mrb[0].mxu0
    %3762 = vmatprep.mubr.f32.mxu0 0.0
    %v3763 = vand.u32 %v2036, 4294901760
    %3764 = vmatmul.mubr.f32.gmra.mrb[0].mxu0 %v3763
    %v3765 = vpop.f32.mrb[0].mxu0
    %v3766 = vadd.f32 %v3505, %v3765
    %v3767 = vpop.f32.mrb[0].mxu0
    %3768 = vmatprep.mubr.f32.mxu0 0.0
    %v3769 = vand.u32 %v2039, 4294901760
    %3770 = vmatmul.mubr.f32.gmra.mrb[0].mxu0 %v3769
    %v3771 = vpop.f32.mrb[0].mxu0
    %v3772 = vadd.f32 %v3511, %v3771
    %v3773 = vpop.f32.mrb[0].mxu0
    %3774 = vmatprep.mubr.f32.mxu0 0.0
    %v3775 = vand.u32 %v2042, 4294901760
    %3776 = vmatmul.mubr.f32.gmra.mrb[0].mxu0 %v3775
    %v3777 = vpop.f32.mrb[0].mxu0
    %v3778 = vadd.f32 %v3517, %v3777
    %v3779 = vpop.f32.mrb[0].mxu0
    %3780 = vmatprep.mubr.f32.mxu0 0.0
    %v3781 = vand.u32 %v2045, 4294901760
    %3782 = vmatmul.mubr.f32.gmra.mrb[0].mxu0 %v3781
    %v3783 = vpop.f32.mrb[0].mxu0
    %v3784 = vadd.f32 %v3523, %v3783
    %v3785 = vpop.f32.mrb[0].mxu0
    %3786 = vmatprep.mubr.f32.mxu0 0.0
    %v3787 = vand.u32 %v2048, 4294901760
    %3788 = vmatmul.mubr.f32.gmra.mrb[0].mxu0 %v3787
    %v3789 = vpop.f32.mrb[0].mxu0
    %v3790 = vadd.f32 %v3529, %v3789
    %v3791 = vpop.f32.mrb[0].mxu0
    %3792 = vmatprep.mubr.f32.mxu0 0.0
    %v3793 = vand.u32 %v2051, 4294901760
    %3794 = vmatmul.mubr.f32.gmra.mrb[0].mxu0 %v3793
    %v3795 = vpop.f32.mrb[0].mxu0
    %v3796 = vadd.f32 %v3535, %v3795
    %v3797 = vpop.f32.mrb[0].mxu0
    %3798 = vmatprep.mubr.f32.mxu0 0.0
    %v3799 = vand.u32 %v2054, 4294901760
    %3800 = vmatmul.mubr.f32.gmra.mrb[0].mxu0 %v3799
    %v3801 = vpop.f32.mrb[0].mxu0
    %v3802 = vadd.f32 %v3541, %v3801
    %v3803 = vpop.f32.mrb[0].mxu0
    %3804 = vmatprep.mubr.f32.mxu0 0.0
    %v3805 = vand.u32 %v2057, 4294901760
    %3806 = vmatmul.mubr.f32.gmra.mrb[0].mxu0 %v3805
    %v3807 = vpop.f32.mrb[0].mxu0
    %v3808 = vadd.f32 %v3547, %v3807
    %v3809 = vpop.f32.mrb[0].mxu0
    %3810 = vmatprep.mubr.f32.mxu0 0.0
    %v3811 = vand.u32 %v2060, 4294901760
    %3812 = vmatmul.mubr.f32.gmra.mrb[0].mxu0 %v3811
    %v3813 = vpop.f32.mrb[0].mxu0
    %v3814 = vadd.f32 %v3553, %v3813
    %v3815 = vpop.f32.mrb[0].mxu0
    %3816 = vmatprep.mubr.f32.mxu0 0.0
    %v3817 = vand.u32 %v2063, 4294901760
    %3818 = vmatmul.mubr.f32.gmra.mrb[0].mxu0 %v3817
    %v3819 = vpop.f32.mrb[0].mxu0
    %v3820 = vadd.f32 %v3559, %v3819
    %v3821 = vpop.f32.mrb[0].mxu0
    %3822 = vmatprep.mubr.f32.mxu0 0.0
    %v3823 = vand.u32 %v2066, 4294901760
    %3824 = vmatmul.mubr.f32.gmra.mrb[0].mxu0 %v3823
    %v3825 = vpop.f32.mrb[0].mxu0
    %v3826 = vadd.f32 %v3565, %v3825
    %v3827 = vpop.f32.mrb[0].mxu0
    %3828 = vmatprep.mubr.f32.mxu0 0.0
    %v3829 = vand.u32 %v2069, 4294901760
    %3830 = vmatmul.mubr.f32.gmra.mrb[0].mxu0 %v3829
    %v3831 = vpop.f32.mrb[0].mxu0
    %v3832 = vadd.f32 %v3571, %v3831
    %v3833 = vpop.f32.mrb[0].mxu0
    %3834 = vmatprep.mubr.f32.mxu0 0.0
    %v3835 = vand.u32 %v2072, 4294901760
    %3836 = vmatmul.mubr.f32.gmra.mrb[0].mxu0 %v3835
    %v3837 = vpop.f32.mrb[0].mxu0
    %v3838 = vadd.f32 %v3577, %v3837
    %v3839 = vpop.f32.mrb[0].mxu0
    %3840 = vmatprep.mubr.f32.mxu0 0.0
    %v3841 = vand.u32 %v2075, 4294901760
    %3842 = vmatmul.mubr.f32.gmra.mrb[0].mxu0 %v3841
    %v3843 = vpop.f32.mrb[0].mxu0
    %v3844 = vadd.f32 %v3583, %v3843
    %v3845 = vpop.f32.mrb[0].mxu0
    %3846 = vmatprep.mubr.f32.mxu0 0.0
    %v3847 = vand.u32 %v2078, 4294901760
    %3848 = vmatmul.mubr.f32.gmra.mrb[0].mxu0 %v3847
    %v3849 = vpop.f32.mrb[0].mxu0
    %v3850 = vadd.f32 %v3589, %v3849
    %v3851 = vpop.f32.mrb[0].mxu0
    %3852 = vmatprep.mubr.f32.mxu0 0.0
    %v3853 = vand.u32 %v2081, 4294901760
    %3854 = vmatmul.mubr.f32.gmra.mrb[0].mxu0 %v3853
    %v3855 = vpop.f32.mrb[0].mxu0
    %v3856 = vadd.f32 %v3595, %v3855
    %v3857 = vpop.f32.mrb[0].mxu0
    %3858 = vmatprep.mubr.f32.mxu0 0.0
    %v3859 = vand.u32 %v2084, 4294901760
    %3860 = vmatmul.mubr.f32.gmra.mrb[0].mxu0 %v3859
    %v3861 = vpop.f32.mrb[0].mxu0
    %v3862 = vadd.f32 %v3601, %v3861
    %v3863 = vpop.f32.mrb[0].mxu0
    %3864 = vmatprep.mubr.f32.mxu0 0.0
    %v3865 = vand.u32 %v2087, 4294901760
    %3866 = vmatmul.mubr.f32.gmra.mrb[0].mxu0 %v3865
    %v3867 = vpop.f32.mrb[0].mxu0
    %v3868 = vadd.f32 %v3607, %v3867
    %v3869 = vpop.f32.mrb[0].mxu0
    %3870 = vmatprep.mubr.f32.mxu0 0.0
    %v3871 = vand.u32 %v2090, 4294901760
    %3872 = vmatmul.mubr.f32.gmra.mrb[0].mxu0 %v3871
    %v3873 = vpop.f32.mrb[0].mxu0
    %v3874 = vadd.f32 %v3613, %v3873
    %v3875 = vpop.f32.mrb[0].mxu0
    %3876 = vmatprep.mubr.f32.mxu0 0.0
    %v3877 = vand.u32 %v2093, 4294901760
    %3878 = vmatmul.mubr.f32.gmra.mrb[0].mxu0 %v3877
    %v3879 = vpop.f32.mrb[0].mxu0
    %v3880 = vadd.f32 %v3619, %v3879
    %v3881 = vpop.f32.mrb[0].mxu0
    %3882 = vmatprep.mubr.f32.mxu0 0.0
    %v3883 = vand.u32 %v2096, 4294901760
    %3884 = vmatmul.mubr.f32.gmra.mrb[0].mxu0 %v3883
    %v3885 = vpop.f32.mrb[0].mxu0
    %v3886 = vadd.f32 %v3625, %v3885
    %v3887 = vpop.f32.mrb[0].mxu0
    %3888 = vmatprep.mubr.f32.mxu0 0.0
    %v3889 = vand.u32 %v2099, 4294901760
    %3890 = vmatmul.mubr.f32.gmra.mrb[0].mxu0 %v3889
    %v3891 = vpop.f32.mrb[0].mxu0
    %v3892 = vadd.f32 %v3631, %v3891
    %v3893 = vpop.f32.mrb[0].mxu0
    %3894 = vmatprep.mubr.f32.mxu0 0.0
    %v3895 = vand.u32 %v2102, 4294901760
    %3896 = vmatmul.mubr.f32.gmra.mrb[0].mxu0 %v3895
    %v3897 = vpop.f32.mrb[0].mxu0
    %v3898 = vadd.f32 %v3637, %v3897
    %v3899 = vpop.f32.mrb[0].mxu0
    %3900 = vmatprep.mubr.f32.mxu0 0.0
    %v3901 = vand.u32 %v2105, 4294901760
    %3902 = vmatmul.mubr.f32.gmra.mrb[0].mxu0 %v3901
    %v3903 = vpop.f32.mrb[0].mxu0
    %v3904 = vadd.f32 %v3643, %v3903
    %v3905 = vpop.f32.mrb[0].mxu0
    %3906 = vmatprep.mubr.f32.mxu0 0.0
    %v3907 = vand.u32 %v2108, 4294901760
    %3908 = vmatmul.mubr.f32.gmra.mrb[0].mxu0 %v3907
    %v3909 = vpop.f32.mrb[0].mxu0
    %v3910 = vadd.f32 %v3649, %v3909
    %v3911 = vpop.f32.mrb[0].mxu0
    %3912 = vmatprep.mubr.f32.mxu0 0.0
    %v3913 = vand.u32 %v2111, 4294901760
    %3914 = vmatmul.mubr.f32.gmra.mrb[0].mxu0 %v3913
    %v3915 = vpop.f32.mrb[0].mxu0
    %v3916 = vadd.f32 %v3655, %v3915
    %v3917 = vpop.f32.mrb[0].mxu0
    %3918 = vmatprep.mubr.f32.mxu0 0.0
    %v3919 = vand.u32 %v2114, 4294901760
    %3920 = vmatmul.mubr.f32.gmra.mrb[0].mxu0 %v3919
    %v3921 = vpop.f32.mrb[0].mxu0
    %v3922 = vadd.f32 %v3661, %v3921
    %v3923 = vpop.f32.mrb[0].mxu0
    %3924 = vmatprep.mubr.f32.mxu0 0.0
    %v3925 = vand.u32 %v2117, 4294901760
    %3926 = vmatmul.mubr.f32.gmra.mrb[0].mxu0 %v3925
    %v3927 = vpop.f32.mrb[0].mxu0
    %v3928 = vadd.f32 %v3667, %v3927
    %v3929 = vpop.f32.mrb[0].mxu0
    %3930 = vmatprep.mubr.f32.mxu0 0.0
    %v3931 = vand.u32 %v2120, 4294901760
    %3932 = vmatmul.mubr.f32.gmra.mrb[0].mxu0 %v3931
    %v3933 = vpop.f32.mrb[0].mxu0
    %v3934 = vadd.f32 %v3673, %v3933
    %v3935 = vpop.f32.mrb[0].mxu0
    %3936 = vmatprep.mubr.f32.mxu0 0.0
    %v3937 = vand.u32 %v2123, 4294901760
    %3938 = vmatmul.mubr.f32.gmra.mrb[0].mxu0 %v3937
    %v3939 = vpop.f32.mrb[0].mxu0
    %v3940 = vadd.f32 %v3679, %v3939
    %v3941 = vpop.f32.mrb[0].mxu0
    %3942 = vdwg.mxu0
    %s3943 = scalar_lea.vmem [#allocation2], 64
    %v3944 = vld [vmem:[%s3943] sm:$0xff]
    %v3945 = vld [vmem:[%s3943 + $0x8] sm:$0xff]
    %v3946 = vld [vmem:[%s3943 + $0x10] sm:$0xff]
    %v3947 = vld [vmem:[%s3943 + $0x18] sm:$0xff]
    %v3948 = vld [vmem:[%s3943 + $0x80] sm:$0xff]
    %v3949 = vld [vmem:[%s3943 + $0x88] sm:$0xff]
    %v3950 = vld [vmem:[%s3943 + $0x90] sm:$0xff]
    %v3951 = vld [vmem:[%s3943 + $0x98] sm:$0xff]
    %v3952 = vld [vmem:[%s3943 + $0x100] sm:$0xff]
    %v3953 = vld [vmem:[%s3943 + $0x108] sm:$0xff]
    %v3954 = vld [vmem:[%s3943 + $0x110] sm:$0xff]
    %v3955 = vld [vmem:[%s3943 + $0x118] sm:$0xff]
    %v3956 = vld [vmem:[%s3943 + $0x180] sm:$0xff]
    %v3957 = vld [vmem:[%s3943 + $0x188] sm:$0xff]
    %v3958 = vld [vmem:[%s3943 + $0x190] sm:$0xff]
    %v3959 = vld [vmem:[%s3943 + $0x198] sm:$0xff]
    %v3960 = vld [vmem:[%s3943 + $0x200] sm:$0xff]
    %v3961 = vld [vmem:[%s3943 + $0x208] sm:$0xff]
    %v3962 = vld [vmem:[%s3943 + $0x210] sm:$0xff]
    %v3963 = vld [vmem:[%s3943 + $0x218] sm:$0xff]
    %v3964 = vld [vmem:[%s3943 + $0x280] sm:$0xff]
    %v3965 = vld [vmem:[%s3943 + $0x288] sm:$0xff]
    %v3966 = vld [vmem:[%s3943 + $0x290] sm:$0xff]
    %v3967 = vld [vmem:[%s3943 + $0x298] sm:$0xff]
    %v3968 = vld [vmem:[%s3943 + $0x300] sm:$0xff]
    %v3969 = vld [vmem:[%s3943 + $0x308] sm:$0xff]
    %v3970 = vld [vmem:[%s3943 + $0x310] sm:$0xff]
    %v3971 = vld [vmem:[%s3943 + $0x318] sm:$0xff]
    %v3972 = vld [vmem:[%s3943 + $0x380] sm:$0xff]
    %v3973 = vld [vmem:[%s3943 + $0x388] sm:$0xff]
    %v3974 = vld [vmem:[%s3943 + $0x390] sm:$0xff]
    %v3975 = vld [vmem:[%s3943 + $0x398] sm:$0xff]
    %s3976 = scalar_lea.vmem [#allocation5], 64
    %v3977 = vld [vmem:[%s3976] sm:$0xff]
    %v3978 = vld [vmem:[%s3976 + $0x8] sm:$0xff]
    %v3979 = vld [vmem:[%s3976 + $0x10] sm:$0xff]
    %v3980 = vld [vmem:[%s3976 + $0x18] sm:$0xff]
    %v3982 = vsel %vm114, %v3944, 0
    %v3985 = vsel %vm114, %v3945, 0
    %v3988 = vsel %vm114, %v3946, 0
    %v3991 = vsel %vm114, %v3947, 0
    %v3994 = vsel %vm114, %v3948, 0
    %v3997 = vsel %vm114, %v3949, 0
    %v4000 = vsel %vm114, %v3950, 0
    %v4003 = vsel %vm114, %v3951, 0
    %v4006 = vsel %vm114, %v3952, 0
    %v4009 = vsel %vm114, %v3953, 0
    %v4012 = vsel %vm114, %v3954, 0
    %v4015 = vsel %vm114, %v3955, 0
    %v4018 = vsel %vm114, %v3956, 0
    %v4021 = vsel %vm114, %v3957, 0
    %v4024 = vsel %vm114, %v3958, 0
    %v4027 = vsel %vm114, %v3959, 0
    %v4030 = vsel %vm114, %v3960, 0
    %v4033 = vsel %vm114, %v3961, 0
    %v4036 = vsel %vm114, %v3962, 0
    %v4039 = vsel %vm114, %v3963, 0
    %v4042 = vsel %vm114, %v3964, 0
    %v4045 = vsel %vm114, %v3965, 0
    %v4048 = vsel %vm114, %v3966, 0
    %v4051 = vsel %vm114, %v3967, 0
    %v4054 = vsel %vm114, %v3968, 0
    %v4057 = vsel %vm114, %v3969, 0
    %v4060 = vsel %vm114, %v3970, 0
    %v4063 = vsel %vm114, %v3971, 0
    %v4066 = vsel %vm114, %v3972, 0
    %v4069 = vsel %vm114, %v3973, 0
    %v4072 = vsel %vm114, %v3974, 0
    %v4075 = vsel %vm114, %v3975, 0
    %4077 = vmatprep.subr.mxu0 0.0
    %v4078 = vand.u32 %v3977, 4294901760
    %4079 = vmatpush1.msra.mxu0 %v4078
    %4080 = vmatprep.subr.mxu0 0.0
    %v4081 = vand.u32 %v3978, 4294901760
    %4082 = vmatpush1.msra.mxu0 %v4081
    %4083 = vmatprep.subr.mxu0 0.0
    %v4084 = vand.u32 %v3979, 4294901760
    %4085 = vmatpush1.msra.mxu0 %v4084
    %4086 = vmatprep.subr.mxu0 0.0
    %v4087 = vand.u32 %v3980, 4294901760
    %4088 = vmatpush1.msra.mxu0 %v4087
    %4089 = vmatprep.subr.mxu0 0.0
    %4090 = vmatpush1.msra.mxu0 0.0
    %4091 = vmatprep.subr.mxu0 0.0
    %4092 = vmatpush1.msra.mxu0 0.0
    %4093 = vmatprep.subr.mxu0 0.0
    %4094 = vmatpush1.msra.mxu0 0.0
    %4095 = vmatprep.subr.mxu0 0.0
    %4096 = vmatpush1.msra.mxu0 0.0
    %4097 = vmatprep.subr.mxu0 0.0
    %4098 = vmatpush1.msra.mxu0 0.0
    %4099 = vmatprep.subr.mxu0 0.0
    %4100 = vmatpush1.msra.mxu0 0.0
    %4101 = vmatprep.subr.mxu0 0.0
    %4102 = vmatpush1.msra.mxu0 0.0
    %4103 = vmatprep.subr.mxu0 0.0
    %4104 = vmatpush1.msra.mxu0 0.0
    %4105 = vmatprep.subr.mxu0 0.0
    %4106 = vmatpush1.msra.mxu0 0.0
    %4107 = vmatprep.subr.mxu0 0.0
    %4108 = vmatpush1.msra.mxu0 0.0
    %4109 = vmatprep.subr.mxu0 0.0
    %4110 = vmatpush1.msra.mxu0 0.0
    %4111 = vmatprep.subr.mxu0 0.0
    %4112 = vmatpush1.msra.mxu0 0.0
    %4113 = vmatprep.subr.mxu0 0.0
    %4114 = vmatpush1.msra.mxu0 0.0
    %4115 = vmatprep.subr.mxu0 0.0
    %4116 = vmatpush1.msra.mxu0 0.0
    %4117 = vmatprep.subr.mxu0 0.0
    %4118 = vmatpush1.msra.mxu0 0.0
    %4119 = vmatprep.subr.mxu0 0.0
    %4120 = vmatpush1.msra.mxu0 0.0
    %4121 = vmatprep.subr.mxu0 0.0
    %4122 = vmatpush1.msra.mxu0 0.0
    %4123 = vmatprep.subr.mxu0 0.0
    %4124 = vmatpush1.msra.mxu0 0.0
    %4125 = vmatprep.subr.mxu0 0.0
    %4126 = vmatpush1.msra.mxu0 0.0
    %4127 = vmatprep.subr.mxu0 0.0
    %4128 = vmatpush1.msra.mxu0 0.0
    %4129 = vmatprep.subr.mxu0 0.0
    %4130 = vmatpush1.msra.mxu0 0.0
    %4131 = vmatprep.subr.mxu0 0.0
    %4132 = vmatpush1.msra.mxu0 0.0
    %4133 = vmatprep.subr.mxu0 0.0
    %4134 = vmatpush1.msra.mxu0 0.0
    %4135 = vmatprep.subr.mxu0 0.0
    %4136 = vmatpush1.msra.mxu0 0.0
    %4137 = vmatprep.subr.mxu0 0.0
    %4138 = vmatpush1.msra.mxu0 0.0
    %4139 = vmatprep.subr.mxu0 0.0
    %4140 = vmatpush1.msra.mxu0 0.0
    %4141 = vmatprep.subr.mxu0 0.0
    %4142 = vmatpush1.msra.mxu0 0.0
    %4143 = vmatprep.subr.mxu0 0.0
    %4144 = vmatpush1.msra.mxu0 0.0
    %4145 = vmatprep.mubr.f32.mxu0 0.0
    %v4146 = vand.u32 %v3982, 4294901760
    %v4147 = vsub.f32 %v3982, %v4146
    %v4148 = vand.u32 %v4147, 4294901760
    %v4149 = vsub.f32 %v4147, %v4148
    %v4150 = vand.u32 %v4149, 4294901760
    %4151 = vmatmul.mubr.f32.gmra.mrb[0].mxu0 %v4150
    %v4152 = vpop.f32.mrb[0].mxu0
    %v4153 = vadd.f32 0.0, %v4152
    %v4154 = vpop.f32.mrb[0].mxu0
    %4155 = vmatprep.mubr.f32.mxu0 0.0
    %v4156 = vand.u32 %v3985, 4294901760
    %v4157 = vsub.f32 %v3985, %v4156
    %v4158 = vand.u32 %v4157, 4294901760
    %v4159 = vsub.f32 %v4157, %v4158
    %v4160 = vand.u32 %v4159, 4294901760
    %4161 = vmatmul.mubr.f32.gmra.mrb[0].mxu0 %v4160
    %v4162 = vpop.f32.mrb[0].mxu0
    %v4163 = vadd.f32 0.0, %v4162
    %v4164 = vpop.f32.mrb[0].mxu0
    %4165 = vmatprep.mubr.f32.mxu0 0.0
    %v4166 = vand.u32 %v3988, 4294901760
    %v4167 = vsub.f32 %v3988, %v4166
    %v4168 = vand.u32 %v4167, 4294901760
    %v4169 = vsub.f32 %v4167, %v4168
    %v4170 = vand.u32 %v4169, 4294901760
    %4171 = vmatmul.mubr.f32.gmra.mrb[0].mxu0 %v4170
    %v4172 = vpop.f32.mrb[0].mxu0
    %v4173 = vadd.f32 0.0, %v4172
    %v4174 = vpop.f32.mrb[0].mxu0
    %4175 = vmatprep.mubr.f32.mxu0 0.0
    %v4176 = vand.u32 %v3991, 4294901760
    %v4177 = vsub.f32 %v3991, %v4176
    %v4178 = vand.u32 %v4177, 4294901760
    %v4179 = vsub.f32 %v4177, %v4178
    %v4180 = vand.u32 %v4179, 4294901760
    %4181 = vmatmul.mubr.f32.gmra.mrb[0].mxu0 %v4180
    %v4182 = vpop.f32.mrb[0].mxu0
    %v4183 = vadd.f32 0.0, %v4182
    %v4184 = vpop.f32.mrb[0].mxu0
    %4185 = vmatprep.mubr.f32.mxu0 0.0
    %v4186 = vand.u32 %v3994, 4294901760
    %v4187 = vsub.f32 %v3994, %v4186
    %v4188 = vand.u32 %v4187, 4294901760
    %v4189 = vsub.f32 %v4187, %v4188
    %v4190 = vand.u32 %v4189, 4294901760
    %4191 = vmatmul.mubr.f32.gmra.mrb[0].mxu0 %v4190
    %v4192 = vpop.f32.mrb[0].mxu0
    %v4193 = vadd.f32 0.0, %v4192
    %v4194 = vpop.f32.mrb[0].mxu0
    %4195 = vmatprep.mubr.f32.mxu0 0.0
    %v4196 = vand.u32 %v3997, 4294901760
    %v4197 = vsub.f32 %v3997, %v4196
    %v4198 = vand.u32 %v4197, 4294901760
    %v4199 = vsub.f32 %v4197, %v4198
    %v4200 = vand.u32 %v4199, 4294901760
    %4201 = vmatmul.mubr.f32.gmra.mrb[0].mxu0 %v4200
    %v4202 = vpop.f32.mrb[0].mxu0
    %v4203 = vadd.f32 0.0, %v4202
    %v4204 = vpop.f32.mrb[0].mxu0
    %4205 = vmatprep.mubr.f32.mxu0 0.0
    %v4206 = vand.u32 %v4000, 4294901760
    %v4207 = vsub.f32 %v4000, %v4206
    %v4208 = vand.u32 %v4207, 4294901760
    %v4209 = vsub.f32 %v4207, %v4208
    %v4210 = vand.u32 %v4209, 4294901760
    %4211 = vmatmul.mubr.f32.gmra.mrb[0].mxu0 %v4210
    %v4212 = vpop.f32.mrb[0].mxu0
    %v4213 = vadd.f32 0.0, %v4212
    %v4214 = vpop.f32.mrb[0].mxu0
    %4215 = vmatprep.mubr.f32.mxu0 0.0
    %v4216 = vand.u32 %v4003, 4294901760
    %v4217 = vsub.f32 %v4003, %v4216
    %v4218 = vand.u32 %v4217, 4294901760
    %v4219 = vsub.f32 %v4217, %v4218
    %v4220 = vand.u32 %v4219, 4294901760
    %4221 = vmatmul.mubr.f32.gmra.mrb[0].mxu0 %v4220
    %v4222 = vpop.f32.mrb[0].mxu0
    %v4223 = vadd.f32 0.0, %v4222
    %v4224 = vpop.f32.mrb[0].mxu0
    %4225 = vmatprep.mubr.f32.mxu0 0.0
    %v4226 = vand.u32 %v4006, 4294901760
    %v4227 = vsub.f32 %v4006, %v4226
    %v4228 = vand.u32 %v4227, 4294901760
    %v4229 = vsub.f32 %v4227, %v4228
    %v4230 = vand.u32 %v4229, 4294901760
    %4231 = vmatmul.mubr.f32.gmra.mrb[0].mxu0 %v4230
    %v4232 = vpop.f32.mrb[0].mxu0
    %v4233 = vadd.f32 0.0, %v4232
    %v4234 = vpop.f32.mrb[0].mxu0
    %4235 = vmatprep.mubr.f32.mxu0 0.0
    %v4236 = vand.u32 %v4009, 4294901760
    %v4237 = vsub.f32 %v4009, %v4236
    %v4238 = vand.u32 %v4237, 4294901760
    %v4239 = vsub.f32 %v4237, %v4238
    %v4240 = vand.u32 %v4239, 4294901760
    %4241 = vmatmul.mubr.f32.gmra.mrb[0].mxu0 %v4240
    %v4242 = vpop.f32.mrb[0].mxu0
    %v4243 = vadd.f32 0.0, %v4242
    %v4244 = vpop.f32.mrb[0].mxu0
    %4245 = vmatprep.mubr.f32.mxu0 0.0
    %v4246 = vand.u32 %v4012, 4294901760
    %v4247 = vsub.f32 %v4012, %v4246
    %v4248 = vand.u32 %v4247, 4294901760
    %v4249 = vsub.f32 %v4247, %v4248
    %v4250 = vand.u32 %v4249, 4294901760
    %4251 = vmatmul.mubr.f32.gmra.mrb[0].mxu0 %v4250
    %v4252 = vpop.f32.mrb[0].mxu0
    %v4253 = vadd.f32 0.0, %v4252
    %v4254 = vpop.f32.mrb[0].mxu0
    %4255 = vmatprep.mubr.f32.mxu0 0.0
    %v4256 = vand.u32 %v4015, 4294901760
    %v4257 = vsub.f32 %v4015, %v4256
    %v4258 = vand.u32 %v4257, 4294901760
    %v4259 = vsub.f32 %v4257, %v4258
    %v4260 = vand.u32 %v4259, 4294901760
    %4261 = vmatmul.mubr.f32.gmra.mrb[0].mxu0 %v4260
    %v4262 = vpop.f32.mrb[0].mxu0
    %v4263 = vadd.f32 0.0, %v4262
    %v4264 = vpop.f32.mrb[0].mxu0
    %4265 = vmatprep.mubr.f32.mxu0 0.0
    %v4266 = vand.u32 %v4018, 4294901760
    %v4267 = vsub.f32 %v4018, %v4266
    %v4268 = vand.u32 %v4267, 4294901760
    %v4269 = vsub.f32 %v4267, %v4268
    %v4270 = vand.u32 %v4269, 4294901760
    %4271 = vmatmul.mubr.f32.gmra.mrb[0].mxu0 %v4270
    %v4272 = vpop.f32.mrb[0].mxu0
    %v4273 = vadd.f32 0.0, %v4272
    %v4274 = vpop.f32.mrb[0].mxu0
    %4275 = vmatprep.mubr.f32.mxu0 0.0
    %v4276 = vand.u32 %v4021, 4294901760
    %v4277 = vsub.f32 %v4021, %v4276
    %v4278 = vand.u32 %v4277, 4294901760
    %v4279 = vsub.f32 %v4277, %v4278
    %v4280 = vand.u32 %v4279, 4294901760
    %4281 = vmatmul.mubr.f32.gmra.mrb[0].mxu0 %v4280
    %v4282 = vpop.f32.mrb[0].mxu0
    %v4283 = vadd.f32 0.0, %v4282
    %v4284 = vpop.f32.mrb[0].mxu0
    %4285 = vmatprep.mubr.f32.mxu0 0.0
    %v4286 = vand.u32 %v4024, 4294901760
    %v4287 = vsub.f32 %v4024, %v4286
    %v4288 = vand.u32 %v4287, 4294901760
    %v4289 = vsub.f32 %v4287, %v4288
    %v4290 = vand.u32 %v4289, 4294901760
    %4291 = vmatmul.mubr.f32.gmra.mrb[0].mxu0 %v4290
    %v4292 = vpop.f32.mrb[0].mxu0
    %v4293 = vadd.f32 0.0, %v4292
    %v4294 = vpop.f32.mrb[0].mxu0
    %4295 = vmatprep.mubr.f32.mxu0 0.0
    %v4296 = vand.u32 %v4027, 4294901760
    %v4297 = vsub.f32 %v4027, %v4296
    %v4298 = vand.u32 %v4297, 4294901760
    %v4299 = vsub.f32 %v4297, %v4298
    %v4300 = vand.u32 %v4299, 4294901760
    %4301 = vmatmul.mubr.f32.gmra.mrb[0].mxu0 %v4300
    %v4302 = vpop.f32.mrb[0].mxu0
    %v4303 = vadd.f32 0.0, %v4302
    %v4304 = vpop.f32.mrb[0].mxu0
    %4305 = vmatprep.mubr.f32.mxu0 0.0
    %v4306 = vand.u32 %v4030, 4294901760
    %v4307 = vsub.f32 %v4030, %v4306
    %v4308 = vand.u32 %v4307, 4294901760
    %v4309 = vsub.f32 %v4307, %v4308
    %v4310 = vand.u32 %v4309, 4294901760
    %4311 = vmatmul.mubr.f32.gmra.mrb[0].mxu0 %v4310
    %v4312 = vpop.f32.mrb[0].mxu0
    %v4313 = vadd.f32 0.0, %v4312
    %v4314 = vpop.f32.mrb[0].mxu0
    %4315 = vmatprep.mubr.f32.mxu0 0.0
    %v4316 = vand.u32 %v4033, 4294901760
    %v4317 = vsub.f32 %v4033, %v4316
    %v4318 = vand.u32 %v4317, 4294901760
    %v4319 = vsub.f32 %v4317, %v4318
    %v4320 = vand.u32 %v4319, 4294901760
    %4321 = vmatmul.mubr.f32.gmra.mrb[0].mxu0 %v4320
    %v4322 = vpop.f32.mrb[0].mxu0
    %v4323 = vadd.f32 0.0, %v4322
    %v4324 = vpop.f32.mrb[0].mxu0
    %4325 = vmatprep.mubr.f32.mxu0 0.0
    %v4326 = vand.u32 %v4036, 4294901760
    %v4327 = vsub.f32 %v4036, %v4326
    %v4328 = vand.u32 %v4327, 4294901760
    %v4329 = vsub.f32 %v4327, %v4328
    %v4330 = vand.u32 %v4329, 4294901760
    %4331 = vmatmul.mubr.f32.gmra.mrb[0].mxu0 %v4330
    %v4332 = vpop.f32.mrb[0].mxu0
    %v4333 = vadd.f32 0.0, %v4332
    %v4334 = vpop.f32.mrb[0].mxu0
    %4335 = vmatprep.mubr.f32.mxu0 0.0
    %v4336 = vand.u32 %v4039, 4294901760
    %v4337 = vsub.f32 %v4039, %v4336
    %v4338 = vand.u32 %v4337, 4294901760
    %v4339 = vsub.f32 %v4337, %v4338
    %v4340 = vand.u32 %v4339, 4294901760
    %4341 = vmatmul.mubr.f32.gmra.mrb[0].mxu0 %v4340
    %v4342 = vpop.f32.mrb[0].mxu0
    %v4343 = vadd.f32 0.0, %v4342
    %v4344 = vpop.f32.mrb[0].mxu0
    %4345 = vmatprep.mubr.f32.mxu0 0.0
    %v4346 = vand.u32 %v4042, 4294901760
    %v4347 = vsub.f32 %v4042, %v4346
    %v4348 = vand.u32 %v4347, 4294901760
    %v4349 = vsub.f32 %v4347, %v4348
    %v4350 = vand.u32 %v4349, 4294901760
    %4351 = vmatmul.mubr.f32.gmra.mrb[0].mxu0 %v4350
    %v4352 = vpop.f32.mrb[0].mxu0
    %v4353 = vadd.f32 0.0, %v4352
    %v4354 = vpop.f32.mrb[0].mxu0
    %4355 = vmatprep.mubr.f32.mxu0 0.0
    %v4356 = vand.u32 %v4045, 4294901760
    %v4357 = vsub.f32 %v4045, %v4356
    %v4358 = vand.u32 %v4357, 4294901760
    %v4359 = vsub.f32 %v4357, %v4358
    %v4360 = vand.u32 %v4359, 4294901760
    %4361 = vmatmul.mubr.f32.gmra.mrb[0].mxu0 %v4360
    %v4362 = vpop.f32.mrb[0].mxu0
    %v4363 = vadd.f32 0.0, %v4362
    %v4364 = vpop.f32.mrb[0].mxu0
    %4365 = vmatprep.mubr.f32.mxu0 0.0
    %v4366 = vand.u32 %v4048, 4294901760
    %v4367 = vsub.f32 %v4048, %v4366
    %v4368 = vand.u32 %v4367, 4294901760
    %v4369 = vsub.f32 %v4367, %v4368
    %v4370 = vand.u32 %v4369, 4294901760
    %4371 = vmatmul.mubr.f32.gmra.mrb[0].mxu0 %v4370
    %v4372 = vpop.f32.mrb[0].mxu0
    %v4373 = vadd.f32 0.0, %v4372
    %v4374 = vpop.f32.mrb[0].mxu0
    %4375 = vmatprep.mubr.f32.mxu0 0.0
    %v4376 = vand.u32 %v4051, 4294901760
    %v4377 = vsub.f32 %v4051, %v4376
    %v4378 = vand.u32 %v4377, 4294901760
    %v4379 = vsub.f32 %v4377, %v4378
    %v4380 = vand.u32 %v4379, 4294901760
    %4381 = vmatmul.mubr.f32.gmra.mrb[0].mxu0 %v4380
    %v4382 = vpop.f32.mrb[0].mxu0
    %v4383 = vadd.f32 0.0, %v4382
    %v4384 = vpop.f32.mrb[0].mxu0
    %4385 = vmatprep.mubr.f32.mxu0 0.0
    %v4386 = vand.u32 %v4054, 4294901760
    %v4387 = vsub.f32 %v4054, %v4386
    %v4388 = vand.u32 %v4387, 4294901760
    %v4389 = vsub.f32 %v4387, %v4388
    %v4390 = vand.u32 %v4389, 4294901760
    %4391 = vmatmul.mubr.f32.gmra.mrb[0].mxu0 %v4390
    %v4392 = vpop.f32.mrb[0].mxu0
    %v4393 = vadd.f32 0.0, %v4392
    %v4394 = vpop.f32.mrb[0].mxu0
    %4395 = vmatprep.mubr.f32.mxu0 0.0
    %v4396 = vand.u32 %v4057, 4294901760
    %v4397 = vsub.f32 %v4057, %v4396
    %v4398 = vand.u32 %v4397, 4294901760
    %v4399 = vsub.f32 %v4397, %v4398
    %v4400 = vand.u32 %v4399, 4294901760
    %4401 = vmatmul.mubr.f32.gmra.mrb[0].mxu0 %v4400
    %v4402 = vpop.f32.mrb[0].mxu0
    %v4403 = vadd.f32 0.0, %v4402
    %v4404 = vpop.f32.mrb[0].mxu0
    %4405 = vmatprep.mubr.f32.mxu0 0.0
    %v4406 = vand.u32 %v4060, 4294901760
    %v4407 = vsub.f32 %v4060, %v4406
    %v4408 = vand.u32 %v4407, 4294901760
    %v4409 = vsub.f32 %v4407, %v4408
    %v4410 = vand.u32 %v4409, 4294901760
    %4411 = vmatmul.mubr.f32.gmra.mrb[0].mxu0 %v4410
    %v4412 = vpop.f32.mrb[0].mxu0
    %v4413 = vadd.f32 0.0, %v4412
    %v4414 = vpop.f32.mrb[0].mxu0
    %4415 = vmatprep.mubr.f32.mxu0 0.0
    %v4416 = vand.u32 %v4063, 4294901760
    %v4417 = vsub.f32 %v4063, %v4416
    %v4418 = vand.u32 %v4417, 4294901760
    %v4419 = vsub.f32 %v4417, %v4418
    %v4420 = vand.u32 %v4419, 4294901760
    %4421 = vmatmul.mubr.f32.gmra.mrb[0].mxu0 %v4420
    %v4422 = vpop.f32.mrb[0].mxu0
    %v4423 = vadd.f32 0.0, %v4422
    %v4424 = vpop.f32.mrb[0].mxu0
    %4425 = vmatprep.mubr.f32.mxu0 0.0
    %v4426 = vand.u32 %v4066, 4294901760
    %v4427 = vsub.f32 %v4066, %v4426
    %v4428 = vand.u32 %v4427, 4294901760
    %v4429 = vsub.f32 %v4427, %v4428
    %v4430 = vand.u32 %v4429, 4294901760
    %4431 = vmatmul.mubr.f32.gmra.mrb[0].mxu0 %v4430
    %v4432 = vpop.f32.mrb[0].mxu0
    %v4433 = vadd.f32 0.0, %v4432
    %v4434 = vpop.f32.mrb[0].mxu0
    %4435 = vmatprep.mubr.f32.mxu0 0.0
    %v4436 = vand.u32 %v4069, 4294901760
    %v4437 = vsub.f32 %v4069, %v4436
    %v4438 = vand.u32 %v4437, 4294901760
    %v4439 = vsub.f32 %v4437, %v4438
    %v4440 = vand.u32 %v4439, 4294901760
    %4441 = vmatmul.mubr.f32.gmra.mrb[0].mxu0 %v4440
    %v4442 = vpop.f32.mrb[0].mxu0
    %v4443 = vadd.f32 0.0, %v4442
    %v4444 = vpop.f32.mrb[0].mxu0
    %4445 = vmatprep.mubr.f32.mxu0 0.0
    %v4446 = vand.u32 %v4072, 4294901760
    %v4447 = vsub.f32 %v4072, %v4446
    %v4448 = vand.u32 %v4447, 4294901760
    %v4449 = vsub.f32 %v4447, %v4448
    %v4450 = vand.u32 %v4449, 4294901760
    %4451 = vmatmul.mubr.f32.gmra.mrb[0].mxu0 %v4450
    %v4452 = vpop.f32.mrb[0].mxu0
    %v4453 = vadd.f32 0.0, %v4452
    %v4454 = vpop.f32.mrb[0].mxu0
    %4455 = vmatprep.mubr.f32.mxu0 0.0
    %v4456 = vand.u32 %v4075, 4294901760
    %v4457 = vsub.f32 %v4075, %v4456
    %v4458 = vand.u32 %v4457, 4294901760
    %v4459 = vsub.f32 %v4457, %v4458
    %v4460 = vand.u32 %v4459, 4294901760
    %4461 = vmatmul.mubr.f32.gmra.mrb[0].mxu0 %v4460
    %v4462 = vpop.f32.mrb[0].mxu0
    %v4463 = vadd.f32 0.0, %v4462
    %v4464 = vpop.f32.mrb[0].mxu0
    %4465 = vdwg.mxu0
    %4466 = vmatprep.subr.mxu0 0.0
    %v4467 = vand.u32 %v3977, 4294901760
    %v4468 = vsub.f32 %v3977, %v4467
    %v4469 = vand.u32 %v4468, 4294901760
    %v4470 = vsub.f32 %v4468, %v4469
    %v4471 = vand.u32 %v4470, 4294901760
    %4472 = vmatpush1.msra.mxu0 %v4471
    %4473 = vmatprep.subr.mxu0 0.0
    %v4474 = vand.u32 %v3978, 4294901760
    %v4475 = vsub.f32 %v3978, %v4474
    %v4476 = vand.u32 %v4475, 4294901760
    %v4477 = vsub.f32 %v4475, %v4476
    %v4478 = vand.u32 %v4477, 4294901760
    %4479 = vmatpush1.msra.mxu0 %v4478
    %4480 = vmatprep.subr.mxu0 0.0
    %v4481 = vand.u32 %v3979, 4294901760
    %v4482 = vsub.f32 %v3979, %v4481
    %v4483 = vand.u32 %v4482, 4294901760
    %v4484 = vsub.f32 %v4482, %v4483
    %v4485 = vand.u32 %v4484, 4294901760
    %4486 = vmatpush1.msra.mxu0 %v4485
    %4487 = vmatprep.subr.mxu0 0.0
    %v4488 = vand.u32 %v3980, 4294901760
    %v4489 = vsub.f32 %v3980, %v4488
    %v4490 = vand.u32 %v4489, 4294901760
    %v4491 = vsub.f32 %v4489, %v4490
    %v4492 = vand.u32 %v4491, 4294901760
    %4493 = vmatpush1.msra.mxu0 %v4492
    %4494 = vmatprep.subr.mxu0 0.0
    %4495 = vmatpush1.msra.mxu0 0.0
    %4496 = vmatprep.subr.mxu0 0.0
    %4497 = vmatpush1.msra.mxu0 0.0
    %4498 = vmatprep.subr.mxu0 0.0
    %4499 = vmatpush1.msra.mxu0 0.0
    %4500 = vmatprep.subr.mxu0 0.0
    %4501 = vmatpush1.msra.mxu0 0.0
    %4502 = vmatprep.subr.mxu0 0.0
    %4503 = vmatpush1.msra.mxu0 0.0
    %4504 = vmatprep.subr.mxu0 0.0
    %4505 = vmatpush1.msra.mxu0 0.0
    %4506 = vmatprep.subr.mxu0 0.0
    %4507 = vmatpush1.msra.mxu0 0.0
    %4508 = vmatprep.subr.mxu0 0.0
    %4509 = vmatpush1.msra.mxu0 0.0
    %4510 = vmatprep.subr.mxu0 0.0
    %4511 = vmatpush1.msra.mxu0 0.0
    %4512 = vmatprep.subr.mxu0 0.0
    %4513 = vmatpush1.msra.mxu0 0.0
    %4514 = vmatprep.subr.mxu0 0.0
    %4515 = vmatpush1.msra.mxu0 0.0
    %4516 = vmatprep.subr.mxu0 0.0
    %4517 = vmatpush1.msra.mxu0 0.0
    %4518 = vmatprep.subr.mxu0 0.0
    %4519 = vmatpush1.msra.mxu0 0.0
    %4520 = vmatprep.subr.mxu0 0.0
    %4521 = vmatpush1.msra.mxu0 0.0
    %4522 = vmatprep.subr.mxu0 0.0
    %4523 = vmatpush1.msra.mxu0 0.0
    %4524 = vmatprep.subr.mxu0 0.0
    %4525 = vmatpush1.msra.mxu0 0.0
    %4526 = vmatprep.subr.mxu0 0.0
    %4527 = vmatpush1.msra.mxu0 0.0
    %4528 = vmatprep.subr.mxu0 0.0
    %4529 = vmatpush1.msra.mxu0 0.0
    %4530 = vmatprep.subr.mxu0 0.0
    %4531 = vmatpush1.msra.mxu0 0.0
    %4532 = vmatprep.subr.mxu0 0.0
    %4533 = vmatpush1.msra.mxu0 0.0
    %4534 = vmatprep.subr.mxu0 0.0
    %4535 = vmatpush1.msra.mxu0 0.0
    %4536 = vmatprep.subr.mxu0 0.0
    %4537 = vmatpush1.msra.mxu0 0.0
    %4538 = vmatprep.subr.mxu0 0.0
    %4539 = vmatpush1.msra.mxu0 0.0
    %4540 = vmatprep.subr.mxu0 0.0
    %4541 = vmatpush1.msra.mxu0 0.0
    %4542 = vmatprep.subr.mxu0 0.0
    %4543 = vmatpush1.msra.mxu0 0.0
    %4544 = vmatprep.subr.mxu0 0.0
    %4545 = vmatpush1.msra.mxu0 0.0
    %4546 = vmatprep.subr.mxu0 0.0
    %4547 = vmatpush1.msra.mxu0 0.0
    %4548 = vmatprep.subr.mxu0 0.0
    %4549 = vmatpush1.msra.mxu0 0.0
    %4550 = vmatprep.mubr.f32.mxu0 0.0
    %v4551 = vand.u32 %v3982, 4294901760
    %4552 = vmatmul.mubr.f32.gmra.mrb[0].mxu0 %v4551
    %v4553 = vpop.f32.mrb[0].mxu0
    %v4554 = vadd.f32 %v4153, %v4553
    %v4555 = vpop.f32.mrb[0].mxu0
    %4556 = vmatprep.mubr.f32.mxu0 0.0
    %v4557 = vand.u32 %v3985, 4294901760
    %4558 = vmatmul.mubr.f32.gmra.mrb[0].mxu0 %v4557
    %v4559 = vpop.f32.mrb[0].mxu0
    %v4560 = vadd.f32 %v4163, %v4559
    %v4561 = vpop.f32.mrb[0].mxu0
    %4562 = vmatprep.mubr.f32.mxu0 0.0
    %v4563 = vand.u32 %v3988, 4294901760
    %4564 = vmatmul.mubr.f32.gmra.mrb[0].mxu0 %v4563
    %v4565 = vpop.f32.mrb[0].mxu0
    %v4566 = vadd.f32 %v4173, %v4565
    %v4567 = vpop.f32.mrb[0].mxu0
    %4568 = vmatprep.mubr.f32.mxu0 0.0
    %v4569 = vand.u32 %v3991, 4294901760
    %4570 = vmatmul.mubr.f32.gmra.mrb[0].mxu0 %v4569
    %v4571 = vpop.f32.mrb[0].mxu0
    %v4572 = vadd.f32 %v4183, %v4571
    %v4573 = vpop.f32.mrb[0].mxu0
    %4574 = vmatprep.mubr.f32.mxu0 0.0
    %v4575 = vand.u32 %v3994, 4294901760
    %4576 = vmatmul.mubr.f32.gmra.mrb[0].mxu0 %v4575
    %v4577 = vpop.f32.mrb[0].mxu0
    %v4578 = vadd.f32 %v4193, %v4577
    %v4579 = vpop.f32.mrb[0].mxu0
    %4580 = vmatprep.mubr.f32.mxu0 0.0
    %v4581 = vand.u32 %v3997, 4294901760
    %4582 = vmatmul.mubr.f32.gmra.mrb[0].mxu0 %v4581
    %v4583 = vpop.f32.mrb[0].mxu0
    %v4584 = vadd.f32 %v4203, %v4583
    %v4585 = vpop.f32.mrb[0].mxu0
    %4586 = vmatprep.mubr.f32.mxu0 0.0
    %v4587 = vand.u32 %v4000, 4294901760
    %4588 = vmatmul.mubr.f32.gmra.mrb[0].mxu0 %v4587
    %v4589 = vpop.f32.mrb[0].mxu0
    %v4590 = vadd.f32 %v4213, %v4589
    %v4591 = vpop.f32.mrb[0].mxu0
    %4592 = vmatprep.mubr.f32.mxu0 0.0
    %v4593 = vand.u32 %v4003, 4294901760
    %4594 = vmatmul.mubr.f32.gmra.mrb[0].mxu0 %v4593
    %v4595 = vpop.f32.mrb[0].mxu0
    %v4596 = vadd.f32 %v4223, %v4595
    %v4597 = vpop.f32.mrb[0].mxu0
    %4598 = vmatprep.mubr.f32.mxu0 0.0
    %v4599 = vand.u32 %v4006, 4294901760
    %4600 = vmatmul.mubr.f32.gmra.mrb[0].mxu0 %v4599
    %v4601 = vpop.f32.mrb[0].mxu0
    %v4602 = vadd.f32 %v4233, %v4601
    %v4603 = vpop.f32.mrb[0].mxu0
    %4604 = vmatprep.mubr.f32.mxu0 0.0
    %v4605 = vand.u32 %v4009, 4294901760
    %4606 = vmatmul.mubr.f32.gmra.mrb[0].mxu0 %v4605
    %v4607 = vpop.f32.mrb[0].mxu0
    %v4608 = vadd.f32 %v4243, %v4607
    %v4609 = vpop.f32.mrb[0].mxu0
    %4610 = vmatprep.mubr.f32.mxu0 0.0
    %v4611 = vand.u32 %v4012, 4294901760
    %4612 = vmatmul.mubr.f32.gmra.mrb[0].mxu0 %v4611
    %v4613 = vpop.f32.mrb[0].mxu0
    %v4614 = vadd.f32 %v4253, %v4613
    %v4615 = vpop.f32.mrb[0].mxu0
    %4616 = vmatprep.mubr.f32.mxu0 0.0
    %v4617 = vand.u32 %v4015, 4294901760
    %4618 = vmatmul.mubr.f32.gmra.mrb[0].mxu0 %v4617
    %v4619 = vpop.f32.mrb[0].mxu0
    %v4620 = vadd.f32 %v4263, %v4619
    %v4621 = vpop.f32.mrb[0].mxu0
    %4622 = vmatprep.mubr.f32.mxu0 0.0
    %v4623 = vand.u32 %v4018, 4294901760
    %4624 = vmatmul.mubr.f32.gmra.mrb[0].mxu0 %v4623
    %v4625 = vpop.f32.mrb[0].mxu0
    %v4626 = vadd.f32 %v4273, %v4625
    %v4627 = vpop.f32.mrb[0].mxu0
    %4628 = vmatprep.mubr.f32.mxu0 0.0
    %v4629 = vand.u32 %v4021, 4294901760
    %4630 = vmatmul.mubr.f32.gmra.mrb[0].mxu0 %v4629
    %v4631 = vpop.f32.mrb[0].mxu0
    %v4632 = vadd.f32 %v4283, %v4631
    %v4633 = vpop.f32.mrb[0].mxu0
    %4634 = vmatprep.mubr.f32.mxu0 0.0
    %v4635 = vand.u32 %v4024, 4294901760
    %4636 = vmatmul.mubr.f32.gmra.mrb[0].mxu0 %v4635
    %v4637 = vpop.f32.mrb[0].mxu0
    %v4638 = vadd.f32 %v4293, %v4637
    %v4639 = vpop.f32.mrb[0].mxu0
    %4640 = vmatprep.mubr.f32.mxu0 0.0
    %v4641 = vand.u32 %v4027, 4294901760
    %4642 = vmatmul.mubr.f32.gmra.mrb[0].mxu0 %v4641
    %v4643 = vpop.f32.mrb[0].mxu0
    %v4644 = vadd.f32 %v4303, %v4643
    %v4645 = vpop.f32.mrb[0].mxu0
    %4646 = vmatprep.mubr.f32.mxu0 0.0
    %v4647 = vand.u32 %v4030, 4294901760
    %4648 = vmatmul.mubr.f32.gmra.mrb[0].mxu0 %v4647
    %v4649 = vpop.f32.mrb[0].mxu0
    %v4650 = vadd.f32 %v4313, %v4649
    %v4651 = vpop.f32.mrb[0].mxu0
    %4652 = vmatprep.mubr.f32.mxu0 0.0
    %v4653 = vand.u32 %v4033, 4294901760
    %4654 = vmatmul.mubr.f32.gmra.mrb[0].mxu0 %v4653
    %v4655 = vpop.f32.mrb[0].mxu0
    %v4656 = vadd.f32 %v4323, %v4655
    %v4657 = vpop.f32.mrb[0].mxu0
    %4658 = vmatprep.mubr.f32.mxu0 0.0
    %v4659 = vand.u32 %v4036, 4294901760
    %4660 = vmatmul.mubr.f32.gmra.mrb[0].mxu0 %v4659
    %v4661 = vpop.f32.mrb[0].mxu0
    %v4662 = vadd.f32 %v4333, %v4661
    %v4663 = vpop.f32.mrb[0].mxu0
    %4664 = vmatprep.mubr.f32.mxu0 0.0
    %v4665 = vand.u32 %v4039, 4294901760
    %4666 = vmatmul.mubr.f32.gmra.mrb[0].mxu0 %v4665
    %v4667 = vpop.f32.mrb[0].mxu0
    %v4668 = vadd.f32 %v4343, %v4667
    %v4669 = vpop.f32.mrb[0].mxu0
    %4670 = vmatprep.mubr.f32.mxu0 0.0
    %v4671 = vand.u32 %v4042, 4294901760
    %4672 = vmatmul.mubr.f32.gmra.mrb[0].mxu0 %v4671
    %v4673 = vpop.f32.mrb[0].mxu0
    %v4674 = vadd.f32 %v4353, %v4673
    %v4675 = vpop.f32.mrb[0].mxu0
    %4676 = vmatprep.mubr.f32.mxu0 0.0
    %v4677 = vand.u32 %v4045, 4294901760
    %4678 = vmatmul.mubr.f32.gmra.mrb[0].mxu0 %v4677
    %v4679 = vpop.f32.mrb[0].mxu0
    %v4680 = vadd.f32 %v4363, %v4679
    %v4681 = vpop.f32.mrb[0].mxu0
    %4682 = vmatprep.mubr.f32.mxu0 0.0
    %v4683 = vand.u32 %v4048, 4294901760
    %4684 = vmatmul.mubr.f32.gmra.mrb[0].mxu0 %v4683
    %v4685 = vpop.f32.mrb[0].mxu0
    %v4686 = vadd.f32 %v4373, %v4685
    %v4687 = vpop.f32.mrb[0].mxu0
    %4688 = vmatprep.mubr.f32.mxu0 0.0
    %v4689 = vand.u32 %v4051, 4294901760
    %4690 = vmatmul.mubr.f32.gmra.mrb[0].mxu0 %v4689
    %v4691 = vpop.f32.mrb[0].mxu0
    %v4692 = vadd.f32 %v4383, %v4691
    %v4693 = vpop.f32.mrb[0].mxu0
    %4694 = vmatprep.mubr.f32.mxu0 0.0
    %v4695 = vand.u32 %v4054, 4294901760
    %4696 = vmatmul.mubr.f32.gmra.mrb[0].mxu0 %v4695
    %v4697 = vpop.f32.mrb[0].mxu0
    %v4698 = vadd.f32 %v4393, %v4697
    %v4699 = vpop.f32.mrb[0].mxu0
    %4700 = vmatprep.mubr.f32.mxu0 0.0
    %v4701 = vand.u32 %v4057, 4294901760
    %4702 = vmatmul.mubr.f32.gmra.mrb[0].mxu0 %v4701
    %v4703 = vpop.f32.mrb[0].mxu0
    %v4704 = vadd.f32 %v4403, %v4703
    %v4705 = vpop.f32.mrb[0].mxu0
    %4706 = vmatprep.mubr.f32.mxu0 0.0
    %v4707 = vand.u32 %v4060, 4294901760
    %4708 = vmatmul.mubr.f32.gmra.mrb[0].mxu0 %v4707
    %v4709 = vpop.f32.mrb[0].mxu0
    %v4710 = vadd.f32 %v4413, %v4709
    %v4711 = vpop.f32.mrb[0].mxu0
    %4712 = vmatprep.mubr.f32.mxu0 0.0
    %v4713 = vand.u32 %v4063, 4294901760
    %4714 = vmatmul.mubr.f32.gmra.mrb[0].mxu0 %v4713
    %v4715 = vpop.f32.mrb[0].mxu0
    %v4716 = vadd.f32 %v4423, %v4715
    %v4717 = vpop.f32.mrb[0].mxu0
    %4718 = vmatprep.mubr.f32.mxu0 0.0
    %v4719 = vand.u32 %v4066, 4294901760
    %4720 = vmatmul.mubr.f32.gmra.mrb[0].mxu0 %v4719
    %v4721 = vpop.f32.mrb[0].mxu0
    %v4722 = vadd.f32 %v4433, %v4721
    %v4723 = vpop.f32.mrb[0].mxu0
    %4724 = vmatprep.mubr.f32.mxu0 0.0
    %v4725 = vand.u32 %v4069, 4294901760
    %4726 = vmatmul.mubr.f32.gmra.mrb[0].mxu0 %v4725
    %v4727 = vpop.f32.mrb[0].mxu0
    %v4728 = vadd.f32 %v4443, %v4727
    %v4729 = vpop.f32.mrb[0].mxu0
    %4730 = vmatprep.mubr.f32.mxu0 0.0
    %v4731 = vand.u32 %v4072, 4294901760
    %4732 = vmatmul.mubr.f32.gmra.mrb[0].mxu0 %v4731
    %v4733 = vpop.f32.mrb[0].mxu0
    %v4734 = vadd.f32 %v4453, %v4733
    %v4735 = vpop.f32.mrb[0].mxu0
    %4736 = vmatprep.mubr.f32.mxu0 0.0
    %v4737 = vand.u32 %v4075, 4294901760
    %4738 = vmatmul.mubr.f32.gmra.mrb[0].mxu0 %v4737
    %v4739 = vpop.f32.mrb[0].mxu0
    %v4740 = vadd.f32 %v4463, %v4739
    %v4741 = vpop.f32.mrb[0].mxu0
    %4742 = vdwg.mxu0
    %4743 = vmatprep.subr.mxu0 0.0
    %v4744 = vand.u32 %v3977, 4294901760
    %v4745 = vsub.f32 %v3977, %v4744
    %4746 = vmatpush1.msra.mxu0 %v4745
    %4747 = vmatprep.subr.mxu0 0.0
    %v4748 = vand.u32 %v3978, 4294901760
    %v4749 = vsub.f32 %v3978, %v4748
    %4750 = vmatpush1.msra.mxu0 %v4749
    %4751 = vmatprep.subr.mxu0 0.0
    %v4752 = vand.u32 %v3979, 4294901760
    %v4753 = vsub.f32 %v3979, %v4752
    %4754 = vmatpush1.msra.mxu0 %v4753
    %4755 = vmatprep.subr.mxu0 0.0
    %v4756 = vand.u32 %v3980, 4294901760
    %v4757 = vsub.f32 %v3980, %v4756
    %4758 = vmatpush1.msra.mxu0 %v4757
    %4759 = vmatprep.subr.mxu0 0.0
    %4760 = vmatpush1.msra.mxu0 0.0
    %4761 = vmatprep.subr.mxu0 0.0
    %4762 = vmatpush1.msra.mxu0 0.0
    %4763 = vmatprep.subr.mxu0 0.0
    %4764 = vmatpush1.msra.mxu0 0.0
    %4765 = vmatprep.subr.mxu0 0.0
    %4766 = vmatpush1.msra.mxu0 0.0
    %4767 = vmatprep.subr.mxu0 0.0
    %4768 = vmatpush1.msra.mxu0 0.0
    %4769 = vmatprep.subr.mxu0 0.0
    %4770 = vmatpush1.msra.mxu0 0.0
    %4771 = vmatprep.subr.mxu0 0.0
    %4772 = vmatpush1.msra.mxu0 0.0
    %4773 = vmatprep.subr.mxu0 0.0
    %4774 = vmatpush1.msra.mxu0 0.0
    %4775 = vmatprep.subr.mxu0 0.0
    %4776 = vmatpush1.msra.mxu0 0.0
    %4777 = vmatprep.subr.mxu0 0.0
    %4778 = vmatpush1.msra.mxu0 0.0
    %4779 = vmatprep.subr.mxu0 0.0
    %4780 = vmatpush1.msra.mxu0 0.0
    %4781 = vmatprep.subr.mxu0 0.0
    %4782 = vmatpush1.msra.mxu0 0.0
    %4783 = vmatprep.subr.mxu0 0.0
    %4784 = vmatpush1.msra.mxu0 0.0
    %4785 = vmatprep.subr.mxu0 0.0
    %4786 = vmatpush1.msra.mxu0 0.0
    %4787 = vmatprep.subr.mxu0 0.0
    %4788 = vmatpush1.msra.mxu0 0.0
    %4789 = vmatprep.subr.mxu0 0.0
    %4790 = vmatpush1.msra.mxu0 0.0
    %4791 = vmatprep.subr.mxu0 0.0
    %4792 = vmatpush1.msra.mxu0 0.0
    %4793 = vmatprep.subr.mxu0 0.0
    %4794 = vmatpush1.msra.mxu0 0.0
    %4795 = vmatprep.subr.mxu0 0.0
    %4796 = vmatpush1.msra.mxu0 0.0
    %4797 = vmatprep.subr.mxu0 0.0
    %4798 = vmatpush1.msra.mxu0 0.0
    %4799 = vmatprep.subr.mxu0 0.0
    %4800 = vmatpush1.msra.mxu0 0.0
    %4801 = vmatprep.subr.mxu0 0.0
    %4802 = vmatpush1.msra.mxu0 0.0
    %4803 = vmatprep.subr.mxu0 0.0
    %4804 = vmatpush1.msra.mxu0 0.0
    %4805 = vmatprep.subr.mxu0 0.0
    %4806 = vmatpush1.msra.mxu0 0.0
    %4807 = vmatprep.subr.mxu0 0.0
    %4808 = vmatpush1.msra.mxu0 0.0
    %4809 = vmatprep.subr.mxu0 0.0
    %4810 = vmatpush1.msra.mxu0 0.0
    %4811 = vmatprep.subr.mxu0 0.0
    %4812 = vmatpush1.msra.mxu0 0.0
    %4813 = vmatprep.subr.mxu0 0.0
    %4814 = vmatpush1.msra.mxu0 0.0
    %4815 = vmatprep.mubr.f32.mxu0 0.0
    %v4816 = vand.u32 %v3982, 4294901760
    %v4817 = vsub.f32 %v3982, %v4816
    %4818 = vmatmul.mubr.f32.gmra.mrb[0].mxu0 %v4817
    %v4819 = vpop.f32.mrb[0].mxu0
    %v4820 = vadd.f32 %v4554, %v4819
    %v4821 = vpop.f32.mrb[0].mxu0
    %4822 = vmatprep.mubr.f32.mxu0 0.0
    %v4823 = vand.u32 %v3985, 4294901760
    %v4824 = vsub.f32 %v3985, %v4823
    %4825 = vmatmul.mubr.f32.gmra.mrb[0].mxu0 %v4824
    %v4826 = vpop.f32.mrb[0].mxu0
    %v4827 = vadd.f32 %v4560, %v4826
    %v4828 = vpop.f32.mrb[0].mxu0
    %4829 = vmatprep.mubr.f32.mxu0 0.0
    %v4830 = vand.u32 %v3988, 4294901760
    %v4831 = vsub.f32 %v3988, %v4830
    %4832 = vmatmul.mubr.f32.gmra.mrb[0].mxu0 %v4831
    %v4833 = vpop.f32.mrb[0].mxu0
    %v4834 = vadd.f32 %v4566, %v4833
    %v4835 = vpop.f32.mrb[0].mxu0
    %4836 = vmatprep.mubr.f32.mxu0 0.0
    %v4837 = vand.u32 %v3991, 4294901760
    %v4838 = vsub.f32 %v3991, %v4837
    %4839 = vmatmul.mubr.f32.gmra.mrb[0].mxu0 %v4838
    %v4840 = vpop.f32.mrb[0].mxu0
    %v4841 = vadd.f32 %v4572, %v4840
    %v4842 = vpop.f32.mrb[0].mxu0
    %4843 = vmatprep.mubr.f32.mxu0 0.0
    %v4844 = vand.u32 %v3994, 4294901760
    %v4845 = vsub.f32 %v3994, %v4844
    %4846 = vmatmul.mubr.f32.gmra.mrb[0].mxu0 %v4845
    %v4847 = vpop.f32.mrb[0].mxu0
    %v4848 = vadd.f32 %v4578, %v4847
    %v4849 = vpop.f32.mrb[0].mxu0
    %4850 = vmatprep.mubr.f32.mxu0 0.0
    %v4851 = vand.u32 %v3997, 4294901760
    %v4852 = vsub.f32 %v3997, %v4851
    %4853 = vmatmul.mubr.f32.gmra.mrb[0].mxu0 %v4852
    %v4854 = vpop.f32.mrb[0].mxu0
    %v4855 = vadd.f32 %v4584, %v4854
    %v4856 = vpop.f32.mrb[0].mxu0
    %4857 = vmatprep.mubr.f32.mxu0 0.0
    %v4858 = vand.u32 %v4000, 4294901760
    %v4859 = vsub.f32 %v4000, %v4858
    %4860 = vmatmul.mubr.f32.gmra.mrb[0].mxu0 %v4859
    %v4861 = vpop.f32.mrb[0].mxu0
    %v4862 = vadd.f32 %v4590, %v4861
    %v4863 = vpop.f32.mrb[0].mxu0
    %4864 = vmatprep.mubr.f32.mxu0 0.0
    %v4865 = vand.u32 %v4003, 4294901760
    %v4866 = vsub.f32 %v4003, %v4865
    %4867 = vmatmul.mubr.f32.gmra.mrb[0].mxu0 %v4866
    %v4868 = vpop.f32.mrb[0].mxu0
    %v4869 = vadd.f32 %v4596, %v4868
    %v4870 = vpop.f32.mrb[0].mxu0
    %4871 = vmatprep.mubr.f32.mxu0 0.0
    %v4872 = vand.u32 %v4006, 4294901760
    %v4873 = vsub.f32 %v4006, %v4872
    %4874 = vmatmul.mubr.f32.gmra.mrb[0].mxu0 %v4873
    %v4875 = vpop.f32.mrb[0].mxu0
    %v4876 = vadd.f32 %v4602, %v4875
    %v4877 = vpop.f32.mrb[0].mxu0
    %4878 = vmatprep.mubr.f32.mxu0 0.0
    %v4879 = vand.u32 %v4009, 4294901760
    %v4880 = vsub.f32 %v4009, %v4879
    %4881 = vmatmul.mubr.f32.gmra.mrb[0].mxu0 %v4880
    %v4882 = vpop.f32.mrb[0].mxu0
    %v4883 = vadd.f32 %v4608, %v4882
    %v4884 = vpop.f32.mrb[0].mxu0
    %4885 = vmatprep.mubr.f32.mxu0 0.0
    %v4886 = vand.u32 %v4012, 4294901760
    %v4887 = vsub.f32 %v4012, %v4886
    %4888 = vmatmul.mubr.f32.gmra.mrb[0].mxu0 %v4887
    %v4889 = vpop.f32.mrb[0].mxu0
    %v4890 = vadd.f32 %v4614, %v4889
    %v4891 = vpop.f32.mrb[0].mxu0
    %4892 = vmatprep.mubr.f32.mxu0 0.0
    %v4893 = vand.u32 %v4015, 4294901760
    %v4894 = vsub.f32 %v4015, %v4893
    %4895 = vmatmul.mubr.f32.gmra.mrb[0].mxu0 %v4894
    %v4896 = vpop.f32.mrb[0].mxu0
    %v4897 = vadd.f32 %v4620, %v4896
    %v4898 = vpop.f32.mrb[0].mxu0
    %4899 = vmatprep.mubr.f32.mxu0 0.0
    %v4900 = vand.u32 %v4018, 4294901760
    %v4901 = vsub.f32 %v4018, %v4900
    %4902 = vmatmul.mubr.f32.gmra.mrb[0].mxu0 %v4901
    %v4903 = vpop.f32.mrb[0].mxu0
    %v4904 = vadd.f32 %v4626, %v4903
    %v4905 = vpop.f32.mrb[0].mxu0
    %4906 = vmatprep.mubr.f32.mxu0 0.0
    %v4907 = vand.u32 %v4021, 4294901760
    %v4908 = vsub.f32 %v4021, %v4907
    %4909 = vmatmul.mubr.f32.gmra.mrb[0].mxu0 %v4908
    %v4910 = vpop.f32.mrb[0].mxu0
    %v4911 = vadd.f32 %v4632, %v4910
    %v4912 = vpop.f32.mrb[0].mxu0
    %4913 = vmatprep.mubr.f32.mxu0 0.0
    %v4914 = vand.u32 %v4024, 4294901760
    %v4915 = vsub.f32 %v4024, %v4914
    %4916 = vmatmul.mubr.f32.gmra.mrb[0].mxu0 %v4915
    %v4917 = vpop.f32.mrb[0].mxu0
    %v4918 = vadd.f32 %v4638, %v4917
    %v4919 = vpop.f32.mrb[0].mxu0
    %4920 = vmatprep.mubr.f32.mxu0 0.0
    %v4921 = vand.u32 %v4027, 4294901760
    %v4922 = vsub.f32 %v4027, %v4921
    %4923 = vmatmul.mubr.f32.gmra.mrb[0].mxu0 %v4922
    %v4924 = vpop.f32.mrb[0].mxu0
    %v4925 = vadd.f32 %v4644, %v4924
    %v4926 = vpop.f32.mrb[0].mxu0
    %4927 = vmatprep.mubr.f32.mxu0 0.0
    %v4928 = vand.u32 %v4030, 4294901760
    %v4929 = vsub.f32 %v4030, %v4928
    %4930 = vmatmul.mubr.f32.gmra.mrb[0].mxu0 %v4929
    %v4931 = vpop.f32.mrb[0].mxu0
    %v4932 = vadd.f32 %v4650, %v4931
    %v4933 = vpop.f32.mrb[0].mxu0
    %4934 = vmatprep.mubr.f32.mxu0 0.0
    %v4935 = vand.u32 %v4033, 4294901760
    %v4936 = vsub.f32 %v4033, %v4935
    %4937 = vmatmul.mubr.f32.gmra.mrb[0].mxu0 %v4936
    %v4938 = vpop.f32.mrb[0].mxu0
    %v4939 = vadd.f32 %v4656, %v4938
    %v4940 = vpop.f32.mrb[0].mxu0
    %4941 = vmatprep.mubr.f32.mxu0 0.0
    %v4942 = vand.u32 %v4036, 4294901760
    %v4943 = vsub.f32 %v4036, %v4942
    %4944 = vmatmul.mubr.f32.gmra.mrb[0].mxu0 %v4943
    %v4945 = vpop.f32.mrb[0].mxu0
    %v4946 = vadd.f32 %v4662, %v4945
    %v4947 = vpop.f32.mrb[0].mxu0
    %4948 = vmatprep.mubr.f32.mxu0 0.0
    %v4949 = vand.u32 %v4039, 4294901760
    %v4950 = vsub.f32 %v4039, %v4949
    %4951 = vmatmul.mubr.f32.gmra.mrb[0].mxu0 %v4950
    %v4952 = vpop.f32.mrb[0].mxu0
    %v4953 = vadd.f32 %v4668, %v4952
    %v4954 = vpop.f32.mrb[0].mxu0
    %4955 = vmatprep.mubr.f32.mxu0 0.0
    %v4956 = vand.u32 %v4042, 4294901760
    %v4957 = vsub.f32 %v4042, %v4956
    %4958 = vmatmul.mubr.f32.gmra.mrb[0].mxu0 %v4957
    %v4959 = vpop.f32.mrb[0].mxu0
    %v4960 = vadd.f32 %v4674, %v4959
    %v4961 = vpop.f32.mrb[0].mxu0
    %4962 = vmatprep.mubr.f32.mxu0 0.0
    %v4963 = vand.u32 %v4045, 4294901760
    %v4964 = vsub.f32 %v4045, %v4963
    %4965 = vmatmul.mubr.f32.gmra.mrb[0].mxu0 %v4964
    %v4966 = vpop.f32.mrb[0].mxu0
    %v4967 = vadd.f32 %v4680, %v4966
    %v4968 = vpop.f32.mrb[0].mxu0
    %4969 = vmatprep.mubr.f32.mxu0 0.0
    %v4970 = vand.u32 %v4048, 4294901760
    %v4971 = vsub.f32 %v4048, %v4970
    %4972 = vmatmul.mubr.f32.gmra.mrb[0].mxu0 %v4971
    %v4973 = vpop.f32.mrb[0].mxu0
    %v4974 = vadd.f32 %v4686, %v4973
    %v4975 = vpop.f32.mrb[0].mxu0
    %4976 = vmatprep.mubr.f32.mxu0 0.0
    %v4977 = vand.u32 %v4051, 4294901760
    %v4978 = vsub.f32 %v4051, %v4977
    %4979 = vmatmul.mubr.f32.gmra.mrb[0].mxu0 %v4978
    %v4980 = vpop.f32.mrb[0].mxu0
    %v4981 = vadd.f32 %v4692, %v4980
    %v4982 = vpop.f32.mrb[0].mxu0
    %4983 = vmatprep.mubr.f32.mxu0 0.0
    %v4984 = vand.u32 %v4054, 4294901760
    %v4985 = vsub.f32 %v4054, %v4984
    %4986 = vmatmul.mubr.f32.gmra.mrb[0].mxu0 %v4985
    %v4987 = vpop.f32.mrb[0].mxu0
    %v4988 = vadd.f32 %v4698, %v4987
    %v4989 = vpop.f32.mrb[0].mxu0
    %4990 = vmatprep.mubr.f32.mxu0 0.0
    %v4991 = vand.u32 %v4057, 4294901760
    %v4992 = vsub.f32 %v4057, %v4991
    %4993 = vmatmul.mubr.f32.gmra.mrb[0].mxu0 %v4992
    %v4994 = vpop.f32.mrb[0].mxu0
    %v4995 = vadd.f32 %v4704, %v4994
    %v4996 = vpop.f32.mrb[0].mxu0
    %4997 = vmatprep.mubr.f32.mxu0 0.0
    %v4998 = vand.u32 %v4060, 4294901760
    %v4999 = vsub.f32 %v4060, %v4998
    %5000 = vmatmul.mubr.f32.gmra.mrb[0].mxu0 %v4999
    %v5001 = vpop.f32.mrb[0].mxu0
    %v5002 = vadd.f32 %v4710, %v5001
    %v5003 = vpop.f32.mrb[0].mxu0
    %5004 = vmatprep.mubr.f32.mxu0 0.0
    %v5005 = vand.u32 %v4063, 4294901760
    %v5006 = vsub.f32 %v4063, %v5005
    %5007 = vmatmul.mubr.f32.gmra.mrb[0].mxu0 %v5006
    %v5008 = vpop.f32.mrb[0].mxu0
    %v5009 = vadd.f32 %v4716, %v5008
    %v5010 = vpop.f32.mrb[0].mxu0
    %5011 = vmatprep.mubr.f32.mxu0 0.0
    %v5012 = vand.u32 %v4066, 4294901760
    %v5013 = vsub.f32 %v4066, %v5012
    %5014 = vmatmul.mubr.f32.gmra.mrb[0].mxu0 %v5013
    %v5015 = vpop.f32.mrb[0].mxu0
    %v5016 = vadd.f32 %v4722, %v5015
    %v5017 = vpop.f32.mrb[0].mxu0
    %5018 = vmatprep.mubr.f32.mxu0 0.0
    %v5019 = vand.u32 %v4069, 4294901760
    %v5020 = vsub.f32 %v4069, %v5019
    %5021 = vmatmul.mubr.f32.gmra.mrb[0].mxu0 %v5020
    %v5022 = vpop.f32.mrb[0].mxu0
    %v5023 = vadd.f32 %v4728, %v5022
    %v5024 = vpop.f32.mrb[0].mxu0
    %5025 = vmatprep.mubr.f32.mxu0 0.0
    %v5026 = vand.u32 %v4072, 4294901760
    %v5027 = vsub.f32 %v4072, %v5026
    %5028 = vmatmul.mubr.f32.gmra.mrb[0].mxu0 %v5027
    %v5029 = vpop.f32.mrb[0].mxu0
    %v5030 = vadd.f32 %v4734, %v5029
    %v5031 = vpop.f32.mrb[0].mxu0
    %5032 = vmatprep.mubr.f32.mxu0 0.0
    %v5033 = vand.u32 %v4075, 4294901760
    %v5034 = vsub.f32 %v4075, %v5033
    %5035 = vmatmul.mubr.f32.gmra.mrb[0].mxu0 %v5034
    %v5036 = vpop.f32.mrb[0].mxu0
    %v5037 = vadd.f32 %v4740, %v5036
    %v5038 = vpop.f32.mrb[0].mxu0
    %5039 = vdwg.mxu0
    %5040 = vmatprep.subr.mxu0 0.0
    %v5041 = vand.u32 %v3977, 4294901760
    %5042 = vmatpush1.msra.mxu0 %v5041
    %5043 = vmatprep.subr.mxu0 0.0
    %v5044 = vand.u32 %v3978, 4294901760
    %5045 = vmatpush1.msra.mxu0 %v5044
    %5046 = vmatprep.subr.mxu0 0.0
    %v5047 = vand.u32 %v3979, 4294901760
    %5048 = vmatpush1.msra.mxu0 %v5047
    %5049 = vmatprep.subr.mxu0 0.0
    %v5050 = vand.u32 %v3980, 4294901760
    %5051 = vmatpush1.msra.mxu0 %v5050
    %5052 = vmatprep.subr.mxu0 0.0
    %5053 = vmatpush1.msra.mxu0 0.0
    %5054 = vmatprep.subr.mxu0 0.0
    %5055 = vmatpush1.msra.mxu0 0.0
    %5056 = vmatprep.subr.mxu0 0.0
    %5057 = vmatpush1.msra.mxu0 0.0
    %5058 = vmatprep.subr.mxu0 0.0
    %5059 = vmatpush1.msra.mxu0 0.0
    %5060 = vmatprep.subr.mxu0 0.0
    %5061 = vmatpush1.msra.mxu0 0.0
    %5062 = vmatprep.subr.mxu0 0.0
    %5063 = vmatpush1.msra.mxu0 0.0
    %5064 = vmatprep.subr.mxu0 0.0
    %5065 = vmatpush1.msra.mxu0 0.0
    %5066 = vmatprep.subr.mxu0 0.0
    %5067 = vmatpush1.msra.mxu0 0.0
    %5068 = vmatprep.subr.mxu0 0.0
    %5069 = vmatpush1.msra.mxu0 0.0
    %5070 = vmatprep.subr.mxu0 0.0
    %5071 = vmatpush1.msra.mxu0 0.0
    %5072 = vmatprep.subr.mxu0 0.0
    %5073 = vmatpush1.msra.mxu0 0.0
    %5074 = vmatprep.subr.mxu0 0.0
    %5075 = vmatpush1.msra.mxu0 0.0
    %5076 = vmatprep.subr.mxu0 0.0
    %5077 = vmatpush1.msra.mxu0 0.0
    %5078 = vmatprep.subr.mxu0 0.0
    %5079 = vmatpush1.msra.mxu0 0.0
    %5080 = vmatprep.subr.mxu0 0.0
    %5081 = vmatpush1.msra.mxu0 0.0
    %5082 = vmatprep.subr.mxu0 0.0
    %5083 = vmatpush1.msra.mxu0 0.0
    %5084 = vmatprep.subr.mxu0 0.0
    %5085 = vmatpush1.msra.mxu0 0.0
    %5086 = vmatprep.subr.mxu0 0.0
    %5087 = vmatpush1.msra.mxu0 0.0
    %5088 = vmatprep.subr.mxu0 0.0
    %5089 = vmatpush1.msra.mxu0 0.0
    %5090 = vmatprep.subr.mxu0 0.0
    %5091 = vmatpush1.msra.mxu0 0.0
    %5092 = vmatprep.subr.mxu0 0.0
    %5093 = vmatpush1.msra.mxu0 0.0
    %5094 = vmatprep.subr.mxu0 0.0
    %5095 = vmatpush1.msra.mxu0 0.0
    %5096 = vmatprep.subr.mxu0 0.0
    %5097 = vmatpush1.msra.mxu0 0.0
    %5098 = vmatprep.subr.mxu0 0.0
    %5099 = vmatpush1.msra.mxu0 0.0
    %5100 = vmatprep.subr.mxu0 0.0
    %5101 = vmatpush1.msra.mxu0 0.0
    %5102 = vmatprep.subr.mxu0 0.0
    %5103 = vmatpush1.msra.mxu0 0.0
    %5104 = vmatprep.subr.mxu0 0.0
    %5105 = vmatpush1.msra.mxu0 0.0
    %5106 = vmatprep.subr.mxu0 0.0
    %5107 = vmatpush1.msra.mxu0 0.0
    %5108 = vmatprep.mubr.f32.mxu0 0.0
    %v5109 = vand.u32 %v3982, 4294901760
    %v5110 = vsub.f32 %v3982, %v5109
    %v5111 = vand.u32 %v5110, 4294901760
    %5112 = vmatmul.mubr.f32.gmra.mrb[0].mxu0 %v5111
    %v5113 = vpop.f32.mrb[0].mxu0
    %v5114 = vadd.f32 %v4820, %v5113
    %v5115 = vpop.f32.mrb[0].mxu0
    %5116 = vmatprep.mubr.f32.mxu0 0.0
    %v5117 = vand.u32 %v3985, 4294901760
    %v5118 = vsub.f32 %v3985, %v5117
    %v5119 = vand.u32 %v5118, 4294901760
    %5120 = vmatmul.mubr.f32.gmra.mrb[0].mxu0 %v5119
    %v5121 = vpop.f32.mrb[0].mxu0
    %v5122 = vadd.f32 %v4827, %v5121
    %v5123 = vpop.f32.mrb[0].mxu0
    %5124 = vmatprep.mubr.f32.mxu0 0.0
    %v5125 = vand.u32 %v3988, 4294901760
    %v5126 = vsub.f32 %v3988, %v5125
    %v5127 = vand.u32 %v5126, 4294901760
    %5128 = vmatmul.mubr.f32.gmra.mrb[0].mxu0 %v5127
    %v5129 = vpop.f32.mrb[0].mxu0
    %v5130 = vadd.f32 %v4834, %v5129
    %v5131 = vpop.f32.mrb[0].mxu0
    %5132 = vmatprep.mubr.f32.mxu0 0.0
    %v5133 = vand.u32 %v3991, 4294901760
    %v5134 = vsub.f32 %v3991, %v5133
    %v5135 = vand.u32 %v5134, 4294901760
    %5136 = vmatmul.mubr.f32.gmra.mrb[0].mxu0 %v5135
    %v5137 = vpop.f32.mrb[0].mxu0
    %v5138 = vadd.f32 %v4841, %v5137
    %v5139 = vpop.f32.mrb[0].mxu0
    %5140 = vmatprep.mubr.f32.mxu0 0.0
    %v5141 = vand.u32 %v3994, 4294901760
    %v5142 = vsub.f32 %v3994, %v5141
    %v5143 = vand.u32 %v5142, 4294901760
    %5144 = vmatmul.mubr.f32.gmra.mrb[0].mxu0 %v5143
    %v5145 = vpop.f32.mrb[0].mxu0
    %v5146 = vadd.f32 %v4848, %v5145
    %v5147 = vpop.f32.mrb[0].mxu0
    %5148 = vmatprep.mubr.f32.mxu0 0.0
    %v5149 = vand.u32 %v3997, 4294901760
    %v5150 = vsub.f32 %v3997, %v5149
    %v5151 = vand.u32 %v5150, 4294901760
    %5152 = vmatmul.mubr.f32.gmra.mrb[0].mxu0 %v5151
    %v5153 = vpop.f32.mrb[0].mxu0
    %v5154 = vadd.f32 %v4855, %v5153
    %v5155 = vpop.f32.mrb[0].mxu0
    %5156 = vmatprep.mubr.f32.mxu0 0.0
    %v5157 = vand.u32 %v4000, 4294901760
    %v5158 = vsub.f32 %v4000, %v5157
    %v5159 = vand.u32 %v5158, 4294901760
    %5160 = vmatmul.mubr.f32.gmra.mrb[0].mxu0 %v5159
    %v5161 = vpop.f32.mrb[0].mxu0
    %v5162 = vadd.f32 %v4862, %v5161
    %v5163 = vpop.f32.mrb[0].mxu0
    %5164 = vmatprep.mubr.f32.mxu0 0.0
    %v5165 = vand.u32 %v4003, 4294901760
    %v5166 = vsub.f32 %v4003, %v5165
    %v5167 = vand.u32 %v5166, 4294901760
    %5168 = vmatmul.mubr.f32.gmra.mrb[0].mxu0 %v5167
    %v5169 = vpop.f32.mrb[0].mxu0
    %v5170 = vadd.f32 %v4869, %v5169
    %v5171 = vpop.f32.mrb[0].mxu0
    %5172 = vmatprep.mubr.f32.mxu0 0.0
    %v5173 = vand.u32 %v4006, 4294901760
    %v5174 = vsub.f32 %v4006, %v5173
    %v5175 = vand.u32 %v5174, 4294901760
    %5176 = vmatmul.mubr.f32.gmra.mrb[0].mxu0 %v5175
    %v5177 = vpop.f32.mrb[0].mxu0
    %v5178 = vadd.f32 %v4876, %v5177
    %v5179 = vpop.f32.mrb[0].mxu0
    %5180 = vmatprep.mubr.f32.mxu0 0.0
    %v5181 = vand.u32 %v4009, 4294901760
    %v5182 = vsub.f32 %v4009, %v5181
    %v5183 = vand.u32 %v5182, 4294901760
    %5184 = vmatmul.mubr.f32.gmra.mrb[0].mxu0 %v5183
    %v5185 = vpop.f32.mrb[0].mxu0
    %v5186 = vadd.f32 %v4883, %v5185
    %v5187 = vpop.f32.mrb[0].mxu0
    %5188 = vmatprep.mubr.f32.mxu0 0.0
    %v5189 = vand.u32 %v4012, 4294901760
    %v5190 = vsub.f32 %v4012, %v5189
    %v5191 = vand.u32 %v5190, 4294901760
    %5192 = vmatmul.mubr.f32.gmra.mrb[0].mxu0 %v5191
    %v5193 = vpop.f32.mrb[0].mxu0
    %v5194 = vadd.f32 %v4890, %v5193
    %v5195 = vpop.f32.mrb[0].mxu0
    %5196 = vmatprep.mubr.f32.mxu0 0.0
    %v5197 = vand.u32 %v4015, 4294901760
    %v5198 = vsub.f32 %v4015, %v5197
    %v5199 = vand.u32 %v5198, 4294901760
    %5200 = vmatmul.mubr.f32.gmra.mrb[0].mxu0 %v5199
    %v5201 = vpop.f32.mrb[0].mxu0
    %v5202 = vadd.f32 %v4897, %v5201
    %v5203 = vpop.f32.mrb[0].mxu0
    %5204 = vmatprep.mubr.f32.mxu0 0.0
    %v5205 = vand.u32 %v4018, 4294901760
    %v5206 = vsub.f32 %v4018, %v5205
    %v5207 = vand.u32 %v5206, 4294901760
    %5208 = vmatmul.mubr.f32.gmra.mrb[0].mxu0 %v5207
    %v5209 = vpop.f32.mrb[0].mxu0
    %v5210 = vadd.f32 %v4904, %v5209
    %v5211 = vpop.f32.mrb[0].mxu0
    %5212 = vmatprep.mubr.f32.mxu0 0.0
    %v5213 = vand.u32 %v4021, 4294901760
    %v5214 = vsub.f32 %v4021, %v5213
    %v5215 = vand.u32 %v5214, 4294901760
    %5216 = vmatmul.mubr.f32.gmra.mrb[0].mxu0 %v5215
    %v5217 = vpop.f32.mrb[0].mxu0
    %v5218 = vadd.f32 %v4911, %v5217
    %v5219 = vpop.f32.mrb[0].mxu0
    %5220 = vmatprep.mubr.f32.mxu0 0.0
    %v5221 = vand.u32 %v4024, 4294901760
    %v5222 = vsub.f32 %v4024, %v5221
    %v5223 = vand.u32 %v5222, 4294901760
    %5224 = vmatmul.mubr.f32.gmra.mrb[0].mxu0 %v5223
    %v5225 = vpop.f32.mrb[0].mxu0
    %v5226 = vadd.f32 %v4918, %v5225
    %v5227 = vpop.f32.mrb[0].mxu0
    %5228 = vmatprep.mubr.f32.mxu0 0.0
    %v5229 = vand.u32 %v4027, 4294901760
    %v5230 = vsub.f32 %v4027, %v5229
    %v5231 = vand.u32 %v5230, 4294901760
    %5232 = vmatmul.mubr.f32.gmra.mrb[0].mxu0 %v5231
    %v5233 = vpop.f32.mrb[0].mxu0
    %v5234 = vadd.f32 %v4925, %v5233
    %v5235 = vpop.f32.mrb[0].mxu0
    %5236 = vmatprep.mubr.f32.mxu0 0.0
    %v5237 = vand.u32 %v4030, 4294901760
    %v5238 = vsub.f32 %v4030, %v5237
    %v5239 = vand.u32 %v5238, 4294901760
    %5240 = vmatmul.mubr.f32.gmra.mrb[0].mxu0 %v5239
    %v5241 = vpop.f32.mrb[0].mxu0
    %v5242 = vadd.f32 %v4932, %v5241
    %v5243 = vpop.f32.mrb[0].mxu0
    %5244 = vmatprep.mubr.f32.mxu0 0.0
    %v5245 = vand.u32 %v4033, 4294901760
    %v5246 = vsub.f32 %v4033, %v5245
    %v5247 = vand.u32 %v5246, 4294901760
    %5248 = vmatmul.mubr.f32.gmra.mrb[0].mxu0 %v5247
    %v5249 = vpop.f32.mrb[0].mxu0
    %v5250 = vadd.f32 %v4939, %v5249
    %v5251 = vpop.f32.mrb[0].mxu0
    %5252 = vmatprep.mubr.f32.mxu0 0.0
    %v5253 = vand.u32 %v4036, 4294901760
    %v5254 = vsub.f32 %v4036, %v5253
    %v5255 = vand.u32 %v5254, 4294901760
    %5256 = vmatmul.mubr.f32.gmra.mrb[0].mxu0 %v5255
    %v5257 = vpop.f32.mrb[0].mxu0
    %v5258 = vadd.f32 %v4946, %v5257
    %v5259 = vpop.f32.mrb[0].mxu0
    %5260 = vmatprep.mubr.f32.mxu0 0.0
    %v5261 = vand.u32 %v4039, 4294901760
    %v5262 = vsub.f32 %v4039, %v5261
    %v5263 = vand.u32 %v5262, 4294901760
    %5264 = vmatmul.mubr.f32.gmra.mrb[0].mxu0 %v5263
    %v5265 = vpop.f32.mrb[0].mxu0
    %v5266 = vadd.f32 %v4953, %v5265
    %v5267 = vpop.f32.mrb[0].mxu0
    %5268 = vmatprep.mubr.f32.mxu0 0.0
    %v5269 = vand.u32 %v4042, 4294901760
    %v5270 = vsub.f32 %v4042, %v5269
    %v5271 = vand.u32 %v5270, 4294901760
    %5272 = vmatmul.mubr.f32.gmra.mrb[0].mxu0 %v5271
    %v5273 = vpop.f32.mrb[0].mxu0
    %v5274 = vadd.f32 %v4960, %v5273
    %v5275 = vpop.f32.mrb[0].mxu0
    %5276 = vmatprep.mubr.f32.mxu0 0.0
    %v5277 = vand.u32 %v4045, 4294901760
    %v5278 = vsub.f32 %v4045, %v5277
    %v5279 = vand.u32 %v5278, 4294901760
    %5280 = vmatmul.mubr.f32.gmra.mrb[0].mxu0 %v5279
    %v5281 = vpop.f32.mrb[0].mxu0
    %v5282 = vadd.f32 %v4967, %v5281
    %v5283 = vpop.f32.mrb[0].mxu0
    %5284 = vmatprep.mubr.f32.mxu0 0.0
    %v5285 = vand.u32 %v4048, 4294901760
    %v5286 = vsub.f32 %v4048, %v5285
    %v5287 = vand.u32 %v5286, 4294901760
    %5288 = vmatmul.mubr.f32.gmra.mrb[0].mxu0 %v5287
    %v5289 = vpop.f32.mrb[0].mxu0
    %v5290 = vadd.f32 %v4974, %v5289
    %v5291 = vpop.f32.mrb[0].mxu0
    %5292 = vmatprep.mubr.f32.mxu0 0.0
    %v5293 = vand.u32 %v4051, 4294901760
    %v5294 = vsub.f32 %v4051, %v5293
    %v5295 = vand.u32 %v5294, 4294901760
    %5296 = vmatmul.mubr.f32.gmra.mrb[0].mxu0 %v5295
    %v5297 = vpop.f32.mrb[0].mxu0
    %v5298 = vadd.f32 %v4981, %v5297
    %v5299 = vpop.f32.mrb[0].mxu0
    %5300 = vmatprep.mubr.f32.mxu0 0.0
    %v5301 = vand.u32 %v4054, 4294901760
    %v5302 = vsub.f32 %v4054, %v5301
    %v5303 = vand.u32 %v5302, 4294901760
    %5304 = vmatmul.mubr.f32.gmra.mrb[0].mxu0 %v5303
    %v5305 = vpop.f32.mrb[0].mxu0
    %v5306 = vadd.f32 %v4988, %v5305
    %v5307 = vpop.f32.mrb[0].mxu0
    %5308 = vmatprep.mubr.f32.mxu0 0.0
    %v5309 = vand.u32 %v4057, 4294901760
    %v5310 = vsub.f32 %v4057, %v5309
    %v5311 = vand.u32 %v5310, 4294901760
    %5312 = vmatmul.mubr.f32.gmra.mrb[0].mxu0 %v5311
    %v5313 = vpop.f32.mrb[0].mxu0
    %v5314 = vadd.f32 %v4995, %v5313
    %v5315 = vpop.f32.mrb[0].mxu0
    %5316 = vmatprep.mubr.f32.mxu0 0.0
    %v5317 = vand.u32 %v4060, 4294901760
    %v5318 = vsub.f32 %v4060, %v5317
    %v5319 = vand.u32 %v5318, 4294901760
    %5320 = vmatmul.mubr.f32.gmra.mrb[0].mxu0 %v5319
    %v5321 = vpop.f32.mrb[0].mxu0
    %v5322 = vadd.f32 %v5002, %v5321
    %v5323 = vpop.f32.mrb[0].mxu0
    %5324 = vmatprep.mubr.f32.mxu0 0.0
    %v5325 = vand.u32 %v4063, 4294901760
    %v5326 = vsub.f32 %v4063, %v5325
    %v5327 = vand.u32 %v5326, 4294901760
    %5328 = vmatmul.mubr.f32.gmra.mrb[0].mxu0 %v5327
    %v5329 = vpop.f32.mrb[0].mxu0
    %v5330 = vadd.f32 %v5009, %v5329
    %v5331 = vpop.f32.mrb[0].mxu0
    %5332 = vmatprep.mubr.f32.mxu0 0.0
    %v5333 = vand.u32 %v4066, 4294901760
    %v5334 = vsub.f32 %v4066, %v5333
    %v5335 = vand.u32 %v5334, 4294901760
    %5336 = vmatmul.mubr.f32.gmra.mrb[0].mxu0 %v5335
    %v5337 = vpop.f32.mrb[0].mxu0
    %v5338 = vadd.f32 %v5016, %v5337
    %v5339 = vpop.f32.mrb[0].mxu0
    %5340 = vmatprep.mubr.f32.mxu0 0.0
    %v5341 = vand.u32 %v4069, 4294901760
    %v5342 = vsub.f32 %v4069, %v5341
    %v5343 = vand.u32 %v5342, 4294901760
    %5344 = vmatmul.mubr.f32.gmra.mrb[0].mxu0 %v5343
    %v5345 = vpop.f32.mrb[0].mxu0
    %v5346 = vadd.f32 %v5023, %v5345
    %v5347 = vpop.f32.mrb[0].mxu0
    %5348 = vmatprep.mubr.f32.mxu0 0.0
    %v5349 = vand.u32 %v4072, 4294901760
    %v5350 = vsub.f32 %v4072, %v5349
    %v5351 = vand.u32 %v5350, 4294901760
    %5352 = vmatmul.mubr.f32.gmra.mrb[0].mxu0 %v5351
    %v5353 = vpop.f32.mrb[0].mxu0
    %v5354 = vadd.f32 %v5030, %v5353
    %v5355 = vpop.f32.mrb[0].mxu0
    %5356 = vmatprep.mubr.f32.mxu0 0.0
    %v5357 = vand.u32 %v4075, 4294901760
    %v5358 = vsub.f32 %v4075, %v5357
    %v5359 = vand.u32 %v5358, 4294901760
    %5360 = vmatmul.mubr.f32.gmra.mrb[0].mxu0 %v5359
    %v5361 = vpop.f32.mrb[0].mxu0
    %v5362 = vadd.f32 %v5037, %v5361
    %v5363 = vpop.f32.mrb[0].mxu0
    %5364 = vdwg.mxu0
    %5365 = vmatprep.subr.mxu0 0.0
    %v5366 = vand.u32 %v3977, 4294901760
    %v5367 = vsub.f32 %v3977, %v5366
    %v5368 = vand.u32 %v5367, 4294901760
    %5369 = vmatpush1.msra.mxu0 %v5368
    %5370 = vmatprep.subr.mxu0 0.0
    %v5371 = vand.u32 %v3978, 4294901760
    %v5372 = vsub.f32 %v3978, %v5371
    %v5373 = vand.u32 %v5372, 4294901760
    %5374 = vmatpush1.msra.mxu0 %v5373
    %5375 = vmatprep.subr.mxu0 0.0
    %v5376 = vand.u32 %v3979, 4294901760
    %v5377 = vsub.f32 %v3979, %v5376
    %v5378 = vand.u32 %v5377, 4294901760
    %5379 = vmatpush1.msra.mxu0 %v5378
    %5380 = vmatprep.subr.mxu0 0.0
    %v5381 = vand.u32 %v3980, 4294901760
    %v5382 = vsub.f32 %v3980, %v5381
    %v5383 = vand.u32 %v5382, 4294901760
    %5384 = vmatpush1.msra.mxu0 %v5383
    %5385 = vmatprep.subr.mxu0 0.0
    %5386 = vmatpush1.msra.mxu0 0.0
    %5387 = vmatprep.subr.mxu0 0.0
    %5388 = vmatpush1.msra.mxu0 0.0
    %5389 = vmatprep.subr.mxu0 0.0
    %5390 = vmatpush1.msra.mxu0 0.0
    %5391 = vmatprep.subr.mxu0 0.0
    %5392 = vmatpush1.msra.mxu0 0.0
    %5393 = vmatprep.subr.mxu0 0.0
    %5394 = vmatpush1.msra.mxu0 0.0
    %5395 = vmatprep.subr.mxu0 0.0
    %5396 = vmatpush1.msra.mxu0 0.0
    %5397 = vmatprep.subr.mxu0 0.0
    %5398 = vmatpush1.msra.mxu0 0.0
    %5399 = vmatprep.subr.mxu0 0.0
    %5400 = vmatpush1.msra.mxu0 0.0
    %5401 = vmatprep.subr.mxu0 0.0
    %5402 = vmatpush1.msra.mxu0 0.0
    %5403 = vmatprep.subr.mxu0 0.0
    %5404 = vmatpush1.msra.mxu0 0.0
    %5405 = vmatprep.subr.mxu0 0.0
    %5406 = vmatpush1.msra.mxu0 0.0
    %5407 = vmatprep.subr.mxu0 0.0
    %5408 = vmatpush1.msra.mxu0 0.0
    %5409 = vmatprep.subr.mxu0 0.0
    %5410 = vmatpush1.msra.mxu0 0.0
    %5411 = vmatprep.subr.mxu0 0.0
    %5412 = vmatpush1.msra.mxu0 0.0
    %5413 = vmatprep.subr.mxu0 0.0
    %5414 = vmatpush1.msra.mxu0 0.0
    %5415 = vmatprep.subr.mxu0 0.0
    %5416 = vmatpush1.msra.mxu0 0.0
    %5417 = vmatprep.subr.mxu0 0.0
    %5418 = vmatpush1.msra.mxu0 0.0
    %5419 = vmatprep.subr.mxu0 0.0
    %5420 = vmatpush1.msra.mxu0 0.0
    %5421 = vmatprep.subr.mxu0 0.0
    %5422 = vmatpush1.msra.mxu0 0.0
    %5423 = vmatprep.subr.mxu0 0.0
    %5424 = vmatpush1.msra.mxu0 0.0
    %5425 = vmatprep.subr.mxu0 0.0
    %5426 = vmatpush1.msra.mxu0 0.0
    %5427 = vmatprep.subr.mxu0 0.0
    %5428 = vmatpush1.msra.mxu0 0.0
    %5429 = vmatprep.subr.mxu0 0.0
    %5430 = vmatpush1.msra.mxu0 0.0
    %5431 = vmatprep.subr.mxu0 0.0
    %5432 = vmatpush1.msra.mxu0 0.0
    %5433 = vmatprep.subr.mxu0 0.0
    %5434 = vmatpush1.msra.mxu0 0.0
    %5435 = vmatprep.subr.mxu0 0.0
    %5436 = vmatpush1.msra.mxu0 0.0
    %5437 = vmatprep.subr.mxu0 0.0
    %5438 = vmatpush1.msra.mxu0 0.0
    %5439 = vmatprep.subr.mxu0 0.0
    %5440 = vmatpush1.msra.mxu0 0.0
    %5441 = vmatprep.mubr.f32.mxu0 0.0
    %v5442 = vand.u32 %v3982, 4294901760
    %5443 = vmatmul.mubr.f32.gmra.mrb[0].mxu0 %v5442
    %v5444 = vpop.f32.mrb[0].mxu0
    %v5445 = vadd.f32 %v5114, %v5444
    %v5446 = vpop.f32.mrb[0].mxu0
    %5447 = vmatprep.mubr.f32.mxu0 0.0
    %v5448 = vand.u32 %v3985, 4294901760
    %5449 = vmatmul.mubr.f32.gmra.mrb[0].mxu0 %v5448
    %v5450 = vpop.f32.mrb[0].mxu0
    %v5451 = vadd.f32 %v5122, %v5450
    %v5452 = vpop.f32.mrb[0].mxu0
    %5453 = vmatprep.mubr.f32.mxu0 0.0
    %v5454 = vand.u32 %v3988, 4294901760
    %5455 = vmatmul.mubr.f32.gmra.mrb[0].mxu0 %v5454
    %v5456 = vpop.f32.mrb[0].mxu0
    %v5457 = vadd.f32 %v5130, %v5456
    %v5458 = vpop.f32.mrb[0].mxu0
    %5459 = vmatprep.mubr.f32.mxu0 0.0
    %v5460 = vand.u32 %v3991, 4294901760
    %5461 = vmatmul.mubr.f32.gmra.mrb[0].mxu0 %v5460
    %v5462 = vpop.f32.mrb[0].mxu0
    %v5463 = vadd.f32 %v5138, %v5462
    %v5464 = vpop.f32.mrb[0].mxu0
    %5465 = vmatprep.mubr.f32.mxu0 0.0
    %v5466 = vand.u32 %v3994, 4294901760
    %5467 = vmatmul.mubr.f32.gmra.mrb[0].mxu0 %v5466
    %v5468 = vpop.f32.mrb[0].mxu0
    %v5469 = vadd.f32 %v5146, %v5468
    %v5470 = vpop.f32.mrb[0].mxu0
    %5471 = vmatprep.mubr.f32.mxu0 0.0
    %v5472 = vand.u32 %v3997, 4294901760
    %5473 = vmatmul.mubr.f32.gmra.mrb[0].mxu0 %v5472
    %v5474 = vpop.f32.mrb[0].mxu0
    %v5475 = vadd.f32 %v5154, %v5474
    %v5476 = vpop.f32.mrb[0].mxu0
    %5477 = vmatprep.mubr.f32.mxu0 0.0
    %v5478 = vand.u32 %v4000, 4294901760
    %5479 = vmatmul.mubr.f32.gmra.mrb[0].mxu0 %v5478
    %v5480 = vpop.f32.mrb[0].mxu0
    %v5481 = vadd.f32 %v5162, %v5480
    %v5482 = vpop.f32.mrb[0].mxu0
    %5483 = vmatprep.mubr.f32.mxu0 0.0
    %v5484 = vand.u32 %v4003, 4294901760
    %5485 = vmatmul.mubr.f32.gmra.mrb[0].mxu0 %v5484
    %v5486 = vpop.f32.mrb[0].mxu0
    %v5487 = vadd.f32 %v5170, %v5486
    %v5488 = vpop.f32.mrb[0].mxu0
    %5489 = vmatprep.mubr.f32.mxu0 0.0
    %v5490 = vand.u32 %v4006, 4294901760
    %5491 = vmatmul.mubr.f32.gmra.mrb[0].mxu0 %v5490
    %v5492 = vpop.f32.mrb[0].mxu0
    %v5493 = vadd.f32 %v5178, %v5492
    %v5494 = vpop.f32.mrb[0].mxu0
    %5495 = vmatprep.mubr.f32.mxu0 0.0
    %v5496 = vand.u32 %v4009, 4294901760
    %5497 = vmatmul.mubr.f32.gmra.mrb[0].mxu0 %v5496
    %v5498 = vpop.f32.mrb[0].mxu0
    %v5499 = vadd.f32 %v5186, %v5498
    %v5500 = vpop.f32.mrb[0].mxu0
    %5501 = vmatprep.mubr.f32.mxu0 0.0
    %v5502 = vand.u32 %v4012, 4294901760
    %5503 = vmatmul.mubr.f32.gmra.mrb[0].mxu0 %v5502
    %v5504 = vpop.f32.mrb[0].mxu0
    %v5505 = vadd.f32 %v5194, %v5504
    %v5506 = vpop.f32.mrb[0].mxu0
    %5507 = vmatprep.mubr.f32.mxu0 0.0
    %v5508 = vand.u32 %v4015, 4294901760
    %5509 = vmatmul.mubr.f32.gmra.mrb[0].mxu0 %v5508
    %v5510 = vpop.f32.mrb[0].mxu0
    %v5511 = vadd.f32 %v5202, %v5510
    %v5512 = vpop.f32.mrb[0].mxu0
    %5513 = vmatprep.mubr.f32.mxu0 0.0
    %v5514 = vand.u32 %v4018, 4294901760
    %5515 = vmatmul.mubr.f32.gmra.mrb[0].mxu0 %v5514
    %v5516 = vpop.f32.mrb[0].mxu0
    %v5517 = vadd.f32 %v5210, %v5516
    %v5518 = vpop.f32.mrb[0].mxu0
    %5519 = vmatprep.mubr.f32.mxu0 0.0
    %v5520 = vand.u32 %v4021, 4294901760
    %5521 = vmatmul.mubr.f32.gmra.mrb[0].mxu0 %v5520
    %v5522 = vpop.f32.mrb[0].mxu0
    %v5523 = vadd.f32 %v5218, %v5522
    %v5524 = vpop.f32.mrb[0].mxu0
    %5525 = vmatprep.mubr.f32.mxu0 0.0
    %v5526 = vand.u32 %v4024, 4294901760
    %5527 = vmatmul.mubr.f32.gmra.mrb[0].mxu0 %v5526
    %v5528 = vpop.f32.mrb[0].mxu0
    %v5529 = vadd.f32 %v5226, %v5528
    %v5530 = vpop.f32.mrb[0].mxu0
    %5531 = vmatprep.mubr.f32.mxu0 0.0
    %v5532 = vand.u32 %v4027, 4294901760
    %5533 = vmatmul.mubr.f32.gmra.mrb[0].mxu0 %v5532
    %v5534 = vpop.f32.mrb[0].mxu0
    %v5535 = vadd.f32 %v5234, %v5534
    %v5536 = vpop.f32.mrb[0].mxu0
    %5537 = vmatprep.mubr.f32.mxu0 0.0
    %v5538 = vand.u32 %v4030, 4294901760
    %5539 = vmatmul.mubr.f32.gmra.mrb[0].mxu0 %v5538
    %v5540 = vpop.f32.mrb[0].mxu0
    %v5541 = vadd.f32 %v5242, %v5540
    %v5542 = vpop.f32.mrb[0].mxu0
    %5543 = vmatprep.mubr.f32.mxu0 0.0
    %v5544 = vand.u32 %v4033, 4294901760
    %5545 = vmatmul.mubr.f32.gmra.mrb[0].mxu0 %v5544
    %v5546 = vpop.f32.mrb[0].mxu0
    %v5547 = vadd.f32 %v5250, %v5546
    %v5548 = vpop.f32.mrb[0].mxu0
    %5549 = vmatprep.mubr.f32.mxu0 0.0
    %v5550 = vand.u32 %v4036, 4294901760
    %5551 = vmatmul.mubr.f32.gmra.mrb[0].mxu0 %v5550
    %v5552 = vpop.f32.mrb[0].mxu0
    %v5553 = vadd.f32 %v5258, %v5552
    %v5554 = vpop.f32.mrb[0].mxu0
    %5555 = vmatprep.mubr.f32.mxu0 0.0
    %v5556 = vand.u32 %v4039, 4294901760
    %5557 = vmatmul.mubr.f32.gmra.mrb[0].mxu0 %v5556
    %v5558 = vpop.f32.mrb[0].mxu0
    %v5559 = vadd.f32 %v5266, %v5558
    %v5560 = vpop.f32.mrb[0].mxu0
    %5561 = vmatprep.mubr.f32.mxu0 0.0
    %v5562 = vand.u32 %v4042, 4294901760
    %5563 = vmatmul.mubr.f32.gmra.mrb[0].mxu0 %v5562
    %v5564 = vpop.f32.mrb[0].mxu0
    %v5565 = vadd.f32 %v5274, %v5564
    %v5566 = vpop.f32.mrb[0].mxu0
    %5567 = vmatprep.mubr.f32.mxu0 0.0
    %v5568 = vand.u32 %v4045, 4294901760
    %5569 = vmatmul.mubr.f32.gmra.mrb[0].mxu0 %v5568
    %v5570 = vpop.f32.mrb[0].mxu0
    %v5571 = vadd.f32 %v5282, %v5570
    %v5572 = vpop.f32.mrb[0].mxu0
    %5573 = vmatprep.mubr.f32.mxu0 0.0
    %v5574 = vand.u32 %v4048, 4294901760
    %5575 = vmatmul.mubr.f32.gmra.mrb[0].mxu0 %v5574
    %v5576 = vpop.f32.mrb[0].mxu0
    %v5577 = vadd.f32 %v5290, %v5576
    %v5578 = vpop.f32.mrb[0].mxu0
    %5579 = vmatprep.mubr.f32.mxu0 0.0
    %v5580 = vand.u32 %v4051, 4294901760
    %5581 = vmatmul.mubr.f32.gmra.mrb[0].mxu0 %v5580
    %v5582 = vpop.f32.mrb[0].mxu0
    %v5583 = vadd.f32 %v5298, %v5582
    %v5584 = vpop.f32.mrb[0].mxu0
    %5585 = vmatprep.mubr.f32.mxu0 0.0
    %v5586 = vand.u32 %v4054, 4294901760
    %5587 = vmatmul.mubr.f32.gmra.mrb[0].mxu0 %v5586
    %v5588 = vpop.f32.mrb[0].mxu0
    %v5589 = vadd.f32 %v5306, %v5588
    %v5590 = vpop.f32.mrb[0].mxu0
    %5591 = vmatprep.mubr.f32.mxu0 0.0
    %v5592 = vand.u32 %v4057, 4294901760
    %5593 = vmatmul.mubr.f32.gmra.mrb[0].mxu0 %v5592
    %v5594 = vpop.f32.mrb[0].mxu0
    %v5595 = vadd.f32 %v5314, %v5594
    %v5596 = vpop.f32.mrb[0].mxu0
    %5597 = vmatprep.mubr.f32.mxu0 0.0
    %v5598 = vand.u32 %v4060, 4294901760
    %5599 = vmatmul.mubr.f32.gmra.mrb[0].mxu0 %v5598
    %v5600 = vpop.f32.mrb[0].mxu0
    %v5601 = vadd.f32 %v5322, %v5600
    %v5602 = vpop.f32.mrb[0].mxu0
    %5603 = vmatprep.mubr.f32.mxu0 0.0
    %v5604 = vand.u32 %v4063, 4294901760
    %5605 = vmatmul.mubr.f32.gmra.mrb[0].mxu0 %v5604
    %v5606 = vpop.f32.mrb[0].mxu0
    %v5607 = vadd.f32 %v5330, %v5606
    %v5608 = vpop.f32.mrb[0].mxu0
    %5609 = vmatprep.mubr.f32.mxu0 0.0
    %v5610 = vand.u32 %v4066, 4294901760
    %5611 = vmatmul.mubr.f32.gmra.mrb[0].mxu0 %v5610
    %v5612 = vpop.f32.mrb[0].mxu0
    %v5613 = vadd.f32 %v5338, %v5612
    %v5614 = vpop.f32.mrb[0].mxu0
    %5615 = vmatprep.mubr.f32.mxu0 0.0
    %v5616 = vand.u32 %v4069, 4294901760
    %5617 = vmatmul.mubr.f32.gmra.mrb[0].mxu0 %v5616
    %v5618 = vpop.f32.mrb[0].mxu0
    %v5619 = vadd.f32 %v5346, %v5618
    %v5620 = vpop.f32.mrb[0].mxu0
    %5621 = vmatprep.mubr.f32.mxu0 0.0
    %v5622 = vand.u32 %v4072, 4294901760
    %5623 = vmatmul.mubr.f32.gmra.mrb[0].mxu0 %v5622
    %v5624 = vpop.f32.mrb[0].mxu0
    %v5625 = vadd.f32 %v5354, %v5624
    %v5626 = vpop.f32.mrb[0].mxu0
    %5627 = vmatprep.mubr.f32.mxu0 0.0
    %v5628 = vand.u32 %v4075, 4294901760
    %5629 = vmatmul.mubr.f32.gmra.mrb[0].mxu0 %v5628
    %v5630 = vpop.f32.mrb[0].mxu0
    %v5631 = vadd.f32 %v5362, %v5630
    %v5632 = vpop.f32.mrb[0].mxu0
    %5633 = vdwg.mxu0
    %5634 = vmatprep.subr.mxu0 0.0
    %v5635 = vand.u32 %v3977, 4294901760
    %5636 = vmatpush1.msra.mxu0 %v5635
    %5637 = vmatprep.subr.mxu0 0.0
    %v5638 = vand.u32 %v3978, 4294901760
    %5639 = vmatpush1.msra.mxu0 %v5638
    %5640 = vmatprep.subr.mxu0 0.0
    %v5641 = vand.u32 %v3979, 4294901760
    %5642 = vmatpush1.msra.mxu0 %v5641
    %5643 = vmatprep.subr.mxu0 0.0
    %v5644 = vand.u32 %v3980, 4294901760
    %5645 = vmatpush1.msra.mxu0 %v5644
    %5646 = vmatprep.subr.mxu0 0.0
    %5647 = vmatpush1.msra.mxu0 0.0
    %5648 = vmatprep.subr.mxu0 0.0
    %5649 = vmatpush1.msra.mxu0 0.0
    %5650 = vmatprep.subr.mxu0 0.0
    %5651 = vmatpush1.msra.mxu0 0.0
    %5652 = vmatprep.subr.mxu0 0.0
    %5653 = vmatpush1.msra.mxu0 0.0
    %5654 = vmatprep.subr.mxu0 0.0
    %5655 = vmatpush1.msra.mxu0 0.0
    %5656 = vmatprep.subr.mxu0 0.0
    %5657 = vmatpush1.msra.mxu0 0.0
    %5658 = vmatprep.subr.mxu0 0.0
    %5659 = vmatpush1.msra.mxu0 0.0
    %5660 = vmatprep.subr.mxu0 0.0
    %5661 = vmatpush1.msra.mxu0 0.0
    %5662 = vmatprep.subr.mxu0 0.0
    %5663 = vmatpush1.msra.mxu0 0.0
    %5664 = vmatprep.subr.mxu0 0.0
    %5665 = vmatpush1.msra.mxu0 0.0
    %5666 = vmatprep.subr.mxu0 0.0
    %5667 = vmatpush1.msra.mxu0 0.0
    %5668 = vmatprep.subr.mxu0 0.0
    %5669 = vmatpush1.msra.mxu0 0.0
    %5670 = vmatprep.subr.mxu0 0.0
    %5671 = vmatpush1.msra.mxu0 0.0
    %5672 = vmatprep.subr.mxu0 0.0
    %5673 = vmatpush1.msra.mxu0 0.0
    %5674 = vmatprep.subr.mxu0 0.0
    %5675 = vmatpush1.msra.mxu0 0.0
    %5676 = vmatprep.subr.mxu0 0.0
    %5677 = vmatpush1.msra.mxu0 0.0
    %5678 = vmatprep.subr.mxu0 0.0
    %5679 = vmatpush1.msra.mxu0 0.0
    %5680 = vmatprep.subr.mxu0 0.0
    %5681 = vmatpush1.msra.mxu0 0.0
    %5682 = vmatprep.subr.mxu0 0.0
    %5683 = vmatpush1.msra.mxu0 0.0
    %5684 = vmatprep.subr.mxu0 0.0
    %5685 = vmatpush1.msra.mxu0 0.0
    %5686 = vmatprep.subr.mxu0 0.0
    %5687 = vmatpush1.msra.mxu0 0.0
    %5688 = vmatprep.subr.mxu0 0.0
    %5689 = vmatpush1.msra.mxu0 0.0
    %5690 = vmatprep.subr.mxu0 0.0
    %5691 = vmatpush1.msra.mxu0 0.0
    %5692 = vmatprep.subr.mxu0 0.0
    %5693 = vmatpush1.msra.mxu0 0.0
    %5694 = vmatprep.subr.mxu0 0.0
    %5695 = vmatpush1.msra.mxu0 0.0
    %5696 = vmatprep.subr.mxu0 0.0
    %5697 = vmatpush1.msra.mxu0 0.0
    %5698 = vmatprep.subr.mxu0 0.0
    %5699 = vmatpush1.msra.mxu0 0.0
    %5700 = vmatprep.subr.mxu0 0.0
    %5701 = vmatpush1.msra.mxu0 0.0
    %5702 = vmatprep.mubr.f32.mxu0 0.0
    %v5703 = vand.u32 %v3982, 4294901760
    %5704 = vmatmul.mubr.f32.gmra.mrb[0].mxu0 %v5703
    %v5705 = vpop.f32.mrb[0].mxu0
    %v5706 = vadd.f32 %v5445, %v5705
    %v5707 = vpop.f32.mrb[0].mxu0
    %5708 = vmatprep.mubr.f32.mxu0 0.0
    %v5709 = vand.u32 %v3985, 4294901760
    %5710 = vmatmul.mubr.f32.gmra.mrb[0].mxu0 %v5709
    %v5711 = vpop.f32.mrb[0].mxu0
    %v5712 = vadd.f32 %v5451, %v5711
    %v5713 = vpop.f32.mrb[0].mxu0
    %5714 = vmatprep.mubr.f32.mxu0 0.0
    %v5715 = vand.u32 %v3988, 4294901760
    %5716 = vmatmul.mubr.f32.gmra.mrb[0].mxu0 %v5715
    %v5717 = vpop.f32.mrb[0].mxu0
    %v5718 = vadd.f32 %v5457, %v5717
    %v5719 = vpop.f32.mrb[0].mxu0
    %5720 = vmatprep.mubr.f32.mxu0 0.0
    %v5721 = vand.u32 %v3991, 4294901760
    %5722 = vmatmul.mubr.f32.gmra.mrb[0].mxu0 %v5721
    %v5723 = vpop.f32.mrb[0].mxu0
    %v5724 = vadd.f32 %v5463, %v5723
    %v5725 = vpop.f32.mrb[0].mxu0
    %5726 = vmatprep.mubr.f32.mxu0 0.0
    %v5727 = vand.u32 %v3994, 4294901760
    %5728 = vmatmul.mubr.f32.gmra.mrb[0].mxu0 %v5727
    %v5729 = vpop.f32.mrb[0].mxu0
    %v5730 = vadd.f32 %v5469, %v5729
    %v5731 = vpop.f32.mrb[0].mxu0
    %5732 = vmatprep.mubr.f32.mxu0 0.0
    %v5733 = vand.u32 %v3997, 4294901760
    %5734 = vmatmul.mubr.f32.gmra.mrb[0].mxu0 %v5733
    %v5735 = vpop.f32.mrb[0].mxu0
    %v5736 = vadd.f32 %v5475, %v5735
    %v5737 = vpop.f32.mrb[0].mxu0
    %5738 = vmatprep.mubr.f32.mxu0 0.0
    %v5739 = vand.u32 %v4000, 4294901760
    %5740 = vmatmul.mubr.f32.gmra.mrb[0].mxu0 %v5739
    %v5741 = vpop.f32.mrb[0].mxu0
    %v5742 = vadd.f32 %v5481, %v5741
    %v5743 = vpop.f32.mrb[0].mxu0
    %5744 = vmatprep.mubr.f32.mxu0 0.0
    %v5745 = vand.u32 %v4003, 4294901760
    %5746 = vmatmul.mubr.f32.gmra.mrb[0].mxu0 %v5745
    %v5747 = vpop.f32.mrb[0].mxu0
    %v5748 = vadd.f32 %v5487, %v5747
    %v5749 = vpop.f32.mrb[0].mxu0
    %5750 = vmatprep.mubr.f32.mxu0 0.0
    %v5751 = vand.u32 %v4006, 4294901760
    %5752 = vmatmul.mubr.f32.gmra.mrb[0].mxu0 %v5751
    %v5753 = vpop.f32.mrb[0].mxu0
    %v5754 = vadd.f32 %v5493, %v5753
    %v5755 = vpop.f32.mrb[0].mxu0
    %5756 = vmatprep.mubr.f32.mxu0 0.0
    %v5757 = vand.u32 %v4009, 4294901760
    %5758 = vmatmul.mubr.f32.gmra.mrb[0].mxu0 %v5757
    %v5759 = vpop.f32.mrb[0].mxu0
    %v5760 = vadd.f32 %v5499, %v5759
    %v5761 = vpop.f32.mrb[0].mxu0
    %5762 = vmatprep.mubr.f32.mxu0 0.0
    %v5763 = vand.u32 %v4012, 4294901760
    %5764 = vmatmul.mubr.f32.gmra.mrb[0].mxu0 %v5763
    %v5765 = vpop.f32.mrb[0].mxu0
    %v5766 = vadd.f32 %v5505, %v5765
    %v5767 = vpop.f32.mrb[0].mxu0
    %5768 = vmatprep.mubr.f32.mxu0 0.0
    %v5769 = vand.u32 %v4015, 4294901760
    %5770 = vmatmul.mubr.f32.gmra.mrb[0].mxu0 %v5769
    %v5771 = vpop.f32.mrb[0].mxu0
    %v5772 = vadd.f32 %v5511, %v5771
    %v5773 = vpop.f32.mrb[0].mxu0
    %5774 = vmatprep.mubr.f32.mxu0 0.0
    %v5775 = vand.u32 %v4018, 4294901760
    %5776 = vmatmul.mubr.f32.gmra.mrb[0].mxu0 %v5775
    %v5777 = vpop.f32.mrb[0].mxu0
    %v5778 = vadd.f32 %v5517, %v5777
    %v5779 = vpop.f32.mrb[0].mxu0
    %5780 = vmatprep.mubr.f32.mxu0 0.0
    %v5781 = vand.u32 %v4021, 4294901760
    %5782 = vmatmul.mubr.f32.gmra.mrb[0].mxu0 %v5781
    %v5783 = vpop.f32.mrb[0].mxu0
    %v5784 = vadd.f32 %v5523, %v5783
    %v5785 = vpop.f32.mrb[0].mxu0
    %5786 = vmatprep.mubr.f32.mxu0 0.0
    %v5787 = vand.u32 %v4024, 4294901760
    %5788 = vmatmul.mubr.f32.gmra.mrb[0].mxu0 %v5787
    %v5789 = vpop.f32.mrb[0].mxu0
    %v5790 = vadd.f32 %v5529, %v5789
    %v5791 = vpop.f32.mrb[0].mxu0
    %5792 = vmatprep.mubr.f32.mxu0 0.0
    %v5793 = vand.u32 %v4027, 4294901760
    %5794 = vmatmul.mubr.f32.gmra.mrb[0].mxu0 %v5793
    %v5795 = vpop.f32.mrb[0].mxu0
    %v5796 = vadd.f32 %v5535, %v5795
    %v5797 = vpop.f32.mrb[0].mxu0
    %5798 = vmatprep.mubr.f32.mxu0 0.0
    %v5799 = vand.u32 %v4030, 4294901760
    %5800 = vmatmul.mubr.f32.gmra.mrb[0].mxu0 %v5799
    %v5801 = vpop.f32.mrb[0].mxu0
    %v5802 = vadd.f32 %v5541, %v5801
    %v5803 = vpop.f32.mrb[0].mxu0
    %5804 = vmatprep.mubr.f32.mxu0 0.0
    %v5805 = vand.u32 %v4033, 4294901760
    %5806 = vmatmul.mubr.f32.gmra.mrb[0].mxu0 %v5805
    %v5807 = vpop.f32.mrb[0].mxu0
    %v5808 = vadd.f32 %v5547, %v5807
    %v5809 = vpop.f32.mrb[0].mxu0
    %5810 = vmatprep.mubr.f32.mxu0 0.0
    %v5811 = vand.u32 %v4036, 4294901760
    %5812 = vmatmul.mubr.f32.gmra.mrb[0].mxu0 %v5811
    %v5813 = vpop.f32.mrb[0].mxu0
    %v5814 = vadd.f32 %v5553, %v5813
    %v5815 = vpop.f32.mrb[0].mxu0
    %5816 = vmatprep.mubr.f32.mxu0 0.0
    %v5817 = vand.u32 %v4039, 4294901760
    %5818 = vmatmul.mubr.f32.gmra.mrb[0].mxu0 %v5817
    %v5819 = vpop.f32.mrb[0].mxu0
    %v5820 = vadd.f32 %v5559, %v5819
    %v5821 = vpop.f32.mrb[0].mxu0
    %5822 = vmatprep.mubr.f32.mxu0 0.0
    %v5823 = vand.u32 %v4042, 4294901760
    %5824 = vmatmul.mubr.f32.gmra.mrb[0].mxu0 %v5823
    %v5825 = vpop.f32.mrb[0].mxu0
    %v5826 = vadd.f32 %v5565, %v5825
    %v5827 = vpop.f32.mrb[0].mxu0
    %5828 = vmatprep.mubr.f32.mxu0 0.0
    %v5829 = vand.u32 %v4045, 4294901760
    %5830 = vmatmul.mubr.f32.gmra.mrb[0].mxu0 %v5829
    %v5831 = vpop.f32.mrb[0].mxu0
    %v5832 = vadd.f32 %v5571, %v5831
    %v5833 = vpop.f32.mrb[0].mxu0
    %5834 = vmatprep.mubr.f32.mxu0 0.0
    %v5835 = vand.u32 %v4048, 4294901760
    %5836 = vmatmul.mubr.f32.gmra.mrb[0].mxu0 %v5835
    %v5837 = vpop.f32.mrb[0].mxu0
    %v5838 = vadd.f32 %v5577, %v5837
    %v5839 = vpop.f32.mrb[0].mxu0
    %5840 = vmatprep.mubr.f32.mxu0 0.0
    %v5841 = vand.u32 %v4051, 4294901760
    %5842 = vmatmul.mubr.f32.gmra.mrb[0].mxu0 %v5841
    %v5843 = vpop.f32.mrb[0].mxu0
    %v5844 = vadd.f32 %v5583, %v5843
    %v5845 = vpop.f32.mrb[0].mxu0
    %5846 = vmatprep.mubr.f32.mxu0 0.0
    %v5847 = vand.u32 %v4054, 4294901760
    %5848 = vmatmul.mubr.f32.gmra.mrb[0].mxu0 %v5847
    %v5849 = vpop.f32.mrb[0].mxu0
    %v5850 = vadd.f32 %v5589, %v5849
    %v5851 = vpop.f32.mrb[0].mxu0
    %5852 = vmatprep.mubr.f32.mxu0 0.0
    %v5853 = vand.u32 %v4057, 4294901760
    %5854 = vmatmul.mubr.f32.gmra.mrb[0].mxu0 %v5853
    %v5855 = vpop.f32.mrb[0].mxu0
    %v5856 = vadd.f32 %v5595, %v5855
    %v5857 = vpop.f32.mrb[0].mxu0
    %5858 = vmatprep.mubr.f32.mxu0 0.0
    %v5859 = vand.u32 %v4060, 4294901760
    %5860 = vmatmul.mubr.f32.gmra.mrb[0].mxu0 %v5859
    %v5861 = vpop.f32.mrb[0].mxu0
    %v5862 = vadd.f32 %v5601, %v5861
    %v5863 = vpop.f32.mrb[0].mxu0
    %5864 = vmatprep.mubr.f32.mxu0 0.0
    %v5865 = vand.u32 %v4063, 4294901760
    %5866 = vmatmul.mubr.f32.gmra.mrb[0].mxu0 %v5865
    %v5867 = vpop.f32.mrb[0].mxu0
    %v5868 = vadd.f32 %v5607, %v5867
    %v5869 = vpop.f32.mrb[0].mxu0
    %5870 = vmatprep.mubr.f32.mxu0 0.0
    %v5871 = vand.u32 %v4066, 4294901760
    %5872 = vmatmul.mubr.f32.gmra.mrb[0].mxu0 %v5871
    %v5873 = vpop.f32.mrb[0].mxu0
    %v5874 = vadd.f32 %v5613, %v5873
    %v5875 = vpop.f32.mrb[0].mxu0
    %5876 = vmatprep.mubr.f32.mxu0 0.0
    %v5877 = vand.u32 %v4069, 4294901760
    %5878 = vmatmul.mubr.f32.gmra.mrb[0].mxu0 %v5877
    %v5879 = vpop.f32.mrb[0].mxu0
    %v5880 = vadd.f32 %v5619, %v5879
    %v5881 = vpop.f32.mrb[0].mxu0
    %5882 = vmatprep.mubr.f32.mxu0 0.0
    %v5883 = vand.u32 %v4072, 4294901760
    %5884 = vmatmul.mubr.f32.gmra.mrb[0].mxu0 %v5883
    %v5885 = vpop.f32.mrb[0].mxu0
    %v5886 = vadd.f32 %v5625, %v5885
    %v5887 = vpop.f32.mrb[0].mxu0
    %5888 = vmatprep.mubr.f32.mxu0 0.0
    %v5889 = vand.u32 %v4075, 4294901760
    %5890 = vmatmul.mubr.f32.gmra.mrb[0].mxu0 %v5889
    %v5891 = vpop.f32.mrb[0].mxu0
    %v5892 = vadd.f32 %v5631, %v5891
    %v5893 = vpop.f32.mrb[0].mxu0
    %5894 = vdwg.mxu0
    %v5895 = vadd.f32 %v3754, %v5706
    %v5896 = vadd.f32 %v3760, %v5712
    %v5897 = vadd.f32 %v3766, %v5718
    %v5898 = vadd.f32 %v3772, %v5724
    %v5899 = vadd.f32 %v3778, %v5730
    %v5900 = vadd.f32 %v3784, %v5736
    %v5901 = vadd.f32 %v3790, %v5742
    %v5902 = vadd.f32 %v3796, %v5748
    %v5903 = vadd.f32 %v3802, %v5754
    %v5904 = vadd.f32 %v3808, %v5760
    %v5905 = vadd.f32 %v3814, %v5766
    %v5906 = vadd.f32 %v3820, %v5772
    %v5907 = vadd.f32 %v3826, %v5778
    %v5908 = vadd.f32 %v3832, %v5784
    %v5909 = vadd.f32 %v3838, %v5790
    %v5910 = vadd.f32 %v3844, %v5796
    %v5911 = vadd.f32 %v3850, %v5802
    %v5912 = vadd.f32 %v3856, %v5808
    %v5913 = vadd.f32 %v3862, %v5814
    %v5914 = vadd.f32 %v3868, %v5820
    %v5915 = vadd.f32 %v3874, %v5826
    %v5916 = vadd.f32 %v3880, %v5832
    %v5917 = vadd.f32 %v3886, %v5838
    %v5918 = vadd.f32 %v3892, %v5844
    %v5919 = vadd.f32 %v3898, %v5850
    %v5920 = vadd.f32 %v3904, %v5856
    %v5921 = vadd.f32 %v3910, %v5862
    %v5922 = vadd.f32 %v3916, %v5868
    %v5923 = vadd.f32 %v3922, %v5874
    %v5924 = vadd.f32 %v3928, %v5880
    %v5925 = vadd.f32 %v3934, %v5886
    %v5926 = vadd.f32 %v3940, %v5892
    %s5927 = scalar_lea.vmem [#allocation2], 96
    %v5928 = vld [vmem:[%s5927] sm:$0xff]
    %v5929 = vld [vmem:[%s5927 + $0x8] sm:$0xff]
    %v5930 = vld [vmem:[%s5927 + $0x10] sm:$0xff]
    %v5931 = vld [vmem:[%s5927 + $0x18] sm:$0xff]
    %v5932 = vld [vmem:[%s5927 + $0x80] sm:$0xff]
    %v5933 = vld [vmem:[%s5927 + $0x88] sm:$0xff]
    %v5934 = vld [vmem:[%s5927 + $0x90] sm:$0xff]
    %v5935 = vld [vmem:[%s5927 + $0x98] sm:$0xff]
    %v5936 = vld [vmem:[%s5927 + $0x100] sm:$0xff]
    %v5937 = vld [vmem:[%s5927 + $0x108] sm:$0xff]
    %v5938 = vld [vmem:[%s5927 + $0x110] sm:$0xff]
    %v5939 = vld [vmem:[%s5927 + $0x118] sm:$0xff]
    %v5940 = vld [vmem:[%s5927 + $0x180] sm:$0xff]
    %v5941 = vld [vmem:[%s5927 + $0x188] sm:$0xff]
    %v5942 = vld [vmem:[%s5927 + $0x190] sm:$0xff]
    %v5943 = vld [vmem:[%s5927 + $0x198] sm:$0xff]
    %v5944 = vld [vmem:[%s5927 + $0x200] sm:$0xff]
    %v5945 = vld [vmem:[%s5927 + $0x208] sm:$0xff]
    %v5946 = vld [vmem:[%s5927 + $0x210] sm:$0xff]
    %v5947 = vld [vmem:[%s5927 + $0x218] sm:$0xff]
    %v5948 = vld [vmem:[%s5927 + $0x280] sm:$0xff]
    %v5949 = vld [vmem:[%s5927 + $0x288] sm:$0xff]
    %v5950 = vld [vmem:[%s5927 + $0x290] sm:$0xff]
    %v5951 = vld [vmem:[%s5927 + $0x298] sm:$0xff]
    %v5952 = vld [vmem:[%s5927 + $0x300] sm:$0xff]
    %v5953 = vld [vmem:[%s5927 + $0x308] sm:$0xff]
    %v5954 = vld [vmem:[%s5927 + $0x310] sm:$0xff]
    %v5955 = vld [vmem:[%s5927 + $0x318] sm:$0xff]
    %v5956 = vld [vmem:[%s5927 + $0x380] sm:$0xff]
    %v5957 = vld [vmem:[%s5927 + $0x388] sm:$0xff]
    %v5958 = vld [vmem:[%s5927 + $0x390] sm:$0xff]
    %v5959 = vld [vmem:[%s5927 + $0x398] sm:$0xff]
    %s5960 = scalar_lea.vmem [#allocation5], 96
    %v5961 = vld [vmem:[%s5960] sm:$0xff]
    %v5962 = vld [vmem:[%s5960 + $0x8] sm:$0xff]
    %v5963 = vld [vmem:[%s5960 + $0x10] sm:$0xff]
    %v5964 = vld [vmem:[%s5960 + $0x18] sm:$0xff]
    %v5966 = vsel %vm114, %v5928, 0
    %v5969 = vsel %vm114, %v5929, 0
    %v5972 = vsel %vm114, %v5930, 0
    %v5975 = vsel %vm114, %v5931, 0
    %v5978 = vsel %vm114, %v5932, 0
    %v5981 = vsel %vm114, %v5933, 0
    %v5984 = vsel %vm114, %v5934, 0
    %v5987 = vsel %vm114, %v5935, 0
    %v5990 = vsel %vm114, %v5936, 0
    %v5993 = vsel %vm114, %v5937, 0
    %v5996 = vsel %vm114, %v5938, 0
    %v5999 = vsel %vm114, %v5939, 0
    %v6002 = vsel %vm114, %v5940, 0
    %v6005 = vsel %vm114, %v5941, 0
    %v6008 = vsel %vm114, %v5942, 0
    %v6011 = vsel %vm114, %v5943, 0
    %v6014 = vsel %vm114, %v5944, 0
    %v6017 = vsel %vm114, %v5945, 0
    %v6020 = vsel %vm114, %v5946, 0
    %v6023 = vsel %vm114, %v5947, 0
    %v6026 = vsel %vm114, %v5948, 0
    %v6029 = vsel %vm114, %v5949, 0
    %v6032 = vsel %vm114, %v5950, 0
    %v6035 = vsel %vm114, %v5951, 0
    %v6038 = vsel %vm114, %v5952, 0
    %v6041 = vsel %vm114, %v5953, 0
    %v6044 = vsel %vm114, %v5954, 0
    %v6047 = vsel %vm114, %v5955, 0
    %v6050 = vsel %vm114, %v5956, 0
    %v6053 = vsel %vm114, %v5957, 0
    %v6056 = vsel %vm114, %v5958, 0
    %v6059 = vsel %vm114, %v5959, 0
    %6061 = vmatprep.subr.mxu0 0.0
    %v6062 = vand.u32 %v5961, 4294901760
    %6063 = vmatpush1.msra.mxu0 %v6062
    %6064 = vmatprep.subr.mxu0 0.0
    %v6065 = vand.u32 %v5962, 4294901760
    %6066 = vmatpush1.msra.mxu0 %v6065
    %6067 = vmatprep.subr.mxu0 0.0
    %v6068 = vand.u32 %v5963, 4294901760
    %6069 = vmatpush1.msra.mxu0 %v6068
    %6070 = vmatprep.subr.mxu0 0.0
    %v6071 = vand.u32 %v5964, 4294901760
    %6072 = vmatpush1.msra.mxu0 %v6071
    %6073 = vmatprep.subr.mxu0 0.0
    %6074 = vmatpush1.msra.mxu0 0.0
    %6075 = vmatprep.subr.mxu0 0.0
    %6076 = vmatpush1.msra.mxu0 0.0
    %6077 = vmatprep.subr.mxu0 0.0
    %6078 = vmatpush1.msra.mxu0 0.0
    %6079 = vmatprep.subr.mxu0 0.0
    %6080 = vmatpush1.msra.mxu0 0.0
    %6081 = vmatprep.subr.mxu0 0.0
    %6082 = vmatpush1.msra.mxu0 0.0
    %6083 = vmatprep.subr.mxu0 0.0
    %6084 = vmatpush1.msra.mxu0 0.0
    %6085 = vmatprep.subr.mxu0 0.0
    %6086 = vmatpush1.msra.mxu0 0.0
    %6087 = vmatprep.subr.mxu0 0.0
    %6088 = vmatpush1.msra.mxu0 0.0
    %6089 = vmatprep.subr.mxu0 0.0
    %6090 = vmatpush1.msra.mxu0 0.0
    %6091 = vmatprep.subr.mxu0 0.0
    %6092 = vmatpush1.msra.mxu0 0.0
    %6093 = vmatprep.subr.mxu0 0.0
    %6094 = vmatpush1.msra.mxu0 0.0
    %6095 = vmatprep.subr.mxu0 0.0
    %6096 = vmatpush1.msra.mxu0 0.0
    %6097 = vmatprep.subr.mxu0 0.0
    %6098 = vmatpush1.msra.mxu0 0.0
    %6099 = vmatprep.subr.mxu0 0.0
    %6100 = vmatpush1.msra.mxu0 0.0
    %6101 = vmatprep.subr.mxu0 0.0
    %6102 = vmatpush1.msra.mxu0 0.0
    %6103 = vmatprep.subr.mxu0 0.0
    %6104 = vmatpush1.msra.mxu0 0.0
    %6105 = vmatprep.subr.mxu0 0.0
    %6106 = vmatpush1.msra.mxu0 0.0
    %6107 = vmatprep.subr.mxu0 0.0
    %6108 = vmatpush1.msra.mxu0 0.0
    %6109 = vmatprep.subr.mxu0 0.0
    %6110 = vmatpush1.msra.mxu0 0.0
    %6111 = vmatprep.subr.mxu0 0.0
    %6112 = vmatpush1.msra.mxu0 0.0
    %6113 = vmatprep.subr.mxu0 0.0
    %6114 = vmatpush1.msra.mxu0 0.0
    %6115 = vmatprep.subr.mxu0 0.0
    %6116 = vmatpush1.msra.mxu0 0.0
    %6117 = vmatprep.subr.mxu0 0.0
    %6118 = vmatpush1.msra.mxu0 0.0
    %6119 = vmatprep.subr.mxu0 0.0
    %6120 = vmatpush1.msra.mxu0 0.0
    %6121 = vmatprep.subr.mxu0 0.0
    %6122 = vmatpush1.msra.mxu0 0.0
    %6123 = vmatprep.subr.mxu0 0.0
    %6124 = vmatpush1.msra.mxu0 0.0
    %6125 = vmatprep.subr.mxu0 0.0
    %6126 = vmatpush1.msra.mxu0 0.0
    %6127 = vmatprep.subr.mxu0 0.0
    %6128 = vmatpush1.msra.mxu0 0.0
    %6129 = vmatprep.mubr.f32.mxu0 0.0
    %v6130 = vand.u32 %v5966, 4294901760
    %v6131 = vsub.f32 %v5966, %v6130
    %v6132 = vand.u32 %v6131, 4294901760
    %v6133 = vsub.f32 %v6131, %v6132
    %v6134 = vand.u32 %v6133, 4294901760
    %6135 = vmatmul.mubr.f32.gmra.mrb[0].mxu0 %v6134
    %v6136 = vpop.f32.mrb[0].mxu0
    %v6137 = vadd.f32 0.0, %v6136
    %v6138 = vpop.f32.mrb[0].mxu0
    %6139 = vmatprep.mubr.f32.mxu0 0.0
    %v6140 = vand.u32 %v5969, 4294901760
    %v6141 = vsub.f32 %v5969, %v6140
    %v6142 = vand.u32 %v6141, 4294901760
    %v6143 = vsub.f32 %v6141, %v6142
    %v6144 = vand.u32 %v6143, 4294901760
    %6145 = vmatmul.mubr.f32.gmra.mrb[0].mxu0 %v6144
    %v6146 = vpop.f32.mrb[0].mxu0
    %v6147 = vadd.f32 0.0, %v6146
    %v6148 = vpop.f32.mrb[0].mxu0
    %6149 = vmatprep.mubr.f32.mxu0 0.0
    %v6150 = vand.u32 %v5972, 4294901760
    %v6151 = vsub.f32 %v5972, %v6150
    %v6152 = vand.u32 %v6151, 4294901760
    %v6153 = vsub.f32 %v6151, %v6152
    %v6154 = vand.u32 %v6153, 4294901760
    %6155 = vmatmul.mubr.f32.gmra.mrb[0].mxu0 %v6154
    %v6156 = vpop.f32.mrb[0].mxu0
    %v6157 = vadd.f32 0.0, %v6156
    %v6158 = vpop.f32.mrb[0].mxu0
    %6159 = vmatprep.mubr.f32.mxu0 0.0
    %v6160 = vand.u32 %v5975, 4294901760
    %v6161 = vsub.f32 %v5975, %v6160
    %v6162 = vand.u32 %v6161, 4294901760
    %v6163 = vsub.f32 %v6161, %v6162
    %v6164 = vand.u32 %v6163, 4294901760
    %6165 = vmatmul.mubr.f32.gmra.mrb[0].mxu0 %v6164
    %v6166 = vpop.f32.mrb[0].mxu0
    %v6167 = vadd.f32 0.0, %v6166
    %v6168 = vpop.f32.mrb[0].mxu0
    %6169 = vmatprep.mubr.f32.mxu0 0.0
    %v6170 = vand.u32 %v5978, 4294901760
    %v6171 = vsub.f32 %v5978, %v6170
    %v6172 = vand.u32 %v6171, 4294901760
    %v6173 = vsub.f32 %v6171, %v6172
    %v6174 = vand.u32 %v6173, 4294901760
    %6175 = vmatmul.mubr.f32.gmra.mrb[0].mxu0 %v6174
    %v6176 = vpop.f32.mrb[0].mxu0
    %v6177 = vadd.f32 0.0, %v6176
    %v6178 = vpop.f32.mrb[0].mxu0
    %6179 = vmatprep.mubr.f32.mxu0 0.0
    %v6180 = vand.u32 %v5981, 4294901760
    %v6181 = vsub.f32 %v5981, %v6180
    %v6182 = vand.u32 %v6181, 4294901760
    %v6183 = vsub.f32 %v6181, %v6182
    %v6184 = vand.u32 %v6183, 4294901760
    %6185 = vmatmul.mubr.f32.gmra.mrb[0].mxu0 %v6184
    %v6186 = vpop.f32.mrb[0].mxu0
    %v6187 = vadd.f32 0.0, %v6186
    %v6188 = vpop.f32.mrb[0].mxu0
    %6189 = vmatprep.mubr.f32.mxu0 0.0
    %v6190 = vand.u32 %v5984, 4294901760
    %v6191 = vsub.f32 %v5984, %v6190
    %v6192 = vand.u32 %v6191, 4294901760
    %v6193 = vsub.f32 %v6191, %v6192
    %v6194 = vand.u32 %v6193, 4294901760
    %6195 = vmatmul.mubr.f32.gmra.mrb[0].mxu0 %v6194
    %v6196 = vpop.f32.mrb[0].mxu0
    %v6197 = vadd.f32 0.0, %v6196
    %v6198 = vpop.f32.mrb[0].mxu0
    %6199 = vmatprep.mubr.f32.mxu0 0.0
    %v6200 = vand.u32 %v5987, 4294901760
    %v6201 = vsub.f32 %v5987, %v6200
    %v6202 = vand.u32 %v6201, 4294901760
    %v6203 = vsub.f32 %v6201, %v6202
    %v6204 = vand.u32 %v6203, 4294901760
    %6205 = vmatmul.mubr.f32.gmra.mrb[0].mxu0 %v6204
    %v6206 = vpop.f32.mrb[0].mxu0
    %v6207 = vadd.f32 0.0, %v6206
    %v6208 = vpop.f32.mrb[0].mxu0
    %6209 = vmatprep.mubr.f32.mxu0 0.0
    %v6210 = vand.u32 %v5990, 4294901760
    %v6211 = vsub.f32 %v5990, %v6210
    %v6212 = vand.u32 %v6211, 4294901760
    %v6213 = vsub.f32 %v6211, %v6212
    %v6214 = vand.u32 %v6213, 4294901760
    %6215 = vmatmul.mubr.f32.gmra.mrb[0].mxu0 %v6214
    %v6216 = vpop.f32.mrb[0].mxu0
    %v6217 = vadd.f32 0.0, %v6216
    %v6218 = vpop.f32.mrb[0].mxu0
    %6219 = vmatprep.mubr.f32.mxu0 0.0
    %v6220 = vand.u32 %v5993, 4294901760
    %v6221 = vsub.f32 %v5993, %v6220
    %v6222 = vand.u32 %v6221, 4294901760
    %v6223 = vsub.f32 %v6221, %v6222
    %v6224 = vand.u32 %v6223, 4294901760
    %6225 = vmatmul.mubr.f32.gmra.mrb[0].mxu0 %v6224
    %v6226 = vpop.f32.mrb[0].mxu0
    %v6227 = vadd.f32 0.0, %v6226
    %v6228 = vpop.f32.mrb[0].mxu0
    %6229 = vmatprep.mubr.f32.mxu0 0.0
    %v6230 = vand.u32 %v5996, 4294901760
    %v6231 = vsub.f32 %v5996, %v6230
    %v6232 = vand.u32 %v6231, 4294901760
    %v6233 = vsub.f32 %v6231, %v6232
    %v6234 = vand.u32 %v6233, 4294901760
    %6235 = vmatmul.mubr.f32.gmra.mrb[0].mxu0 %v6234
    %v6236 = vpop.f32.mrb[0].mxu0
    %v6237 = vadd.f32 0.0, %v6236
    %v6238 = vpop.f32.mrb[0].mxu0
    %6239 = vmatprep.mubr.f32.mxu0 0.0
    %v6240 = vand.u32 %v5999, 4294901760
    %v6241 = vsub.f32 %v5999, %v6240
    %v6242 = vand.u32 %v6241, 4294901760
    %v6243 = vsub.f32 %v6241, %v6242
    %v6244 = vand.u32 %v6243, 4294901760
    %6245 = vmatmul.mubr.f32.gmra.mrb[0].mxu0 %v6244
    %v6246 = vpop.f32.mrb[0].mxu0
    %v6247 = vadd.f32 0.0, %v6246
    %v6248 = vpop.f32.mrb[0].mxu0
    %6249 = vmatprep.mubr.f32.mxu0 0.0
    %v6250 = vand.u32 %v6002, 4294901760
    %v6251 = vsub.f32 %v6002, %v6250
    %v6252 = vand.u32 %v6251, 4294901760
    %v6253 = vsub.f32 %v6251, %v6252
    %v6254 = vand.u32 %v6253, 4294901760
    %6255 = vmatmul.mubr.f32.gmra.mrb[0].mxu0 %v6254
    %v6256 = vpop.f32.mrb[0].mxu0
    %v6257 = vadd.f32 0.0, %v6256
    %v6258 = vpop.f32.mrb[0].mxu0
    %6259 = vmatprep.mubr.f32.mxu0 0.0
    %v6260 = vand.u32 %v6005, 4294901760
    %v6261 = vsub.f32 %v6005, %v6260
    %v6262 = vand.u32 %v6261, 4294901760
    %v6263 = vsub.f32 %v6261, %v6262
    %v6264 = vand.u32 %v6263, 4294901760
    %6265 = vmatmul.mubr.f32.gmra.mrb[0].mxu0 %v6264
    %v6266 = vpop.f32.mrb[0].mxu0
    %v6267 = vadd.f32 0.0, %v6266
    %v6268 = vpop.f32.mrb[0].mxu0
    %6269 = vmatprep.mubr.f32.mxu0 0.0
    %v6270 = vand.u32 %v6008, 4294901760
    %v6271 = vsub.f32 %v6008, %v6270
    %v6272 = vand.u32 %v6271, 4294901760
    %v6273 = vsub.f32 %v6271, %v6272
    %v6274 = vand.u32 %v6273, 4294901760
    %6275 = vmatmul.mubr.f32.gmra.mrb[0].mxu0 %v6274
    %v6276 = vpop.f32.mrb[0].mxu0
    %v6277 = vadd.f32 0.0, %v6276
    %v6278 = vpop.f32.mrb[0].mxu0
    %6279 = vmatprep.mubr.f32.mxu0 0.0
    %v6280 = vand.u32 %v6011, 4294901760
    %v6281 = vsub.f32 %v6011, %v6280
    %v6282 = vand.u32 %v6281, 4294901760
    %v6283 = vsub.f32 %v6281, %v6282
    %v6284 = vand.u32 %v6283, 4294901760
    %6285 = vmatmul.mubr.f32.gmra.mrb[0].mxu0 %v6284
    %v6286 = vpop.f32.mrb[0].mxu0
    %v6287 = vadd.f32 0.0, %v6286
    %v6288 = vpop.f32.mrb[0].mxu0
    %6289 = vmatprep.mubr.f32.mxu0 0.0
    %v6290 = vand.u32 %v6014, 4294901760
    %v6291 = vsub.f32 %v6014, %v6290
    %v6292 = vand.u32 %v6291, 4294901760
    %v6293 = vsub.f32 %v6291, %v6292
    %v6294 = vand.u32 %v6293, 4294901760
    %6295 = vmatmul.mubr.f32.gmra.mrb[0].mxu0 %v6294
    %v6296 = vpop.f32.mrb[0].mxu0
    %v6297 = vadd.f32 0.0, %v6296
    %v6298 = vpop.f32.mrb[0].mxu0
    %6299 = vmatprep.mubr.f32.mxu0 0.0
    %v6300 = vand.u32 %v6017, 4294901760
    %v6301 = vsub.f32 %v6017, %v6300
    %v6302 = vand.u32 %v6301, 4294901760
    %v6303 = vsub.f32 %v6301, %v6302
    %v6304 = vand.u32 %v6303, 4294901760
    %6305 = vmatmul.mubr.f32.gmra.mrb[0].mxu0 %v6304
    %v6306 = vpop.f32.mrb[0].mxu0
    %v6307 = vadd.f32 0.0, %v6306
    %v6308 = vpop.f32.mrb[0].mxu0
    %6309 = vmatprep.mubr.f32.mxu0 0.0
    %v6310 = vand.u32 %v6020, 4294901760
    %v6311 = vsub.f32 %v6020, %v6310
    %v6312 = vand.u32 %v6311, 4294901760
    %v6313 = vsub.f32 %v6311, %v6312
    %v6314 = vand.u32 %v6313, 4294901760
    %6315 = vmatmul.mubr.f32.gmra.mrb[0].mxu0 %v6314
    %v6316 = vpop.f32.mrb[0].mxu0
    %v6317 = vadd.f32 0.0, %v6316
    %v6318 = vpop.f32.mrb[0].mxu0
    %6319 = vmatprep.mubr.f32.mxu0 0.0
    %v6320 = vand.u32 %v6023, 4294901760
    %v6321 = vsub.f32 %v6023, %v6320
    %v6322 = vand.u32 %v6321, 4294901760
    %v6323 = vsub.f32 %v6321, %v6322
    %v6324 = vand.u32 %v6323, 4294901760
    %6325 = vmatmul.mubr.f32.gmra.mrb[0].mxu0 %v6324
    %v6326 = vpop.f32.mrb[0].mxu0
    %v6327 = vadd.f32 0.0, %v6326
    %v6328 = vpop.f32.mrb[0].mxu0
    %6329 = vmatprep.mubr.f32.mxu0 0.0
    %v6330 = vand.u32 %v6026, 4294901760
    %v6331 = vsub.f32 %v6026, %v6330
    %v6332 = vand.u32 %v6331, 4294901760
    %v6333 = vsub.f32 %v6331, %v6332
    %v6334 = vand.u32 %v6333, 4294901760
    %6335 = vmatmul.mubr.f32.gmra.mrb[0].mxu0 %v6334
    %v6336 = vpop.f32.mrb[0].mxu0
    %v6337 = vadd.f32 0.0, %v6336
    %v6338 = vpop.f32.mrb[0].mxu0
    %6339 = vmatprep.mubr.f32.mxu0 0.0
    %v6340 = vand.u32 %v6029, 4294901760
    %v6341 = vsub.f32 %v6029, %v6340
    %v6342 = vand.u32 %v6341, 4294901760
    %v6343 = vsub.f32 %v6341, %v6342
    %v6344 = vand.u32 %v6343, 4294901760
    %6345 = vmatmul.mubr.f32.gmra.mrb[0].mxu0 %v6344
    %v6346 = vpop.f32.mrb[0].mxu0
    %v6347 = vadd.f32 0.0, %v6346
    %v6348 = vpop.f32.mrb[0].mxu0
    %6349 = vmatprep.mubr.f32.mxu0 0.0
    %v6350 = vand.u32 %v6032, 4294901760
    %v6351 = vsub.f32 %v6032, %v6350
    %v6352 = vand.u32 %v6351, 4294901760
    %v6353 = vsub.f32 %v6351, %v6352
    %v6354 = vand.u32 %v6353, 4294901760
    %6355 = vmatmul.mubr.f32.gmra.mrb[0].mxu0 %v6354
    %v6356 = vpop.f32.mrb[0].mxu0
    %v6357 = vadd.f32 0.0, %v6356
    %v6358 = vpop.f32.mrb[0].mxu0
    %6359 = vmatprep.mubr.f32.mxu0 0.0
    %v6360 = vand.u32 %v6035, 4294901760
    %v6361 = vsub.f32 %v6035, %v6360
    %v6362 = vand.u32 %v6361, 4294901760
    %v6363 = vsub.f32 %v6361, %v6362
    %v6364 = vand.u32 %v6363, 4294901760
    %6365 = vmatmul.mubr.f32.gmra.mrb[0].mxu0 %v6364
    %v6366 = vpop.f32.mrb[0].mxu0
    %v6367 = vadd.f32 0.0, %v6366
    %v6368 = vpop.f32.mrb[0].mxu0
    %6369 = vmatprep.mubr.f32.mxu0 0.0
    %v6370 = vand.u32 %v6038, 4294901760
    %v6371 = vsub.f32 %v6038, %v6370
    %v6372 = vand.u32 %v6371, 4294901760
    %v6373 = vsub.f32 %v6371, %v6372
    %v6374 = vand.u32 %v6373, 4294901760
    %6375 = vmatmul.mubr.f32.gmra.mrb[0].mxu0 %v6374
    %v6376 = vpop.f32.mrb[0].mxu0
    %v6377 = vadd.f32 0.0, %v6376
    %v6378 = vpop.f32.mrb[0].mxu0
    %6379 = vmatprep.mubr.f32.mxu0 0.0
    %v6380 = vand.u32 %v6041, 4294901760
    %v6381 = vsub.f32 %v6041, %v6380
    %v6382 = vand.u32 %v6381, 4294901760
    %v6383 = vsub.f32 %v6381, %v6382
    %v6384 = vand.u32 %v6383, 4294901760
    %6385 = vmatmul.mubr.f32.gmra.mrb[0].mxu0 %v6384
    %v6386 = vpop.f32.mrb[0].mxu0
    %v6387 = vadd.f32 0.0, %v6386
    %v6388 = vpop.f32.mrb[0].mxu0
    %6389 = vmatprep.mubr.f32.mxu0 0.0
    %v6390 = vand.u32 %v6044, 4294901760
    %v6391 = vsub.f32 %v6044, %v6390
    %v6392 = vand.u32 %v6391, 4294901760
    %v6393 = vsub.f32 %v6391, %v6392
    %v6394 = vand.u32 %v6393, 4294901760
    %6395 = vmatmul.mubr.f32.gmra.mrb[0].mxu0 %v6394
    %v6396 = vpop.f32.mrb[0].mxu0
    %v6397 = vadd.f32 0.0, %v6396
    %v6398 = vpop.f32.mrb[0].mxu0
    %6399 = vmatprep.mubr.f32.mxu0 0.0
    %v6400 = vand.u32 %v6047, 4294901760
    %v6401 = vsub.f32 %v6047, %v6400
    %v6402 = vand.u32 %v6401, 4294901760
    %v6403 = vsub.f32 %v6401, %v6402
    %v6404 = vand.u32 %v6403, 4294901760
    %6405 = vmatmul.mubr.f32.gmra.mrb[0].mxu0 %v6404
    %v6406 = vpop.f32.mrb[0].mxu0
    %v6407 = vadd.f32 0.0, %v6406
    %v6408 = vpop.f32.mrb[0].mxu0
    %6409 = vmatprep.mubr.f32.mxu0 0.0
    %v6410 = vand.u32 %v6050, 4294901760
    %v6411 = vsub.f32 %v6050, %v6410
    %v6412 = vand.u32 %v6411, 4294901760
    %v6413 = vsub.f32 %v6411, %v6412
    %v6414 = vand.u32 %v6413, 4294901760
    %6415 = vmatmul.mubr.f32.gmra.mrb[0].mxu0 %v6414
    %v6416 = vpop.f32.mrb[0].mxu0
    %v6417 = vadd.f32 0.0, %v6416
    %v6418 = vpop.f32.mrb[0].mxu0
    %6419 = vmatprep.mubr.f32.mxu0 0.0
    %v6420 = vand.u32 %v6053, 4294901760
    %v6421 = vsub.f32 %v6053, %v6420
    %v6422 = vand.u32 %v6421, 4294901760
    %v6423 = vsub.f32 %v6421, %v6422
    %v6424 = vand.u32 %v6423, 4294901760
    %6425 = vmatmul.mubr.f32.gmra.mrb[0].mxu0 %v6424
    %v6426 = vpop.f32.mrb[0].mxu0
    %v6427 = vadd.f32 0.0, %v6426
    %v6428 = vpop.f32.mrb[0].mxu0
    %6429 = vmatprep.mubr.f32.mxu0 0.0
    %v6430 = vand.u32 %v6056, 4294901760
    %v6431 = vsub.f32 %v6056, %v6430
    %v6432 = vand.u32 %v6431, 4294901760
    %v6433 = vsub.f32 %v6431, %v6432
    %v6434 = vand.u32 %v6433, 4294901760
    %6435 = vmatmul.mubr.f32.gmra.mrb[0].mxu0 %v6434
    %v6436 = vpop.f32.mrb[0].mxu0
    %v6437 = vadd.f32 0.0, %v6436
    %v6438 = vpop.f32.mrb[0].mxu0
    %6439 = vmatprep.mubr.f32.mxu0 0.0
    %v6440 = vand.u32 %v6059, 4294901760
    %v6441 = vsub.f32 %v6059, %v6440
    %v6442 = vand.u32 %v6441, 4294901760
    %v6443 = vsub.f32 %v6441, %v6442
    %v6444 = vand.u32 %v6443, 4294901760
    %6445 = vmatmul.mubr.f32.gmra.mrb[0].mxu0 %v6444
    %v6446 = vpop.f32.mrb[0].mxu0
    %v6447 = vadd.f32 0.0, %v6446
    %v6448 = vpop.f32.mrb[0].mxu0
    %6449 = vdwg.mxu0
    %6450 = vmatprep.subr.mxu0 0.0
    %v6451 = vand.u32 %v5961, 4294901760
    %v6452 = vsub.f32 %v5961, %v6451
    %v6453 = vand.u32 %v6452, 4294901760
    %v6454 = vsub.f32 %v6452, %v6453
    %v6455 = vand.u32 %v6454, 4294901760
    %6456 = vmatpush1.msra.mxu0 %v6455
    %6457 = vmatprep.subr.mxu0 0.0
    %v6458 = vand.u32 %v5962, 4294901760
    %v6459 = vsub.f32 %v5962, %v6458
    %v6460 = vand.u32 %v6459, 4294901760
    %v6461 = vsub.f32 %v6459, %v6460
    %v6462 = vand.u32 %v6461, 4294901760
    %6463 = vmatpush1.msra.mxu0 %v6462
    %6464 = vmatprep.subr.mxu0 0.0
    %v6465 = vand.u32 %v5963, 4294901760
    %v6466 = vsub.f32 %v5963, %v6465
    %v6467 = vand.u32 %v6466, 4294901760
    %v6468 = vsub.f32 %v6466, %v6467
    %v6469 = vand.u32 %v6468, 4294901760
    %6470 = vmatpush1.msra.mxu0 %v6469
    %6471 = vmatprep.subr.mxu0 0.0
    %v6472 = vand.u32 %v5964, 4294901760
    %v6473 = vsub.f32 %v5964, %v6472
    %v6474 = vand.u32 %v6473, 4294901760
    %v6475 = vsub.f32 %v6473, %v6474
    %v6476 = vand.u32 %v6475, 4294901760
    %6477 = vmatpush1.msra.mxu0 %v6476
    %6478 = vmatprep.subr.mxu0 0.0
    %6479 = vmatpush1.msra.mxu0 0.0
    %6480 = vmatprep.subr.mxu0 0.0
    %6481 = vmatpush1.msra.mxu0 0.0
    %6482 = vmatprep.subr.mxu0 0.0
    %6483 = vmatpush1.msra.mxu0 0.0
    %6484 = vmatprep.subr.mxu0 0.0
    %6485 = vmatpush1.msra.mxu0 0.0
    %6486 = vmatprep.subr.mxu0 0.0
    %6487 = vmatpush1.msra.mxu0 0.0
    %6488 = vmatprep.subr.mxu0 0.0
    %6489 = vmatpush1.msra.mxu0 0.0
    %6490 = vmatprep.subr.mxu0 0.0
    %6491 = vmatpush1.msra.mxu0 0.0
    %6492 = vmatprep.subr.mxu0 0.0
    %6493 = vmatpush1.msra.mxu0 0.0
    %6494 = vmatprep.subr.mxu0 0.0
    %6495 = vmatpush1.msra.mxu0 0.0
    %6496 = vmatprep.subr.mxu0 0.0
    %6497 = vmatpush1.msra.mxu0 0.0
    %6498 = vmatprep.subr.mxu0 0.0
    %6499 = vmatpush1.msra.mxu0 0.0
    %6500 = vmatprep.subr.mxu0 0.0
    %6501 = vmatpush1.msra.mxu0 0.0
    %6502 = vmatprep.subr.mxu0 0.0
    %6503 = vmatpush1.msra.mxu0 0.0
    %6504 = vmatprep.subr.mxu0 0.0
    %6505 = vmatpush1.msra.mxu0 0.0
    %6506 = vmatprep.subr.mxu0 0.0
    %6507 = vmatpush1.msra.mxu0 0.0
    %6508 = vmatprep.subr.mxu0 0.0
    %6509 = vmatpush1.msra.mxu0 0.0
    %6510 = vmatprep.subr.mxu0 0.0
    %6511 = vmatpush1.msra.mxu0 0.0
    %6512 = vmatprep.subr.mxu0 0.0
    %6513 = vmatpush1.msra.mxu0 0.0
    %6514 = vmatprep.subr.mxu0 0.0
    %6515 = vmatpush1.msra.mxu0 0.0
    %6516 = vmatprep.subr.mxu0 0.0
    %6517 = vmatpush1.msra.mxu0 0.0
    %6518 = vmatprep.subr.mxu0 0.0
    %6519 = vmatpush1.msra.mxu0 0.0
    %6520 = vmatprep.subr.mxu0 0.0
    %6521 = vmatpush1.msra.mxu0 0.0
    %6522 = vmatprep.subr.mxu0 0.0
    %6523 = vmatpush1.msra.mxu0 0.0
    %6524 = vmatprep.subr.mxu0 0.0
    %6525 = vmatpush1.msra.mxu0 0.0
    %6526 = vmatprep.subr.mxu0 0.0
    %6527 = vmatpush1.msra.mxu0 0.0
    %6528 = vmatprep.subr.mxu0 0.0
    %6529 = vmatpush1.msra.mxu0 0.0
    %6530 = vmatprep.subr.mxu0 0.0
    %6531 = vmatpush1.msra.mxu0 0.0
    %6532 = vmatprep.subr.mxu0 0.0
    %6533 = vmatpush1.msra.mxu0 0.0
    %6534 = vmatprep.mubr.f32.mxu0 0.0
    %v6535 = vand.u32 %v5966, 4294901760
    %6536 = vmatmul.mubr.f32.gmra.mrb[0].mxu0 %v6535
    %v6537 = vpop.f32.mrb[0].mxu0
    %v6538 = vadd.f32 %v6137, %v6537
    %v6539 = vpop.f32.mrb[0].mxu0
    %6540 = vmatprep.mubr.f32.mxu0 0.0
    %v6541 = vand.u32 %v5969, 4294901760
    %6542 = vmatmul.mubr.f32.gmra.mrb[0].mxu0 %v6541
    %v6543 = vpop.f32.mrb[0].mxu0
    %v6544 = vadd.f32 %v6147, %v6543
    %v6545 = vpop.f32.mrb[0].mxu0
    %6546 = vmatprep.mubr.f32.mxu0 0.0
    %v6547 = vand.u32 %v5972, 4294901760
    %6548 = vmatmul.mubr.f32.gmra.mrb[0].mxu0 %v6547
    %v6549 = vpop.f32.mrb[0].mxu0
    %v6550 = vadd.f32 %v6157, %v6549
    %v6551 = vpop.f32.mrb[0].mxu0
    %6552 = vmatprep.mubr.f32.mxu0 0.0
    %v6553 = vand.u32 %v5975, 4294901760
    %6554 = vmatmul.mubr.f32.gmra.mrb[0].mxu0 %v6553
    %v6555 = vpop.f32.mrb[0].mxu0
    %v6556 = vadd.f32 %v6167, %v6555
    %v6557 = vpop.f32.mrb[0].mxu0
    %6558 = vmatprep.mubr.f32.mxu0 0.0
    %v6559 = vand.u32 %v5978, 4294901760
    %6560 = vmatmul.mubr.f32.gmra.mrb[0].mxu0 %v6559
    %v6561 = vpop.f32.mrb[0].mxu0
    %v6562 = vadd.f32 %v6177, %v6561
    %v6563 = vpop.f32.mrb[0].mxu0
    %6564 = vmatprep.mubr.f32.mxu0 0.0
    %v6565 = vand.u32 %v5981, 4294901760
    %6566 = vmatmul.mubr.f32.gmra.mrb[0].mxu0 %v6565
    %v6567 = vpop.f32.mrb[0].mxu0
    %v6568 = vadd.f32 %v6187, %v6567
    %v6569 = vpop.f32.mrb[0].mxu0
    %6570 = vmatprep.mubr.f32.mxu0 0.0
    %v6571 = vand.u32 %v5984, 4294901760
    %6572 = vmatmul.mubr.f32.gmra.mrb[0].mxu0 %v6571
    %v6573 = vpop.f32.mrb[0].mxu0
    %v6574 = vadd.f32 %v6197, %v6573
    %v6575 = vpop.f32.mrb[0].mxu0
    %6576 = vmatprep.mubr.f32.mxu0 0.0
    %v6577 = vand.u32 %v5987, 4294901760
    %6578 = vmatmul.mubr.f32.gmra.mrb[0].mxu0 %v6577
    %v6579 = vpop.f32.mrb[0].mxu0
    %v6580 = vadd.f32 %v6207, %v6579
    %v6581 = vpop.f32.mrb[0].mxu0
    %6582 = vmatprep.mubr.f32.mxu0 0.0
    %v6583 = vand.u32 %v5990, 4294901760
    %6584 = vmatmul.mubr.f32.gmra.mrb[0].mxu0 %v6583
    %v6585 = vpop.f32.mrb[0].mxu0
    %v6586 = vadd.f32 %v6217, %v6585
    %v6587 = vpop.f32.mrb[0].mxu0
    %6588 = vmatprep.mubr.f32.mxu0 0.0
    %v6589 = vand.u32 %v5993, 4294901760
    %6590 = vmatmul.mubr.f32.gmra.mrb[0].mxu0 %v6589
    %v6591 = vpop.f32.mrb[0].mxu0
    %v6592 = vadd.f32 %v6227, %v6591
    %v6593 = vpop.f32.mrb[0].mxu0
    %6594 = vmatprep.mubr.f32.mxu0 0.0
    %v6595 = vand.u32 %v5996, 4294901760
    %6596 = vmatmul.mubr.f32.gmra.mrb[0].mxu0 %v6595
    %v6597 = vpop.f32.mrb[0].mxu0
    %v6598 = vadd.f32 %v6237, %v6597
    %v6599 = vpop.f32.mrb[0].mxu0
    %6600 = vmatprep.mubr.f32.mxu0 0.0
    %v6601 = vand.u32 %v5999, 4294901760
    %6602 = vmatmul.mubr.f32.gmra.mrb[0].mxu0 %v6601
    %v6603 = vpop.f32.mrb[0].mxu0
    %v6604 = vadd.f32 %v6247, %v6603
    %v6605 = vpop.f32.mrb[0].mxu0
    %6606 = vmatprep.mubr.f32.mxu0 0.0
    %v6607 = vand.u32 %v6002, 4294901760
    %6608 = vmatmul.mubr.f32.gmra.mrb[0].mxu0 %v6607
    %v6609 = vpop.f32.mrb[0].mxu0
    %v6610 = vadd.f32 %v6257, %v6609
    %v6611 = vpop.f32.mrb[0].mxu0
    %6612 = vmatprep.mubr.f32.mxu0 0.0
    %v6613 = vand.u32 %v6005, 4294901760
    %6614 = vmatmul.mubr.f32.gmra.mrb[0].mxu0 %v6613
    %v6615 = vpop.f32.mrb[0].mxu0
    %v6616 = vadd.f32 %v6267, %v6615
    %v6617 = vpop.f32.mrb[0].mxu0
    %6618 = vmatprep.mubr.f32.mxu0 0.0
    %v6619 = vand.u32 %v6008, 4294901760
    %6620 = vmatmul.mubr.f32.gmra.mrb[0].mxu0 %v6619
    %v6621 = vpop.f32.mrb[0].mxu0
    %v6622 = vadd.f32 %v6277, %v6621
    %v6623 = vpop.f32.mrb[0].mxu0
    %6624 = vmatprep.mubr.f32.mxu0 0.0
    %v6625 = vand.u32 %v6011, 4294901760
    %6626 = vmatmul.mubr.f32.gmra.mrb[0].mxu0 %v6625
    %v6627 = vpop.f32.mrb[0].mxu0
    %v6628 = vadd.f32 %v6287, %v6627
    %v6629 = vpop.f32.mrb[0].mxu0
    %6630 = vmatprep.mubr.f32.mxu0 0.0
    %v6631 = vand.u32 %v6014, 4294901760
    %6632 = vmatmul.mubr.f32.gmra.mrb[0].mxu0 %v6631
    %v6633 = vpop.f32.mrb[0].mxu0
    %v6634 = vadd.f32 %v6297, %v6633
    %v6635 = vpop.f32.mrb[0].mxu0
    %6636 = vmatprep.mubr.f32.mxu0 0.0
    %v6637 = vand.u32 %v6017, 4294901760
    %6638 = vmatmul.mubr.f32.gmra.mrb[0].mxu0 %v6637
    %v6639 = vpop.f32.mrb[0].mxu0
    %v6640 = vadd.f32 %v6307, %v6639
    %v6641 = vpop.f32.mrb[0].mxu0
    %6642 = vmatprep.mubr.f32.mxu0 0.0
    %v6643 = vand.u32 %v6020, 4294901760
    %6644 = vmatmul.mubr.f32.gmra.mrb[0].mxu0 %v6643
    %v6645 = vpop.f32.mrb[0].mxu0
    %v6646 = vadd.f32 %v6317, %v6645
    %v6647 = vpop.f32.mrb[0].mxu0
    %6648 = vmatprep.mubr.f32.mxu0 0.0
    %v6649 = vand.u32 %v6023, 4294901760
    %6650 = vmatmul.mubr.f32.gmra.mrb[0].mxu0 %v6649
    %v6651 = vpop.f32.mrb[0].mxu0
    %v6652 = vadd.f32 %v6327, %v6651
    %v6653 = vpop.f32.mrb[0].mxu0
    %6654 = vmatprep.mubr.f32.mxu0 0.0
    %v6655 = vand.u32 %v6026, 4294901760
    %6656 = vmatmul.mubr.f32.gmra.mrb[0].mxu0 %v6655
    %v6657 = vpop.f32.mrb[0].mxu0
    %v6658 = vadd.f32 %v6337, %v6657
    %v6659 = vpop.f32.mrb[0].mxu0
    %6660 = vmatprep.mubr.f32.mxu0 0.0
    %v6661 = vand.u32 %v6029, 4294901760
    %6662 = vmatmul.mubr.f32.gmra.mrb[0].mxu0 %v6661
    %v6663 = vpop.f32.mrb[0].mxu0
    %v6664 = vadd.f32 %v6347, %v6663
    %v6665 = vpop.f32.mrb[0].mxu0
    %6666 = vmatprep.mubr.f32.mxu0 0.0
    %v6667 = vand.u32 %v6032, 4294901760
    %6668 = vmatmul.mubr.f32.gmra.mrb[0].mxu0 %v6667
    %v6669 = vpop.f32.mrb[0].mxu0
    %v6670 = vadd.f32 %v6357, %v6669
    %v6671 = vpop.f32.mrb[0].mxu0
    %6672 = vmatprep.mubr.f32.mxu0 0.0
    %v6673 = vand.u32 %v6035, 4294901760
    %6674 = vmatmul.mubr.f32.gmra.mrb[0].mxu0 %v6673
    %v6675 = vpop.f32.mrb[0].mxu0
    %v6676 = vadd.f32 %v6367, %v6675
    %v6677 = vpop.f32.mrb[0].mxu0
    %6678 = vmatprep.mubr.f32.mxu0 0.0
    %v6679 = vand.u32 %v6038, 4294901760
    %6680 = vmatmul.mubr.f32.gmra.mrb[0].mxu0 %v6679
    %v6681 = vpop.f32.mrb[0].mxu0
    %v6682 = vadd.f32 %v6377, %v6681
    %v6683 = vpop.f32.mrb[0].mxu0
    %6684 = vmatprep.mubr.f32.mxu0 0.0
    %v6685 = vand.u32 %v6041, 4294901760
    %6686 = vmatmul.mubr.f32.gmra.mrb[0].mxu0 %v6685
    %v6687 = vpop.f32.mrb[0].mxu0
    %v6688 = vadd.f32 %v6387, %v6687
    %v6689 = vpop.f32.mrb[0].mxu0
    %6690 = vmatprep.mubr.f32.mxu0 0.0
    %v6691 = vand.u32 %v6044, 4294901760
    %6692 = vmatmul.mubr.f32.gmra.mrb[0].mxu0 %v6691
    %v6693 = vpop.f32.mrb[0].mxu0
    %v6694 = vadd.f32 %v6397, %v6693
    %v6695 = vpop.f32.mrb[0].mxu0
    %6696 = vmatprep.mubr.f32.mxu0 0.0
    %v6697 = vand.u32 %v6047, 4294901760
    %6698 = vmatmul.mubr.f32.gmra.mrb[0].mxu0 %v6697
    %v6699 = vpop.f32.mrb[0].mxu0
    %v6700 = vadd.f32 %v6407, %v6699
    %v6701 = vpop.f32.mrb[0].mxu0
    %6702 = vmatprep.mubr.f32.mxu0 0.0
    %v6703 = vand.u32 %v6050, 4294901760
    %6704 = vmatmul.mubr.f32.gmra.mrb[0].mxu0 %v6703
    %v6705 = vpop.f32.mrb[0].mxu0
    %v6706 = vadd.f32 %v6417, %v6705
    %v6707 = vpop.f32.mrb[0].mxu0
    %6708 = vmatprep.mubr.f32.mxu0 0.0
    %v6709 = vand.u32 %v6053, 4294901760
    %6710 = vmatmul.mubr.f32.gmra.mrb[0].mxu0 %v6709
    %v6711 = vpop.f32.mrb[0].mxu0
    %v6712 = vadd.f32 %v6427, %v6711
    %v6713 = vpop.f32.mrb[0].mxu0
    %6714 = vmatprep.mubr.f32.mxu0 0.0
    %v6715 = vand.u32 %v6056, 4294901760
    %6716 = vmatmul.mubr.f32.gmra.mrb[0].mxu0 %v6715
    %v6717 = vpop.f32.mrb[0].mxu0
    %v6718 = vadd.f32 %v6437, %v6717
    %v6719 = vpop.f32.mrb[0].mxu0
    %6720 = vmatprep.mubr.f32.mxu0 0.0
    %v6721 = vand.u32 %v6059, 4294901760
    %6722 = vmatmul.mubr.f32.gmra.mrb[0].mxu0 %v6721
    %v6723 = vpop.f32.mrb[0].mxu0
    %v6724 = vadd.f32 %v6447, %v6723
    %v6725 = vpop.f32.mrb[0].mxu0
    %6726 = vdwg.mxu0
    %6727 = vmatprep.subr.mxu0 0.0
    %v6728 = vand.u32 %v5961, 4294901760
    %v6729 = vsub.f32 %v5961, %v6728
    %6730 = vmatpush1.msra.mxu0 %v6729
    %6731 = vmatprep.subr.mxu0 0.0
    %v6732 = vand.u32 %v5962, 4294901760
    %v6733 = vsub.f32 %v5962, %v6732
    %6734 = vmatpush1.msra.mxu0 %v6733
    %6735 = vmatprep.subr.mxu0 0.0
    %v6736 = vand.u32 %v5963, 4294901760
    %v6737 = vsub.f32 %v5963, %v6736
    %6738 = vmatpush1.msra.mxu0 %v6737
    %6739 = vmatprep.subr.mxu0 0.0
    %v6740 = vand.u32 %v5964, 4294901760
    %v6741 = vsub.f32 %v5964, %v6740
    %6742 = vmatpush1.msra.mxu0 %v6741
    %6743 = vmatprep.subr.mxu0 0.0
    %6744 = vmatpush1.msra.mxu0 0.0
    %6745 = vmatprep.subr.mxu0 0.0
    %6746 = vmatpush1.msra.mxu0 0.0
    %6747 = vmatprep.subr.mxu0 0.0
    %6748 = vmatpush1.msra.mxu0 0.0
    %6749 = vmatprep.subr.mxu0 0.0
    %6750 = vmatpush1.msra.mxu0 0.0
    %6751 = vmatprep.subr.mxu0 0.0
    %6752 = vmatpush1.msra.mxu0 0.0
    %6753 = vmatprep.subr.mxu0 0.0
    %6754 = vmatpush1.msra.mxu0 0.0
    %6755 = vmatprep.subr.mxu0 0.0
    %6756 = vmatpush1.msra.mxu0 0.0
    %6757 = vmatprep.subr.mxu0 0.0
    %6758 = vmatpush1.msra.mxu0 0.0
    %6759 = vmatprep.subr.mxu0 0.0
    %6760 = vmatpush1.msra.mxu0 0.0
    %6761 = vmatprep.subr.mxu0 0.0
    %6762 = vmatpush1.msra.mxu0 0.0
    %6763 = vmatprep.subr.mxu0 0.0
    %6764 = vmatpush1.msra.mxu0 0.0
    %6765 = vmatprep.subr.mxu0 0.0
    %6766 = vmatpush1.msra.mxu0 0.0
    %6767 = vmatprep.subr.mxu0 0.0
    %6768 = vmatpush1.msra.mxu0 0.0
    %6769 = vmatprep.subr.mxu0 0.0
    %6770 = vmatpush1.msra.mxu0 0.0
    %6771 = vmatprep.subr.mxu0 0.0
    %6772 = vmatpush1.msra.mxu0 0.0
    %6773 = vmatprep.subr.mxu0 0.0
    %6774 = vmatpush1.msra.mxu0 0.0
    %6775 = vmatprep.subr.mxu0 0.0
    %6776 = vmatpush1.msra.mxu0 0.0
    %6777 = vmatprep.subr.mxu0 0.0
    %6778 = vmatpush1.msra.mxu0 0.0
    %6779 = vmatprep.subr.mxu0 0.0
    %6780 = vmatpush1.msra.mxu0 0.0
    %6781 = vmatprep.subr.mxu0 0.0
    %6782 = vmatpush1.msra.mxu0 0.0
    %6783 = vmatprep.subr.mxu0 0.0
    %6784 = vmatpush1.msra.mxu0 0.0
    %6785 = vmatprep.subr.mxu0 0.0
    %6786 = vmatpush1.msra.mxu0 0.0
    %6787 = vmatprep.subr.mxu0 0.0
    %6788 = vmatpush1.msra.mxu0 0.0
    %6789 = vmatprep.subr.mxu0 0.0
    %6790 = vmatpush1.msra.mxu0 0.0
    %6791 = vmatprep.subr.mxu0 0.0
    %6792 = vmatpush1.msra.mxu0 0.0
    %6793 = vmatprep.subr.mxu0 0.0
    %6794 = vmatpush1.msra.mxu0 0.0
    %6795 = vmatprep.subr.mxu0 0.0
    %6796 = vmatpush1.msra.mxu0 0.0
    %6797 = vmatprep.subr.mxu0 0.0
    %6798 = vmatpush1.msra.mxu0 0.0
    %6799 = vmatprep.mubr.f32.mxu0 0.0
    %v6800 = vand.u32 %v5966, 4294901760
    %v6801 = vsub.f32 %v5966, %v6800
    %6802 = vmatmul.mubr.f32.gmra.mrb[0].mxu0 %v6801
    %v6803 = vpop.f32.mrb[0].mxu0
    %v6804 = vadd.f32 %v6538, %v6803
    %v6805 = vpop.f32.mrb[0].mxu0
    %6806 = vmatprep.mubr.f32.mxu0 0.0
    %v6807 = vand.u32 %v5969, 4294901760
    %v6808 = vsub.f32 %v5969, %v6807
    %6809 = vmatmul.mubr.f32.gmra.mrb[0].mxu0 %v6808
    %v6810 = vpop.f32.mrb[0].mxu0
    %v6811 = vadd.f32 %v6544, %v6810
    %v6812 = vpop.f32.mrb[0].mxu0
    %6813 = vmatprep.mubr.f32.mxu0 0.0
    %v6814 = vand.u32 %v5972, 4294901760
    %v6815 = vsub.f32 %v5972, %v6814
    %6816 = vmatmul.mubr.f32.gmra.mrb[0].mxu0 %v6815
    %v6817 = vpop.f32.mrb[0].mxu0
    %v6818 = vadd.f32 %v6550, %v6817
    %v6819 = vpop.f32.mrb[0].mxu0
    %6820 = vmatprep.mubr.f32.mxu0 0.0
    %v6821 = vand.u32 %v5975, 4294901760
    %v6822 = vsub.f32 %v5975, %v6821
    %6823 = vmatmul.mubr.f32.gmra.mrb[0].mxu0 %v6822
    %v6824 = vpop.f32.mrb[0].mxu0
    %v6825 = vadd.f32 %v6556, %v6824
    %v6826 = vpop.f32.mrb[0].mxu0
    %6827 = vmatprep.mubr.f32.mxu0 0.0
    %v6828 = vand.u32 %v5978, 4294901760
    %v6829 = vsub.f32 %v5978, %v6828
    %6830 = vmatmul.mubr.f32.gmra.mrb[0].mxu0 %v6829
    %v6831 = vpop.f32.mrb[0].mxu0
    %v6832 = vadd.f32 %v6562, %v6831
    %v6833 = vpop.f32.mrb[0].mxu0
    %6834 = vmatprep.mubr.f32.mxu0 0.0
    %v6835 = vand.u32 %v5981, 4294901760
    %v6836 = vsub.f32 %v5981, %v6835
    %6837 = vmatmul.mubr.f32.gmra.mrb[0].mxu0 %v6836
    %v6838 = vpop.f32.mrb[0].mxu0
    %v6839 = vadd.f32 %v6568, %v6838
    %v6840 = vpop.f32.mrb[0].mxu0
    %6841 = vmatprep.mubr.f32.mxu0 0.0
    %v6842 = vand.u32 %v5984, 4294901760
    %v6843 = vsub.f32 %v5984, %v6842
    %6844 = vmatmul.mubr.f32.gmra.mrb[0].mxu0 %v6843
    %v6845 = vpop.f32.mrb[0].mxu0
    %v6846 = vadd.f32 %v6574, %v6845
    %v6847 = vpop.f32.mrb[0].mxu0
    %6848 = vmatprep.mubr.f32.mxu0 0.0
    %v6849 = vand.u32 %v5987, 4294901760
    %v6850 = vsub.f32 %v5987, %v6849
    %6851 = vmatmul.mubr.f32.gmra.mrb[0].mxu0 %v6850
    %v6852 = vpop.f32.mrb[0].mxu0
    %v6853 = vadd.f32 %v6580, %v6852
    %v6854 = vpop.f32.mrb[0].mxu0
    %6855 = vmatprep.mubr.f32.mxu0 0.0
    %v6856 = vand.u32 %v5990, 4294901760
    %v6857 = vsub.f32 %v5990, %v6856
    %6858 = vmatmul.mubr.f32.gmra.mrb[0].mxu0 %v6857
    %v6859 = vpop.f32.mrb[0].mxu0
    %v6860 = vadd.f32 %v6586, %v6859
    %v6861 = vpop.f32.mrb[0].mxu0
    %6862 = vmatprep.mubr.f32.mxu0 0.0
    %v6863 = vand.u32 %v5993, 4294901760
    %v6864 = vsub.f32 %v5993, %v6863
    %6865 = vmatmul.mubr.f32.gmra.mrb[0].mxu0 %v6864
    %v6866 = vpop.f32.mrb[0].mxu0
    %v6867 = vadd.f32 %v6592, %v6866
    %v6868 = vpop.f32.mrb[0].mxu0
    %6869 = vmatprep.mubr.f32.mxu0 0.0
    %v6870 = vand.u32 %v5996, 4294901760
    %v6871 = vsub.f32 %v5996, %v6870
    %6872 = vmatmul.mubr.f32.gmra.mrb[0].mxu0 %v6871
    %v6873 = vpop.f32.mrb[0].mxu0
    %v6874 = vadd.f32 %v6598, %v6873
    %v6875 = vpop.f32.mrb[0].mxu0
    %6876 = vmatprep.mubr.f32.mxu0 0.0
    %v6877 = vand.u32 %v5999, 4294901760
    %v6878 = vsub.f32 %v5999, %v6877
    %6879 = vmatmul.mubr.f32.gmra.mrb[0].mxu0 %v6878
    %v6880 = vpop.f32.mrb[0].mxu0
    %v6881 = vadd.f32 %v6604, %v6880
    %v6882 = vpop.f32.mrb[0].mxu0
    %6883 = vmatprep.mubr.f32.mxu0 0.0
    %v6884 = vand.u32 %v6002, 4294901760
    %v6885 = vsub.f32 %v6002, %v6884
    %6886 = vmatmul.mubr.f32.gmra.mrb[0].mxu0 %v6885
    %v6887 = vpop.f32.mrb[0].mxu0
    %v6888 = vadd.f32 %v6610, %v6887
    %v6889 = vpop.f32.mrb[0].mxu0
    %6890 = vmatprep.mubr.f32.mxu0 0.0
    %v6891 = vand.u32 %v6005, 4294901760
    %v6892 = vsub.f32 %v6005, %v6891
    %6893 = vmatmul.mubr.f32.gmra.mrb[0].mxu0 %v6892
    %v6894 = vpop.f32.mrb[0].mxu0
    %v6895 = vadd.f32 %v6616, %v6894
    %v6896 = vpop.f32.mrb[0].mxu0
    %6897 = vmatprep.mubr.f32.mxu0 0.0
    %v6898 = vand.u32 %v6008, 4294901760
    %v6899 = vsub.f32 %v6008, %v6898
    %6900 = vmatmul.mubr.f32.gmra.mrb[0].mxu0 %v6899
    %v6901 = vpop.f32.mrb[0].mxu0
    %v6902 = vadd.f32 %v6622, %v6901
    %v6903 = vpop.f32.mrb[0].mxu0
    %6904 = vmatprep.mubr.f32.mxu0 0.0
    %v6905 = vand.u32 %v6011, 4294901760
    %v6906 = vsub.f32 %v6011, %v6905
    %6907 = vmatmul.mubr.f32.gmra.mrb[0].mxu0 %v6906
    %v6908 = vpop.f32.mrb[0].mxu0
    %v6909 = vadd.f32 %v6628, %v6908
    %v6910 = vpop.f32.mrb[0].mxu0
    %6911 = vmatprep.mubr.f32.mxu0 0.0
    %v6912 = vand.u32 %v6014, 4294901760
    %v6913 = vsub.f32 %v6014, %v6912
    %6914 = vmatmul.mubr.f32.gmra.mrb[0].mxu0 %v6913
    %v6915 = vpop.f32.mrb[0].mxu0
    %v6916 = vadd.f32 %v6634, %v6915
    %v6917 = vpop.f32.mrb[0].mxu0
    %6918 = vmatprep.mubr.f32.mxu0 0.0
    %v6919 = vand.u32 %v6017, 4294901760
    %v6920 = vsub.f32 %v6017, %v6919
    %6921 = vmatmul.mubr.f32.gmra.mrb[0].mxu0 %v6920
    %v6922 = vpop.f32.mrb[0].mxu0
    %v6923 = vadd.f32 %v6640, %v6922
    %v6924 = vpop.f32.mrb[0].mxu0
    %6925 = vmatprep.mubr.f32.mxu0 0.0
    %v6926 = vand.u32 %v6020, 4294901760
    %v6927 = vsub.f32 %v6020, %v6926
    %6928 = vmatmul.mubr.f32.gmra.mrb[0].mxu0 %v6927
    %v6929 = vpop.f32.mrb[0].mxu0
    %v6930 = vadd.f32 %v6646, %v6929
    %v6931 = vpop.f32.mrb[0].mxu0
    %6932 = vmatprep.mubr.f32.mxu0 0.0
    %v6933 = vand.u32 %v6023, 4294901760
    %v6934 = vsub.f32 %v6023, %v6933
    %6935 = vmatmul.mubr.f32.gmra.mrb[0].mxu0 %v6934
    %v6936 = vpop.f32.mrb[0].mxu0
    %v6937 = vadd.f32 %v6652, %v6936
    %v6938 = vpop.f32.mrb[0].mxu0
    %6939 = vmatprep.mubr.f32.mxu0 0.0
    %v6940 = vand.u32 %v6026, 4294901760
    %v6941 = vsub.f32 %v6026, %v6940
    %6942 = vmatmul.mubr.f32.gmra.mrb[0].mxu0 %v6941
    %v6943 = vpop.f32.mrb[0].mxu0
    %v6944 = vadd.f32 %v6658, %v6943
    %v6945 = vpop.f32.mrb[0].mxu0
    %6946 = vmatprep.mubr.f32.mxu0 0.0
    %v6947 = vand.u32 %v6029, 4294901760
    %v6948 = vsub.f32 %v6029, %v6947
    %6949 = vmatmul.mubr.f32.gmra.mrb[0].mxu0 %v6948
    %v6950 = vpop.f32.mrb[0].mxu0
    %v6951 = vadd.f32 %v6664, %v6950
    %v6952 = vpop.f32.mrb[0].mxu0
    %6953 = vmatprep.mubr.f32.mxu0 0.0
    %v6954 = vand.u32 %v6032, 4294901760
    %v6955 = vsub.f32 %v6032, %v6954
    %6956 = vmatmul.mubr.f32.gmra.mrb[0].mxu0 %v6955
    %v6957 = vpop.f32.mrb[0].mxu0
    %v6958 = vadd.f32 %v6670, %v6957
    %v6959 = vpop.f32.mrb[0].mxu0
    %6960 = vmatprep.mubr.f32.mxu0 0.0
    %v6961 = vand.u32 %v6035, 4294901760
    %v6962 = vsub.f32 %v6035, %v6961
    %6963 = vmatmul.mubr.f32.gmra.mrb[0].mxu0 %v6962
    %v6964 = vpop.f32.mrb[0].mxu0
    %v6965 = vadd.f32 %v6676, %v6964
    %v6966 = vpop.f32.mrb[0].mxu0
    %6967 = vmatprep.mubr.f32.mxu0 0.0
    %v6968 = vand.u32 %v6038, 4294901760
    %v6969 = vsub.f32 %v6038, %v6968
    %6970 = vmatmul.mubr.f32.gmra.mrb[0].mxu0 %v6969
    %v6971 = vpop.f32.mrb[0].mxu0
    %v6972 = vadd.f32 %v6682, %v6971
    %v6973 = vpop.f32.mrb[0].mxu0
    %6974 = vmatprep.mubr.f32.mxu0 0.0
    %v6975 = vand.u32 %v6041, 4294901760
    %v6976 = vsub.f32 %v6041, %v6975
    %6977 = vmatmul.mubr.f32.gmra.mrb[0].mxu0 %v6976
    %v6978 = vpop.f32.mrb[0].mxu0
    %v6979 = vadd.f32 %v6688, %v6978
    %v6980 = vpop.f32.mrb[0].mxu0
    %6981 = vmatprep.mubr.f32.mxu0 0.0
    %v6982 = vand.u32 %v6044, 4294901760
    %v6983 = vsub.f32 %v6044, %v6982
    %6984 = vmatmul.mubr.f32.gmra.mrb[0].mxu0 %v6983
    %v6985 = vpop.f32.mrb[0].mxu0
    %v6986 = vadd.f32 %v6694, %v6985
    %v6987 = vpop.f32.mrb[0].mxu0
    %6988 = vmatprep.mubr.f32.mxu0 0.0
    %v6989 = vand.u32 %v6047, 4294901760
    %v6990 = vsub.f32 %v6047, %v6989
    %6991 = vmatmul.mubr.f32.gmra.mrb[0].mxu0 %v6990
    %v6992 = vpop.f32.mrb[0].mxu0
    %v6993 = vadd.f32 %v6700, %v6992
    %v6994 = vpop.f32.mrb[0].mxu0
    %6995 = vmatprep.mubr.f32.mxu0 0.0
    %v6996 = vand.u32 %v6050, 4294901760
    %v6997 = vsub.f32 %v6050, %v6996
    %6998 = vmatmul.mubr.f32.gmra.mrb[0].mxu0 %v6997
    %v6999 = vpop.f32.mrb[0].mxu0
    %v7000 = vadd.f32 %v6706, %v6999
    %v7001 = vpop.f32.mrb[0].mxu0
    %7002 = vmatprep.mubr.f32.mxu0 0.0
    %v7003 = vand.u32 %v6053, 4294901760
    %v7004 = vsub.f32 %v6053, %v7003
    %7005 = vmatmul.mubr.f32.gmra.mrb[0].mxu0 %v7004
    %v7006 = vpop.f32.mrb[0].mxu0
    %v7007 = vadd.f32 %v6712, %v7006
    %v7008 = vpop.f32.mrb[0].mxu0
    %7009 = vmatprep.mubr.f32.mxu0 0.0
    %v7010 = vand.u32 %v6056, 4294901760
    %v7011 = vsub.f32 %v6056, %v7010
    %7012 = vmatmul.mubr.f32.gmra.mrb[0].mxu0 %v7011
    %v7013 = vpop.f32.mrb[0].mxu0
    %v7014 = vadd.f32 %v6718, %v7013
    %v7015 = vpop.f32.mrb[0].mxu0
    %7016 = vmatprep.mubr.f32.mxu0 0.0
    %v7017 = vand.u32 %v6059, 4294901760
    %v7018 = vsub.f32 %v6059, %v7017
    %7019 = vmatmul.mubr.f32.gmra.mrb[0].mxu0 %v7018
    %v7020 = vpop.f32.mrb[0].mxu0
    %v7021 = vadd.f32 %v6724, %v7020
    %v7022 = vpop.f32.mrb[0].mxu0
    %7023 = vdwg.mxu0
    %7024 = vmatprep.subr.mxu0 0.0
    %v7025 = vand.u32 %v5961, 4294901760
    %7026 = vmatpush1.msra.mxu0 %v7025
    %7027 = vmatprep.subr.mxu0 0.0
    %v7028 = vand.u32 %v5962, 4294901760
    %7029 = vmatpush1.msra.mxu0 %v7028
    %7030 = vmatprep.subr.mxu0 0.0
    %v7031 = vand.u32 %v5963, 4294901760
    %7032 = vmatpush1.msra.mxu0 %v7031
    %7033 = vmatprep.subr.mxu0 0.0
    %v7034 = vand.u32 %v5964, 4294901760
    %7035 = vmatpush1.msra.mxu0 %v7034
    %7036 = vmatprep.subr.mxu0 0.0
    %7037 = vmatpush1.msra.mxu0 0.0
    %7038 = vmatprep.subr.mxu0 0.0
    %7039 = vmatpush1.msra.mxu0 0.0
    %7040 = vmatprep.subr.mxu0 0.0
    %7041 = vmatpush1.msra.mxu0 0.0
    %7042 = vmatprep.subr.mxu0 0.0
    %7043 = vmatpush1.msra.mxu0 0.0
    %7044 = vmatprep.subr.mxu0 0.0
    %7045 = vmatpush1.msra.mxu0 0.0
    %7046 = vmatprep.subr.mxu0 0.0
    %7047 = vmatpush1.msra.mxu0 0.0
    %7048 = vmatprep.subr.mxu0 0.0
    %7049 = vmatpush1.msra.mxu0 0.0
    %7050 = vmatprep.subr.mxu0 0.0
    %7051 = vmatpush1.msra.mxu0 0.0
    %7052 = vmatprep.subr.mxu0 0.0
    %7053 = vmatpush1.msra.mxu0 0.0
    %7054 = vmatprep.subr.mxu0 0.0
    %7055 = vmatpush1.msra.mxu0 0.0
    %7056 = vmatprep.subr.mxu0 0.0
    %7057 = vmatpush1.msra.mxu0 0.0
    %7058 = vmatprep.subr.mxu0 0.0
    %7059 = vmatpush1.msra.mxu0 0.0
    %7060 = vmatprep.subr.mxu0 0.0
    %7061 = vmatpush1.msra.mxu0 0.0
    %7062 = vmatprep.subr.mxu0 0.0
    %7063 = vmatpush1.msra.mxu0 0.0
    %7064 = vmatprep.subr.mxu0 0.0
    %7065 = vmatpush1.msra.mxu0 0.0
    %7066 = vmatprep.subr.mxu0 0.0
    %7067 = vmatpush1.msra.mxu0 0.0
    %7068 = vmatprep.subr.mxu0 0.0
    %7069 = vmatpush1.msra.mxu0 0.0
    %7070 = vmatprep.subr.mxu0 0.0
    %7071 = vmatpush1.msra.mxu0 0.0
    %7072 = vmatprep.subr.mxu0 0.0
    %7073 = vmatpush1.msra.mxu0 0.0
    %7074 = vmatprep.subr.mxu0 0.0
    %7075 = vmatpush1.msra.mxu0 0.0
    %7076 = vmatprep.subr.mxu0 0.0
    %7077 = vmatpush1.msra.mxu0 0.0
    %7078 = vmatprep.subr.mxu0 0.0
    %7079 = vmatpush1.msra.mxu0 0.0
    %7080 = vmatprep.subr.mxu0 0.0
    %7081 = vmatpush1.msra.mxu0 0.0
    %7082 = vmatprep.subr.mxu0 0.0
    %7083 = vmatpush1.msra.mxu0 0.0
    %7084 = vmatprep.subr.mxu0 0.0
    %7085 = vmatpush1.msra.mxu0 0.0
    %7086 = vmatprep.subr.mxu0 0.0
    %7087 = vmatpush1.msra.mxu0 0.0
    %7088 = vmatprep.subr.mxu0 0.0
    %7089 = vmatpush1.msra.mxu0 0.0
    %7090 = vmatprep.subr.mxu0 0.0
    %7091 = vmatpush1.msra.mxu0 0.0
    %7092 = vmatprep.mubr.f32.mxu0 0.0
    %v7093 = vand.u32 %v5966, 4294901760
    %v7094 = vsub.f32 %v5966, %v7093
    %v7095 = vand.u32 %v7094, 4294901760
    %7096 = vmatmul.mubr.f32.gmra.mrb[0].mxu0 %v7095
    %v7097 = vpop.f32.mrb[0].mxu0
    %v7098 = vadd.f32 %v6804, %v7097
    %v7099 = vpop.f32.mrb[0].mxu0
    %7100 = vmatprep.mubr.f32.mxu0 0.0
    %v7101 = vand.u32 %v5969, 4294901760
    %v7102 = vsub.f32 %v5969, %v7101
    %v7103 = vand.u32 %v7102, 4294901760
    %7104 = vmatmul.mubr.f32.gmra.mrb[0].mxu0 %v7103
    %v7105 = vpop.f32.mrb[0].mxu0
    %v7106 = vadd.f32 %v6811, %v7105
    %v7107 = vpop.f32.mrb[0].mxu0
    %7108 = vmatprep.mubr.f32.mxu0 0.0
    %v7109 = vand.u32 %v5972, 4294901760
    %v7110 = vsub.f32 %v5972, %v7109
    %v7111 = vand.u32 %v7110, 4294901760
    %7112 = vmatmul.mubr.f32.gmra.mrb[0].mxu0 %v7111
    %v7113 = vpop.f32.mrb[0].mxu0
    %v7114 = vadd.f32 %v6818, %v7113
    %v7115 = vpop.f32.mrb[0].mxu0
    %7116 = vmatprep.mubr.f32.mxu0 0.0
    %v7117 = vand.u32 %v5975, 4294901760
    %v7118 = vsub.f32 %v5975, %v7117
    %v7119 = vand.u32 %v7118, 4294901760
    %7120 = vmatmul.mubr.f32.gmra.mrb[0].mxu0 %v7119
    %v7121 = vpop.f32.mrb[0].mxu0
    %v7122 = vadd.f32 %v6825, %v7121
    %v7123 = vpop.f32.mrb[0].mxu0
    %7124 = vmatprep.mubr.f32.mxu0 0.0
    %v7125 = vand.u32 %v5978, 4294901760
    %v7126 = vsub.f32 %v5978, %v7125
    %v7127 = vand.u32 %v7126, 4294901760
    %7128 = vmatmul.mubr.f32.gmra.mrb[0].mxu0 %v7127
    %v7129 = vpop.f32.mrb[0].mxu0
    %v7130 = vadd.f32 %v6832, %v7129
    %v7131 = vpop.f32.mrb[0].mxu0
    %7132 = vmatprep.mubr.f32.mxu0 0.0
    %v7133 = vand.u32 %v5981, 4294901760
    %v7134 = vsub.f32 %v5981, %v7133
    %v7135 = vand.u32 %v7134, 4294901760
    %7136 = vmatmul.mubr.f32.gmra.mrb[0].mxu0 %v7135
    %v7137 = vpop.f32.mrb[0].mxu0
    %v7138 = vadd.f32 %v6839, %v7137
    %v7139 = vpop.f32.mrb[0].mxu0
    %7140 = vmatprep.mubr.f32.mxu0 0.0
    %v7141 = vand.u32 %v5984, 4294901760
    %v7142 = vsub.f32 %v5984, %v7141
    %v7143 = vand.u32 %v7142, 4294901760
    %7144 = vmatmul.mubr.f32.gmra.mrb[0].mxu0 %v7143
    %v7145 = vpop.f32.mrb[0].mxu0
    %v7146 = vadd.f32 %v6846, %v7145
    %v7147 = vpop.f32.mrb[0].mxu0
    %7148 = vmatprep.mubr.f32.mxu0 0.0
    %v7149 = vand.u32 %v5987, 4294901760
    %v7150 = vsub.f32 %v5987, %v7149
    %v7151 = vand.u32 %v7150, 4294901760
    %7152 = vmatmul.mubr.f32.gmra.mrb[0].mxu0 %v7151
    %v7153 = vpop.f32.mrb[0].mxu0
    %v7154 = vadd.f32 %v6853, %v7153
    %v7155 = vpop.f32.mrb[0].mxu0
    %7156 = vmatprep.mubr.f32.mxu0 0.0
    %v7157 = vand.u32 %v5990, 4294901760
    %v7158 = vsub.f32 %v5990, %v7157
    %v7159 = vand.u32 %v7158, 4294901760
    %7160 = vmatmul.mubr.f32.gmra.mrb[0].mxu0 %v7159
    %v7161 = vpop.f32.mrb[0].mxu0
    %v7162 = vadd.f32 %v6860, %v7161
    %v7163 = vpop.f32.mrb[0].mxu0
    %7164 = vmatprep.mubr.f32.mxu0 0.0
    %v7165 = vand.u32 %v5993, 4294901760
    %v7166 = vsub.f32 %v5993, %v7165
    %v7167 = vand.u32 %v7166, 4294901760
    %7168 = vmatmul.mubr.f32.gmra.mrb[0].mxu0 %v7167
    %v7169 = vpop.f32.mrb[0].mxu0
    %v7170 = vadd.f32 %v6867, %v7169
    %v7171 = vpop.f32.mrb[0].mxu0
    %7172 = vmatprep.mubr.f32.mxu0 0.0
    %v7173 = vand.u32 %v5996, 4294901760
    %v7174 = vsub.f32 %v5996, %v7173
    %v7175 = vand.u32 %v7174, 4294901760
    %7176 = vmatmul.mubr.f32.gmra.mrb[0].mxu0 %v7175
    %v7177 = vpop.f32.mrb[0].mxu0
    %v7178 = vadd.f32 %v6874, %v7177
    %v7179 = vpop.f32.mrb[0].mxu0
    %7180 = vmatprep.mubr.f32.mxu0 0.0
    %v7181 = vand.u32 %v5999, 4294901760
    %v7182 = vsub.f32 %v5999, %v7181
    %v7183 = vand.u32 %v7182, 4294901760
    %7184 = vmatmul.mubr.f32.gmra.mrb[0].mxu0 %v7183
    %v7185 = vpop.f32.mrb[0].mxu0
    %v7186 = vadd.f32 %v6881, %v7185
    %v7187 = vpop.f32.mrb[0].mxu0
    %7188 = vmatprep.mubr.f32.mxu0 0.0
    %v7189 = vand.u32 %v6002, 4294901760
    %v7190 = vsub.f32 %v6002, %v7189
    %v7191 = vand.u32 %v7190, 4294901760
    %7192 = vmatmul.mubr.f32.gmra.mrb[0].mxu0 %v7191
    %v7193 = vpop.f32.mrb[0].mxu0
    %v7194 = vadd.f32 %v6888, %v7193
    %v7195 = vpop.f32.mrb[0].mxu0
    %7196 = vmatprep.mubr.f32.mxu0 0.0
    %v7197 = vand.u32 %v6005, 4294901760
    %v7198 = vsub.f32 %v6005, %v7197
    %v7199 = vand.u32 %v7198, 4294901760
    %7200 = vmatmul.mubr.f32.gmra.mrb[0].mxu0 %v7199
    %v7201 = vpop.f32.mrb[0].mxu0
    %v7202 = vadd.f32 %v6895, %v7201
    %v7203 = vpop.f32.mrb[0].mxu0
    %7204 = vmatprep.mubr.f32.mxu0 0.0
    %v7205 = vand.u32 %v6008, 4294901760
    %v7206 = vsub.f32 %v6008, %v7205
    %v7207 = vand.u32 %v7206, 4294901760
    %7208 = vmatmul.mubr.f32.gmra.mrb[0].mxu0 %v7207
    %v7209 = vpop.f32.mrb[0].mxu0
    %v7210 = vadd.f32 %v6902, %v7209
    %v7211 = vpop.f32.mrb[0].mxu0
    %7212 = vmatprep.mubr.f32.mxu0 0.0
    %v7213 = vand.u32 %v6011, 4294901760
    %v7214 = vsub.f32 %v6011, %v7213
    %v7215 = vand.u32 %v7214, 4294901760
    %7216 = vmatmul.mubr.f32.gmra.mrb[0].mxu0 %v7215
    %v7217 = vpop.f32.mrb[0].mxu0
    %v7218 = vadd.f32 %v6909, %v7217
    %v7219 = vpop.f32.mrb[0].mxu0
    %7220 = vmatprep.mubr.f32.mxu0 0.0
    %v7221 = vand.u32 %v6014, 4294901760
    %v7222 = vsub.f32 %v6014, %v7221
    %v7223 = vand.u32 %v7222, 4294901760
    %7224 = vmatmul.mubr.f32.gmra.mrb[0].mxu0 %v7223
    %v7225 = vpop.f32.mrb[0].mxu0
    %v7226 = vadd.f32 %v6916, %v7225
    %v7227 = vpop.f32.mrb[0].mxu0
    %7228 = vmatprep.mubr.f32.mxu0 0.0
    %v7229 = vand.u32 %v6017, 4294901760
    %v7230 = vsub.f32 %v6017, %v7229
    %v7231 = vand.u32 %v7230, 4294901760
    %7232 = vmatmul.mubr.f32.gmra.mrb[0].mxu0 %v7231
    %v7233 = vpop.f32.mrb[0].mxu0
    %v7234 = vadd.f32 %v6923, %v7233
    %v7235 = vpop.f32.mrb[0].mxu0
    %7236 = vmatprep.mubr.f32.mxu0 0.0
    %v7237 = vand.u32 %v6020, 4294901760
    %v7238 = vsub.f32 %v6020, %v7237
    %v7239 = vand.u32 %v7238, 4294901760
    %7240 = vmatmul.mubr.f32.gmra.mrb[0].mxu0 %v7239
    %v7241 = vpop.f32.mrb[0].mxu0
    %v7242 = vadd.f32 %v6930, %v7241
    %v7243 = vpop.f32.mrb[0].mxu0
    %7244 = vmatprep.mubr.f32.mxu0 0.0
    %v7245 = vand.u32 %v6023, 4294901760
    %v7246 = vsub.f32 %v6023, %v7245
    %v7247 = vand.u32 %v7246, 4294901760
    %7248 = vmatmul.mubr.f32.gmra.mrb[0].mxu0 %v7247
    %v7249 = vpop.f32.mrb[0].mxu0
    %v7250 = vadd.f32 %v6937, %v7249
    %v7251 = vpop.f32.mrb[0].mxu0
    %7252 = vmatprep.mubr.f32.mxu0 0.0
    %v7253 = vand.u32 %v6026, 4294901760
    %v7254 = vsub.f32 %v6026, %v7253
    %v7255 = vand.u32 %v7254, 4294901760
    %7256 = vmatmul.mubr.f32.gmra.mrb[0].mxu0 %v7255
    %v7257 = vpop.f32.mrb[0].mxu0
    %v7258 = vadd.f32 %v6944, %v7257
    %v7259 = vpop.f32.mrb[0].mxu0
    %7260 = vmatprep.mubr.f32.mxu0 0.0
    %v7261 = vand.u32 %v6029, 4294901760
    %v7262 = vsub.f32 %v6029, %v7261
    %v7263 = vand.u32 %v7262, 4294901760
    %7264 = vmatmul.mubr.f32.gmra.mrb[0].mxu0 %v7263
    %v7265 = vpop.f32.mrb[0].mxu0
    %v7266 = vadd.f32 %v6951, %v7265
    %v7267 = vpop.f32.mrb[0].mxu0
    %7268 = vmatprep.mubr.f32.mxu0 0.0
    %v7269 = vand.u32 %v6032, 4294901760
    %v7270 = vsub.f32 %v6032, %v7269
    %v7271 = vand.u32 %v7270, 4294901760
    %7272 = vmatmul.mubr.f32.gmra.mrb[0].mxu0 %v7271
    %v7273 = vpop.f32.mrb[0].mxu0
    %v7274 = vadd.f32 %v6958, %v7273
    %v7275 = vpop.f32.mrb[0].mxu0
    %7276 = vmatprep.mubr.f32.mxu0 0.0
    %v7277 = vand.u32 %v6035, 4294901760
    %v7278 = vsub.f32 %v6035, %v7277
    %v7279 = vand.u32 %v7278, 4294901760
    %7280 = vmatmul.mubr.f32.gmra.mrb[0].mxu0 %v7279
    %v7281 = vpop.f32.mrb[0].mxu0
    %v7282 = vadd.f32 %v6965, %v7281
    %v7283 = vpop.f32.mrb[0].mxu0
    %7284 = vmatprep.mubr.f32.mxu0 0.0
    %v7285 = vand.u32 %v6038, 4294901760
    %v7286 = vsub.f32 %v6038, %v7285
    %v7287 = vand.u32 %v7286, 4294901760
    %7288 = vmatmul.mubr.f32.gmra.mrb[0].mxu0 %v7287
    %v7289 = vpop.f32.mrb[0].mxu0
    %v7290 = vadd.f32 %v6972, %v7289
    %v7291 = vpop.f32.mrb[0].mxu0
    %7292 = vmatprep.mubr.f32.mxu0 0.0
    %v7293 = vand.u32 %v6041, 4294901760
    %v7294 = vsub.f32 %v6041, %v7293
    %v7295 = vand.u32 %v7294, 4294901760
    %7296 = vmatmul.mubr.f32.gmra.mrb[0].mxu0 %v7295
    %v7297 = vpop.f32.mrb[0].mxu0
    %v7298 = vadd.f32 %v6979, %v7297
    %v7299 = vpop.f32.mrb[0].mxu0
    %7300 = vmatprep.mubr.f32.mxu0 0.0
    %v7301 = vand.u32 %v6044, 4294901760
    %v7302 = vsub.f32 %v6044, %v7301
    %v7303 = vand.u32 %v7302, 4294901760
    %7304 = vmatmul.mubr.f32.gmra.mrb[0].mxu0 %v7303
    %v7305 = vpop.f32.mrb[0].mxu0
    %v7306 = vadd.f32 %v6986, %v7305
    %v7307 = vpop.f32.mrb[0].mxu0
    %7308 = vmatprep.mubr.f32.mxu0 0.0
    %v7309 = vand.u32 %v6047, 4294901760
    %v7310 = vsub.f32 %v6047, %v7309
    %v7311 = vand.u32 %v7310, 4294901760
    %7312 = vmatmul.mubr.f32.gmra.mrb[0].mxu0 %v7311
    %v7313 = vpop.f32.mrb[0].mxu0
    %v7314 = vadd.f32 %v6993, %v7313
    %v7315 = vpop.f32.mrb[0].mxu0
    %7316 = vmatprep.mubr.f32.mxu0 0.0
    %v7317 = vand.u32 %v6050, 4294901760
    %v7318 = vsub.f32 %v6050, %v7317
    %v7319 = vand.u32 %v7318, 4294901760
    %7320 = vmatmul.mubr.f32.gmra.mrb[0].mxu0 %v7319
    %v7321 = vpop.f32.mrb[0].mxu0
    %v7322 = vadd.f32 %v7000, %v7321
    %v7323 = vpop.f32.mrb[0].mxu0
    %7324 = vmatprep.mubr.f32.mxu0 0.0
    %v7325 = vand.u32 %v6053, 4294901760
    %v7326 = vsub.f32 %v6053, %v7325
    %v7327 = vand.u32 %v7326, 4294901760
    %7328 = vmatmul.mubr.f32.gmra.mrb[0].mxu0 %v7327
    %v7329 = vpop.f32.mrb[0].mxu0
    %v7330 = vadd.f32 %v7007, %v7329
    %v7331 = vpop.f32.mrb[0].mxu0
    %7332 = vmatprep.mubr.f32.mxu0 0.0
    %v7333 = vand.u32 %v6056, 4294901760
    %v7334 = vsub.f32 %v6056, %v7333
    %v7335 = vand.u32 %v7334, 4294901760
    %7336 = vmatmul.mubr.f32.gmra.mrb[0].mxu0 %v7335
    %v7337 = vpop.f32.mrb[0].mxu0
    %v7338 = vadd.f32 %v7014, %v7337
    %v7339 = vpop.f32.mrb[0].mxu0
    %7340 = vmatprep.mubr.f32.mxu0 0.0
    %v7341 = vand.u32 %v6059, 4294901760
    %v7342 = vsub.f32 %v6059, %v7341
    %v7343 = vand.u32 %v7342, 4294901760
    %7344 = vmatmul.mubr.f32.gmra.mrb[0].mxu0 %v7343
    %v7345 = vpop.f32.mrb[0].mxu0
    %v7346 = vadd.f32 %v7021, %v7345
    %v7347 = vpop.f32.mrb[0].mxu0
    %7348 = vdwg.mxu0
    %7349 = vmatprep.subr.mxu0 0.0
    %v7350 = vand.u32 %v5961, 4294901760
    %v7351 = vsub.f32 %v5961, %v7350
    %v7352 = vand.u32 %v7351, 4294901760
    %7353 = vmatpush1.msra.mxu0 %v7352
    %7354 = vmatprep.subr.mxu0 0.0
    %v7355 = vand.u32 %v5962, 4294901760
    %v7356 = vsub.f32 %v5962, %v7355
    %v7357 = vand.u32 %v7356, 4294901760
    %7358 = vmatpush1.msra.mxu0 %v7357
    %7359 = vmatprep.subr.mxu0 0.0
    %v7360 = vand.u32 %v5963, 4294901760
    %v7361 = vsub.f32 %v5963, %v7360
    %v7362 = vand.u32 %v7361, 4294901760
    %7363 = vmatpush1.msra.mxu0 %v7362
    %7364 = vmatprep.subr.mxu0 0.0
    %v7365 = vand.u32 %v5964, 4294901760
    %v7366 = vsub.f32 %v5964, %v7365
    %v7367 = vand.u32 %v7366, 4294901760
    %7368 = vmatpush1.msra.mxu0 %v7367
    %7369 = vmatprep.subr.mxu0 0.0
    %7370 = vmatpush1.msra.mxu0 0.0
    %7371 = vmatprep.subr.mxu0 0.0
    %7372 = vmatpush1.msra.mxu0 0.0
    %7373 = vmatprep.subr.mxu0 0.0
    %7374 = vmatpush1.msra.mxu0 0.0
    %7375 = vmatprep.subr.mxu0 0.0
    %7376 = vmatpush1.msra.mxu0 0.0
    %7377 = vmatprep.subr.mxu0 0.0
    %7378 = vmatpush1.msra.mxu0 0.0
    %7379 = vmatprep.subr.mxu0 0.0
    %7380 = vmatpush1.msra.mxu0 0.0
    %7381 = vmatprep.subr.mxu0 0.0
    %7382 = vmatpush1.msra.mxu0 0.0
    %7383 = vmatprep.subr.mxu0 0.0
    %7384 = vmatpush1.msra.mxu0 0.0
    %7385 = vmatprep.subr.mxu0 0.0
    %7386 = vmatpush1.msra.mxu0 0.0
    %7387 = vmatprep.subr.mxu0 0.0
    %7388 = vmatpush1.msra.mxu0 0.0
    %7389 = vmatprep.subr.mxu0 0.0
    %7390 = vmatpush1.msra.mxu0 0.0
    %7391 = vmatprep.subr.mxu0 0.0
    %7392 = vmatpush1.msra.mxu0 0.0
    %7393 = vmatprep.subr.mxu0 0.0
    %7394 = vmatpush1.msra.mxu0 0.0
    %7395 = vmatprep.subr.mxu0 0.0
    %7396 = vmatpush1.msra.mxu0 0.0
    %7397 = vmatprep.subr.mxu0 0.0
    %7398 = vmatpush1.msra.mxu0 0.0
    %7399 = vmatprep.subr.mxu0 0.0
    %7400 = vmatpush1.msra.mxu0 0.0
    %7401 = vmatprep.subr.mxu0 0.0
    %7402 = vmatpush1.msra.mxu0 0.0
    %7403 = vmatprep.subr.mxu0 0.0
    %7404 = vmatpush1.msra.mxu0 0.0
    %7405 = vmatprep.subr.mxu0 0.0
    %7406 = vmatpush1.msra.mxu0 0.0
    %7407 = vmatprep.subr.mxu0 0.0
    %7408 = vmatpush1.msra.mxu0 0.0
    %7409 = vmatprep.subr.mxu0 0.0
    %7410 = vmatpush1.msra.mxu0 0.0
    %7411 = vmatprep.subr.mxu0 0.0
    %7412 = vmatpush1.msra.mxu0 0.0
    %7413 = vmatprep.subr.mxu0 0.0
    %7414 = vmatpush1.msra.mxu0 0.0
    %7415 = vmatprep.subr.mxu0 0.0
    %7416 = vmatpush1.msra.mxu0 0.0
    %7417 = vmatprep.subr.mxu0 0.0
    %7418 = vmatpush1.msra.mxu0 0.0
    %7419 = vmatprep.subr.mxu0 0.0
    %7420 = vmatpush1.msra.mxu0 0.0
    %7421 = vmatprep.subr.mxu0 0.0
    %7422 = vmatpush1.msra.mxu0 0.0
    %7423 = vmatprep.subr.mxu0 0.0
    %7424 = vmatpush1.msra.mxu0 0.0
    %7425 = vmatprep.mubr.f32.mxu0 0.0
    %v7426 = vand.u32 %v5966, 4294901760
    %7427 = vmatmul.mubr.f32.gmra.mrb[0].mxu0 %v7426
    %v7428 = vpop.f32.mrb[0].mxu0
    %v7429 = vadd.f32 %v7098, %v7428
    %v7430 = vpop.f32.mrb[0].mxu0
    %7431 = vmatprep.mubr.f32.mxu0 0.0
    %v7432 = vand.u32 %v5969, 4294901760
    %7433 = vmatmul.mubr.f32.gmra.mrb[0].mxu0 %v7432
    %v7434 = vpop.f32.mrb[0].mxu0
    %v7435 = vadd.f32 %v7106, %v7434
    %v7436 = vpop.f32.mrb[0].mxu0
    %7437 = vmatprep.mubr.f32.mxu0 0.0
    %v7438 = vand.u32 %v5972, 4294901760
    %7439 = vmatmul.mubr.f32.gmra.mrb[0].mxu0 %v7438
    %v7440 = vpop.f32.mrb[0].mxu0
    %v7441 = vadd.f32 %v7114, %v7440
    %v7442 = vpop.f32.mrb[0].mxu0
    %7443 = vmatprep.mubr.f32.mxu0 0.0
    %v7444 = vand.u32 %v5975, 4294901760
    %7445 = vmatmul.mubr.f32.gmra.mrb[0].mxu0 %v7444
    %v7446 = vpop.f32.mrb[0].mxu0
    %v7447 = vadd.f32 %v7122, %v7446
    %v7448 = vpop.f32.mrb[0].mxu0
    %7449 = vmatprep.mubr.f32.mxu0 0.0
    %v7450 = vand.u32 %v5978, 4294901760
    %7451 = vmatmul.mubr.f32.gmra.mrb[0].mxu0 %v7450
    %v7452 = vpop.f32.mrb[0].mxu0
    %v7453 = vadd.f32 %v7130, %v7452
    %v7454 = vpop.f32.mrb[0].mxu0
    %7455 = vmatprep.mubr.f32.mxu0 0.0
    %v7456 = vand.u32 %v5981, 4294901760
    %7457 = vmatmul.mubr.f32.gmra.mrb[0].mxu0 %v7456
    %v7458 = vpop.f32.mrb[0].mxu0
    %v7459 = vadd.f32 %v7138, %v7458
    %v7460 = vpop.f32.mrb[0].mxu0
    %7461 = vmatprep.mubr.f32.mxu0 0.0
    %v7462 = vand.u32 %v5984, 4294901760
    %7463 = vmatmul.mubr.f32.gmra.mrb[0].mxu0 %v7462
    %v7464 = vpop.f32.mrb[0].mxu0
    %v7465 = vadd.f32 %v7146, %v7464
    %v7466 = vpop.f32.mrb[0].mxu0
    %7467 = vmatprep.mubr.f32.mxu0 0.0
    %v7468 = vand.u32 %v5987, 4294901760
    %7469 = vmatmul.mubr.f32.gmra.mrb[0].mxu0 %v7468
    %v7470 = vpop.f32.mrb[0].mxu0
    %v7471 = vadd.f32 %v7154, %v7470
    %v7472 = vpop.f32.mrb[0].mxu0
    %7473 = vmatprep.mubr.f32.mxu0 0.0
    %v7474 = vand.u32 %v5990, 4294901760
    %7475 = vmatmul.mubr.f32.gmra.mrb[0].mxu0 %v7474
    %v7476 = vpop.f32.mrb[0].mxu0
    %v7477 = vadd.f32 %v7162, %v7476
    %v7478 = vpop.f32.mrb[0].mxu0
    %7479 = vmatprep.mubr.f32.mxu0 0.0
    %v7480 = vand.u32 %v5993, 4294901760
    %7481 = vmatmul.mubr.f32.gmra.mrb[0].mxu0 %v7480
    %v7482 = vpop.f32.mrb[0].mxu0
    %v7483 = vadd.f32 %v7170, %v7482
    %v7484 = vpop.f32.mrb[0].mxu0
    %7485 = vmatprep.mubr.f32.mxu0 0.0
    %v7486 = vand.u32 %v5996, 4294901760
    %7487 = vmatmul.mubr.f32.gmra.mrb[0].mxu0 %v7486
    %v7488 = vpop.f32.mrb[0].mxu0
    %v7489 = vadd.f32 %v7178, %v7488
    %v7490 = vpop.f32.mrb[0].mxu0
    %7491 = vmatprep.mubr.f32.mxu0 0.0
    %v7492 = vand.u32 %v5999, 4294901760
    %7493 = vmatmul.mubr.f32.gmra.mrb[0].mxu0 %v7492
    %v7494 = vpop.f32.mrb[0].mxu0
    %v7495 = vadd.f32 %v7186, %v7494
    %v7496 = vpop.f32.mrb[0].mxu0
    %7497 = vmatprep.mubr.f32.mxu0 0.0
    %v7498 = vand.u32 %v6002, 4294901760
    %7499 = vmatmul.mubr.f32.gmra.mrb[0].mxu0 %v7498
    %v7500 = vpop.f32.mrb[0].mxu0
    %v7501 = vadd.f32 %v7194, %v7500
    %v7502 = vpop.f32.mrb[0].mxu0
    %7503 = vmatprep.mubr.f32.mxu0 0.0
    %v7504 = vand.u32 %v6005, 4294901760
    %7505 = vmatmul.mubr.f32.gmra.mrb[0].mxu0 %v7504
    %v7506 = vpop.f32.mrb[0].mxu0
    %v7507 = vadd.f32 %v7202, %v7506
    %v7508 = vpop.f32.mrb[0].mxu0
    %7509 = vmatprep.mubr.f32.mxu0 0.0
    %v7510 = vand.u32 %v6008, 4294901760
    %7511 = vmatmul.mubr.f32.gmra.mrb[0].mxu0 %v7510
    %v7512 = vpop.f32.mrb[0].mxu0
    %v7513 = vadd.f32 %v7210, %v7512
    %v7514 = vpop.f32.mrb[0].mxu0
    %7515 = vmatprep.mubr.f32.mxu0 0.0
    %v7516 = vand.u32 %v6011, 4294901760
    %7517 = vmatmul.mubr.f32.gmra.mrb[0].mxu0 %v7516
    %v7518 = vpop.f32.mrb[0].mxu0
    %v7519 = vadd.f32 %v7218, %v7518
    %v7520 = vpop.f32.mrb[0].mxu0
    %7521 = vmatprep.mubr.f32.mxu0 0.0
    %v7522 = vand.u32 %v6014, 4294901760
    %7523 = vmatmul.mubr.f32.gmra.mrb[0].mxu0 %v7522
    %v7524 = vpop.f32.mrb[0].mxu0
    %v7525 = vadd.f32 %v7226, %v7524
    %v7526 = vpop.f32.mrb[0].mxu0
    %7527 = vmatprep.mubr.f32.mxu0 0.0
    %v7528 = vand.u32 %v6017, 4294901760
    %7529 = vmatmul.mubr.f32.gmra.mrb[0].mxu0 %v7528
    %v7530 = vpop.f32.mrb[0].mxu0
    %v7531 = vadd.f32 %v7234, %v7530
    %v7532 = vpop.f32.mrb[0].mxu0
    %7533 = vmatprep.mubr.f32.mxu0 0.0
    %v7534 = vand.u32 %v6020, 4294901760
    %7535 = vmatmul.mubr.f32.gmra.mrb[0].mxu0 %v7534
    %v7536 = vpop.f32.mrb[0].mxu0
    %v7537 = vadd.f32 %v7242, %v7536
    %v7538 = vpop.f32.mrb[0].mxu0
    %7539 = vmatprep.mubr.f32.mxu0 0.0
    %v7540 = vand.u32 %v6023, 4294901760
    %7541 = vmatmul.mubr.f32.gmra.mrb[0].mxu0 %v7540
    %v7542 = vpop.f32.mrb[0].mxu0
    %v7543 = vadd.f32 %v7250, %v7542
    %v7544 = vpop.f32.mrb[0].mxu0
    %7545 = vmatprep.mubr.f32.mxu0 0.0
    %v7546 = vand.u32 %v6026, 4294901760
    %7547 = vmatmul.mubr.f32.gmra.mrb[0].mxu0 %v7546
    %v7548 = vpop.f32.mrb[0].mxu0
    %v7549 = vadd.f32 %v7258, %v7548
    %v7550 = vpop.f32.mrb[0].mxu0
    %7551 = vmatprep.mubr.f32.mxu0 0.0
    %v7552 = vand.u32 %v6029, 4294901760
    %7553 = vmatmul.mubr.f32.gmra.mrb[0].mxu0 %v7552
    %v7554 = vpop.f32.mrb[0].mxu0
    %v7555 = vadd.f32 %v7266, %v7554
    %v7556 = vpop.f32.mrb[0].mxu0
    %7557 = vmatprep.mubr.f32.mxu0 0.0
    %v7558 = vand.u32 %v6032, 4294901760
    %7559 = vmatmul.mubr.f32.gmra.mrb[0].mxu0 %v7558
    %v7560 = vpop.f32.mrb[0].mxu0
    %v7561 = vadd.f32 %v7274, %v7560
    %v7562 = vpop.f32.mrb[0].mxu0
    %7563 = vmatprep.mubr.f32.mxu0 0.0
    %v7564 = vand.u32 %v6035, 4294901760
    %7565 = vmatmul.mubr.f32.gmra.mrb[0].mxu0 %v7564
    %v7566 = vpop.f32.mrb[0].mxu0
    %v7567 = vadd.f32 %v7282, %v7566
    %v7568 = vpop.f32.mrb[0].mxu0
    %7569 = vmatprep.mubr.f32.mxu0 0.0
    %v7570 = vand.u32 %v6038, 4294901760
    %7571 = vmatmul.mubr.f32.gmra.mrb[0].mxu0 %v7570
    %v7572 = vpop.f32.mrb[0].mxu0
    %v7573 = vadd.f32 %v7290, %v7572
    %v7574 = vpop.f32.mrb[0].mxu0
    %7575 = vmatprep.mubr.f32.mxu0 0.0
    %v7576 = vand.u32 %v6041, 4294901760
    %7577 = vmatmul.mubr.f32.gmra.mrb[0].mxu0 %v7576
    %v7578 = vpop.f32.mrb[0].mxu0
    %v7579 = vadd.f32 %v7298, %v7578
    %v7580 = vpop.f32.mrb[0].mxu0
    %7581 = vmatprep.mubr.f32.mxu0 0.0
    %v7582 = vand.u32 %v6044, 4294901760
    %7583 = vmatmul.mubr.f32.gmra.mrb[0].mxu0 %v7582
    %v7584 = vpop.f32.mrb[0].mxu0
    %v7585 = vadd.f32 %v7306, %v7584
    %v7586 = vpop.f32.mrb[0].mxu0
    %7587 = vmatprep.mubr.f32.mxu0 0.0
    %v7588 = vand.u32 %v6047, 4294901760
    %7589 = vmatmul.mubr.f32.gmra.mrb[0].mxu0 %v7588
    %v7590 = vpop.f32.mrb[0].mxu0
    %v7591 = vadd.f32 %v7314, %v7590
    %v7592 = vpop.f32.mrb[0].mxu0
    %7593 = vmatprep.mubr.f32.mxu0 0.0
    %v7594 = vand.u32 %v6050, 4294901760
    %7595 = vmatmul.mubr.f32.gmra.mrb[0].mxu0 %v7594
    %v7596 = vpop.f32.mrb[0].mxu0
    %v7597 = vadd.f32 %v7322, %v7596
    %v7598 = vpop.f32.mrb[0].mxu0
    %7599 = vmatprep.mubr.f32.mxu0 0.0
    %v7600 = vand.u32 %v6053, 4294901760
    %7601 = vmatmul.mubr.f32.gmra.mrb[0].mxu0 %v7600
    %v7602 = vpop.f32.mrb[0].mxu0
    %v7603 = vadd.f32 %v7330, %v7602
    %v7604 = vpop.f32.mrb[0].mxu0
    %7605 = vmatprep.mubr.f32.mxu0 0.0
    %v7606 = vand.u32 %v6056, 4294901760
    %7607 = vmatmul.mubr.f32.gmra.mrb[0].mxu0 %v7606
    %v7608 = vpop.f32.mrb[0].mxu0
    %v7609 = vadd.f32 %v7338, %v7608
    %v7610 = vpop.f32.mrb[0].mxu0
    %7611 = vmatprep.mubr.f32.mxu0 0.0
    %v7612 = vand.u32 %v6059, 4294901760
    %7613 = vmatmul.mubr.f32.gmra.mrb[0].mxu0 %v7612
    %v7614 = vpop.f32.mrb[0].mxu0
    %v7615 = vadd.f32 %v7346, %v7614
    %v7616 = vpop.f32.mrb[0].mxu0
    %7617 = vdwg.mxu0
    %7618 = vmatprep.subr.mxu0 0.0
    %v7619 = vand.u32 %v5961, 4294901760
    %7620 = vmatpush1.msra.mxu0 %v7619
    %7621 = vmatprep.subr.mxu0 0.0
    %v7622 = vand.u32 %v5962, 4294901760
    %7623 = vmatpush1.msra.mxu0 %v7622
    %7624 = vmatprep.subr.mxu0 0.0
    %v7625 = vand.u32 %v5963, 4294901760
    %7626 = vmatpush1.msra.mxu0 %v7625
    %7627 = vmatprep.subr.mxu0 0.0
    %v7628 = vand.u32 %v5964, 4294901760
    %7629 = vmatpush1.msra.mxu0 %v7628
    %7630 = vmatprep.subr.mxu0 0.0
    %7631 = vmatpush1.msra.mxu0 0.0
    %7632 = vmatprep.subr.mxu0 0.0
    %7633 = vmatpush1.msra.mxu0 0.0
    %7634 = vmatprep.subr.mxu0 0.0
    %7635 = vmatpush1.msra.mxu0 0.0
    %7636 = vmatprep.subr.mxu0 0.0
    %7637 = vmatpush1.msra.mxu0 0.0
    %7638 = vmatprep.subr.mxu0 0.0
    %7639 = vmatpush1.msra.mxu0 0.0
    %7640 = vmatprep.subr.mxu0 0.0
    %7641 = vmatpush1.msra.mxu0 0.0
    %7642 = vmatprep.subr.mxu0 0.0
    %7643 = vmatpush1.msra.mxu0 0.0
    %7644 = vmatprep.subr.mxu0 0.0
    %7645 = vmatpush1.msra.mxu0 0.0
    %7646 = vmatprep.subr.mxu0 0.0
    %7647 = vmatpush1.msra.mxu0 0.0
    %7648 = vmatprep.subr.mxu0 0.0
    %7649 = vmatpush1.msra.mxu0 0.0
    %7650 = vmatprep.subr.mxu0 0.0
    %7651 = vmatpush1.msra.mxu0 0.0
    %7652 = vmatprep.subr.mxu0 0.0
    %7653 = vmatpush1.msra.mxu0 0.0
    %7654 = vmatprep.subr.mxu0 0.0
    %7655 = vmatpush1.msra.mxu0 0.0
    %7656 = vmatprep.subr.mxu0 0.0
    %7657 = vmatpush1.msra.mxu0 0.0
    %7658 = vmatprep.subr.mxu0 0.0
    %7659 = vmatpush1.msra.mxu0 0.0
    %7660 = vmatprep.subr.mxu0 0.0
    %7661 = vmatpush1.msra.mxu0 0.0
    %7662 = vmatprep.subr.mxu0 0.0
    %7663 = vmatpush1.msra.mxu0 0.0
    %7664 = vmatprep.subr.mxu0 0.0
    %7665 = vmatpush1.msra.mxu0 0.0
    %7666 = vmatprep.subr.mxu0 0.0
    %7667 = vmatpush1.msra.mxu0 0.0
    %7668 = vmatprep.subr.mxu0 0.0
    %7669 = vmatpush1.msra.mxu0 0.0
    %7670 = vmatprep.subr.mxu0 0.0
    %7671 = vmatpush1.msra.mxu0 0.0
    %7672 = vmatprep.subr.mxu0 0.0
    %7673 = vmatpush1.msra.mxu0 0.0
    %7674 = vmatprep.subr.mxu0 0.0
    %7675 = vmatpush1.msra.mxu0 0.0
    %7676 = vmatprep.subr.mxu0 0.0
    %7677 = vmatpush1.msra.mxu0 0.0
    %7678 = vmatprep.subr.mxu0 0.0
    %7679 = vmatpush1.msra.mxu0 0.0
    %7680 = vmatprep.subr.mxu0 0.0
    %7681 = vmatpush1.msra.mxu0 0.0
    %7682 = vmatprep.subr.mxu0 0.0
    %7683 = vmatpush1.msra.mxu0 0.0
    %7684 = vmatprep.subr.mxu0 0.0
    %7685 = vmatpush1.msra.mxu0 0.0
    %7686 = vmatprep.mubr.f32.mxu0 0.0
    %v7687 = vand.u32 %v5966, 4294901760
    %7688 = vmatmul.mubr.f32.gmra.mrb[0].mxu0 %v7687
    %v7689 = vpop.f32.mrb[0].mxu0
    %v7690 = vadd.f32 %v7429, %v7689
    %v7691 = vpop.f32.mrb[0].mxu0
    %7692 = vmatprep.mubr.f32.mxu0 0.0
    %v7693 = vand.u32 %v5969, 4294901760
    %7694 = vmatmul.mubr.f32.gmra.mrb[0].mxu0 %v7693
    %v7695 = vpop.f32.mrb[0].mxu0
    %v7696 = vadd.f32 %v7435, %v7695
    %v7697 = vpop.f32.mrb[0].mxu0
    %7698 = vmatprep.mubr.f32.mxu0 0.0
    %v7699 = vand.u32 %v5972, 4294901760
    %7700 = vmatmul.mubr.f32.gmra.mrb[0].mxu0 %v7699
    %v7701 = vpop.f32.mrb[0].mxu0
    %v7702 = vadd.f32 %v7441, %v7701
    %v7703 = vpop.f32.mrb[0].mxu0
    %7704 = vmatprep.mubr.f32.mxu0 0.0
    %v7705 = vand.u32 %v5975, 4294901760
    %7706 = vmatmul.mubr.f32.gmra.mrb[0].mxu0 %v7705
    %v7707 = vpop.f32.mrb[0].mxu0
    %v7708 = vadd.f32 %v7447, %v7707
    %v7709 = vpop.f32.mrb[0].mxu0
    %7710 = vmatprep.mubr.f32.mxu0 0.0
    %v7711 = vand.u32 %v5978, 4294901760
    %7712 = vmatmul.mubr.f32.gmra.mrb[0].mxu0 %v7711
    %v7713 = vpop.f32.mrb[0].mxu0
    %v7714 = vadd.f32 %v7453, %v7713
    %v7715 = vpop.f32.mrb[0].mxu0
    %7716 = vmatprep.mubr.f32.mxu0 0.0
    %v7717 = vand.u32 %v5981, 4294901760
    %7718 = vmatmul.mubr.f32.gmra.mrb[0].mxu0 %v7717
    %v7719 = vpop.f32.mrb[0].mxu0
    %v7720 = vadd.f32 %v7459, %v7719
    %v7721 = vpop.f32.mrb[0].mxu0
    %7722 = vmatprep.mubr.f32.mxu0 0.0
    %v7723 = vand.u32 %v5984, 4294901760
    %7724 = vmatmul.mubr.f32.gmra.mrb[0].mxu0 %v7723
    %v7725 = vpop.f32.mrb[0].mxu0
    %v7726 = vadd.f32 %v7465, %v7725
    %v7727 = vpop.f32.mrb[0].mxu0
    %7728 = vmatprep.mubr.f32.mxu0 0.0
    %v7729 = vand.u32 %v5987, 4294901760
    %7730 = vmatmul.mubr.f32.gmra.mrb[0].mxu0 %v7729
    %v7731 = vpop.f32.mrb[0].mxu0
    %v7732 = vadd.f32 %v7471, %v7731
    %v7733 = vpop.f32.mrb[0].mxu0
    %7734 = vmatprep.mubr.f32.mxu0 0.0
    %v7735 = vand.u32 %v5990, 4294901760
    %7736 = vmatmul.mubr.f32.gmra.mrb[0].mxu0 %v7735
    %v7737 = vpop.f32.mrb[0].mxu0
    %v7738 = vadd.f32 %v7477, %v7737
    %v7739 = vpop.f32.mrb[0].mxu0
    %7740 = vmatprep.mubr.f32.mxu0 0.0
    %v7741 = vand.u32 %v5993, 4294901760
    %7742 = vmatmul.mubr.f32.gmra.mrb[0].mxu0 %v7741
    %v7743 = vpop.f32.mrb[0].mxu0
    %v7744 = vadd.f32 %v7483, %v7743
    %v7745 = vpop.f32.mrb[0].mxu0
    %7746 = vmatprep.mubr.f32.mxu0 0.0
    %v7747 = vand.u32 %v5996, 4294901760
    %7748 = vmatmul.mubr.f32.gmra.mrb[0].mxu0 %v7747
    %v7749 = vpop.f32.mrb[0].mxu0
    %v7750 = vadd.f32 %v7489, %v7749
    %v7751 = vpop.f32.mrb[0].mxu0
    %7752 = vmatprep.mubr.f32.mxu0 0.0
    %v7753 = vand.u32 %v5999, 4294901760
    %7754 = vmatmul.mubr.f32.gmra.mrb[0].mxu0 %v7753
    %v7755 = vpop.f32.mrb[0].mxu0
    %v7756 = vadd.f32 %v7495, %v7755
    %v7757 = vpop.f32.mrb[0].mxu0
    %7758 = vmatprep.mubr.f32.mxu0 0.0
    %v7759 = vand.u32 %v6002, 4294901760
    %7760 = vmatmul.mubr.f32.gmra.mrb[0].mxu0 %v7759
    %v7761 = vpop.f32.mrb[0].mxu0
    %v7762 = vadd.f32 %v7501, %v7761
    %v7763 = vpop.f32.mrb[0].mxu0
    %7764 = vmatprep.mubr.f32.mxu0 0.0
    %v7765 = vand.u32 %v6005, 4294901760
    %7766 = vmatmul.mubr.f32.gmra.mrb[0].mxu0 %v7765
    %v7767 = vpop.f32.mrb[0].mxu0
    %v7768 = vadd.f32 %v7507, %v7767
    %v7769 = vpop.f32.mrb[0].mxu0
    %7770 = vmatprep.mubr.f32.mxu0 0.0
    %v7771 = vand.u32 %v6008, 4294901760
    %7772 = vmatmul.mubr.f32.gmra.mrb[0].mxu0 %v7771
    %v7773 = vpop.f32.mrb[0].mxu0
    %v7774 = vadd.f32 %v7513, %v7773
    %v7775 = vpop.f32.mrb[0].mxu0
    %7776 = vmatprep.mubr.f32.mxu0 0.0
    %v7777 = vand.u32 %v6011, 4294901760
    %7778 = vmatmul.mubr.f32.gmra.mrb[0].mxu0 %v7777
    %v7779 = vpop.f32.mrb[0].mxu0
    %v7780 = vadd.f32 %v7519, %v7779
    %v7781 = vpop.f32.mrb[0].mxu0
    %7782 = vmatprep.mubr.f32.mxu0 0.0
    %v7783 = vand.u32 %v6014, 4294901760
    %7784 = vmatmul.mubr.f32.gmra.mrb[0].mxu0 %v7783
    %v7785 = vpop.f32.mrb[0].mxu0
    %v7786 = vadd.f32 %v7525, %v7785
    %v7787 = vpop.f32.mrb[0].mxu0
    %7788 = vmatprep.mubr.f32.mxu0 0.0
    %v7789 = vand.u32 %v6017, 4294901760
    %7790 = vmatmul.mubr.f32.gmra.mrb[0].mxu0 %v7789
    %v7791 = vpop.f32.mrb[0].mxu0
    %v7792 = vadd.f32 %v7531, %v7791
    %v7793 = vpop.f32.mrb[0].mxu0
    %7794 = vmatprep.mubr.f32.mxu0 0.0
    %v7795 = vand.u32 %v6020, 4294901760
    %7796 = vmatmul.mubr.f32.gmra.mrb[0].mxu0 %v7795
    %v7797 = vpop.f32.mrb[0].mxu0
    %v7798 = vadd.f32 %v7537, %v7797
    %v7799 = vpop.f32.mrb[0].mxu0
    %7800 = vmatprep.mubr.f32.mxu0 0.0
    %v7801 = vand.u32 %v6023, 4294901760
    %7802 = vmatmul.mubr.f32.gmra.mrb[0].mxu0 %v7801
    %v7803 = vpop.f32.mrb[0].mxu0
    %v7804 = vadd.f32 %v7543, %v7803
    %v7805 = vpop.f32.mrb[0].mxu0
    %7806 = vmatprep.mubr.f32.mxu0 0.0
    %v7807 = vand.u32 %v6026, 4294901760
    %7808 = vmatmul.mubr.f32.gmra.mrb[0].mxu0 %v7807
    %v7809 = vpop.f32.mrb[0].mxu0
    %v7810 = vadd.f32 %v7549, %v7809
    %v7811 = vpop.f32.mrb[0].mxu0
    %7812 = vmatprep.mubr.f32.mxu0 0.0
    %v7813 = vand.u32 %v6029, 4294901760
    %7814 = vmatmul.mubr.f32.gmra.mrb[0].mxu0 %v7813
    %v7815 = vpop.f32.mrb[0].mxu0
    %v7816 = vadd.f32 %v7555, %v7815
    %v7817 = vpop.f32.mrb[0].mxu0
    %7818 = vmatprep.mubr.f32.mxu0 0.0
    %v7819 = vand.u32 %v6032, 4294901760
    %7820 = vmatmul.mubr.f32.gmra.mrb[0].mxu0 %v7819
    %v7821 = vpop.f32.mrb[0].mxu0
    %v7822 = vadd.f32 %v7561, %v7821
    %v7823 = vpop.f32.mrb[0].mxu0
    %7824 = vmatprep.mubr.f32.mxu0 0.0
    %v7825 = vand.u32 %v6035, 4294901760
    %7826 = vmatmul.mubr.f32.gmra.mrb[0].mxu0 %v7825
    %v7827 = vpop.f32.mrb[0].mxu0
    %v7828 = vadd.f32 %v7567, %v7827
    %v7829 = vpop.f32.mrb[0].mxu0
    %7830 = vmatprep.mubr.f32.mxu0 0.0
    %v7831 = vand.u32 %v6038, 4294901760
    %7832 = vmatmul.mubr.f32.gmra.mrb[0].mxu0 %v7831
    %v7833 = vpop.f32.mrb[0].mxu0
    %v7834 = vadd.f32 %v7573, %v7833
    %v7835 = vpop.f32.mrb[0].mxu0
    %7836 = vmatprep.mubr.f32.mxu0 0.0
    %v7837 = vand.u32 %v6041, 4294901760
    %7838 = vmatmul.mubr.f32.gmra.mrb[0].mxu0 %v7837
    %v7839 = vpop.f32.mrb[0].mxu0
    %v7840 = vadd.f32 %v7579, %v7839
    %v7841 = vpop.f32.mrb[0].mxu0
    %7842 = vmatprep.mubr.f32.mxu0 0.0
    %v7843 = vand.u32 %v6044, 4294901760
    %7844 = vmatmul.mubr.f32.gmra.mrb[0].mxu0 %v7843
    %v7845 = vpop.f32.mrb[0].mxu0
    %v7846 = vadd.f32 %v7585, %v7845
    %v7847 = vpop.f32.mrb[0].mxu0
    %7848 = vmatprep.mubr.f32.mxu0 0.0
    %v7849 = vand.u32 %v6047, 4294901760
    %7850 = vmatmul.mubr.f32.gmra.mrb[0].mxu0 %v7849
    %v7851 = vpop.f32.mrb[0].mxu0
    %v7852 = vadd.f32 %v7591, %v7851
    %v7853 = vpop.f32.mrb[0].mxu0
    %7854 = vmatprep.mubr.f32.mxu0 0.0
    %v7855 = vand.u32 %v6050, 4294901760
    %7856 = vmatmul.mubr.f32.gmra.mrb[0].mxu0 %v7855
    %v7857 = vpop.f32.mrb[0].mxu0
    %v7858 = vadd.f32 %v7597, %v7857
    %v7859 = vpop.f32.mrb[0].mxu0
    %7860 = vmatprep.mubr.f32.mxu0 0.0
    %v7861 = vand.u32 %v6053, 4294901760
    %7862 = vmatmul.mubr.f32.gmra.mrb[0].mxu0 %v7861
    %v7863 = vpop.f32.mrb[0].mxu0
    %v7864 = vadd.f32 %v7603, %v7863
    %v7865 = vpop.f32.mrb[0].mxu0
    %7866 = vmatprep.mubr.f32.mxu0 0.0
    %v7867 = vand.u32 %v6056, 4294901760
    %7868 = vmatmul.mubr.f32.gmra.mrb[0].mxu0 %v7867
    %v7869 = vpop.f32.mrb[0].mxu0
    %v7870 = vadd.f32 %v7609, %v7869
    %v7871 = vpop.f32.mrb[0].mxu0
    %7872 = vmatprep.mubr.f32.mxu0 0.0
    %v7873 = vand.u32 %v6059, 4294901760
    %7874 = vmatmul.mubr.f32.gmra.mrb[0].mxu0 %v7873
    %v7875 = vpop.f32.mrb[0].mxu0
    %v7876 = vadd.f32 %v7615, %v7875
    %v7877 = vpop.f32.mrb[0].mxu0
    %7878 = vdwg.mxu0
    %v7879 = vadd.f32 %v5895, %v7690
    %v7880 = vadd.f32 %v5896, %v7696
    %v7881 = vadd.f32 %v5897, %v7702
    %v7882 = vadd.f32 %v5898, %v7708
    %v7883 = vadd.f32 %v5899, %v7714
    %v7884 = vadd.f32 %v5900, %v7720
    %v7885 = vadd.f32 %v5901, %v7726
    %v7886 = vadd.f32 %v5902, %v7732
    %v7887 = vadd.f32 %v5903, %v7738
    %v7888 = vadd.f32 %v5904, %v7744
    %v7889 = vadd.f32 %v5905, %v7750
    %v7890 = vadd.f32 %v5906, %v7756
    %v7891 = vadd.f32 %v5907, %v7762
    %v7892 = vadd.f32 %v5908, %v7768
    %v7893 = vadd.f32 %v5909, %v7774
    %v7894 = vadd.f32 %v5910, %v7780
    %v7895 = vadd.f32 %v5911, %v7786
    %v7896 = vadd.f32 %v5912, %v7792
    %v7897 = vadd.f32 %v5913, %v7798
    %v7898 = vadd.f32 %v5914, %v7804
    %v7899 = vadd.f32 %v5915, %v7810
    %v7900 = vadd.f32 %v5916, %v7816
    %v7901 = vadd.f32 %v5917, %v7822
    %v7902 = vadd.f32 %v5918, %v7828
    %v7903 = vadd.f32 %v5919, %v7834
    %v7904 = vadd.f32 %v5920, %v7840
    %v7905 = vadd.f32 %v5921, %v7846
    %v7906 = vadd.f32 %v5922, %v7852
    %v7907 = vadd.f32 %v5923, %v7858
    %v7908 = vadd.f32 %v5924, %v7864
    %v7909 = vadd.f32 %v5925, %v7870
    %v7910 = vadd.f32 %v5926, %v7876
    %7911 = vst [vmem:[#allocation7] sm:$0xff] %v7879
    %7912 = vst [vmem:[#allocation7 + $0x8] sm:$0xff] %v7880
    %7913 = vst [vmem:[#allocation7 + $0x10] sm:$0xff] %v7881
    %7914 = vst [vmem:[#allocation7 + $0x18] sm:$0xff] %v7882
    %7915 = vst [vmem:[#allocation7 + $0x20] sm:$0xff] %v7883
    %7916 = vst [vmem:[#allocation7 + $0x28] sm:$0xff] %v7884
    %7917 = vst [vmem:[#allocation7 + $0x30] sm:$0xff] %v7885
    %7918 = vst [vmem:[#allocation7 + $0x38] sm:$0xff] %v7886
    %7919 = vst [vmem:[#allocation7 + $0x40] sm:$0xff] %v7887
    %7920 = vst [vmem:[#allocation7 + $0x48] sm:$0xff] %v7888
    %7921 = vst [vmem:[#allocation7 + $0x50] sm:$0xff] %v7889
    %7922 = vst [vmem:[#allocation7 + $0x58] sm:$0xff] %v7890
    %7923 = vst [vmem:[#allocation7 + $0x60] sm:$0xff] %v7891
    %7924 = vst [vmem:[#allocation7 + $0x68] sm:$0xff] %v7892
    %7925 = vst [vmem:[#allocation7 + $0x70] sm:$0xff] %v7893
    %7926 = vst [vmem:[#allocation7 + $0x78] sm:$0xff] %v7894
    %7927 = vst [vmem:[#allocation7 + $0x80] sm:$0xff] %v7895
    %7928 = vst [vmem:[#allocation7 + $0x88] sm:$0xff] %v7896
    %7929 = vst [vmem:[#allocation7 + $0x90] sm:$0xff] %v7897
    %7930 = vst [vmem:[#allocation7 + $0x98] sm:$0xff] %v7898
    %7931 = vst [vmem:[#allocation7 + $0xa0] sm:$0xff] %v7899
    %7932 = vst [vmem:[#allocation7 + $0xa8] sm:$0xff] %v7900
    %7933 = vst [vmem:[#allocation7 + $0xb0] sm:$0xff] %v7901
    %7934 = vst [vmem:[#allocation7 + $0xb8] sm:$0xff] %v7902
    %7935 = vst [vmem:[#allocation7 + $0xc0] sm:$0xff] %v7903
    %7936 = vst [vmem:[#allocation7 + $0xc8] sm:$0xff] %v7904
    %7937 = vst [vmem:[#allocation7 + $0xd0] sm:$0xff] %v7905
    %7938 = vst [vmem:[#allocation7 + $0xd8] sm:$0xff] %v7906
    %7939 = vst [vmem:[#allocation7 + $0xe0] sm:$0xff] %v7907
    %7940 = vst [vmem:[#allocation7 + $0xe8] sm:$0xff] %v7908
    %7941 = vst [vmem:[#allocation7 + $0xf0] sm:$0xff] %v7909
    %7942 = vst [vmem:[#allocation7 + $0xf8] sm:$0xff] %v7910
    // Predicated region
    $region18: #{tpu_custom_call.1} parent=1 // pred_check
      _
    $region19: #{tpu_custom_call.1} parent=1 // pred_check_branch
      %7944 = sbr.rel (0) target = $region21
    $region20: #{tpu_custom_call.1} parent=1 // pred_region
      %s7946 = ssub.s32 4096, 4096
      %7947 = vsyncadd [#allocation4], %s7946
      %s7948 = sshll.u32 [#allocation7], 4
      %s7949 = int_to_ptr.vmem [resolvable:$true] %s7948
      %7954 = dma.vmem_to_hbm [thread:$0]  %s7949, 4096, %s2, [#allocation4], 128, 128, 8
    $region21: #{tpu_custom_call.1} parent=1 // pred_fallthru
      _
    // Predicated region
    $region22: #{tpu_custom_call.1} parent=1 // pred_check
      _
    $region23: #{tpu_custom_call.1} parent=1 // pred_check_branch
      %7956 = sbr.rel (0) target = $region25
    $region24: #{tpu_custom_call.1} parent=1 // pred_region
      %7957 = dma.done [#allocation4], 4096
    $region25: #{tpu_custom_call.1} parent=1 // pred_fallthru
      _
    %7958 = vsyncpa [#allocation3], 1
    %7959 = vsyncpa [#allocation6], 1
    %7960 = vsyncpa [#allocation4], 1

</llo_original>
